<compile_context>
chip_gen: v5e
topology: v5e:2x2
jax: 0.10.0
libtpu: 0.0.40
codegen_flags: <defaults>
</compile_context>

<pallas_src>
import jax
import jax.numpy as jnp
from jax.experimental import pallas as pl
from jax.experimental.pallas import tpu as pltpu


# ---------------------------------------------------------------------------
# Kernel 1: conv1 (3x3, pad 1, Cin=1, Cout=8) + bias + ReLU + 2x2/2 max-pool
# ---------------------------------------------------------------------------
def conv1_relu_pool_kernel(xe_ref, w_ref, b_ref, o_ref):
    """Fused conv1 + bias + ReLU + pool, VPU formulation (Cin = 1).

    xe_ref: (B, 2, 2, 15, 15) VMEM   parity-split zero-padded input:
            xe[b, rh, rw, p, q] = pad1(x)[b, 2p+rh, 2q+rw]
    w_ref : (72,) SMEM               conv1 weight, index co*9 + kh*3 + kw
    b_ref : (8,)  SMEM               conv1 bias
    o_ref : (B, 8, 14, 14) VMEM      pooled activations (NCHW block)
    """
    Ph = Pw = 14

    # Load the 4 parity sub-images once, then build the 16 distinct static
    # windows that cover every (pool-phase, tap) combination.
    sub = [[xe_ref[:, rh, rw, :, :] for rw in range(2)] for rh in range(2)]
    win = {}
    for rh in range(2):
        for rw in range(2):
            for qh in range(2):
                for qw in range(2):
                    win[(rh, rw, qh, qw)] = sub[rh][rw][:, qh:qh + Ph, qw:qw + Pw]

    # Hoist scalar weight / bias reads out of the MAC loops.
    wv = [w_ref[i] for i in range(72)]
    bv = [b_ref[i] for i in range(8)]

    chans = []
    for co in range(8):
        phase_vals = []
        for a in range(2):          # pooling phase (rows)
            for b in range(2):      # pooling phase (cols)
                acc = None
                for kh in range(3):
                    for kw in range(3):
                        rh, qh = (a + kh) % 2, (a + kh) // 2
                        rw, qw = (b + kw) % 2, (b + kw) // 2
                        term = win[(rh, rw, qh, qw)] * wv[co * 9 + kh * 3 + kw]
                        acc = term if acc is None else acc + term
                phase_vals.append(acc)
        pooled = jnp.maximum(jnp.maximum(phase_vals[0], phase_vals[1]),
                             jnp.maximum(phase_vals[2], phase_vals[3]))
        # bias + ReLU once, after the pooling max (exact by monotonicity).
        chans.append(jnp.maximum(pooled + bv[co], 0.0))

    o_ref[...] = jnp.stack(chans, axis=1)            # (B, 8, 14, 14)


# ---------------------------------------------------------------------------
# Kernel 2: conv2 (3x3, pad 1, Cin=8, Cout=16) + bias + ReLU + pool + fused FC
# ---------------------------------------------------------------------------
def conv2_relu_pool_fc_kernel(xe_ref, w2_ref, b2_ref, wfc_ref, bfc_ref, o_ref):
    """In-VMEM im2col -> one MXU matmul -> pool -> bias/ReLU -> fused FC.

    xe_ref : (B, 2, 2, 8, 9, 8) VMEM  parity-split padded conv1 output (NHWC):
             xe[b, rh, rw, p, q, c] = pad(y1)[b, 2p+rh, 2q+rw, c]
    w2_ref : (72, 16) VMEM            conv2 weight, rows ordered (kh, kw, cin)
    b2_ref : (1, 16)  VMEM
    wfc_ref: (10, 56, 16) VMEM        fc weight permuted to (out, h*8+w, c),
                                      column w=7 zero-padded
    bfc_ref: (1, 10)  VMEM
    o_ref  : (B, 10)  VMEM            logits
    """
    B = o_ref.shape[0]
    Ph, Pwp = 7, 8                    # 7 valid pooled rows, 8 cols (last = pad)

    # 16 distinct static windows (unit-stride slices of the parity sub-blocks).
    win = {}
    for rh in range(2):
        for rw in range(2):
            s = xe_ref[:, rh, rw, :, :, :]            # (B, 8, 9, 8)
            for qh in range(2):
                for qw in range(2):
                    win[(rh, rw, qh, qw)] = s[:, qh:qh + Ph, qw:qw + Pwp, :]

    # Build im2col rows for all 4 pooling phases and fold phases+batch into M.
    phase_rows = []
    for a in range(2):
        for b in range(2):
            taps = [win[((a + kh) % 2, (b + kw) % 2, (a + kh) // 2, (b + kw) // 2)]
                    for kh in range(3) for kw in range(3)]     # 9 x (B, 7, 8, 8)
            patches = jnp.concatenate(taps, axis=-1)           # (B, 7, 8, 72)
            phase_rows.append(patches.reshape(B * Ph * Pwp, 72))
    lhs = jnp.concatenate(phase_rows, axis=0)                  # (4*B*56, 72)

    # One MXU call for the whole block.
    z = jnp.dot(lhs, w2_ref[...], preferred_element_type=jnp.float32)  # (4*B*56, 16)

    # 2x2 max-pool = max over the 4 phases; bias + ReLU applied once after.
    z = z.reshape(4, B * Ph * Pwp, 16)
    y2 = jnp.maximum(jnp.max(z, axis=0) + b2_ref[...], 0.0)            # (B*56, 16)

    # Fused FC epilogue: out[n, o] = sum_{s,c} y2[n, s, c] * wfc[o, s, c] + bfc
    y2 = y2.reshape(B, Ph * Pwp, 16)                                   # (B, 56, 16)
    prod = y2[:, None, :, :] * wfc_ref[...][None, :, :, :]             # (B, 10, 56, 16)
    fc = jnp.sum(jnp.sum(prod, axis=3), axis=2)                        # (B, 10)
    o_ref[...] = fc + bfc_ref[...]


# ---------------------------------------------------------------------------
# pallas_call wrappers
# ---------------------------------------------------------------------------
def _conv1_pallas(xe1, w1_flat, b1, block_b):
    npad = xe1.shape[0]
    return pl.pallas_call(
        conv1_relu_pool_kernel,
        out_shape=jax.ShapeDtypeStruct((npad, 8, 14, 14), jnp.float32),
        grid=(npad // block_b,),
        in_specs=[
            pl.BlockSpec((block_b, 2, 2, 15, 15), lambda n: (n, 0, 0, 0, 0)),
            pl.BlockSpec(memory_space=pltpu.MemorySpace.SMEM),
            pl.BlockSpec(memory_space=pltpu.MemorySpace.SMEM),
        ],
        out_specs=pl.BlockSpec((block_b, 8, 14, 14), lambda n: (n, 0, 0, 0)),
        compiler_params=pltpu.CompilerParams(
            dimension_semantics=("parallel",),
            vmem_limit_bytes=32 * 1024 * 1024),
    )(xe1, w1_flat, b1)


def _conv2_fc_pallas(xe2, w2, b2, wfc, bfc, block_b):
    npad = xe2.shape[0]
    return pl.pallas_call(
        conv2_relu_pool_fc_kernel,
        out_shape=jax.ShapeDtypeStruct((npad, 10), jnp.float32),
        grid=(npad // block_b,),
        in_specs=[
            pl.BlockSpec((block_b, 2, 2, 8, 9, 8), lambda n: (n, 0, 0, 0, 0, 0)),
            pl.BlockSpec((72, 16), lambda n: (0, 0)),
            pl.BlockSpec((1, 16), lambda n: (0, 0)),
            pl.BlockSpec((10, 56, 16), lambda n: (0, 0, 0)),
            pl.BlockSpec((1, 10), lambda n: (0, 0)),
        ],
        out_specs=pl.BlockSpec((block_b, 10), lambda n: (n, 0)),
        compiler_params=pltpu.CompilerParams(
            dimension_semantics=("parallel",),
            vmem_limit_bytes=32 * 1024 * 1024),  # keep blocks well under v7x VMEM
    )(xe2, w2, b2, wfc, bfc)


# ---------------------------------------------------------------------------
# One-time parameter preparation (weight permutations hoisted out of forward)
# ---------------------------------------------------------------------------
def prepare_params(params):
    w1 = params["w1"].reshape(72)                                    # co*9+kh*3+kw
    b1 = params["b1"]                                                # (8,)
    w2 = jnp.transpose(params["w2"], (2, 3, 1, 0)).reshape(72, 16)   # (kh,kw,cin)xco
    b2 = params["b2"].reshape(1, 16)
    wfc = params["wfc"].reshape(10, 16, 7, 7).transpose(0, 2, 3, 1)  # (o, h, w, c)
    wfc = jnp.pad(wfc, ((0, 0), (0, 0), (0, 1), (0, 0)))             # pad w: 7 -> 8
    wfc = wfc.reshape(10, 56, 16)                                    # s = h*8 + w
    bfc = params["bfc"].reshape(1, 10)
    return {"w1": w1, "b1": b1, "w2": w2, "b2": b2, "wfc": wfc, "bfc": bfc}


# ---------------------------------------------------------------------------
# Forward pass (wrapper glue = padding / parity split only, ~1x data)
# ---------------------------------------------------------------------------
@jax.jit
def cnn_forward(x_nchw, prepared):
    n = x_nchw.shape[0]
    block_b = min(8, n)
    npad = -(-n // block_b) * block_b

    x3 = x_nchw.reshape(n, 28, 28).astype(jnp.float32)
    if npad != n:
        x3 = jnp.pad(x3, ((0, npad - n), (0, 0), (0, 0)))

    # Layer-1 prep: zero-pad by 1 and split into the four (row, col) parity
    # sub-images so in-kernel im2col taps are static unit-stride slices.
    xp = jnp.pad(x3, ((0, 0), (1, 1), (1, 1)))                           # (n, 30, 30)
    xe1 = xp.reshape(npad, 15, 2, 15, 2).transpose(0, 2, 4, 1, 3)        # (n, 2, 2, 15, 15)

    y1 = _conv1_pallas(xe1, prepared["w1"], prepared["b1"], block_b)     # (n, 8, 14, 14)

    # Layer-2 prep: same parity split of the padded NHWC conv1 output.
    y1n = jnp.transpose(y1, (0, 2, 3, 1))                                # (n, 14, 14, 8)
    y1p = jnp.pad(y1n, ((0, 0), (1, 1), (1, 3), (0, 0)))                 # (n, 16, 18, 8)
    xe2 = y1p.reshape(npad, 8, 2, 9, 2, 8).transpose(0, 2, 4, 1, 3, 5)   # (n, 2, 2, 8, 9, 8)

    logits = _conv2_fc_pallas(xe2, prepared["w2"], prepared["b2"],
                              prepared["wfc"], prepared["bfc"], block_b)  # (n, 10)
    return logits[:n]


# ---------------------------------------------------------------------------
# Pure-JAX reference matching PyTorch semantics (for verification)
# ---------------------------------------------------------------------------
def torch_like_reference(x_nchw, params):
    def conv2d(x, w, b):
        y = jax.lax.conv_general_dilated(
            x, w, window_strides=(1, 1), padding=((1, 1), (1, 1)),
            dimension_numbers=("NCHW", "OIHW", "NCHW"))
        return y + b.reshape(1, -1, 1, 1)

    def maxpool(x):
        return jax.lax.reduce_window(x, -jnp.inf, jax.lax.max,
                                     (1, 1, 2, 2), (1, 1, 2, 2), "VALID")

    x = jax.nn.relu(conv2d(x_nchw, params["w1"], params["b1"]))
    x = maxpool(x)
    x = jax.nn.relu(conv2d(x, params["w2"], params["b2"]))
    x = maxpool(x)
    x = x.reshape(x.shape[0], -1)
    return x @ params["wfc"].T + params["bfc"]


if __name__ == "__main__":
    key = jax.random.PRNGKey(0)
    ks = jax.random.split(key, 7)
    # Deterministic synthetic parameters (shapes from CNN.__init__).
    params = {
        "w1": jax.random.normal(ks[0], (8, 1, 3, 3), jnp.float32) * 0.3,
        "b1": jax.random.normal(ks[1], (8,), jnp.float32) * 0.1,
        "w2": jax.random.normal(ks[2], (16, 8, 3, 3), jnp.float32) * 0.1,
        "b2": jax.random.normal(ks[3], (16,), jnp.float32) * 0.1,
        "wfc": jax.random.normal(ks[4], (10, 16 * 7 * 7), jnp.float32) * 0.05,
        "bfc": jax.random.normal(ks[5], (10,), jnp.float32) * 0.05,
    }
    x = jax.random.normal(ks[6], (2, 1, 28, 28), jnp.float32)  # NCHW, MNIST-sized

    prepared = prepare_params(params)
    out = jax.block_until_ready(cnn_forward(x, prepared))
    ref = jax.block_until_ready(torch_like_reference(x, params))

    assert out.shape == (2, 10), out.shape
    assert jnp.allclose(out, ref, rtol=1e-3, atol=1e-3), (out, ref)
    print("KERNEL_OK")
</pallas_src>

<mosaic_0001>
module attributes {stable_mosaic.version = 11 : i64} {
  func.func @conv1_relu_pool_kernel(%arg0: i32, %arg1: memref<2x2x2x15x15xf32, #tpu.memory_space<vmem>>, %arg2: memref<72xf32, #tpu.memory_space<smem>>, %arg3: memref<8xf32, #tpu.memory_space<smem>>, %arg4: memref<2x8x14x14xf32, #tpu.memory_space<vmem>>) attributes {dimension_semantics = [#tpu.dimension_semantics<parallel>], iteration_bounds = array<i64: 1>, scalar_prefetch = 0 : i64, scratch_operands = 0 : i64, tpu.core_type = #tpu.core_type<tc>, window_params = [{transform_indices = @transform_0, window_bounds = array<i64: 2, 2, 2, 15, 15>}, {transform_indices = @transform_1, window_bounds = array<i64: 72>}, {transform_indices = @transform_2, window_bounds = array<i64: 8>}, {transform_indices = @transform_3, window_bounds = array<i64: 2, 8, 14, 14>}]} {
    %c0 = arith.constant 0 : index
    %c0_0 = arith.constant 0 : index
    %c0_1 = arith.constant 0 : index
    %c0_2 = arith.constant 0 : index
    %c0_3 = arith.constant 0 : index
    %0 = vector.load %arg1[%c0, %c0_0, %c0_1, %c0_2, %c0_3] : memref<2x2x2x15x15xf32, #tpu.memory_space<vmem>>, vector<2x1x1x15x15xf32>
    %1 = vector.shape_cast %0 : vector<2x1x1x15x15xf32> to vector<2x15x15xf32>
    %c0_4 = arith.constant 0 : index
    %c0_5 = arith.constant 0 : index
    %c1 = arith.constant 1 : index
    %c0_6 = arith.constant 0 : index
    %c0_7 = arith.constant 0 : index
    %2 = vector.load %arg1[%c0_4, %c0_5, %c1, %c0_6, %c0_7] : memref<2x2x2x15x15xf32, #tpu.memory_space<vmem>>, vector<2x1x1x15x15xf32>
    %3 = vector.shape_cast %2 : vector<2x1x1x15x15xf32> to vector<2x15x15xf32>
    %c0_8 = arith.constant 0 : index
    %c1_9 = arith.constant 1 : index
    %c0_10 = arith.constant 0 : index
    %c0_11 = arith.constant 0 : index
    %c0_12 = arith.constant 0 : index
    %4 = vector.load %arg1[%c0_8, %c1_9, %c0_10, %c0_11, %c0_12] : memref<2x2x2x15x15xf32, #tpu.memory_space<vmem>>, vector<2x1x1x15x15xf32>
    %5 = vector.shape_cast %4 : vector<2x1x1x15x15xf32> to vector<2x15x15xf32>
    %c0_13 = arith.constant 0 : index
    %c1_14 = arith.constant 1 : index
    %c1_15 = arith.constant 1 : index
    %c0_16 = arith.constant 0 : index
    %c0_17 = arith.constant 0 : index
    %6 = vector.load %arg1[%c0_13, %c1_14, %c1_15, %c0_16, %c0_17] : memref<2x2x2x15x15xf32, #tpu.memory_space<vmem>>, vector<2x1x1x15x15xf32>
    %7 = vector.shape_cast %6 : vector<2x1x1x15x15xf32> to vector<2x15x15xf32>
    %8 = vector.extract_strided_slice %1 {offsets = [0, 0, 0], sizes = [2, 14, 14], strides = [1, 1, 1]} : vector<2x15x15xf32> to vector<2x14x14xf32>
    %9 = vector.extract_strided_slice %1 {offsets = [0, 0, 1], sizes = [2, 14, 14], strides = [1, 1, 1]} : vector<2x15x15xf32> to vector<2x14x14xf32>
    %10 = vector.extract_strided_slice %1 {offsets = [0, 1, 0], sizes = [2, 14, 14], strides = [1, 1, 1]} : vector<2x15x15xf32> to vector<2x14x14xf32>
    %11 = vector.extract_strided_slice %1 {offsets = [0, 1, 1], sizes = [2, 14, 14], strides = [1, 1, 1]} : vector<2x15x15xf32> to vector<2x14x14xf32>
    %12 = vector.extract_strided_slice %3 {offsets = [0, 0, 0], sizes = [2, 14, 14], strides = [1, 1, 1]} : vector<2x15x15xf32> to vector<2x14x14xf32>
    %13 = vector.extract_strided_slice %3 {offsets = [0, 0, 1], sizes = [2, 14, 14], strides = [1, 1, 1]} : vector<2x15x15xf32> to vector<2x14x14xf32>
    %14 = vector.extract_strided_slice %3 {offsets = [0, 1, 0], sizes = [2, 14, 14], strides = [1, 1, 1]} : vector<2x15x15xf32> to vector<2x14x14xf32>
    %15 = vector.extract_strided_slice %3 {offsets = [0, 1, 1], sizes = [2, 14, 14], strides = [1, 1, 1]} : vector<2x15x15xf32> to vector<2x14x14xf32>
    %16 = vector.extract_strided_slice %5 {offsets = [0, 0, 0], sizes = [2, 14, 14], strides = [1, 1, 1]} : vector<2x15x15xf32> to vector<2x14x14xf32>
    %17 = vector.extract_strided_slice %5 {offsets = [0, 0, 1], sizes = [2, 14, 14], strides = [1, 1, 1]} : vector<2x15x15xf32> to vector<2x14x14xf32>
    %18 = vector.extract_strided_slice %5 {offsets = [0, 1, 0], sizes = [2, 14, 14], strides = [1, 1, 1]} : vector<2x15x15xf32> to vector<2x14x14xf32>
    %19 = vector.extract_strided_slice %5 {offsets = [0, 1, 1], sizes = [2, 14, 14], strides = [1, 1, 1]} : vector<2x15x15xf32> to vector<2x14x14xf32>
    %20 = vector.extract_strided_slice %7 {offsets = [0, 0, 0], sizes = [2, 14, 14], strides = [1, 1, 1]} : vector<2x15x15xf32> to vector<2x14x14xf32>
    %21 = vector.extract_strided_slice %7 {offsets = [0, 0, 1], sizes = [2, 14, 14], strides = [1, 1, 1]} : vector<2x15x15xf32> to vector<2x14x14xf32>
    %22 = vector.extract_strided_slice %7 {offsets = [0, 1, 0], sizes = [2, 14, 14], strides = [1, 1, 1]} : vector<2x15x15xf32> to vector<2x14x14xf32>
    %23 = vector.extract_strided_slice %7 {offsets = [0, 1, 1], sizes = [2, 14, 14], strides = [1, 1, 1]} : vector<2x15x15xf32> to vector<2x14x14xf32>
    %c0_18 = arith.constant 0 : index
    %24 = memref.load %arg2[%c0_18] : memref<72xf32, #tpu.memory_space<smem>>
    %c1_19 = arith.constant 1 : index
    %25 = memref.load %arg2[%c1_19] : memref<72xf32, #tpu.memory_space<smem>>
    %c2 = arith.constant 2 : index
    %26 = memref.load %arg2[%c2] : memref<72xf32, #tpu.memory_space<smem>>
    %c3 = arith.constant 3 : index
    %27 = memref.load %arg2[%c3] : memref<72xf32, #tpu.memory_space<smem>>
    %c4 = arith.constant 4 : index
    %28 = memref.load %arg2[%c4] : memref<72xf32, #tpu.memory_space<smem>>
    %c5 = arith.constant 5 : index
    %29 = memref.load %arg2[%c5] : memref<72xf32, #tpu.memory_space<smem>>
    %c6 = arith.constant 6 : index
    %30 = memref.load %arg2[%c6] : memref<72xf32, #tpu.memory_space<smem>>
    %c7 = arith.constant 7 : index
    %31 = memref.load %arg2[%c7] : memref<72xf32, #tpu.memory_space<smem>>
    %c8 = arith.constant 8 : index
    %32 = memref.load %arg2[%c8] : memref<72xf32, #tpu.memory_space<smem>>
    %c9 = arith.constant 9 : index
    %33 = memref.load %arg2[%c9] : memref<72xf32, #tpu.memory_space<smem>>
    %c10 = arith.constant 10 : index
    %34 = memref.load %arg2[%c10] : memref<72xf32, #tpu.memory_space<smem>>
    %c11 = arith.constant 11 : index
    %35 = memref.load %arg2[%c11] : memref<72xf32, #tpu.memory_space<smem>>
    %c12 = arith.constant 12 : index
    %36 = memref.load %arg2[%c12] : memref<72xf32, #tpu.memory_space<smem>>
    %c13 = arith.constant 13 : index
    %37 = memref.load %arg2[%c13] : memref<72xf32, #tpu.memory_space<smem>>
    %c14 = arith.constant 14 : index
    %38 = memref.load %arg2[%c14] : memref<72xf32, #tpu.memory_space<smem>>
    %c15 = arith.constant 15 : index
    %39 = memref.load %arg2[%c15] : memref<72xf32, #tpu.memory_space<smem>>
    %c16 = arith.constant 16 : index
    %40 = memref.load %arg2[%c16] : memref<72xf32, #tpu.memory_space<smem>>
    %c17 = arith.constant 17 : index
    %41 = memref.load %arg2[%c17] : memref<72xf32, #tpu.memory_space<smem>>
    %c18 = arith.constant 18 : index
    %42 = memref.load %arg2[%c18] : memref<72xf32, #tpu.memory_space<smem>>
    %c19 = arith.constant 19 : index
    %43 = memref.load %arg2[%c19] : memref<72xf32, #tpu.memory_space<smem>>
    %c20 = arith.constant 20 : index
    %44 = memref.load %arg2[%c20] : memref<72xf32, #tpu.memory_space<smem>>
    %c21 = arith.constant 21 : index
    %45 = memref.load %arg2[%c21] : memref<72xf32, #tpu.memory_space<smem>>
    %c22 = arith.constant 22 : index
    %46 = memref.load %arg2[%c22] : memref<72xf32, #tpu.memory_space<smem>>
    %c23 = arith.constant 23 : index
    %47 = memref.load %arg2[%c23] : memref<72xf32, #tpu.memory_space<smem>>
    %c24 = arith.constant 24 : index
    %48 = memref.load %arg2[%c24] : memref<72xf32, #tpu.memory_space<smem>>
    %c25 = arith.constant 25 : index
    %49 = memref.load %arg2[%c25] : memref<72xf32, #tpu.memory_space<smem>>
    %c26 = arith.constant 26 : index
    %50 = memref.load %arg2[%c26] : memref<72xf32, #tpu.memory_space<smem>>
    %c27 = arith.constant 27 : index
    %51 = memref.load %arg2[%c27] : memref<72xf32, #tpu.memory_space<smem>>
    %c28 = arith.constant 28 : index
    %52 = memref.load %arg2[%c28] : memref<72xf32, #tpu.memory_space<smem>>
    %c29 = arith.constant 29 : index
    %53 = memref.load %arg2[%c29] : memref<72xf32, #tpu.memory_space<smem>>
    %c30 = arith.constant 30 : index
    %54 = memref.load %arg2[%c30] : memref<72xf32, #tpu.memory_space<smem>>
    %c31 = arith.constant 31 : index
    %55 = memref.load %arg2[%c31] : memref<72xf32, #tpu.memory_space<smem>>
    %c32 = arith.constant 32 : index
    %56 = memref.load %arg2[%c32] : memref<72xf32, #tpu.memory_space<smem>>
    %c33 = arith.constant 33 : index
    %57 = memref.load %arg2[%c33] : memref<72xf32, #tpu.memory_space<smem>>
    %c34 = arith.constant 34 : index
    %58 = memref.load %arg2[%c34] : memref<72xf32, #tpu.memory_space<smem>>
    %c35 = arith.constant 35 : index
    %59 = memref.load %arg2[%c35] : memref<72xf32, #tpu.memory_space<smem>>
    %c36 = arith.constant 36 : index
    %60 = memref.load %arg2[%c36] : memref<72xf32, #tpu.memory_space<smem>>
    %c37 = arith.constant 37 : index
    %61 = memref.load %arg2[%c37] : memref<72xf32, #tpu.memory_space<smem>>
    %c38 = arith.constant 38 : index
    %62 = memref.load %arg2[%c38] : memref<72xf32, #tpu.memory_space<smem>>
    %c39 = arith.constant 39 : index
    %63 = memref.load %arg2[%c39] : memref<72xf32, #tpu.memory_space<smem>>
    %c40 = arith.constant 40 : index
    %64 = memref.load %arg2[%c40] : memref<72xf32, #tpu.memory_space<smem>>
    %c41 = arith.constant 41 : index
    %65 = memref.load %arg2[%c41] : memref<72xf32, #tpu.memory_space<smem>>
    %c42 = arith.constant 42 : index
    %66 = memref.load %arg2[%c42] : memref<72xf32, #tpu.memory_space<smem>>
    %c43 = arith.constant 43 : index
    %67 = memref.load %arg2[%c43] : memref<72xf32, #tpu.memory_space<smem>>
    %c44 = arith.constant 44 : index
    %68 = memref.load %arg2[%c44] : memref<72xf32, #tpu.memory_space<smem>>
    %c45 = arith.constant 45 : index
    %69 = memref.load %arg2[%c45] : memref<72xf32, #tpu.memory_space<smem>>
    %c46 = arith.constant 46 : index
    %70 = memref.load %arg2[%c46] : memref<72xf32, #tpu.memory_space<smem>>
    %c47 = arith.constant 47 : index
    %71 = memref.load %arg2[%c47] : memref<72xf32, #tpu.memory_space<smem>>
    %c48 = arith.constant 48 : index
    %72 = memref.load %arg2[%c48] : memref<72xf32, #tpu.memory_space<smem>>
    %c49 = arith.constant 49 : index
    %73 = memref.load %arg2[%c49] : memref<72xf32, #tpu.memory_space<smem>>
    %c50 = arith.constant 50 : index
    %74 = memref.load %arg2[%c50] : memref<72xf32, #tpu.memory_space<smem>>
    %c51 = arith.constant 51 : index
    %75 = memref.load %arg2[%c51] : memref<72xf32, #tpu.memory_space<smem>>
    %c52 = arith.constant 52 : index
    %76 = memref.load %arg2[%c52] : memref<72xf32, #tpu.memory_space<smem>>
    %c53 = arith.constant 53 : index
    %77 = memref.load %arg2[%c53] : memref<72xf32, #tpu.memory_space<smem>>
    %c54 = arith.constant 54 : index
    %78 = memref.load %arg2[%c54] : memref<72xf32, #tpu.memory_space<smem>>
    %c55 = arith.constant 55 : index
    %79 = memref.load %arg2[%c55] : memref<72xf32, #tpu.memory_space<smem>>
    %c56 = arith.constant 56 : index
    %80 = memref.load %arg2[%c56] : memref<72xf32, #tpu.memory_space<smem>>
    %c57 = arith.constant 57 : index
    %81 = memref.load %arg2[%c57] : memref<72xf32, #tpu.memory_space<smem>>
    %c58 = arith.constant 58 : index
    %82 = memref.load %arg2[%c58] : memref<72xf32, #tpu.memory_space<smem>>
    %c59 = arith.constant 59 : index
    %83 = memref.load %arg2[%c59] : memref<72xf32, #tpu.memory_space<smem>>
    %c60 = arith.constant 60 : index
    %84 = memref.load %arg2[%c60] : memref<72xf32, #tpu.memory_space<smem>>
    %c61 = arith.constant 61 : index
    %85 = memref.load %arg2[%c61] : memref<72xf32, #tpu.memory_space<smem>>
    %c62 = arith.constant 62 : index
    %86 = memref.load %arg2[%c62] : memref<72xf32, #tpu.memory_space<smem>>
    %c63 = arith.constant 63 : index
    %87 = memref.load %arg2[%c63] : memref<72xf32, #tpu.memory_space<smem>>
    %c64 = arith.constant 64 : index
    %88 = memref.load %arg2[%c64] : memref<72xf32, #tpu.memory_space<smem>>
    %c65 = arith.constant 65 : index
    %89 = memref.load %arg2[%c65] : memref<72xf32, #tpu.memory_space<smem>>
    %c66 = arith.constant 66 : index
    %90 = memref.load %arg2[%c66] : memref<72xf32, #tpu.memory_space<smem>>
    %c67 = arith.constant 67 : index
    %91 = memref.load %arg2[%c67] : memref<72xf32, #tpu.memory_space<smem>>
    %c68 = arith.constant 68 : index
    %92 = memref.load %arg2[%c68] : memref<72xf32, #tpu.memory_space<smem>>
    %c69 = arith.constant 69 : index
    %93 = memref.load %arg2[%c69] : memref<72xf32, #tpu.memory_space<smem>>
    %c70 = arith.constant 70 : index
    %94 = memref.load %arg2[%c70] : memref<72xf32, #tpu.memory_space<smem>>
    %c71 = arith.constant 71 : index
    %95 = memref.load %arg2[%c71] : memref<72xf32, #tpu.memory_space<smem>>
    %c0_20 = arith.constant 0 : index
    %96 = memref.load %arg3[%c0_20] : memref<8xf32, #tpu.memory_space<smem>>
    %c1_21 = arith.constant 1 : index
    %97 = memref.load %arg3[%c1_21] : memref<8xf32, #tpu.memory_space<smem>>
    %c2_22 = arith.constant 2 : index
    %98 = memref.load %arg3[%c2_22] : memref<8xf32, #tpu.memory_space<smem>>
    %c3_23 = arith.constant 3 : index
    %99 = memref.load %arg3[%c3_23] : memref<8xf32, #tpu.memory_space<smem>>
    %c4_24 = arith.constant 4 : index
    %100 = memref.load %arg3[%c4_24] : memref<8xf32, #tpu.memory_space<smem>>
    %c5_25 = arith.constant 5 : index
    %101 = memref.load %arg3[%c5_25] : memref<8xf32, #tpu.memory_space<smem>>
    %c6_26 = arith.constant 6 : index
    %102 = memref.load %arg3[%c6_26] : memref<8xf32, #tpu.memory_space<smem>>
    %c7_27 = arith.constant 7 : index
    %103 = memref.load %arg3[%c7_27] : memref<8xf32, #tpu.memory_space<smem>>
    %104 = vector.broadcast %24 : f32 to vector<2x14x14xf32>
    %105 = arith.mulf %8, %104 : vector<2x14x14xf32>
    %106 = vector.broadcast %25 : f32 to vector<2x14x14xf32>
    %107 = arith.mulf %12, %106 : vector<2x14x14xf32>
    %108 = arith.addf %105, %107 : vector<2x14x14xf32>
    %109 = vector.broadcast %26 : f32 to vector<2x14x14xf32>
    %110 = arith.mulf %9, %109 : vector<2x14x14xf32>
    %111 = arith.addf %108, %110 : vector<2x14x14xf32>
    %112 = vector.broadcast %27 : f32 to vector<2x14x14xf32>
    %113 = arith.mulf %16, %112 : vector<2x14x14xf32>
    %114 = arith.addf %111, %113 : vector<2x14x14xf32>
    %115 = vector.broadcast %28 : f32 to vector<2x14x14xf32>
    %116 = arith.mulf %20, %115 : vector<2x14x14xf32>
    %117 = arith.addf %114, %116 : vector<2x14x14xf32>
    %118 = vector.broadcast %29 : f32 to vector<2x14x14xf32>
    %119 = arith.mulf %17, %118 : vector<2x14x14xf32>
    %120 = arith.addf %117, %119 : vector<2x14x14xf32>
    %121 = vector.broadcast %30 : f32 to vector<2x14x14xf32>
    %122 = arith.mulf %10, %121 : vector<2x14x14xf32>
    %123 = arith.addf %120, %122 : vector<2x14x14xf32>
    %124 = vector.broadcast %31 : f32 to vector<2x14x14xf32>
    %125 = arith.mulf %14, %124 : vector<2x14x14xf32>
    %126 = arith.addf %123, %125 : vector<2x14x14xf32>
    %127 = vector.broadcast %32 : f32 to vector<2x14x14xf32>
    %128 = arith.mulf %11, %127 : vector<2x14x14xf32>
    %129 = arith.addf %126, %128 : vector<2x14x14xf32>
    %130 = vector.broadcast %24 : f32 to vector<2x14x14xf32>
    %131 = arith.mulf %12, %130 : vector<2x14x14xf32>
    %132 = vector.broadcast %25 : f32 to vector<2x14x14xf32>
    %133 = arith.mulf %9, %132 : vector<2x14x14xf32>
    %134 = arith.addf %131, %133 : vector<2x14x14xf32>
    %135 = vector.broadcast %26 : f32 to vector<2x14x14xf32>
    %136 = arith.mulf %13, %135 : vector<2x14x14xf32>
    %137 = arith.addf %134, %136 : vector<2x14x14xf32>
    %138 = vector.broadcast %27 : f32 to vector<2x14x14xf32>
    %139 = arith.mulf %20, %138 : vector<2x14x14xf32>
    %140 = arith.addf %137, %139 : vector<2x14x14xf32>
    %141 = vector.broadcast %28 : f32 to vector<2x14x14xf32>
    %142 = arith.mulf %17, %141 : vector<2x14x14xf32>
    %143 = arith.addf %140, %142 : vector<2x14x14xf32>
    %144 = vector.broadcast %29 : f32 to vector<2x14x14xf32>
    %145 = arith.mulf %21, %144 : vector<2x14x14xf32>
    %146 = arith.addf %143, %145 : vector<2x14x14xf32>
    %147 = vector.broadcast %30 : f32 to vector<2x14x14xf32>
    %148 = arith.mulf %14, %147 : vector<2x14x14xf32>
    %149 = arith.addf %146, %148 : vector<2x14x14xf32>
    %150 = vector.broadcast %31 : f32 to vector<2x14x14xf32>
    %151 = arith.mulf %11, %150 : vector<2x14x14xf32>
    %152 = arith.addf %149, %151 : vector<2x14x14xf32>
    %153 = vector.broadcast %32 : f32 to vector<2x14x14xf32>
    %154 = arith.mulf %15, %153 : vector<2x14x14xf32>
    %155 = arith.addf %152, %154 : vector<2x14x14xf32>
    %156 = vector.broadcast %24 : f32 to vector<2x14x14xf32>
    %157 = arith.mulf %16, %156 : vector<2x14x14xf32>
    %158 = vector.broadcast %25 : f32 to vector<2x14x14xf32>
    %159 = arith.mulf %20, %158 : vector<2x14x14xf32>
    %160 = arith.addf %157, %159 : vector<2x14x14xf32>
    %161 = vector.broadcast %26 : f32 to vector<2x14x14xf32>
    %162 = arith.mulf %17, %161 : vector<2x14x14xf32>
    %163 = arith.addf %160, %162 : vector<2x14x14xf32>
    %164 = vector.broadcast %27 : f32 to vector<2x14x14xf32>
    %165 = arith.mulf %10, %164 : vector<2x14x14xf32>
    %166 = arith.addf %163, %165 : vector<2x14x14xf32>
    %167 = vector.broadcast %28 : f32 to vector<2x14x14xf32>
    %168 = arith.mulf %14, %167 : vector<2x14x14xf32>
    %169 = arith.addf %166, %168 : vector<2x14x14xf32>
    %170 = vector.broadcast %29 : f32 to vector<2x14x14xf32>
    %171 = arith.mulf %11, %170 : vector<2x14x14xf32>
    %172 = arith.addf %169, %171 : vector<2x14x14xf32>
    %173 = vector.broadcast %30 : f32 to vector<2x14x14xf32>
    %174 = arith.mulf %18, %173 : vector<2x14x14xf32>
    %175 = arith.addf %172, %174 : vector<2x14x14xf32>
    %176 = vector.broadcast %31 : f32 to vector<2x14x14xf32>
    %177 = arith.mulf %22, %176 : vector<2x14x14xf32>
    %178 = arith.addf %175, %177 : vector<2x14x14xf32>
    %179 = vector.broadcast %32 : f32 to vector<2x14x14xf32>
    %180 = arith.mulf %19, %179 : vector<2x14x14xf32>
    %181 = arith.addf %178, %180 : vector<2x14x14xf32>
    %182 = vector.broadcast %24 : f32 to vector<2x14x14xf32>
    %183 = arith.mulf %20, %182 : vector<2x14x14xf32>
    %184 = vector.broadcast %25 : f32 to vector<2x14x14xf32>
    %185 = arith.mulf %17, %184 : vector<2x14x14xf32>
    %186 = arith.addf %183, %185 : vector<2x14x14xf32>
    %187 = vector.broadcast %26 : f32 to vector<2x14x14xf32>
    %188 = arith.mulf %21, %187 : vector<2x14x14xf32>
    %189 = arith.addf %186, %188 : vector<2x14x14xf32>
    %190 = vector.broadcast %27 : f32 to vector<2x14x14xf32>
    %191 = arith.mulf %14, %190 : vector<2x14x14xf32>
    %192 = arith.addf %189, %191 : vector<2x14x14xf32>
    %193 = vector.broadcast %28 : f32 to vector<2x14x14xf32>
    %194 = arith.mulf %11, %193 : vector<2x14x14xf32>
    %195 = arith.addf %192, %194 : vector<2x14x14xf32>
    %196 = vector.broadcast %29 : f32 to vector<2x14x14xf32>
    %197 = arith.mulf %15, %196 : vector<2x14x14xf32>
    %198 = arith.addf %195, %197 : vector<2x14x14xf32>
    %199 = vector.broadcast %30 : f32 to vector<2x14x14xf32>
    %200 = arith.mulf %22, %199 : vector<2x14x14xf32>
    %201 = arith.addf %198, %200 : vector<2x14x14xf32>
    %202 = vector.broadcast %31 : f32 to vector<2x14x14xf32>
    %203 = arith.mulf %19, %202 : vector<2x14x14xf32>
    %204 = arith.addf %201, %203 : vector<2x14x14xf32>
    %205 = vector.broadcast %32 : f32 to vector<2x14x14xf32>
    %206 = arith.mulf %23, %205 : vector<2x14x14xf32>
    %207 = arith.addf %204, %206 : vector<2x14x14xf32>
    %208 = arith.maximumf %129, %155 : vector<2x14x14xf32>
    %209 = arith.maximumf %181, %207 : vector<2x14x14xf32>
    %210 = arith.maximumf %208, %209 : vector<2x14x14xf32>
    %211 = vector.broadcast %96 : f32 to vector<2x14x14xf32>
    %212 = arith.addf %210, %211 : vector<2x14x14xf32>
    %cst = arith.constant 0.000000e+00 : f32
    %213 = vector.broadcast %cst : f32 to vector<2x14x14xf32>
    %214 = arith.maximumf %212, %213 : vector<2x14x14xf32>
    %215 = vector.broadcast %33 : f32 to vector<2x14x14xf32>
    %216 = arith.mulf %8, %215 : vector<2x14x14xf32>
    %217 = vector.broadcast %34 : f32 to vector<2x14x14xf32>
    %218 = arith.mulf %12, %217 : vector<2x14x14xf32>
    %219 = arith.addf %216, %218 : vector<2x14x14xf32>
    %220 = vector.broadcast %35 : f32 to vector<2x14x14xf32>
    %221 = arith.mulf %9, %220 : vector<2x14x14xf32>
    %222 = arith.addf %219, %221 : vector<2x14x14xf32>
    %223 = vector.broadcast %36 : f32 to vector<2x14x14xf32>
    %224 = arith.mulf %16, %223 : vector<2x14x14xf32>
    %225 = arith.addf %222, %224 : vector<2x14x14xf32>
    %226 = vector.broadcast %37 : f32 to vector<2x14x14xf32>
    %227 = arith.mulf %20, %226 : vector<2x14x14xf32>
    %228 = arith.addf %225, %227 : vector<2x14x14xf32>
    %229 = vector.broadcast %38 : f32 to vector<2x14x14xf32>
    %230 = arith.mulf %17, %229 : vector<2x14x14xf32>
    %231 = arith.addf %228, %230 : vector<2x14x14xf32>
    %232 = vector.broadcast %39 : f32 to vector<2x14x14xf32>
    %233 = arith.mulf %10, %232 : vector<2x14x14xf32>
    %234 = arith.addf %231, %233 : vector<2x14x14xf32>
    %235 = vector.broadcast %40 : f32 to vector<2x14x14xf32>
    %236 = arith.mulf %14, %235 : vector<2x14x14xf32>
    %237 = arith.addf %234, %236 : vector<2x14x14xf32>
    %238 = vector.broadcast %41 : f32 to vector<2x14x14xf32>
    %239 = arith.mulf %11, %238 : vector<2x14x14xf32>
    %240 = arith.addf %237, %239 : vector<2x14x14xf32>
    %241 = vector.broadcast %33 : f32 to vector<2x14x14xf32>
    %242 = arith.mulf %12, %241 : vector<2x14x14xf32>
    %243 = vector.broadcast %34 : f32 to vector<2x14x14xf32>
    %244 = arith.mulf %9, %243 : vector<2x14x14xf32>
    %245 = arith.addf %242, %244 : vector<2x14x14xf32>
    %246 = vector.broadcast %35 : f32 to vector<2x14x14xf32>
    %247 = arith.mulf %13, %246 : vector<2x14x14xf32>
    %248 = arith.addf %245, %247 : vector<2x14x14xf32>
    %249 = vector.broadcast %36 : f32 to vector<2x14x14xf32>
    %250 = arith.mulf %20, %249 : vector<2x14x14xf32>
    %251 = arith.addf %248, %250 : vector<2x14x14xf32>
    %252 = vector.broadcast %37 : f32 to vector<2x14x14xf32>
    %253 = arith.mulf %17, %252 : vector<2x14x14xf32>
    %254 = arith.addf %251, %253 : vector<2x14x14xf32>
    %255 = vector.broadcast %38 : f32 to vector<2x14x14xf32>
    %256 = arith.mulf %21, %255 : vector<2x14x14xf32>
    %257 = arith.addf %254, %256 : vector<2x14x14xf32>
    %258 = vector.broadcast %39 : f32 to vector<2x14x14xf32>
    %259 = arith.mulf %14, %258 : vector<2x14x14xf32>
    %260 = arith.addf %257, %259 : vector<2x14x14xf32>
    %261 = vector.broadcast %40 : f32 to vector<2x14x14xf32>
    %262 = arith.mulf %11, %261 : vector<2x14x14xf32>
    %263 = arith.addf %260, %262 : vector<2x14x14xf32>
    %264 = vector.broadcast %41 : f32 to vector<2x14x14xf32>
    %265 = arith.mulf %15, %264 : vector<2x14x14xf32>
    %266 = arith.addf %263, %265 : vector<2x14x14xf32>
    %267 = vector.broadcast %33 : f32 to vector<2x14x14xf32>
    %268 = arith.mulf %16, %267 : vector<2x14x14xf32>
    %269 = vector.broadcast %34 : f32 to vector<2x14x14xf32>
    %270 = arith.mulf %20, %269 : vector<2x14x14xf32>
    %271 = arith.addf %268, %270 : vector<2x14x14xf32>
    %272 = vector.broadcast %35 : f32 to vector<2x14x14xf32>
    %273 = arith.mulf %17, %272 : vector<2x14x14xf32>
    %274 = arith.addf %271, %273 : vector<2x14x14xf32>
    %275 = vector.broadcast %36 : f32 to vector<2x14x14xf32>
    %276 = arith.mulf %10, %275 : vector<2x14x14xf32>
    %277 = arith.addf %274, %276 : vector<2x14x14xf32>
    %278 = vector.broadcast %37 : f32 to vector<2x14x14xf32>
    %279 = arith.mulf %14, %278 : vector<2x14x14xf32>
    %280 = arith.addf %277, %279 : vector<2x14x14xf32>
    %281 = vector.broadcast %38 : f32 to vector<2x14x14xf32>
    %282 = arith.mulf %11, %281 : vector<2x14x14xf32>
    %283 = arith.addf %280, %282 : vector<2x14x14xf32>
    %284 = vector.broadcast %39 : f32 to vector<2x14x14xf32>
    %285 = arith.mulf %18, %284 : vector<2x14x14xf32>
    %286 = arith.addf %283, %285 : vector<2x14x14xf32>
    %287 = vector.broadcast %40 : f32 to vector<2x14x14xf32>
    %288 = arith.mulf %22, %287 : vector<2x14x14xf32>
    %289 = arith.addf %286, %288 : vector<2x14x14xf32>
    %290 = vector.broadcast %41 : f32 to vector<2x14x14xf32>
    %291 = arith.mulf %19, %290 : vector<2x14x14xf32>
    %292 = arith.addf %289, %291 : vector<2x14x14xf32>
    %293 = vector.broadcast %33 : f32 to vector<2x14x14xf32>
    %294 = arith.mulf %20, %293 : vector<2x14x14xf32>
    %295 = vector.broadcast %34 : f32 to vector<2x14x14xf32>
    %296 = arith.mulf %17, %295 : vector<2x14x14xf32>
    %297 = arith.addf %294, %296 : vector<2x14x14xf32>
    %298 = vector.broadcast %35 : f32 to vector<2x14x14xf32>
    %299 = arith.mulf %21, %298 : vector<2x14x14xf32>
    %300 = arith.addf %297, %299 : vector<2x14x14xf32>
    %301 = vector.broadcast %36 : f32 to vector<2x14x14xf32>
    %302 = arith.mulf %14, %301 : vector<2x14x14xf32>
    %303 = arith.addf %300, %302 : vector<2x14x14xf32>
    %304 = vector.broadcast %37 : f32 to vector<2x14x14xf32>
    %305 = arith.mulf %11, %304 : vector<2x14x14xf32>
    %306 = arith.addf %303, %305 : vector<2x14x14xf32>
    %307 = vector.broadcast %38 : f32 to vector<2x14x14xf32>
    %308 = arith.mulf %15, %307 : vector<2x14x14xf32>
    %309 = arith.addf %306, %308 : vector<2x14x14xf32>
    %310 = vector.broadcast %39 : f32 to vector<2x14x14xf32>
    %311 = arith.mulf %22, %310 : vector<2x14x14xf32>
    %312 = arith.addf %309, %311 : vector<2x14x14xf32>
    %313 = vector.broadcast %40 : f32 to vector<2x14x14xf32>
    %314 = arith.mulf %19, %313 : vector<2x14x14xf32>
    %315 = arith.addf %312, %314 : vector<2x14x14xf32>
    %316 = vector.broadcast %41 : f32 to vector<2x14x14xf32>
    %317 = arith.mulf %23, %316 : vector<2x14x14xf32>
    %318 = arith.addf %315, %317 : vector<2x14x14xf32>
    %319 = arith.maximumf %240, %266 : vector<2x14x14xf32>
    %320 = arith.maximumf %292, %318 : vector<2x14x14xf32>
    %321 = arith.maximumf %319, %320 : vector<2x14x14xf32>
    %322 = vector.broadcast %97 : f32 to vector<2x14x14xf32>
    %323 = arith.addf %321, %322 : vector<2x14x14xf32>
    %cst_28 = arith.constant 0.000000e+00 : f32
    %324 = vector.broadcast %cst_28 : f32 to vector<2x14x14xf32>
    %325 = arith.maximumf %323, %324 : vector<2x14x14xf32>
    %326 = vector.broadcast %42 : f32 to vector<2x14x14xf32>
    %327 = arith.mulf %8, %326 : vector<2x14x14xf32>
    %328 = vector.broadcast %43 : f32 to vector<2x14x14xf32>
    %329 = arith.mulf %12, %328 : vector<2x14x14xf32>
    %330 = arith.addf %327, %329 : vector<2x14x14xf32>
    %331 = vector.broadcast %44 : f32 to vector<2x14x14xf32>
    %332 = arith.mulf %9, %331 : vector<2x14x14xf32>
    %333 = arith.addf %330, %332 : vector<2x14x14xf32>
    %334 = vector.broadcast %45 : f32 to vector<2x14x14xf32>
    %335 = arith.mulf %16, %334 : vector<2x14x14xf32>
    %336 = arith.addf %333, %335 : vector<2x14x14xf32>
    %337 = vector.broadcast %46 : f32 to vector<2x14x14xf32>
    %338 = arith.mulf %20, %337 : vector<2x14x14xf32>
    %339 = arith.addf %336, %338 : vector<2x14x14xf32>
    %340 = vector.broadcast %47 : f32 to vector<2x14x14xf32>
    %341 = arith.mulf %17, %340 : vector<2x14x14xf32>
    %342 = arith.addf %339, %341 : vector<2x14x14xf32>
    %343 = vector.broadcast %48 : f32 to vector<2x14x14xf32>
    %344 = arith.mulf %10, %343 : vector<2x14x14xf32>
    %345 = arith.addf %342, %344 : vector<2x14x14xf32>
    %346 = vector.broadcast %49 : f32 to vector<2x14x14xf32>
    %347 = arith.mulf %14, %346 : vector<2x14x14xf32>
    %348 = arith.addf %345, %347 : vector<2x14x14xf32>
    %349 = vector.broadcast %50 : f32 to vector<2x14x14xf32>
    %350 = arith.mulf %11, %349 : vector<2x14x14xf32>
    %351 = arith.addf %348, %350 : vector<2x14x14xf32>
    %352 = vector.broadcast %42 : f32 to vector<2x14x14xf32>
    %353 = arith.mulf %12, %352 : vector<2x14x14xf32>
    %354 = vector.broadcast %43 : f32 to vector<2x14x14xf32>
    %355 = arith.mulf %9, %354 : vector<2x14x14xf32>
    %356 = arith.addf %353, %355 : vector<2x14x14xf32>
    %357 = vector.broadcast %44 : f32 to vector<2x14x14xf32>
    %358 = arith.mulf %13, %357 : vector<2x14x14xf32>
    %359 = arith.addf %356, %358 : vector<2x14x14xf32>
    %360 = vector.broadcast %45 : f32 to vector<2x14x14xf32>
    %361 = arith.mulf %20, %360 : vector<2x14x14xf32>
    %362 = arith.addf %359, %361 : vector<2x14x14xf32>
    %363 = vector.broadcast %46 : f32 to vector<2x14x14xf32>
    %364 = arith.mulf %17, %363 : vector<2x14x14xf32>
    %365 = arith.addf %362, %364 : vector<2x14x14xf32>
    %366 = vector.broadcast %47 : f32 to vector<2x14x14xf32>
    %367 = arith.mulf %21, %366 : vector<2x14x14xf32>
    %368 = arith.addf %365, %367 : vector<2x14x14xf32>
    %369 = vector.broadcast %48 : f32 to vector<2x14x14xf32>
    %370 = arith.mulf %14, %369 : vector<2x14x14xf32>
    %371 = arith.addf %368, %370 : vector<2x14x14xf32>
    %372 = vector.broadcast %49 : f32 to vector<2x14x14xf32>
    %373 = arith.mulf %11, %372 : vector<2x14x14xf32>
    %374 = arith.addf %371, %373 : vector<2x14x14xf32>
    %375 = vector.broadcast %50 : f32 to vector<2x14x14xf32>
    %376 = arith.mulf %15, %375 : vector<2x14x14xf32>
    %377 = arith.addf %374, %376 : vector<2x14x14xf32>
    %378 = vector.broadcast %42 : f32 to vector<2x14x14xf32>
    %379 = arith.mulf %16, %378 : vector<2x14x14xf32>
    %380 = vector.broadcast %43 : f32 to vector<2x14x14xf32>
    %381 = arith.mulf %20, %380 : vector<2x14x14xf32>
    %382 = arith.addf %379, %381 : vector<2x14x14xf32>
    %383 = vector.broadcast %44 : f32 to vector<2x14x14xf32>
    %384 = arith.mulf %17, %383 : vector<2x14x14xf32>
    %385 = arith.addf %382, %384 : vector<2x14x14xf32>
    %386 = vector.broadcast %45 : f32 to vector<2x14x14xf32>
    %387 = arith.mulf %10, %386 : vector<2x14x14xf32>
    %388 = arith.addf %385, %387 : vector<2x14x14xf32>
    %389 = vector.broadcast %46 : f32 to vector<2x14x14xf32>
    %390 = arith.mulf %14, %389 : vector<2x14x14xf32>
    %391 = arith.addf %388, %390 : vector<2x14x14xf32>
    %392 = vector.broadcast %47 : f32 to vector<2x14x14xf32>
    %393 = arith.mulf %11, %392 : vector<2x14x14xf32>
    %394 = arith.addf %391, %393 : vector<2x14x14xf32>
    %395 = vector.broadcast %48 : f32 to vector<2x14x14xf32>
    %396 = arith.mulf %18, %395 : vector<2x14x14xf32>
    %397 = arith.addf %394, %396 : vector<2x14x14xf32>
    %398 = vector.broadcast %49 : f32 to vector<2x14x14xf32>
    %399 = arith.mulf %22, %398 : vector<2x14x14xf32>
    %400 = arith.addf %397, %399 : vector<2x14x14xf32>
    %401 = vector.broadcast %50 : f32 to vector<2x14x14xf32>
    %402 = arith.mulf %19, %401 : vector<2x14x14xf32>
    %403 = arith.addf %400, %402 : vector<2x14x14xf32>
    %404 = vector.broadcast %42 : f32 to vector<2x14x14xf32>
    %405 = arith.mulf %20, %404 : vector<2x14x14xf32>
    %406 = vector.broadcast %43 : f32 to vector<2x14x14xf32>
    %407 = arith.mulf %17, %406 : vector<2x14x14xf32>
    %408 = arith.addf %405, %407 : vector<2x14x14xf32>
    %409 = vector.broadcast %44 : f32 to vector<2x14x14xf32>
    %410 = arith.mulf %21, %409 : vector<2x14x14xf32>
    %411 = arith.addf %408, %410 : vector<2x14x14xf32>
    %412 = vector.broadcast %45 : f32 to vector<2x14x14xf32>
    %413 = arith.mulf %14, %412 : vector<2x14x14xf32>
    %414 = arith.addf %411, %413 : vector<2x14x14xf32>
    %415 = vector.broadcast %46 : f32 to vector<2x14x14xf32>
    %416 = arith.mulf %11, %415 : vector<2x14x14xf32>
    %417 = arith.addf %414, %416 : vector<2x14x14xf32>
    %418 = vector.broadcast %47 : f32 to vector<2x14x14xf32>
    %419 = arith.mulf %15, %418 : vector<2x14x14xf32>
    %420 = arith.addf %417, %419 : vector<2x14x14xf32>
    %421 = vector.broadcast %48 : f32 to vector<2x14x14xf32>
    %422 = arith.mulf %22, %421 : vector<2x14x14xf32>
    %423 = arith.addf %420, %422 : vector<2x14x14xf32>
    %424 = vector.broadcast %49 : f32 to vector<2x14x14xf32>
    %425 = arith.mulf %19, %424 : vector<2x14x14xf32>
    %426 = arith.addf %423, %425 : vector<2x14x14xf32>
    %427 = vector.broadcast %50 : f32 to vector<2x14x14xf32>
    %428 = arith.mulf %23, %427 : vector<2x14x14xf32>
    %429 = arith.addf %426, %428 : vector<2x14x14xf32>
    %430 = arith.maximumf %351, %377 : vector<2x14x14xf32>
    %431 = arith.maximumf %403, %429 : vector<2x14x14xf32>
    %432 = arith.maximumf %430, %431 : vector<2x14x14xf32>
    %433 = vector.broadcast %98 : f32 to vector<2x14x14xf32>
    %434 = arith.addf %432, %433 : vector<2x14x14xf32>
    %cst_29 = arith.constant 0.000000e+00 : f32
    %435 = vector.broadcast %cst_29 : f32 to vector<2x14x14xf32>
    %436 = arith.maximumf %434, %435 : vector<2x14x14xf32>
    %437 = vector.broadcast %51 : f32 to vector<2x14x14xf32>
    %438 = arith.mulf %8, %437 : vector<2x14x14xf32>
    %439 = vector.broadcast %52 : f32 to vector<2x14x14xf32>
    %440 = arith.mulf %12, %439 : vector<2x14x14xf32>
    %441 = arith.addf %438, %440 : vector<2x14x14xf32>
    %442 = vector.broadcast %53 : f32 to vector<2x14x14xf32>
    %443 = arith.mulf %9, %442 : vector<2x14x14xf32>
    %444 = arith.addf %441, %443 : vector<2x14x14xf32>
    %445 = vector.broadcast %54 : f32 to vector<2x14x14xf32>
    %446 = arith.mulf %16, %445 : vector<2x14x14xf32>
    %447 = arith.addf %444, %446 : vector<2x14x14xf32>
    %448 = vector.broadcast %55 : f32 to vector<2x14x14xf32>
    %449 = arith.mulf %20, %448 : vector<2x14x14xf32>
    %450 = arith.addf %447, %449 : vector<2x14x14xf32>
    %451 = vector.broadcast %56 : f32 to vector<2x14x14xf32>
    %452 = arith.mulf %17, %451 : vector<2x14x14xf32>
    %453 = arith.addf %450, %452 : vector<2x14x14xf32>
    %454 = vector.broadcast %57 : f32 to vector<2x14x14xf32>
    %455 = arith.mulf %10, %454 : vector<2x14x14xf32>
    %456 = arith.addf %453, %455 : vector<2x14x14xf32>
    %457 = vector.broadcast %58 : f32 to vector<2x14x14xf32>
    %458 = arith.mulf %14, %457 : vector<2x14x14xf32>
    %459 = arith.addf %456, %458 : vector<2x14x14xf32>
    %460 = vector.broadcast %59 : f32 to vector<2x14x14xf32>
    %461 = arith.mulf %11, %460 : vector<2x14x14xf32>
    %462 = arith.addf %459, %461 : vector<2x14x14xf32>
    %463 = vector.broadcast %51 : f32 to vector<2x14x14xf32>
    %464 = arith.mulf %12, %463 : vector<2x14x14xf32>
    %465 = vector.broadcast %52 : f32 to vector<2x14x14xf32>
    %466 = arith.mulf %9, %465 : vector<2x14x14xf32>
    %467 = arith.addf %464, %466 : vector<2x14x14xf32>
    %468 = vector.broadcast %53 : f32 to vector<2x14x14xf32>
    %469 = arith.mulf %13, %468 : vector<2x14x14xf32>
    %470 = arith.addf %467, %469 : vector<2x14x14xf32>
    %471 = vector.broadcast %54 : f32 to vector<2x14x14xf32>
    %472 = arith.mulf %20, %471 : vector<2x14x14xf32>
    %473 = arith.addf %470, %472 : vector<2x14x14xf32>
    %474 = vector.broadcast %55 : f32 to vector<2x14x14xf32>
    %475 = arith.mulf %17, %474 : vector<2x14x14xf32>
    %476 = arith.addf %473, %475 : vector<2x14x14xf32>
    %477 = vector.broadcast %56 : f32 to vector<2x14x14xf32>
    %478 = arith.mulf %21, %477 : vector<2x14x14xf32>
    %479 = arith.addf %476, %478 : vector<2x14x14xf32>
    %480 = vector.broadcast %57 : f32 to vector<2x14x14xf32>
    %481 = arith.mulf %14, %480 : vector<2x14x14xf32>
    %482 = arith.addf %479, %481 : vector<2x14x14xf32>
    %483 = vector.broadcast %58 : f32 to vector<2x14x14xf32>
    %484 = arith.mulf %11, %483 : vector<2x14x14xf32>
    %485 = arith.addf %482, %484 : vector<2x14x14xf32>
    %486 = vector.broadcast %59 : f32 to vector<2x14x14xf32>
    %487 = arith.mulf %15, %486 : vector<2x14x14xf32>
    %488 = arith.addf %485, %487 : vector<2x14x14xf32>
    %489 = vector.broadcast %51 : f32 to vector<2x14x14xf32>
    %490 = arith.mulf %16, %489 : vector<2x14x14xf32>
    %491 = vector.broadcast %52 : f32 to vector<2x14x14xf32>
    %492 = arith.mulf %20, %491 : vector<2x14x14xf32>
    %493 = arith.addf %490, %492 : vector<2x14x14xf32>
    %494 = vector.broadcast %53 : f32 to vector<2x14x14xf32>
    %495 = arith.mulf %17, %494 : vector<2x14x14xf32>
    %496 = arith.addf %493, %495 : vector<2x14x14xf32>
    %497 = vector.broadcast %54 : f32 to vector<2x14x14xf32>
    %498 = arith.mulf %10, %497 : vector<2x14x14xf32>
    %499 = arith.addf %496, %498 : vector<2x14x14xf32>
    %500 = vector.broadcast %55 : f32 to vector<2x14x14xf32>
    %501 = arith.mulf %14, %500 : vector<2x14x14xf32>
    %502 = arith.addf %499, %501 : vector<2x14x14xf32>
    %503 = vector.broadcast %56 : f32 to vector<2x14x14xf32>
    %504 = arith.mulf %11, %503 : vector<2x14x14xf32>
    %505 = arith.addf %502, %504 : vector<2x14x14xf32>
    %506 = vector.broadcast %57 : f32 to vector<2x14x14xf32>
    %507 = arith.mulf %18, %506 : vector<2x14x14xf32>
    %508 = arith.addf %505, %507 : vector<2x14x14xf32>
    %509 = vector.broadcast %58 : f32 to vector<2x14x14xf32>
    %510 = arith.mulf %22, %509 : vector<2x14x14xf32>
    %511 = arith.addf %508, %510 : vector<2x14x14xf32>
    %512 = vector.broadcast %59 : f32 to vector<2x14x14xf32>
    %513 = arith.mulf %19, %512 : vector<2x14x14xf32>
    %514 = arith.addf %511, %513 : vector<2x14x14xf32>
    %515 = vector.broadcast %51 : f32 to vector<2x14x14xf32>
    %516 = arith.mulf %20, %515 : vector<2x14x14xf32>
    %517 = vector.broadcast %52 : f32 to vector<2x14x14xf32>
    %518 = arith.mulf %17, %517 : vector<2x14x14xf32>
    %519 = arith.addf %516, %518 : vector<2x14x14xf32>
    %520 = vector.broadcast %53 : f32 to vector<2x14x14xf32>
    %521 = arith.mulf %21, %520 : vector<2x14x14xf32>
    %522 = arith.addf %519, %521 : vector<2x14x14xf32>
    %523 = vector.broadcast %54 : f32 to vector<2x14x14xf32>
    %524 = arith.mulf %14, %523 : vector<2x14x14xf32>
    %525 = arith.addf %522, %524 : vector<2x14x14xf32>
    %526 = vector.broadcast %55 : f32 to vector<2x14x14xf32>
    %527 = arith.mulf %11, %526 : vector<2x14x14xf32>
    %528 = arith.addf %525, %527 : vector<2x14x14xf32>
    %529 = vector.broadcast %56 : f32 to vector<2x14x14xf32>
    %530 = arith.mulf %15, %529 : vector<2x14x14xf32>
    %531 = arith.addf %528, %530 : vector<2x14x14xf32>
    %532 = vector.broadcast %57 : f32 to vector<2x14x14xf32>
    %533 = arith.mulf %22, %532 : vector<2x14x14xf32>
    %534 = arith.addf %531, %533 : vector<2x14x14xf32>
    %535 = vector.broadcast %58 : f32 to vector<2x14x14xf32>
    %536 = arith.mulf %19, %535 : vector<2x14x14xf32>
    %537 = arith.addf %534, %536 : vector<2x14x14xf32>
    %538 = vector.broadcast %59 : f32 to vector<2x14x14xf32>
    %539 = arith.mulf %23, %538 : vector<2x14x14xf32>
    %540 = arith.addf %537, %539 : vector<2x14x14xf32>
    %541 = arith.maximumf %462, %488 : vector<2x14x14xf32>
    %542 = arith.maximumf %514, %540 : vector<2x14x14xf32>
    %543 = arith.maximumf %541, %542 : vector<2x14x14xf32>
    %544 = vector.broadcast %99 : f32 to vector<2x14x14xf32>
    %545 = arith.addf %543, %544 : vector<2x14x14xf32>
    %cst_30 = arith.constant 0.000000e+00 : f32
    %546 = vector.broadcast %cst_30 : f32 to vector<2x14x14xf32>
    %547 = arith.maximumf %545, %546 : vector<2x14x14xf32>
    %548 = vector.broadcast %60 : f32 to vector<2x14x14xf32>
    %549 = arith.mulf %8, %548 : vector<2x14x14xf32>
    %550 = vector.broadcast %61 : f32 to vector<2x14x14xf32>
    %551 = arith.mulf %12, %550 : vector<2x14x14xf32>
    %552 = arith.addf %549, %551 : vector<2x14x14xf32>
    %553 = vector.broadcast %62 : f32 to vector<2x14x14xf32>
    %554 = arith.mulf %9, %553 : vector<2x14x14xf32>
    %555 = arith.addf %552, %554 : vector<2x14x14xf32>
    %556 = vector.broadcast %63 : f32 to vector<2x14x14xf32>
    %557 = arith.mulf %16, %556 : vector<2x14x14xf32>
    %558 = arith.addf %555, %557 : vector<2x14x14xf32>
    %559 = vector.broadcast %64 : f32 to vector<2x14x14xf32>
    %560 = arith.mulf %20, %559 : vector<2x14x14xf32>
    %561 = arith.addf %558, %560 : vector<2x14x14xf32>
    %562 = vector.broadcast %65 : f32 to vector<2x14x14xf32>
    %563 = arith.mulf %17, %562 : vector<2x14x14xf32>
    %564 = arith.addf %561, %563 : vector<2x14x14xf32>
    %565 = vector.broadcast %66 : f32 to vector<2x14x14xf32>
    %566 = arith.mulf %10, %565 : vector<2x14x14xf32>
    %567 = arith.addf %564, %566 : vector<2x14x14xf32>
    %568 = vector.broadcast %67 : f32 to vector<2x14x14xf32>
    %569 = arith.mulf %14, %568 : vector<2x14x14xf32>
    %570 = arith.addf %567, %569 : vector<2x14x14xf32>
    %571 = vector.broadcast %68 : f32 to vector<2x14x14xf32>
    %572 = arith.mulf %11, %571 : vector<2x14x14xf32>
    %573 = arith.addf %570, %572 : vector<2x14x14xf32>
    %574 = vector.broadcast %60 : f32 to vector<2x14x14xf32>
    %575 = arith.mulf %12, %574 : vector<2x14x14xf32>
    %576 = vector.broadcast %61 : f32 to vector<2x14x14xf32>
    %577 = arith.mulf %9, %576 : vector<2x14x14xf32>
    %578 = arith.addf %575, %577 : vector<2x14x14xf32>
    %579 = vector.broadcast %62 : f32 to vector<2x14x14xf32>
    %580 = arith.mulf %13, %579 : vector<2x14x14xf32>
    %581 = arith.addf %578, %580 : vector<2x14x14xf32>
    %582 = vector.broadcast %63 : f32 to vector<2x14x14xf32>
    %583 = arith.mulf %20, %582 : vector<2x14x14xf32>
    %584 = arith.addf %581, %583 : vector<2x14x14xf32>
    %585 = vector.broadcast %64 : f32 to vector<2x14x14xf32>
    %586 = arith.mulf %17, %585 : vector<2x14x14xf32>
    %587 = arith.addf %584, %586 : vector<2x14x14xf32>
    %588 = vector.broadcast %65 : f32 to vector<2x14x14xf32>
    %589 = arith.mulf %21, %588 : vector<2x14x14xf32>
    %590 = arith.addf %587, %589 : vector<2x14x14xf32>
    %591 = vector.broadcast %66 : f32 to vector<2x14x14xf32>
    %592 = arith.mulf %14, %591 : vector<2x14x14xf32>
    %593 = arith.addf %590, %592 : vector<2x14x14xf32>
    %594 = vector.broadcast %67 : f32 to vector<2x14x14xf32>
    %595 = arith.mulf %11, %594 : vector<2x14x14xf32>
    %596 = arith.addf %593, %595 : vector<2x14x14xf32>
    %597 = vector.broadcast %68 : f32 to vector<2x14x14xf32>
    %598 = arith.mulf %15, %597 : vector<2x14x14xf32>
    %599 = arith.addf %596, %598 : vector<2x14x14xf32>
    %600 = vector.broadcast %60 : f32 to vector<2x14x14xf32>
    %601 = arith.mulf %16, %600 : vector<2x14x14xf32>
    %602 = vector.broadcast %61 : f32 to vector<2x14x14xf32>
    %603 = arith.mulf %20, %602 : vector<2x14x14xf32>
    %604 = arith.addf %601, %603 : vector<2x14x14xf32>
    %605 = vector.broadcast %62 : f32 to vector<2x14x14xf32>
    %606 = arith.mulf %17, %605 : vector<2x14x14xf32>
    %607 = arith.addf %604, %606 : vector<2x14x14xf32>
    %608 = vector.broadcast %63 : f32 to vector<2x14x14xf32>
    %609 = arith.mulf %10, %608 : vector<2x14x14xf32>
    %610 = arith.addf %607, %609 : vector<2x14x14xf32>
    %611 = vector.broadcast %64 : f32 to vector<2x14x14xf32>
    %612 = arith.mulf %14, %611 : vector<2x14x14xf32>
    %613 = arith.addf %610, %612 : vector<2x14x14xf32>
    %614 = vector.broadcast %65 : f32 to vector<2x14x14xf32>
    %615 = arith.mulf %11, %614 : vector<2x14x14xf32>
    %616 = arith.addf %613, %615 : vector<2x14x14xf32>
    %617 = vector.broadcast %66 : f32 to vector<2x14x14xf32>
    %618 = arith.mulf %18, %617 : vector<2x14x14xf32>
    %619 = arith.addf %616, %618 : vector<2x14x14xf32>
    %620 = vector.broadcast %67 : f32 to vector<2x14x14xf32>
    %621 = arith.mulf %22, %620 : vector<2x14x14xf32>
    %622 = arith.addf %619, %621 : vector<2x14x14xf32>
    %623 = vector.broadcast %68 : f32 to vector<2x14x14xf32>
    %624 = arith.mulf %19, %623 : vector<2x14x14xf32>
    %625 = arith.addf %622, %624 : vector<2x14x14xf32>
    %626 = vector.broadcast %60 : f32 to vector<2x14x14xf32>
    %627 = arith.mulf %20, %626 : vector<2x14x14xf32>
    %628 = vector.broadcast %61 : f32 to vector<2x14x14xf32>
    %629 = arith.mulf %17, %628 : vector<2x14x14xf32>
    %630 = arith.addf %627, %629 : vector<2x14x14xf32>
    %631 = vector.broadcast %62 : f32 to vector<2x14x14xf32>
    %632 = arith.mulf %21, %631 : vector<2x14x14xf32>
    %633 = arith.addf %630, %632 : vector<2x14x14xf32>
    %634 = vector.broadcast %63 : f32 to vector<2x14x14xf32>
    %635 = arith.mulf %14, %634 : vector<2x14x14xf32>
    %636 = arith.addf %633, %635 : vector<2x14x14xf32>
    %637 = vector.broadcast %64 : f32 to vector<2x14x14xf32>
    %638 = arith.mulf %11, %637 : vector<2x14x14xf32>
    %639 = arith.addf %636, %638 : vector<2x14x14xf32>
    %640 = vector.broadcast %65 : f32 to vector<2x14x14xf32>
    %641 = arith.mulf %15, %640 : vector<2x14x14xf32>
    %642 = arith.addf %639, %641 : vector<2x14x14xf32>
    %643 = vector.broadcast %66 : f32 to vector<2x14x14xf32>
    %644 = arith.mulf %22, %643 : vector<2x14x14xf32>
    %645 = arith.addf %642, %644 : vector<2x14x14xf32>
    %646 = vector.broadcast %67 : f32 to vector<2x14x14xf32>
    %647 = arith.mulf %19, %646 : vector<2x14x14xf32>
    %648 = arith.addf %645, %647 : vector<2x14x14xf32>
    %649 = vector.broadcast %68 : f32 to vector<2x14x14xf32>
    %650 = arith.mulf %23, %649 : vector<2x14x14xf32>
    %651 = arith.addf %648, %650 : vector<2x14x14xf32>
    %652 = arith.maximumf %573, %599 : vector<2x14x14xf32>
    %653 = arith.maximumf %625, %651 : vector<2x14x14xf32>
    %654 = arith.maximumf %652, %653 : vector<2x14x14xf32>
    %655 = vector.broadcast %100 : f32 to vector<2x14x14xf32>
    %656 = arith.addf %654, %655 : vector<2x14x14xf32>
    %cst_31 = arith.constant 0.000000e+00 : f32
    %657 = vector.broadcast %cst_31 : f32 to vector<2x14x14xf32>
    %658 = arith.maximumf %656, %657 : vector<2x14x14xf32>
    %659 = vector.broadcast %69 : f32 to vector<2x14x14xf32>
    %660 = arith.mulf %8, %659 : vector<2x14x14xf32>
    %661 = vector.broadcast %70 : f32 to vector<2x14x14xf32>
    %662 = arith.mulf %12, %661 : vector<2x14x14xf32>
    %663 = arith.addf %660, %662 : vector<2x14x14xf32>
    %664 = vector.broadcast %71 : f32 to vector<2x14x14xf32>
    %665 = arith.mulf %9, %664 : vector<2x14x14xf32>
    %666 = arith.addf %663, %665 : vector<2x14x14xf32>
    %667 = vector.broadcast %72 : f32 to vector<2x14x14xf32>
    %668 = arith.mulf %16, %667 : vector<2x14x14xf32>
    %669 = arith.addf %666, %668 : vector<2x14x14xf32>
    %670 = vector.broadcast %73 : f32 to vector<2x14x14xf32>
    %671 = arith.mulf %20, %670 : vector<2x14x14xf32>
    %672 = arith.addf %669, %671 : vector<2x14x14xf32>
    %673 = vector.broadcast %74 : f32 to vector<2x14x14xf32>
    %674 = arith.mulf %17, %673 : vector<2x14x14xf32>
    %675 = arith.addf %672, %674 : vector<2x14x14xf32>
    %676 = vector.broadcast %75 : f32 to vector<2x14x14xf32>
    %677 = arith.mulf %10, %676 : vector<2x14x14xf32>
    %678 = arith.addf %675, %677 : vector<2x14x14xf32>
    %679 = vector.broadcast %76 : f32 to vector<2x14x14xf32>
    %680 = arith.mulf %14, %679 : vector<2x14x14xf32>
    %681 = arith.addf %678, %680 : vector<2x14x14xf32>
    %682 = vector.broadcast %77 : f32 to vector<2x14x14xf32>
    %683 = arith.mulf %11, %682 : vector<2x14x14xf32>
    %684 = arith.addf %681, %683 : vector<2x14x14xf32>
    %685 = vector.broadcast %69 : f32 to vector<2x14x14xf32>
    %686 = arith.mulf %12, %685 : vector<2x14x14xf32>
    %687 = vector.broadcast %70 : f32 to vector<2x14x14xf32>
    %688 = arith.mulf %9, %687 : vector<2x14x14xf32>
    %689 = arith.addf %686, %688 : vector<2x14x14xf32>
    %690 = vector.broadcast %71 : f32 to vector<2x14x14xf32>
    %691 = arith.mulf %13, %690 : vector<2x14x14xf32>
    %692 = arith.addf %689, %691 : vector<2x14x14xf32>
    %693 = vector.broadcast %72 : f32 to vector<2x14x14xf32>
    %694 = arith.mulf %20, %693 : vector<2x14x14xf32>
    %695 = arith.addf %692, %694 : vector<2x14x14xf32>
    %696 = vector.broadcast %73 : f32 to vector<2x14x14xf32>
    %697 = arith.mulf %17, %696 : vector<2x14x14xf32>
    %698 = arith.addf %695, %697 : vector<2x14x14xf32>
    %699 = vector.broadcast %74 : f32 to vector<2x14x14xf32>
    %700 = arith.mulf %21, %699 : vector<2x14x14xf32>
    %701 = arith.addf %698, %700 : vector<2x14x14xf32>
    %702 = vector.broadcast %75 : f32 to vector<2x14x14xf32>
    %703 = arith.mulf %14, %702 : vector<2x14x14xf32>
    %704 = arith.addf %701, %703 : vector<2x14x14xf32>
    %705 = vector.broadcast %76 : f32 to vector<2x14x14xf32>
    %706 = arith.mulf %11, %705 : vector<2x14x14xf32>
    %707 = arith.addf %704, %706 : vector<2x14x14xf32>
    %708 = vector.broadcast %77 : f32 to vector<2x14x14xf32>
    %709 = arith.mulf %15, %708 : vector<2x14x14xf32>
    %710 = arith.addf %707, %709 : vector<2x14x14xf32>
    %711 = vector.broadcast %69 : f32 to vector<2x14x14xf32>
    %712 = arith.mulf %16, %711 : vector<2x14x14xf32>
    %713 = vector.broadcast %70 : f32 to vector<2x14x14xf32>
    %714 = arith.mulf %20, %713 : vector<2x14x14xf32>
    %715 = arith.addf %712, %714 : vector<2x14x14xf32>
    %716 = vector.broadcast %71 : f32 to vector<2x14x14xf32>
    %717 = arith.mulf %17, %716 : vector<2x14x14xf32>
    %718 = arith.addf %715, %717 : vector<2x14x14xf32>
    %719 = vector.broadcast %72 : f32 to vector<2x14x14xf32>
    %720 = arith.mulf %10, %719 : vector<2x14x14xf32>
    %721 = arith.addf %718, %720 : vector<2x14x14xf32>
    %722 = vector.broadcast %73 : f32 to vector<2x14x14xf32>
    %723 = arith.mulf %14, %722 : vector<2x14x14xf32>
    %724 = arith.addf %721, %723 : vector<2x14x14xf32>
    %725 = vector.broadcast %74 : f32 to vector<2x14x14xf32>
    %726 = arith.mulf %11, %725 : vector<2x14x14xf32>
    %727 = arith.addf %724, %726 : vector<2x14x14xf32>
    %728 = vector.broadcast %75 : f32 to vector<2x14x14xf32>
    %729 = arith.mulf %18, %728 : vector<2x14x14xf32>
    %730 = arith.addf %727, %729 : vector<2x14x14xf32>
    %731 = vector.broadcast %76 : f32 to vector<2x14x14xf32>
    %732 = arith.mulf %22, %731 : vector<2x14x14xf32>
    %733 = arith.addf %730, %732 : vector<2x14x14xf32>
    %734 = vector.broadcast %77 : f32 to vector<2x14x14xf32>
    %735 = arith.mulf %19, %734 : vector<2x14x14xf32>
    %736 = arith.addf %733, %735 : vector<2x14x14xf32>
    %737 = vector.broadcast %69 : f32 to vector<2x14x14xf32>
    %738 = arith.mulf %20, %737 : vector<2x14x14xf32>
    %739 = vector.broadcast %70 : f32 to vector<2x14x14xf32>
    %740 = arith.mulf %17, %739 : vector<2x14x14xf32>
    %741 = arith.addf %738, %740 : vector<2x14x14xf32>
    %742 = vector.broadcast %71 : f32 to vector<2x14x14xf32>
    %743 = arith.mulf %21, %742 : vector<2x14x14xf32>
    %744 = arith.addf %741, %743 : vector<2x14x14xf32>
    %745 = vector.broadcast %72 : f32 to vector<2x14x14xf32>
    %746 = arith.mulf %14, %745 : vector<2x14x14xf32>
    %747 = arith.addf %744, %746 : vector<2x14x14xf32>
    %748 = vector.broadcast %73 : f32 to vector<2x14x14xf32>
    %749 = arith.mulf %11, %748 : vector<2x14x14xf32>
    %750 = arith.addf %747, %749 : vector<2x14x14xf32>
    %751 = vector.broadcast %74 : f32 to vector<2x14x14xf32>
    %752 = arith.mulf %15, %751 : vector<2x14x14xf32>
    %753 = arith.addf %750, %752 : vector<2x14x14xf32>
    %754 = vector.broadcast %75 : f32 to vector<2x14x14xf32>
    %755 = arith.mulf %22, %754 : vector<2x14x14xf32>
    %756 = arith.addf %753, %755 : vector<2x14x14xf32>
    %757 = vector.broadcast %76 : f32 to vector<2x14x14xf32>
    %758 = arith.mulf %19, %757 : vector<2x14x14xf32>
    %759 = arith.addf %756, %758 : vector<2x14x14xf32>
    %760 = vector.broadcast %77 : f32 to vector<2x14x14xf32>
    %761 = arith.mulf %23, %760 : vector<2x14x14xf32>
    %762 = arith.addf %759, %761 : vector<2x14x14xf32>
    %763 = arith.maximumf %684, %710 : vector<2x14x14xf32>
    %764 = arith.maximumf %736, %762 : vector<2x14x14xf32>
    %765 = arith.maximumf %763, %764 : vector<2x14x14xf32>
    %766 = vector.broadcast %101 : f32 to vector<2x14x14xf32>
    %767 = arith.addf %765, %766 : vector<2x14x14xf32>
    %cst_32 = arith.constant 0.000000e+00 : f32
    %768 = vector.broadcast %cst_32 : f32 to vector<2x14x14xf32>
    %769 = arith.maximumf %767, %768 : vector<2x14x14xf32>
    %770 = vector.broadcast %78 : f32 to vector<2x14x14xf32>
    %771 = arith.mulf %8, %770 : vector<2x14x14xf32>
    %772 = vector.broadcast %79 : f32 to vector<2x14x14xf32>
    %773 = arith.mulf %12, %772 : vector<2x14x14xf32>
    %774 = arith.addf %771, %773 : vector<2x14x14xf32>
    %775 = vector.broadcast %80 : f32 to vector<2x14x14xf32>
    %776 = arith.mulf %9, %775 : vector<2x14x14xf32>
    %777 = arith.addf %774, %776 : vector<2x14x14xf32>
    %778 = vector.broadcast %81 : f32 to vector<2x14x14xf32>
    %779 = arith.mulf %16, %778 : vector<2x14x14xf32>
    %780 = arith.addf %777, %779 : vector<2x14x14xf32>
    %781 = vector.broadcast %82 : f32 to vector<2x14x14xf32>
    %782 = arith.mulf %20, %781 : vector<2x14x14xf32>
    %783 = arith.addf %780, %782 : vector<2x14x14xf32>
    %784 = vector.broadcast %83 : f32 to vector<2x14x14xf32>
    %785 = arith.mulf %17, %784 : vector<2x14x14xf32>
    %786 = arith.addf %783, %785 : vector<2x14x14xf32>
    %787 = vector.broadcast %84 : f32 to vector<2x14x14xf32>
    %788 = arith.mulf %10, %787 : vector<2x14x14xf32>
    %789 = arith.addf %786, %788 : vector<2x14x14xf32>
    %790 = vector.broadcast %85 : f32 to vector<2x14x14xf32>
    %791 = arith.mulf %14, %790 : vector<2x14x14xf32>
    %792 = arith.addf %789, %791 : vector<2x14x14xf32>
    %793 = vector.broadcast %86 : f32 to vector<2x14x14xf32>
    %794 = arith.mulf %11, %793 : vector<2x14x14xf32>
    %795 = arith.addf %792, %794 : vector<2x14x14xf32>
    %796 = vector.broadcast %78 : f32 to vector<2x14x14xf32>
    %797 = arith.mulf %12, %796 : vector<2x14x14xf32>
    %798 = vector.broadcast %79 : f32 to vector<2x14x14xf32>
    %799 = arith.mulf %9, %798 : vector<2x14x14xf32>
    %800 = arith.addf %797, %799 : vector<2x14x14xf32>
    %801 = vector.broadcast %80 : f32 to vector<2x14x14xf32>
    %802 = arith.mulf %13, %801 : vector<2x14x14xf32>
    %803 = arith.addf %800, %802 : vector<2x14x14xf32>
    %804 = vector.broadcast %81 : f32 to vector<2x14x14xf32>
    %805 = arith.mulf %20, %804 : vector<2x14x14xf32>
    %806 = arith.addf %803, %805 : vector<2x14x14xf32>
    %807 = vector.broadcast %82 : f32 to vector<2x14x14xf32>
    %808 = arith.mulf %17, %807 : vector<2x14x14xf32>
    %809 = arith.addf %806, %808 : vector<2x14x14xf32>
    %810 = vector.broadcast %83 : f32 to vector<2x14x14xf32>
    %811 = arith.mulf %21, %810 : vector<2x14x14xf32>
    %812 = arith.addf %809, %811 : vector<2x14x14xf32>
    %813 = vector.broadcast %84 : f32 to vector<2x14x14xf32>
    %814 = arith.mulf %14, %813 : vector<2x14x14xf32>
    %815 = arith.addf %812, %814 : vector<2x14x14xf32>
    %816 = vector.broadcast %85 : f32 to vector<2x14x14xf32>
    %817 = arith.mulf %11, %816 : vector<2x14x14xf32>
    %818 = arith.addf %815, %817 : vector<2x14x14xf32>
    %819 = vector.broadcast %86 : f32 to vector<2x14x14xf32>
    %820 = arith.mulf %15, %819 : vector<2x14x14xf32>
    %821 = arith.addf %818, %820 : vector<2x14x14xf32>
    %822 = vector.broadcast %78 : f32 to vector<2x14x14xf32>
    %823 = arith.mulf %16, %822 : vector<2x14x14xf32>
    %824 = vector.broadcast %79 : f32 to vector<2x14x14xf32>
    %825 = arith.mulf %20, %824 : vector<2x14x14xf32>
    %826 = arith.addf %823, %825 : vector<2x14x14xf32>
    %827 = vector.broadcast %80 : f32 to vector<2x14x14xf32>
    %828 = arith.mulf %17, %827 : vector<2x14x14xf32>
    %829 = arith.addf %826, %828 : vector<2x14x14xf32>
    %830 = vector.broadcast %81 : f32 to vector<2x14x14xf32>
    %831 = arith.mulf %10, %830 : vector<2x14x14xf32>
    %832 = arith.addf %829, %831 : vector<2x14x14xf32>
    %833 = vector.broadcast %82 : f32 to vector<2x14x14xf32>
    %834 = arith.mulf %14, %833 : vector<2x14x14xf32>
    %835 = arith.addf %832, %834 : vector<2x14x14xf32>
    %836 = vector.broadcast %83 : f32 to vector<2x14x14xf32>
    %837 = arith.mulf %11, %836 : vector<2x14x14xf32>
    %838 = arith.addf %835, %837 : vector<2x14x14xf32>
    %839 = vector.broadcast %84 : f32 to vector<2x14x14xf32>
    %840 = arith.mulf %18, %839 : vector<2x14x14xf32>
    %841 = arith.addf %838, %840 : vector<2x14x14xf32>
    %842 = vector.broadcast %85 : f32 to vector<2x14x14xf32>
    %843 = arith.mulf %22, %842 : vector<2x14x14xf32>
    %844 = arith.addf %841, %843 : vector<2x14x14xf32>
    %845 = vector.broadcast %86 : f32 to vector<2x14x14xf32>
    %846 = arith.mulf %19, %845 : vector<2x14x14xf32>
    %847 = arith.addf %844, %846 : vector<2x14x14xf32>
    %848 = vector.broadcast %78 : f32 to vector<2x14x14xf32>
    %849 = arith.mulf %20, %848 : vector<2x14x14xf32>
    %850 = vector.broadcast %79 : f32 to vector<2x14x14xf32>
    %851 = arith.mulf %17, %850 : vector<2x14x14xf32>
    %852 = arith.addf %849, %851 : vector<2x14x14xf32>
    %853 = vector.broadcast %80 : f32 to vector<2x14x14xf32>
    %854 = arith.mulf %21, %853 : vector<2x14x14xf32>
    %855 = arith.addf %852, %854 : vector<2x14x14xf32>
    %856 = vector.broadcast %81 : f32 to vector<2x14x14xf32>
    %857 = arith.mulf %14, %856 : vector<2x14x14xf32>
    %858 = arith.addf %855, %857 : vector<2x14x14xf32>
    %859 = vector.broadcast %82 : f32 to vector<2x14x14xf32>
    %860 = arith.mulf %11, %859 : vector<2x14x14xf32>
    %861 = arith.addf %858, %860 : vector<2x14x14xf32>
    %862 = vector.broadcast %83 : f32 to vector<2x14x14xf32>
    %863 = arith.mulf %15, %862 : vector<2x14x14xf32>
    %864 = arith.addf %861, %863 : vector<2x14x14xf32>
    %865 = vector.broadcast %84 : f32 to vector<2x14x14xf32>
    %866 = arith.mulf %22, %865 : vector<2x14x14xf32>
    %867 = arith.addf %864, %866 : vector<2x14x14xf32>
    %868 = vector.broadcast %85 : f32 to vector<2x14x14xf32>
    %869 = arith.mulf %19, %868 : vector<2x14x14xf32>
    %870 = arith.addf %867, %869 : vector<2x14x14xf32>
    %871 = vector.broadcast %86 : f32 to vector<2x14x14xf32>
    %872 = arith.mulf %23, %871 : vector<2x14x14xf32>
    %873 = arith.addf %870, %872 : vector<2x14x14xf32>
    %874 = arith.maximumf %795, %821 : vector<2x14x14xf32>
    %875 = arith.maximumf %847, %873 : vector<2x14x14xf32>
    %876 = arith.maximumf %874, %875 : vector<2x14x14xf32>
    %877 = vector.broadcast %102 : f32 to vector<2x14x14xf32>
    %878 = arith.addf %876, %877 : vector<2x14x14xf32>
    %cst_33 = arith.constant 0.000000e+00 : f32
    %879 = vector.broadcast %cst_33 : f32 to vector<2x14x14xf32>
    %880 = arith.maximumf %878, %879 : vector<2x14x14xf32>
    %881 = vector.broadcast %87 : f32 to vector<2x14x14xf32>
    %882 = arith.mulf %8, %881 : vector<2x14x14xf32>
    %883 = vector.broadcast %88 : f32 to vector<2x14x14xf32>
    %884 = arith.mulf %12, %883 : vector<2x14x14xf32>
    %885 = arith.addf %882, %884 : vector<2x14x14xf32>
    %886 = vector.broadcast %89 : f32 to vector<2x14x14xf32>
    %887 = arith.mulf %9, %886 : vector<2x14x14xf32>
    %888 = arith.addf %885, %887 : vector<2x14x14xf32>
    %889 = vector.broadcast %90 : f32 to vector<2x14x14xf32>
    %890 = arith.mulf %16, %889 : vector<2x14x14xf32>
    %891 = arith.addf %888, %890 : vector<2x14x14xf32>
    %892 = vector.broadcast %91 : f32 to vector<2x14x14xf32>
    %893 = arith.mulf %20, %892 : vector<2x14x14xf32>
    %894 = arith.addf %891, %893 : vector<2x14x14xf32>
    %895 = vector.broadcast %92 : f32 to vector<2x14x14xf32>
    %896 = arith.mulf %17, %895 : vector<2x14x14xf32>
    %897 = arith.addf %894, %896 : vector<2x14x14xf32>
    %898 = vector.broadcast %93 : f32 to vector<2x14x14xf32>
    %899 = arith.mulf %10, %898 : vector<2x14x14xf32>
    %900 = arith.addf %897, %899 : vector<2x14x14xf32>
    %901 = vector.broadcast %94 : f32 to vector<2x14x14xf32>
    %902 = arith.mulf %14, %901 : vector<2x14x14xf32>
    %903 = arith.addf %900, %902 : vector<2x14x14xf32>
    %904 = vector.broadcast %95 : f32 to vector<2x14x14xf32>
    %905 = arith.mulf %11, %904 : vector<2x14x14xf32>
    %906 = arith.addf %903, %905 : vector<2x14x14xf32>
    %907 = vector.broadcast %87 : f32 to vector<2x14x14xf32>
    %908 = arith.mulf %12, %907 : vector<2x14x14xf32>
    %909 = vector.broadcast %88 : f32 to vector<2x14x14xf32>
    %910 = arith.mulf %9, %909 : vector<2x14x14xf32>
    %911 = arith.addf %908, %910 : vector<2x14x14xf32>
    %912 = vector.broadcast %89 : f32 to vector<2x14x14xf32>
    %913 = arith.mulf %13, %912 : vector<2x14x14xf32>
    %914 = arith.addf %911, %913 : vector<2x14x14xf32>
    %915 = vector.broadcast %90 : f32 to vector<2x14x14xf32>
    %916 = arith.mulf %20, %915 : vector<2x14x14xf32>
    %917 = arith.addf %914, %916 : vector<2x14x14xf32>
    %918 = vector.broadcast %91 : f32 to vector<2x14x14xf32>
    %919 = arith.mulf %17, %918 : vector<2x14x14xf32>
    %920 = arith.addf %917, %919 : vector<2x14x14xf32>
    %921 = vector.broadcast %92 : f32 to vector<2x14x14xf32>
    %922 = arith.mulf %21, %921 : vector<2x14x14xf32>
    %923 = arith.addf %920, %922 : vector<2x14x14xf32>
    %924 = vector.broadcast %93 : f32 to vector<2x14x14xf32>
    %925 = arith.mulf %14, %924 : vector<2x14x14xf32>
    %926 = arith.addf %923, %925 : vector<2x14x14xf32>
    %927 = vector.broadcast %94 : f32 to vector<2x14x14xf32>
    %928 = arith.mulf %11, %927 : vector<2x14x14xf32>
    %929 = arith.addf %926, %928 : vector<2x14x14xf32>
    %930 = vector.broadcast %95 : f32 to vector<2x14x14xf32>
    %931 = arith.mulf %15, %930 : vector<2x14x14xf32>
    %932 = arith.addf %929, %931 : vector<2x14x14xf32>
    %933 = vector.broadcast %87 : f32 to vector<2x14x14xf32>
    %934 = arith.mulf %16, %933 : vector<2x14x14xf32>
    %935 = vector.broadcast %88 : f32 to vector<2x14x14xf32>
    %936 = arith.mulf %20, %935 : vector<2x14x14xf32>
    %937 = arith.addf %934, %936 : vector<2x14x14xf32>
    %938 = vector.broadcast %89 : f32 to vector<2x14x14xf32>
    %939 = arith.mulf %17, %938 : vector<2x14x14xf32>
    %940 = arith.addf %937, %939 : vector<2x14x14xf32>
    %941 = vector.broadcast %90 : f32 to vector<2x14x14xf32>
    %942 = arith.mulf %10, %941 : vector<2x14x14xf32>
    %943 = arith.addf %940, %942 : vector<2x14x14xf32>
    %944 = vector.broadcast %91 : f32 to vector<2x14x14xf32>
    %945 = arith.mulf %14, %944 : vector<2x14x14xf32>
    %946 = arith.addf %943, %945 : vector<2x14x14xf32>
    %947 = vector.broadcast %92 : f32 to vector<2x14x14xf32>
    %948 = arith.mulf %11, %947 : vector<2x14x14xf32>
    %949 = arith.addf %946, %948 : vector<2x14x14xf32>
    %950 = vector.broadcast %93 : f32 to vector<2x14x14xf32>
    %951 = arith.mulf %18, %950 : vector<2x14x14xf32>
    %952 = arith.addf %949, %951 : vector<2x14x14xf32>
    %953 = vector.broadcast %94 : f32 to vector<2x14x14xf32>
    %954 = arith.mulf %22, %953 : vector<2x14x14xf32>
    %955 = arith.addf %952, %954 : vector<2x14x14xf32>
    %956 = vector.broadcast %95 : f32 to vector<2x14x14xf32>
    %957 = arith.mulf %19, %956 : vector<2x14x14xf32>
    %958 = arith.addf %955, %957 : vector<2x14x14xf32>
    %959 = vector.broadcast %87 : f32 to vector<2x14x14xf32>
    %960 = arith.mulf %20, %959 : vector<2x14x14xf32>
    %961 = vector.broadcast %88 : f32 to vector<2x14x14xf32>
    %962 = arith.mulf %17, %961 : vector<2x14x14xf32>
    %963 = arith.addf %960, %962 : vector<2x14x14xf32>
    %964 = vector.broadcast %89 : f32 to vector<2x14x14xf32>
    %965 = arith.mulf %21, %964 : vector<2x14x14xf32>
    %966 = arith.addf %963, %965 : vector<2x14x14xf32>
    %967 = vector.broadcast %90 : f32 to vector<2x14x14xf32>
    %968 = arith.mulf %14, %967 : vector<2x14x14xf32>
    %969 = arith.addf %966, %968 : vector<2x14x14xf32>
    %970 = vector.broadcast %91 : f32 to vector<2x14x14xf32>
    %971 = arith.mulf %11, %970 : vector<2x14x14xf32>
    %972 = arith.addf %969, %971 : vector<2x14x14xf32>
    %973 = vector.broadcast %92 : f32 to vector<2x14x14xf32>
    %974 = arith.mulf %15, %973 : vector<2x14x14xf32>
    %975 = arith.addf %972, %974 : vector<2x14x14xf32>
    %976 = vector.broadcast %93 : f32 to vector<2x14x14xf32>
    %977 = arith.mulf %22, %976 : vector<2x14x14xf32>
    %978 = arith.addf %975, %977 : vector<2x14x14xf32>
    %979 = vector.broadcast %94 : f32 to vector<2x14x14xf32>
    %980 = arith.mulf %19, %979 : vector<2x14x14xf32>
    %981 = arith.addf %978, %980 : vector<2x14x14xf32>
    %982 = vector.broadcast %95 : f32 to vector<2x14x14xf32>
    %983 = arith.mulf %23, %982 : vector<2x14x14xf32>
    %984 = arith.addf %981, %983 : vector<2x14x14xf32>
    %985 = arith.maximumf %906, %932 : vector<2x14x14xf32>
    %986 = arith.maximumf %958, %984 : vector<2x14x14xf32>
    %987 = arith.maximumf %985, %986 : vector<2x14x14xf32>
    %988 = vector.broadcast %103 : f32 to vector<2x14x14xf32>
    %989 = arith.addf %987, %988 : vector<2x14x14xf32>
    %cst_34 = arith.constant 0.000000e+00 : f32
    %990 = vector.broadcast %cst_34 : f32 to vector<2x14x14xf32>
    %991 = arith.maximumf %989, %990 : vector<2x14x14xf32>
    %992 = vector.shape_cast %214 : vector<2x14x14xf32> to vector<2x1x14x14xf32>
    %993 = vector.shape_cast %325 : vector<2x14x14xf32> to vector<2x1x14x14xf32>
    %994 = vector.shape_cast %436 : vector<2x14x14xf32> to vector<2x1x14x14xf32>
    %995 = vector.shape_cast %547 : vector<2x14x14xf32> to vector<2x1x14x14xf32>
    %996 = vector.shape_cast %658 : vector<2x14x14xf32> to vector<2x1x14x14xf32>
    %997 = vector.shape_cast %769 : vector<2x14x14xf32> to vector<2x1x14x14xf32>
    %998 = vector.shape_cast %880 : vector<2x14x14xf32> to vector<2x1x14x14xf32>
    %999 = vector.shape_cast %991 : vector<2x14x14xf32> to vector<2x1x14x14xf32>
    %1000 = tpu.concatenate %992, %993, %994, %995, %996, %997, %998, %999 in 1 : vector<2x1x14x14xf32>, vector<2x1x14x14xf32>, vector<2x1x14x14xf32>, vector<2x1x14x14xf32>, vector<2x1x14x14xf32>, vector<2x1x14x14xf32>, vector<2x1x14x14xf32>, vector<2x1x14x14xf32> -> vector<2x8x14x14xf32>
    %c0_35 = arith.constant 0 : index
    %c0_36 = arith.constant 0 : index
    %c0_37 = arith.constant 0 : index
    %c0_38 = arith.constant 0 : index
    %1001 = vector.load %arg4[%c0_35, %c0_36, %c0_37, %c0_38] : memref<2x8x14x14xf32, #tpu.memory_space<vmem>>, vector<2x8x14x14xf32>
    tpu.vector_store %arg4[%c0_35, %c0_36, %c0_37, %c0_38], %1000 {strides = array<i32>} : memref<2x8x14x14xf32, #tpu.memory_space<vmem>>, vector<2x8x14x14xf32>,
    return
  }
  func.func @transform_0(%arg0: i32) -> (i32, i32, i32, i32, i32) {
    %c0_i32 = arith.constant 0 : i32
    %c0_i32_0 = arith.constant 0 : i32
    %c0_i32_1 = arith.constant 0 : i32
    %c0_i32_2 = arith.constant 0 : i32
    %c0_i32_3 = arith.constant 0 : i32
    return %arg0, %c0_i32, %c0_i32_0, %c0_i32_1, %c0_i32_2 : i32, i32, i32, i32, i32
  }
  func.func @transform_1(%arg0: i32) -> i32 {
    %c0_i32 = arith.constant 0 : i32
    %c0_i32_0 = arith.constant 0 : i32
    return %c0_i32 : i32
  }
  func.func @transform_2(%arg0: i32) -> i32 {
    %c0_i32 = arith.constant 0 : i32
    %c0_i32_0 = arith.constant 0 : i32
    return %c0_i32 : i32
  }
  func.func @transform_3(%arg0: i32) -> (i32, i32, i32, i32) {
    %c0_i32 = arith.constant 0 : i32
    %c0_i32_0 = arith.constant 0 : i32
    %c0_i32_1 = arith.constant 0 : i32
    %c0_i32_2 = arith.constant 0 : i32
    return %arg0, %c0_i32, %c0_i32_0, %c0_i32_1 : i32, i32, i32, i32
  }
}

module attributes {stable_mosaic.version = 11 : i64} {
  func.func @conv2_relu_pool_fc_kernel(%arg0: i32, %arg1: memref<2x2x2x8x9x8xf32, #tpu.memory_space<vmem>>, %arg2: memref<72x16xf32, #tpu.memory_space<vmem>>, %arg3: memref<1x16xf32, #tpu.memory_space<vmem>>, %arg4: memref<10x56x16xf32, #tpu.memory_space<vmem>>, %arg5: memref<1x10xf32, #tpu.memory_space<vmem>>, %arg6: memref<2x10xf32, #tpu.memory_space<vmem>>) attributes {dimension_semantics = [#tpu.dimension_semantics<parallel>], iteration_bounds = array<i64: 1>, scalar_prefetch = 0 : i64, scratch_operands = 0 : i64, tpu.core_type = #tpu.core_type<tc>, window_params = [{transform_indices = @transform_0, window_bounds = array<i64: 2, 2, 2, 8, 9, 8>}, {pipeline_mode = #tpu.pipeline_mode<synchronous>, transform_indices = @transform_1, window_bounds = array<i64: 72, 16>}, {pipeline_mode = #tpu.pipeline_mode<synchronous>, transform_indices = @transform_2, window_bounds = array<i64: 1, 16>}, {pipeline_mode = #tpu.pipeline_mode<synchronous>, transform_indices = @transform_3, window_bounds = array<i64: 10, 56, 16>}, {pipeline_mode = #tpu.pipeline_mode<synchronous>, transform_indices = @transform_4, window_bounds = array<i64: 1, 10>}, {transform_indices = @transform_5, window_bounds = array<i64: 2, 10>}]} {
    %c0 = arith.constant 0 : index
    %c0_0 = arith.constant 0 : index
    %c0_1 = arith.constant 0 : index
    %c0_2 = arith.constant 0 : index
    %c0_3 = arith.constant 0 : index
    %c0_4 = arith.constant 0 : index
    %0 = vector.load %arg1[%c0, %c0_0, %c0_1, %c0_2, %c0_3, %c0_4] : memref<2x2x2x8x9x8xf32, #tpu.memory_space<vmem>>, vector<2x1x1x8x9x8xf32>
    %1 = vector.shape_cast %0 : vector<2x1x1x8x9x8xf32> to vector<2x8x9x8xf32>
    %2 = vector.extract_strided_slice %1 {offsets = [0, 0, 0, 0], sizes = [2, 7, 8, 8], strides = [1, 1, 1, 1]} : vector<2x8x9x8xf32> to vector<2x7x8x8xf32>
    %3 = vector.extract_strided_slice %1 {offsets = [0, 0, 1, 0], sizes = [2, 7, 8, 8], strides = [1, 1, 1, 1]} : vector<2x8x9x8xf32> to vector<2x7x8x8xf32>
    %4 = vector.extract_strided_slice %1 {offsets = [0, 1, 0, 0], sizes = [2, 7, 8, 8], strides = [1, 1, 1, 1]} : vector<2x8x9x8xf32> to vector<2x7x8x8xf32>
    %5 = vector.extract_strided_slice %1 {offsets = [0, 1, 1, 0], sizes = [2, 7, 8, 8], strides = [1, 1, 1, 1]} : vector<2x8x9x8xf32> to vector<2x7x8x8xf32>
    %c0_5 = arith.constant 0 : index
    %c0_6 = arith.constant 0 : index
    %c1 = arith.constant 1 : index
    %c0_7 = arith.constant 0 : index
    %c0_8 = arith.constant 0 : index
    %c0_9 = arith.constant 0 : index
    %6 = vector.load %arg1[%c0_5, %c0_6, %c1, %c0_7, %c0_8, %c0_9] : memref<2x2x2x8x9x8xf32, #tpu.memory_space<vmem>>, vector<2x1x1x8x9x8xf32>
    %7 = vector.shape_cast %6 : vector<2x1x1x8x9x8xf32> to vector<2x8x9x8xf32>
    %8 = vector.extract_strided_slice %7 {offsets = [0, 0, 0, 0], sizes = [2, 7, 8, 8], strides = [1, 1, 1, 1]} : vector<2x8x9x8xf32> to vector<2x7x8x8xf32>
    %9 = vector.extract_strided_slice %7 {offsets = [0, 0, 1, 0], sizes = [2, 7, 8, 8], strides = [1, 1, 1, 1]} : vector<2x8x9x8xf32> to vector<2x7x8x8xf32>
    %10 = vector.extract_strided_slice %7 {offsets = [0, 1, 0, 0], sizes = [2, 7, 8, 8], strides = [1, 1, 1, 1]} : vector<2x8x9x8xf32> to vector<2x7x8x8xf32>
    %11 = vector.extract_strided_slice %7 {offsets = [0, 1, 1, 0], sizes = [2, 7, 8, 8], strides = [1, 1, 1, 1]} : vector<2x8x9x8xf32> to vector<2x7x8x8xf32>
    %c0_10 = arith.constant 0 : index
    %c1_11 = arith.constant 1 : index
    %c0_12 = arith.constant 0 : index
    %c0_13 = arith.constant 0 : index
    %c0_14 = arith.constant 0 : index
    %c0_15 = arith.constant 0 : index
    %12 = vector.load %arg1[%c0_10, %c1_11, %c0_12, %c0_13, %c0_14, %c0_15] : memref<2x2x2x8x9x8xf32, #tpu.memory_space<vmem>>, vector<2x1x1x8x9x8xf32>
    %13 = vector.shape_cast %12 : vector<2x1x1x8x9x8xf32> to vector<2x8x9x8xf32>
    %14 = vector.extract_strided_slice %13 {offsets = [0, 0, 0, 0], sizes = [2, 7, 8, 8], strides = [1, 1, 1, 1]} : vector<2x8x9x8xf32> to vector<2x7x8x8xf32>
    %15 = vector.extract_strided_slice %13 {offsets = [0, 0, 1, 0], sizes = [2, 7, 8, 8], strides = [1, 1, 1, 1]} : vector<2x8x9x8xf32> to vector<2x7x8x8xf32>
    %16 = vector.extract_strided_slice %13 {offsets = [0, 1, 0, 0], sizes = [2, 7, 8, 8], strides = [1, 1, 1, 1]} : vector<2x8x9x8xf32> to vector<2x7x8x8xf32>
    %17 = vector.extract_strided_slice %13 {offsets = [0, 1, 1, 0], sizes = [2, 7, 8, 8], strides = [1, 1, 1, 1]} : vector<2x8x9x8xf32> to vector<2x7x8x8xf32>
    %c0_16 = arith.constant 0 : index
    %c1_17 = arith.constant 1 : index
    %c1_18 = arith.constant 1 : index
    %c0_19 = arith.constant 0 : index
    %c0_20 = arith.constant 0 : index
    %c0_21 = arith.constant 0 : index
    %18 = vector.load %arg1[%c0_16, %c1_17, %c1_18, %c0_19, %c0_20, %c0_21] : memref<2x2x2x8x9x8xf32, #tpu.memory_space<vmem>>, vector<2x1x1x8x9x8xf32>
    %19 = vector.shape_cast %18 : vector<2x1x1x8x9x8xf32> to vector<2x8x9x8xf32>
    %20 = vector.extract_strided_slice %19 {offsets = [0, 0, 0, 0], sizes = [2, 7, 8, 8], strides = [1, 1, 1, 1]} : vector<2x8x9x8xf32> to vector<2x7x8x8xf32>
    %21 = vector.extract_strided_slice %19 {offsets = [0, 0, 1, 0], sizes = [2, 7, 8, 8], strides = [1, 1, 1, 1]} : vector<2x8x9x8xf32> to vector<2x7x8x8xf32>
    %22 = vector.extract_strided_slice %19 {offsets = [0, 1, 0, 0], sizes = [2, 7, 8, 8], strides = [1, 1, 1, 1]} : vector<2x8x9x8xf32> to vector<2x7x8x8xf32>
    %23 = vector.extract_strided_slice %19 {offsets = [0, 1, 1, 0], sizes = [2, 7, 8, 8], strides = [1, 1, 1, 1]} : vector<2x8x9x8xf32> to vector<2x7x8x8xf32>
    %24 = tpu.concatenate %2, %8, %3, %14, %20, %15, %4, %10, %5 in 3 : vector<2x7x8x8xf32>, vector<2x7x8x8xf32>, vector<2x7x8x8xf32>, vector<2x7x8x8xf32>, vector<2x7x8x8xf32>, vector<2x7x8x8xf32>, vector<2x7x8x8xf32>, vector<2x7x8x8xf32>, vector<2x7x8x8xf32> -> vector<2x7x8x72xf32>
    %25 = vector.shape_cast %24 : vector<2x7x8x72xf32> to vector<112x72xf32>
    %26 = tpu.concatenate %8, %3, %9, %20, %15, %21, %10, %5, %11 in 3 : vector<2x7x8x8xf32>, vector<2x7x8x8xf32>, vector<2x7x8x8xf32>, vector<2x7x8x8xf32>, vector<2x7x8x8xf32>, vector<2x7x8x8xf32>, vector<2x7x8x8xf32>, vector<2x7x8x8xf32>, vector<2x7x8x8xf32> -> vector<2x7x8x72xf32>
    %27 = vector.shape_cast %26 : vector<2x7x8x72xf32> to vector<112x72xf32>
    %28 = tpu.concatenate %14, %20, %15, %4, %10, %5, %16, %22, %17 in 3 : vector<2x7x8x8xf32>, vector<2x7x8x8xf32>, vector<2x7x8x8xf32>, vector<2x7x8x8xf32>, vector<2x7x8x8xf32>, vector<2x7x8x8xf32>, vector<2x7x8x8xf32>, vector<2x7x8x8xf32>, vector<2x7x8x8xf32> -> vector<2x7x8x72xf32>
    %29 = vector.shape_cast %28 : vector<2x7x8x72xf32> to vector<112x72xf32>
    %30 = tpu.concatenate %20, %15, %21, %10, %5, %11, %22, %17, %23 in 3 : vector<2x7x8x8xf32>, vector<2x7x8x8xf32>, vector<2x7x8x8xf32>, vector<2x7x8x8xf32>, vector<2x7x8x8xf32>, vector<2x7x8x8xf32>, vector<2x7x8x8xf32>, vector<2x7x8x8xf32>, vector<2x7x8x8xf32> -> vector<2x7x8x72xf32>
    %31 = vector.shape_cast %30 : vector<2x7x8x72xf32> to vector<112x72xf32>
    %32 = tpu.concatenate %25, %27, %29, %31 in 0 : vector<112x72xf32>, vector<112x72xf32>, vector<112x72xf32>, vector<112x72xf32> -> vector<448x72xf32>
    %c0_22 = arith.constant 0 : index
    %c0_23 = arith.constant 0 : index
    %33 = vector.load %arg2[%c0_22, %c0_23] : memref<72x16xf32, #tpu.memory_space<vmem>>, vector<72x16xf32>
    %cst = arith.constant dense<0.000000e+00> : vector<448x16xf32>
    %34 = tpu.matmul %32, %33, %cst {dimension_numbers = #tpu.dot_dimension_numbers<[1], [0], [0], [1], [0, 0, 1, 1], [], []>} : vector<448x72xf32>, vector<72x16xf32>, vector<448x16xf32> -> vector<448x16xf32>
    %35 = vector.shape_cast %34 : vector<448x16xf32> to vector<4x112x16xf32>
    %cst_24 = arith.constant dense<0xFF800000> : vector<112x16xf32>
    %36 = vector.multi_reduction <maximumf>, %35, %cst_24 [0] : vector<4x112x16xf32> to vector<112x16xf32>
    %c0_25 = arith.constant 0 : index
    %c0_26 = arith.constant 0 : index
    %37 = vector.load %arg3[%c0_25, %c0_26] : memref<1x16xf32, #tpu.memory_space<vmem>>, vector<1x16xf32>
    %38 = vector.broadcast %37 : vector<1x16xf32> to vector<112x16xf32>
    %39 = arith.addf %36, %38 : vector<112x16xf32>
    %cst_27 = arith.constant 0.000000e+00 : f32
    %40 = vector.broadcast %cst_27 : f32 to vector<112x16xf32>
    %41 = arith.maximumf %39, %40 : vector<112x16xf32>
    %42 = vector.shape_cast %41 : vector<112x16xf32> to vector<2x56x16xf32>
    %43 = vector.shape_cast %42 : vector<2x56x16xf32> to vector<2x1x56x16xf32>
    %c0_28 = arith.constant 0 : index
    %c0_29 = arith.constant 0 : index
    %c0_30 = arith.constant 0 : index
    %44 = vector.load %arg4[%c0_28, %c0_29, %c0_30] : memref<10x56x16xf32, #tpu.memory_space<vmem>>, vector<10x56x16xf32>
    %45 = vector.shape_cast %44 : vector<10x56x16xf32> to vector<1x10x56x16xf32>
    %46 = vector.broadcast %43 : vector<2x1x56x16xf32> to vector<2x10x56x16xf32>
    %47 = vector.broadcast %45 : vector<1x10x56x16xf32> to vector<2x10x56x16xf32>
    %48 = arith.mulf %46, %47 : vector<2x10x56x16xf32>
    %cst_31 = arith.constant dense<0.000000e+00> : vector<2x10x56xf32>
    %49 = vector.multi_reduction <add>, %48, %cst_31 [3] : vector<2x10x56x16xf32> to vector<2x10x56xf32>
    %cst_32 = arith.constant dense<0.000000e+00> : vector<2x10xf32>
    %50 = vector.multi_reduction <add>, %49, %cst_32 [2] : vector<2x10x56xf32> to vector<2x10xf32>
    %c0_33 = arith.constant 0 : index
    %c0_34 = arith.constant 0 : index
    %51 = vector.load %arg5[%c0_33, %c0_34] : memref<1x10xf32, #tpu.memory_space<vmem>>, vector<1x10xf32>
    %52 = vector.broadcast %51 : vector<1x10xf32> to vector<2x10xf32>
    %53 = arith.addf %50, %52 : vector<2x10xf32>
    %c0_35 = arith.constant 0 : index
    %c0_36 = arith.constant 0 : index
    %54 = vector.load %arg6[%c0_35, %c0_36] : memref<2x10xf32, #tpu.memory_space<vmem>>, vector<2x10xf32>
    tpu.vector_store %arg6[%c0_35, %c0_36], %53 {strides = array<i32>} : memref<2x10xf32, #tpu.memory_space<vmem>>, vector<2x10xf32>,
    return
  }
  func.func @transform_0(%arg0: i32) -> (i32, i32, i32, i32, i32, i32) {
    %c0_i32 = arith.constant 0 : i32
    %c0_i32_0 = arith.constant 0 : i32
    %c0_i32_1 = arith.constant 0 : i32
    %c0_i32_2 = arith.constant 0 : i32
    %c0_i32_3 = arith.constant 0 : i32
    %c0_i32_4 = arith.constant 0 : i32
    return %arg0, %c0_i32, %c0_i32_0, %c0_i32_1, %c0_i32_2, %c0_i32_3 : i32, i32, i32, i32, i32, i32
  }
  func.func @transform_1(%arg0: i32) -> (i32, i32) {
    %c0_i32 = arith.constant 0 : i32
    %c0_i32_0 = arith.constant 0 : i32
    %c0_i32_1 = arith.constant 0 : i32
    return %c0_i32, %c0_i32_0 : i32, i32
  }
  func.func @transform_2(%arg0: i32) -> (i32, i32) {
    %c0_i32 = arith.constant 0 : i32
    %c0_i32_0 = arith.constant 0 : i32
    %c0_i32_1 = arith.constant 0 : i32
    return %c0_i32, %c0_i32_0 : i32, i32
  }
  func.func @transform_3(%arg0: i32) -> (i32, i32, i32) {
    %c0_i32 = arith.constant 0 : i32
    %c0_i32_0 = arith.constant 0 : i32
    %c0_i32_1 = arith.constant 0 : i32
    %c0_i32_2 = arith.constant 0 : i32
    return %c0_i32, %c0_i32_0, %c0_i32_1 : i32, i32, i32
  }
  func.func @transform_4(%arg0: i32) -> (i32, i32) {
    %c0_i32 = arith.constant 0 : i32
    %c0_i32_0 = arith.constant 0 : i32
    %c0_i32_1 = arith.constant 0 : i32
    return %c0_i32, %c0_i32_0 : i32, i32
  }
  func.func @transform_5(%arg0: i32) -> (i32, i32) {
    %c0_i32 = arith.constant 0 : i32
    %c0_i32_0 = arith.constant 0 : i32
    return %arg0, %c0_i32 : i32, i32
  }
}

</mosaic_0001>

<llo_original>
// kernel: cnn_forward.3
$region0: #{cnn_forward.3}
  #allocation0 [shape = 'u32[]', space=smem, size = 0x4, offset = 0x4, fixed_abs, tag = 'smem constant byte address 0x4 - core index']
  #allocation1 [shape = 'u32[72,128]{1,0:T(1,128)}', space=vmem, size = 0x9000, scoped, tag = 'internal scratch']
  %s0 = inlined_call_operand.vmem [shape: f32[2,2,2,8,9,8], index: 0, kind: input, shape index: {}]
  %s1 = inlined_call_operand.vmem [shape: f32[72,16], index: 1, kind: input, shape index: {}]
  %s2 = inlined_call_operand.vmem [shape: f32[1,16], index: 2, kind: input, shape index: {}]
  %s3 = inlined_call_operand.vmem [shape: f32[10,56,16], index: 3, kind: input, shape index: {}]
  %s4 = inlined_call_operand.vmem [shape: f32[1,10], index: 4, kind: input, shape index: {}]
  %s5 = inlined_call_operand.hbm [shape: f32[2,10], index: 5, kind: output, shape index: {}]
  %s6 = sld [smem:[#allocation0]]
  $region30: #{cnn_forward.3} parent=0
    _
  %s8 = ssub.s32 1, %s6
  %s9 = scalar_select 0, %s8, %s6
  $region1: #{cnn_forward.3} parent=0
    #allocation2 [shape = 'u8[1024]{0}', space=vmem, size = 0x400, scoped, tag = 'output window, operand 0, single buffered']
    #allocation3 [shape = 's32[1]{0}', space=sflag, size = 0x4, scoped, tag = 'scoped memory for cnn_forward.3']
    %10 = vsyncpa [#allocation3], 0
    // Predicated region
    $region2: #{cnn_forward.3} parent=1 // pred_check
      _
    $region3: #{cnn_forward.3} parent=1 // pred_check_branch
      %12 = sbr.rel (0) target = $region5
    $region4: #{cnn_forward.3} parent=1 // pred_region
      _
    $region5: #{cnn_forward.3} parent=1 // pred_fallthru
      _
    // Predicated region
    $region6: #{cnn_forward.3} parent=1 // pred_check
      _
    $region7: #{cnn_forward.3} parent=1 // pred_check_branch
      %14 = sbr.rel (0) target = $region9
    $region8: #{cnn_forward.3} parent=1 // pred_region
      _
    $region9: #{cnn_forward.3} parent=1 // pred_fallthru
      _
    // Predicated region
    $region10: #{cnn_forward.3} parent=1 // pred_check
      _
    $region11: #{cnn_forward.3} parent=1 // pred_check_branch
      %16 = sbr.rel (0) target = $region13
    $region12: #{cnn_forward.3} parent=1 // pred_region
      _
    $region13: #{cnn_forward.3} parent=1 // pred_fallthru
      _
    // Predicated region
    $region14: #{cnn_forward.3} parent=1 // pred_check
      _
    $region15: #{cnn_forward.3} parent=1 // pred_check_branch
      %18 = sbr.rel (0) target = $region17
    $region16: #{cnn_forward.3} parent=1 // pred_region
      _
    $region17: #{cnn_forward.3} parent=1 // pred_fallthru
      _
    // Predicated region
    $region18: #{cnn_forward.3} parent=1 // pred_check
      _
    $region19: #{cnn_forward.3} parent=1 // pred_check_branch
      %20 = sbr.rel (0) target = $region21
    $region20: #{cnn_forward.3} parent=1 // pred_region
      _
    $region21: #{cnn_forward.3} parent=1 // pred_fallthru
      _
    %v21 = vld [vmem:[%s0] sm:$0xff]
    %v22 = vld [vmem:[%s0 + $0x8] sm:$0x1]
    %v23 = vld [vmem:[%s0 + $0x10] sm:$0xff]
    %v24 = vld [vmem:[%s0 + $0x18] sm:$0x1]
    %v25 = vld [vmem:[%s0 + $0x20] sm:$0xff]
    %v26 = vld [vmem:[%s0 + $0x28] sm:$0x1]
    %v27 = vld [vmem:[%s0 + $0x30] sm:$0xff]
    %v28 = vld [vmem:[%s0 + $0x38] sm:$0x1]
    %v29 = vld [vmem:[%s0 + $0x40] sm:$0xff]
    %v30 = vld [vmem:[%s0 + $0x48] sm:$0x1]
    %v31 = vld [vmem:[%s0 + $0x50] sm:$0xff]
    %v32 = vld [vmem:[%s0 + $0x58] sm:$0x1]
    %v33 = vld [vmem:[%s0 + $0x60] sm:$0xff]
    %v34 = vld [vmem:[%s0 + $0x68] sm:$0x1]
    %v35 = vld [vmem:[%s0 + $0x70] sm:$0xff]
    %v36 = vld [vmem:[%s0 + $0x78] sm:$0x1]
    %v37 = vld [vmem:[%s0 + $0x200] sm:$0xff]
    %v38 = vld [vmem:[%s0 + $0x208] sm:$0x1]
    %v39 = vld [vmem:[%s0 + $0x210] sm:$0xff]
    %v40 = vld [vmem:[%s0 + $0x218] sm:$0x1]
    %v41 = vld [vmem:[%s0 + $0x220] sm:$0xff]
    %v42 = vld [vmem:[%s0 + $0x228] sm:$0x1]
    %v43 = vld [vmem:[%s0 + $0x230] sm:$0xff]
    %v44 = vld [vmem:[%s0 + $0x238] sm:$0x1]
    %v45 = vld [vmem:[%s0 + $0x240] sm:$0xff]
    %v46 = vld [vmem:[%s0 + $0x248] sm:$0x1]
    %v47 = vld [vmem:[%s0 + $0x250] sm:$0xff]
    %v48 = vld [vmem:[%s0 + $0x258] sm:$0x1]
    %v49 = vld [vmem:[%s0 + $0x260] sm:$0xff]
    %v50 = vld [vmem:[%s0 + $0x268] sm:$0x1]
    %v51 = vld [vmem:[%s0 + $0x270] sm:$0xff]
    %v52 = vld [vmem:[%s0 + $0x278] sm:$0x1]
    %s53 = scalar_lea.vmem %s0, 128
    %v54 = vld [vmem:[%s53] sm:$0xff]
    %v55 = vld [vmem:[%s53 + $0x8] sm:$0x1]
    %v56 = vld [vmem:[%s53 + $0x10] sm:$0xff]
    %v57 = vld [vmem:[%s53 + $0x18] sm:$0x1]
    %v58 = vld [vmem:[%s53 + $0x20] sm:$0xff]
    %v59 = vld [vmem:[%s53 + $0x28] sm:$0x1]
    %v60 = vld [vmem:[%s53 + $0x30] sm:$0xff]
    %v61 = vld [vmem:[%s53 + $0x38] sm:$0x1]
    %v62 = vld [vmem:[%s53 + $0x40] sm:$0xff]
    %v63 = vld [vmem:[%s53 + $0x48] sm:$0x1]
    %v64 = vld [vmem:[%s53 + $0x50] sm:$0xff]
    %v65 = vld [vmem:[%s53 + $0x58] sm:$0x1]
    %v66 = vld [vmem:[%s53 + $0x60] sm:$0xff]
    %v67 = vld [vmem:[%s53 + $0x68] sm:$0x1]
    %v68 = vld [vmem:[%s53 + $0x70] sm:$0xff]
    %v69 = vld [vmem:[%s53 + $0x78] sm:$0x1]
    %v70 = vld [vmem:[%s53 + $0x200] sm:$0xff]
    %v71 = vld [vmem:[%s53 + $0x208] sm:$0x1]
    %v72 = vld [vmem:[%s53 + $0x210] sm:$0xff]
    %v73 = vld [vmem:[%s53 + $0x218] sm:$0x1]
    %v74 = vld [vmem:[%s53 + $0x220] sm:$0xff]
    %v75 = vld [vmem:[%s53 + $0x228] sm:$0x1]
    %v76 = vld [vmem:[%s53 + $0x230] sm:$0xff]
    %v77 = vld [vmem:[%s53 + $0x238] sm:$0x1]
    %v78 = vld [vmem:[%s53 + $0x240] sm:$0xff]
    %v79 = vld [vmem:[%s53 + $0x248] sm:$0x1]
    %v80 = vld [vmem:[%s53 + $0x250] sm:$0xff]
    %v81 = vld [vmem:[%s53 + $0x258] sm:$0x1]
    %v82 = vld [vmem:[%s53 + $0x260] sm:$0xff]
    %v83 = vld [vmem:[%s53 + $0x268] sm:$0x1]
    %v84 = vld [vmem:[%s53 + $0x270] sm:$0xff]
    %v85 = vld [vmem:[%s53 + $0x278] sm:$0x1]
    %s86 = scalar_lea.vmem %s0, 256
    %v87 = vld [vmem:[%s86] sm:$0xff]
    %v88 = vld [vmem:[%s86 + $0x8] sm:$0x1]
    %v89 = vld [vmem:[%s86 + $0x10] sm:$0xff]
    %v90 = vld [vmem:[%s86 + $0x18] sm:$0x1]
    %v91 = vld [vmem:[%s86 + $0x20] sm:$0xff]
    %v92 = vld [vmem:[%s86 + $0x28] sm:$0x1]
    %v93 = vld [vmem:[%s86 + $0x30] sm:$0xff]
    %v94 = vld [vmem:[%s86 + $0x38] sm:$0x1]
    %v95 = vld [vmem:[%s86 + $0x40] sm:$0xff]
    %v96 = vld [vmem:[%s86 + $0x48] sm:$0x1]
    %v97 = vld [vmem:[%s86 + $0x50] sm:$0xff]
    %v98 = vld [vmem:[%s86 + $0x58] sm:$0x1]
    %v99 = vld [vmem:[%s86 + $0x60] sm:$0xff]
    %v100 = vld [vmem:[%s86 + $0x68] sm:$0x1]
    %v101 = vld [vmem:[%s86 + $0x70] sm:$0xff]
    %v102 = vld [vmem:[%s86 + $0x78] sm:$0x1]
    %v103 = vld [vmem:[%s86 + $0x200] sm:$0xff]
    %v104 = vld [vmem:[%s86 + $0x208] sm:$0x1]
    %v105 = vld [vmem:[%s86 + $0x210] sm:$0xff]
    %v106 = vld [vmem:[%s86 + $0x218] sm:$0x1]
    %v107 = vld [vmem:[%s86 + $0x220] sm:$0xff]
    %v108 = vld [vmem:[%s86 + $0x228] sm:$0x1]
    %v109 = vld [vmem:[%s86 + $0x230] sm:$0xff]
    %v110 = vld [vmem:[%s86 + $0x238] sm:$0x1]
    %v111 = vld [vmem:[%s86 + $0x240] sm:$0xff]
    %v112 = vld [vmem:[%s86 + $0x248] sm:$0x1]
    %v113 = vld [vmem:[%s86 + $0x250] sm:$0xff]
    %v114 = vld [vmem:[%s86 + $0x258] sm:$0x1]
    %v115 = vld [vmem:[%s86 + $0x260] sm:$0xff]
    %v116 = vld [vmem:[%s86 + $0x268] sm:$0x1]
    %v117 = vld [vmem:[%s86 + $0x270] sm:$0xff]
    %v118 = vld [vmem:[%s86 + $0x278] sm:$0x1]
    %s119 = scalar_lea.vmem %s0, 384
    %v120 = vld [vmem:[%s119] sm:$0xff]
    %v121 = vld [vmem:[%s119 + $0x8] sm:$0x1]
    %v122 = vld [vmem:[%s119 + $0x10] sm:$0xff]
    %v123 = vld [vmem:[%s119 + $0x18] sm:$0x1]
    %v124 = vld [vmem:[%s119 + $0x20] sm:$0xff]
    %v125 = vld [vmem:[%s119 + $0x28] sm:$0x1]
    %v126 = vld [vmem:[%s119 + $0x30] sm:$0xff]
    %v127 = vld [vmem:[%s119 + $0x38] sm:$0x1]
    %v128 = vld [vmem:[%s119 + $0x40] sm:$0xff]
    %v129 = vld [vmem:[%s119 + $0x48] sm:$0x1]
    %v130 = vld [vmem:[%s119 + $0x50] sm:$0xff]
    %v131 = vld [vmem:[%s119 + $0x58] sm:$0x1]
    %v132 = vld [vmem:[%s119 + $0x60] sm:$0xff]
    %v133 = vld [vmem:[%s119 + $0x68] sm:$0x1]
    %v134 = vld [vmem:[%s119 + $0x70] sm:$0xff]
    %v135 = vld [vmem:[%s119 + $0x78] sm:$0x1]
    %v136 = vld [vmem:[%s119 + $0x200] sm:$0xff]
    %v137 = vld [vmem:[%s119 + $0x208] sm:$0x1]
    %v138 = vld [vmem:[%s119 + $0x210] sm:$0xff]
    %v139 = vld [vmem:[%s119 + $0x218] sm:$0x1]
    %v140 = vld [vmem:[%s119 + $0x220] sm:$0xff]
    %v141 = vld [vmem:[%s119 + $0x228] sm:$0x1]
    %v142 = vld [vmem:[%s119 + $0x230] sm:$0xff]
    %v143 = vld [vmem:[%s119 + $0x238] sm:$0x1]
    %v144 = vld [vmem:[%s119 + $0x240] sm:$0xff]
    %v145 = vld [vmem:[%s119 + $0x248] sm:$0x1]
    %v146 = vld [vmem:[%s119 + $0x250] sm:$0xff]
    %v147 = vld [vmem:[%s119 + $0x258] sm:$0x1]
    %v148 = vld [vmem:[%s119 + $0x260] sm:$0xff]
    %v149 = vld [vmem:[%s119 + $0x268] sm:$0x1]
    %v150 = vld [vmem:[%s119 + $0x270] sm:$0xff]
    %v151 = vld [vmem:[%s119 + $0x278] sm:$0x1]
    %166 = vrot.lane.b32.xlu0 %v54, 8
    %v167 = vpop.permute.xlu0 %166
    %168 = vrot.lane.b32.xlu0 %v56, 8
    %v169 = vpop.permute.xlu0 %168
    %170 = vrot.lane.b32.xlu0 %v58, 8
    %v171 = vpop.permute.xlu0 %170
    %172 = vrot.lane.b32.xlu0 %v60, 8
    %v173 = vpop.permute.xlu0 %172
    %174 = vrot.lane.b32.xlu0 %v62, 8
    %v175 = vpop.permute.xlu0 %174
    %176 = vrot.lane.b32.xlu0 %v64, 8
    %v177 = vpop.permute.xlu0 %176
    %178 = vrot.lane.b32.xlu0 %v66, 8
    %v179 = vpop.permute.xlu0 %178
    %180 = vrot.lane.b32.xlu0 %v70, 8
    %v181 = vpop.permute.xlu0 %180
    %182 = vrot.lane.b32.xlu0 %v72, 8
    %v183 = vpop.permute.xlu0 %182
    %184 = vrot.lane.b32.xlu0 %v74, 8
    %v185 = vpop.permute.xlu0 %184
    %186 = vrot.lane.b32.xlu0 %v76, 8
    %v187 = vpop.permute.xlu0 %186
    %188 = vrot.lane.b32.xlu0 %v78, 8
    %v189 = vpop.permute.xlu0 %188
    %190 = vrot.lane.b32.xlu0 %v80, 8
    %v191 = vpop.permute.xlu0 %190
    %192 = vrot.lane.b32.xlu0 %v82, 8
    %v193 = vpop.permute.xlu0 %192
    %vm236 = vcmask 1046528
    %v237 = vrot.slane %v21, 1
    %v238 = vrot.slane %v22, 1
    %v239 = vsel %vm236, %v237, %v238
    %v240 = vrot.slane %v23, 1
    %v241 = vrot.slane %v24, 1
    %v242 = vsel %vm236, %v240, %v241
    %v243 = vrot.slane %v25, 1
    %v244 = vrot.slane %v26, 1
    %v245 = vsel %vm236, %v243, %v244
    %v246 = vrot.slane %v27, 1
    %v247 = vrot.slane %v28, 1
    %v248 = vsel %vm236, %v246, %v247
    %v249 = vrot.slane %v29, 1
    %v250 = vrot.slane %v30, 1
    %v251 = vsel %vm236, %v249, %v250
    %v252 = vrot.slane %v31, 1
    %v253 = vrot.slane %v32, 1
    %v254 = vsel %vm236, %v252, %v253
    %v255 = vrot.slane %v33, 1
    %v256 = vrot.slane %v34, 1
    %v257 = vsel %vm236, %v255, %v256
    %v258 = vrot.slane %v37, 1
    %v259 = vrot.slane %v38, 1
    %v260 = vsel %vm236, %v258, %v259
    %v261 = vrot.slane %v39, 1
    %v262 = vrot.slane %v40, 1
    %v263 = vsel %vm236, %v261, %v262
    %v264 = vrot.slane %v41, 1
    %v265 = vrot.slane %v42, 1
    %v266 = vsel %vm236, %v264, %v265
    %v267 = vrot.slane %v43, 1
    %v268 = vrot.slane %v44, 1
    %v269 = vsel %vm236, %v267, %v268
    %v270 = vrot.slane %v45, 1
    %v271 = vrot.slane %v46, 1
    %v272 = vsel %vm236, %v270, %v271
    %v273 = vrot.slane %v47, 1
    %v274 = vrot.slane %v48, 1
    %v275 = vsel %vm236, %v273, %v274
    %v276 = vrot.slane %v49, 1
    %v277 = vrot.slane %v50, 1
    %v278 = vsel %vm236, %v276, %v277
    %279 = vrot.lane.b32.xlu0 %v239, 16
    %v280 = vpop.permute.xlu0 %279
    %281 = vrot.lane.b32.xlu0 %v242, 16
    %v282 = vpop.permute.xlu0 %281
    %283 = vrot.lane.b32.xlu0 %v245, 16
    %v284 = vpop.permute.xlu0 %283
    %285 = vrot.lane.b32.xlu0 %v248, 16
    %v286 = vpop.permute.xlu0 %285
    %287 = vrot.lane.b32.xlu0 %v251, 16
    %v288 = vpop.permute.xlu0 %287
    %289 = vrot.lane.b32.xlu0 %v254, 16
    %v290 = vpop.permute.xlu0 %289
    %291 = vrot.lane.b32.xlu0 %v257, 16
    %v292 = vpop.permute.xlu0 %291
    %293 = vrot.lane.b32.xlu0 %v260, 16
    %v294 = vpop.permute.xlu0 %293
    %295 = vrot.lane.b32.xlu0 %v263, 16
    %v296 = vpop.permute.xlu0 %295
    %297 = vrot.lane.b32.xlu0 %v266, 16
    %v298 = vpop.permute.xlu0 %297
    %299 = vrot.lane.b32.xlu0 %v269, 16
    %v300 = vpop.permute.xlu0 %299
    %301 = vrot.lane.b32.xlu0 %v272, 16
    %v302 = vpop.permute.xlu0 %301
    %303 = vrot.lane.b32.xlu0 %v275, 16
    %v304 = vpop.permute.xlu0 %303
    %305 = vrot.lane.b32.xlu0 %v278, 16
    %v306 = vpop.permute.xlu0 %305
    %335 = vrot.lane.b32.xlu0 %v87, 24
    %v336 = vpop.permute.xlu0 %335
    %337 = vrot.lane.b32.xlu0 %v89, 24
    %v338 = vpop.permute.xlu0 %337
    %339 = vrot.lane.b32.xlu0 %v91, 24
    %v340 = vpop.permute.xlu0 %339
    %341 = vrot.lane.b32.xlu0 %v93, 24
    %v342 = vpop.permute.xlu0 %341
    %343 = vrot.lane.b32.xlu0 %v95, 24
    %v344 = vpop.permute.xlu0 %343
    %345 = vrot.lane.b32.xlu0 %v97, 24
    %v346 = vpop.permute.xlu0 %345
    %347 = vrot.lane.b32.xlu0 %v99, 24
    %v348 = vpop.permute.xlu0 %347
    %349 = vrot.lane.b32.xlu0 %v103, 24
    %v350 = vpop.permute.xlu0 %349
    %351 = vrot.lane.b32.xlu0 %v105, 24
    %v352 = vpop.permute.xlu0 %351
    %353 = vrot.lane.b32.xlu0 %v107, 24
    %v354 = vpop.permute.xlu0 %353
    %355 = vrot.lane.b32.xlu0 %v109, 24
    %v356 = vpop.permute.xlu0 %355
    %357 = vrot.lane.b32.xlu0 %v111, 24
    %v358 = vpop.permute.xlu0 %357
    %359 = vrot.lane.b32.xlu0 %v113, 24
    %v360 = vpop.permute.xlu0 %359
    %361 = vrot.lane.b32.xlu0 %v115, 24
    %v362 = vpop.permute.xlu0 %361
    %391 = vrot.lane.b32.xlu0 %v120, 32
    %v392 = vpop.permute.xlu0 %391
    %393 = vrot.lane.b32.xlu0 %v122, 32
    %v394 = vpop.permute.xlu0 %393
    %395 = vrot.lane.b32.xlu0 %v124, 32
    %v396 = vpop.permute.xlu0 %395
    %397 = vrot.lane.b32.xlu0 %v126, 32
    %v398 = vpop.permute.xlu0 %397
    %399 = vrot.lane.b32.xlu0 %v128, 32
    %v400 = vpop.permute.xlu0 %399
    %401 = vrot.lane.b32.xlu0 %v130, 32
    %v402 = vpop.permute.xlu0 %401
    %403 = vrot.lane.b32.xlu0 %v132, 32
    %v404 = vpop.permute.xlu0 %403
    %405 = vrot.lane.b32.xlu0 %v136, 32
    %v406 = vpop.permute.xlu0 %405
    %407 = vrot.lane.b32.xlu0 %v138, 32
    %v408 = vpop.permute.xlu0 %407
    %409 = vrot.lane.b32.xlu0 %v140, 32
    %v410 = vpop.permute.xlu0 %409
    %411 = vrot.lane.b32.xlu0 %v142, 32
    %v412 = vpop.permute.xlu0 %411
    %413 = vrot.lane.b32.xlu0 %v144, 32
    %v414 = vpop.permute.xlu0 %413
    %415 = vrot.lane.b32.xlu0 %v146, 32
    %v416 = vpop.permute.xlu0 %415
    %417 = vrot.lane.b32.xlu0 %v148, 32
    %v418 = vpop.permute.xlu0 %417
    %v447 = vrot.slane %v87, 1
    %v448 = vrot.slane %v88, 1
    %v449 = vsel %vm236, %v447, %v448
    %v450 = vrot.slane %v89, 1
    %v451 = vrot.slane %v90, 1
    %v452 = vsel %vm236, %v450, %v451
    %v453 = vrot.slane %v91, 1
    %v454 = vrot.slane %v92, 1
    %v455 = vsel %vm236, %v453, %v454
    %v456 = vrot.slane %v93, 1
    %v457 = vrot.slane %v94, 1
    %v458 = vsel %vm236, %v456, %v457
    %v459 = vrot.slane %v95, 1
    %v460 = vrot.slane %v96, 1
    %v461 = vsel %vm236, %v459, %v460
    %v462 = vrot.slane %v97, 1
    %v463 = vrot.slane %v98, 1
    %v464 = vsel %vm236, %v462, %v463
    %v465 = vrot.slane %v99, 1
    %v466 = vrot.slane %v100, 1
    %v467 = vsel %vm236, %v465, %v466
    %v468 = vrot.slane %v103, 1
    %v469 = vrot.slane %v104, 1
    %v470 = vsel %vm236, %v468, %v469
    %v471 = vrot.slane %v105, 1
    %v472 = vrot.slane %v106, 1
    %v473 = vsel %vm236, %v471, %v472
    %v474 = vrot.slane %v107, 1
    %v475 = vrot.slane %v108, 1
    %v476 = vsel %vm236, %v474, %v475
    %v477 = vrot.slane %v109, 1
    %v478 = vrot.slane %v110, 1
    %v479 = vsel %vm236, %v477, %v478
    %v480 = vrot.slane %v111, 1
    %v481 = vrot.slane %v112, 1
    %v482 = vsel %vm236, %v480, %v481
    %v483 = vrot.slane %v113, 1
    %v484 = vrot.slane %v114, 1
    %v485 = vsel %vm236, %v483, %v484
    %v486 = vrot.slane %v115, 1
    %v487 = vrot.slane %v116, 1
    %v488 = vsel %vm236, %v486, %v487
    %489 = vrot.lane.b32.xlu0 %v449, 40
    %v490 = vpop.permute.xlu0 %489
    %491 = vrot.lane.b32.xlu0 %v452, 40
    %v492 = vpop.permute.xlu0 %491
    %493 = vrot.lane.b32.xlu0 %v455, 40
    %v494 = vpop.permute.xlu0 %493
    %495 = vrot.lane.b32.xlu0 %v458, 40
    %v496 = vpop.permute.xlu0 %495
    %497 = vrot.lane.b32.xlu0 %v461, 40
    %v498 = vpop.permute.xlu0 %497
    %499 = vrot.lane.b32.xlu0 %v464, 40
    %v500 = vpop.permute.xlu0 %499
    %501 = vrot.lane.b32.xlu0 %v467, 40
    %v502 = vpop.permute.xlu0 %501
    %503 = vrot.lane.b32.xlu0 %v470, 40
    %v504 = vpop.permute.xlu0 %503
    %505 = vrot.lane.b32.xlu0 %v473, 40
    %v506 = vpop.permute.xlu0 %505
    %507 = vrot.lane.b32.xlu0 %v476, 40
    %v508 = vpop.permute.xlu0 %507
    %509 = vrot.lane.b32.xlu0 %v479, 40
    %v510 = vpop.permute.xlu0 %509
    %511 = vrot.lane.b32.xlu0 %v482, 40
    %v512 = vpop.permute.xlu0 %511
    %513 = vrot.lane.b32.xlu0 %v485, 40
    %v514 = vpop.permute.xlu0 %513
    %515 = vrot.lane.b32.xlu0 %v488, 40
    %v516 = vpop.permute.xlu0 %515
    %533 = vrot.lane.b32.xlu0 %v23, 48
    %v534 = vpop.permute.xlu0 %533
    %535 = vrot.lane.b32.xlu0 %v25, 48
    %v536 = vpop.permute.xlu0 %535
    %537 = vrot.lane.b32.xlu0 %v27, 48
    %v538 = vpop.permute.xlu0 %537
    %539 = vrot.lane.b32.xlu0 %v29, 48
    %v540 = vpop.permute.xlu0 %539
    %541 = vrot.lane.b32.xlu0 %v31, 48
    %v542 = vpop.permute.xlu0 %541
    %543 = vrot.lane.b32.xlu0 %v33, 48
    %v544 = vpop.permute.xlu0 %543
    %545 = vrot.lane.b32.xlu0 %v35, 48
    %v546 = vpop.permute.xlu0 %545
    %547 = vrot.lane.b32.xlu0 %v39, 48
    %v548 = vpop.permute.xlu0 %547
    %549 = vrot.lane.b32.xlu0 %v41, 48
    %v550 = vpop.permute.xlu0 %549
    %551 = vrot.lane.b32.xlu0 %v43, 48
    %v552 = vpop.permute.xlu0 %551
    %553 = vrot.lane.b32.xlu0 %v45, 48
    %v554 = vpop.permute.xlu0 %553
    %555 = vrot.lane.b32.xlu0 %v47, 48
    %v556 = vpop.permute.xlu0 %555
    %557 = vrot.lane.b32.xlu0 %v49, 48
    %v558 = vpop.permute.xlu0 %557
    %559 = vrot.lane.b32.xlu0 %v51, 48
    %v560 = vpop.permute.xlu0 %559
    %577 = vrot.lane.b32.xlu0 %v56, 56
    %v578 = vpop.permute.xlu0 %577
    %579 = vrot.lane.b32.xlu0 %v58, 56
    %v580 = vpop.permute.xlu0 %579
    %581 = vrot.lane.b32.xlu0 %v60, 56
    %v582 = vpop.permute.xlu0 %581
    %583 = vrot.lane.b32.xlu0 %v62, 56
    %v584 = vpop.permute.xlu0 %583
    %585 = vrot.lane.b32.xlu0 %v64, 56
    %v586 = vpop.permute.xlu0 %585
    %587 = vrot.lane.b32.xlu0 %v66, 56
    %v588 = vpop.permute.xlu0 %587
    %589 = vrot.lane.b32.xlu0 %v68, 56
    %v590 = vpop.permute.xlu0 %589
    %591 = vrot.lane.b32.xlu0 %v72, 56
    %v592 = vpop.permute.xlu0 %591
    %593 = vrot.lane.b32.xlu0 %v74, 56
    %v594 = vpop.permute.xlu0 %593
    %595 = vrot.lane.b32.xlu0 %v76, 56
    %v596 = vpop.permute.xlu0 %595
    %597 = vrot.lane.b32.xlu0 %v78, 56
    %v598 = vpop.permute.xlu0 %597
    %599 = vrot.lane.b32.xlu0 %v80, 56
    %v600 = vpop.permute.xlu0 %599
    %601 = vrot.lane.b32.xlu0 %v82, 56
    %v602 = vpop.permute.xlu0 %601
    %603 = vrot.lane.b32.xlu0 %v84, 56
    %v604 = vpop.permute.xlu0 %603
    %v621 = vrot.slane %v35, 1
    %v622 = vrot.slane %v36, 1
    %v623 = vsel %vm236, %v621, %v622
    %v624 = vrot.slane %v51, 1
    %v625 = vrot.slane %v52, 1
    %v626 = vsel %vm236, %v624, %v625
    %627 = vrot.lane.b32.xlu0 %v242, 64
    %v628 = vpop.permute.xlu0 %627
    %629 = vrot.lane.b32.xlu0 %v245, 64
    %v630 = vpop.permute.xlu0 %629
    %631 = vrot.lane.b32.xlu0 %v248, 64
    %v632 = vpop.permute.xlu0 %631
    %633 = vrot.lane.b32.xlu0 %v251, 64
    %v634 = vpop.permute.xlu0 %633
    %635 = vrot.lane.b32.xlu0 %v254, 64
    %v636 = vpop.permute.xlu0 %635
    %637 = vrot.lane.b32.xlu0 %v257, 64
    %v638 = vpop.permute.xlu0 %637
    %639 = vrot.lane.b32.xlu0 %v623, 64
    %v640 = vpop.permute.xlu0 %639
    %641 = vrot.lane.b32.xlu0 %v263, 64
    %v642 = vpop.permute.xlu0 %641
    %643 = vrot.lane.b32.xlu0 %v266, 64
    %v644 = vpop.permute.xlu0 %643
    %645 = vrot.lane.b32.xlu0 %v269, 64
    %v646 = vpop.permute.xlu0 %645
    %647 = vrot.lane.b32.xlu0 %v272, 64
    %v648 = vpop.permute.xlu0 %647
    %649 = vrot.lane.b32.xlu0 %v275, 64
    %v650 = vpop.permute.xlu0 %649
    %651 = vrot.lane.b32.xlu0 %v278, 64
    %v652 = vpop.permute.xlu0 %651
    %653 = vrot.lane.b32.xlu0 %v626, 64
    %v654 = vpop.permute.xlu0 %653
    %vm669 = vcmask 64512
    %v670 = vsel %vm669, %v21, %v167
    %v671 = vsel %vm669, %v23, %v169
    %v672 = vsel %vm669, %v25, %v171
    %v673 = vsel %vm669, %v27, %v173
    %v674 = vsel %vm669, %v29, %v175
    %v675 = vsel %vm669, %v31, %v177
    %v676 = vsel %vm669, %v33, %v179
    %v677 = vsel %vm669, %v37, %v181
    %v678 = vsel %vm669, %v39, %v183
    %v679 = vsel %vm669, %v41, %v185
    %v680 = vsel %vm669, %v43, %v187
    %v681 = vsel %vm669, %v45, %v189
    %v682 = vsel %vm669, %v47, %v191
    %v683 = vsel %vm669, %v49, %v193
    %vm684 = vcmask 130048
    %v685 = vsel %vm684, %v670, %v280
    %v686 = vsel %vm684, %v671, %v282
    %v687 = vsel %vm684, %v672, %v284
    %v688 = vsel %vm684, %v673, %v286
    %v689 = vsel %vm684, %v674, %v288
    %v690 = vsel %vm684, %v675, %v290
    %v691 = vsel %vm684, %v676, %v292
    %v692 = vsel %vm684, %v677, %v294
    %v693 = vsel %vm684, %v678, %v296
    %v694 = vsel %vm684, %v679, %v298
    %v695 = vsel %vm684, %v680, %v300
    %v696 = vsel %vm684, %v681, %v302
    %v697 = vsel %vm684, %v682, %v304
    %v698 = vsel %vm684, %v683, %v306
    %vm699 = vcmask 195584
    %v700 = vsel %vm699, %v685, %v336
    %v701 = vsel %vm699, %v686, %v338
    %v702 = vsel %vm699, %v687, %v340
    %v703 = vsel %vm699, %v688, %v342
    %v704 = vsel %vm699, %v689, %v344
    %v705 = vsel %vm699, %v690, %v346
    %v706 = vsel %vm699, %v691, %v348
    %v707 = vsel %vm699, %v692, %v350
    %v708 = vsel %vm699, %v693, %v352
    %v709 = vsel %vm699, %v694, %v354
    %v710 = vsel %vm699, %v695, %v356
    %v711 = vsel %vm699, %v696, %v358
    %v712 = vsel %vm699, %v697, %v360
    %v713 = vsel %vm699, %v698, %v362
    %vm714 = vcmask 261120
    %v715 = vsel %vm714, %v700, %v392
    %v716 = vsel %vm714, %v701, %v394
    %v717 = vsel %vm714, %v702, %v396
    %v718 = vsel %vm714, %v703, %v398
    %v719 = vsel %vm714, %v704, %v400
    %v720 = vsel %vm714, %v705, %v402
    %v721 = vsel %vm714, %v706, %v404
    %v722 = vsel %vm714, %v707, %v406
    %v723 = vsel %vm714, %v708, %v408
    %v724 = vsel %vm714, %v709, %v410
    %v725 = vsel %vm714, %v710, %v412
    %v726 = vsel %vm714, %v711, %v414
    %v727 = vsel %vm714, %v712, %v416
    %v728 = vsel %vm714, %v713, %v418
    %vm729 = vcmask 326656
    %v730 = vsel %vm729, %v715, %v490
    %v731 = vsel %vm729, %v716, %v492
    %v732 = vsel %vm729, %v717, %v494
    %v733 = vsel %vm729, %v718, %v496
    %v734 = vsel %vm729, %v719, %v498
    %v735 = vsel %vm729, %v720, %v500
    %v736 = vsel %vm729, %v721, %v502
    %v737 = vsel %vm729, %v722, %v504
    %v738 = vsel %vm729, %v723, %v506
    %v739 = vsel %vm729, %v724, %v508
    %v740 = vsel %vm729, %v725, %v510
    %v741 = vsel %vm729, %v726, %v512
    %v742 = vsel %vm729, %v727, %v514
    %v743 = vsel %vm729, %v728, %v516
    %vm744 = vcmask 392192
    %v745 = vsel %vm744, %v730, %v534
    %v746 = vsel %vm744, %v731, %v536
    %v747 = vsel %vm744, %v732, %v538
    %v748 = vsel %vm744, %v733, %v540
    %v749 = vsel %vm744, %v734, %v542
    %v750 = vsel %vm744, %v735, %v544
    %v751 = vsel %vm744, %v736, %v546
    %v752 = vsel %vm744, %v737, %v548
    %v753 = vsel %vm744, %v738, %v550
    %v754 = vsel %vm744, %v739, %v552
    %v755 = vsel %vm744, %v740, %v554
    %v756 = vsel %vm744, %v741, %v556
    %v757 = vsel %vm744, %v742, %v558
    %v758 = vsel %vm744, %v743, %v560
    %vm759 = vcmask 457728
    %v760 = vsel %vm759, %v745, %v578
    %v761 = vsel %vm759, %v746, %v580
    %v762 = vsel %vm759, %v747, %v582
    %v763 = vsel %vm759, %v748, %v584
    %v764 = vsel %vm759, %v749, %v586
    %v765 = vsel %vm759, %v750, %v588
    %v766 = vsel %vm759, %v751, %v590
    %v767 = vsel %vm759, %v752, %v592
    %v768 = vsel %vm759, %v753, %v594
    %v769 = vsel %vm759, %v754, %v596
    %v770 = vsel %vm759, %v755, %v598
    %v771 = vsel %vm759, %v756, %v600
    %v772 = vsel %vm759, %v757, %v602
    %v773 = vsel %vm759, %v758, %v604
    %vm774 = vcmask 523264
    %v775 = vsel %vm774, %v760, %v628
    %v776 = vsel %vm774, %v761, %v630
    %v777 = vsel %vm774, %v762, %v632
    %v778 = vsel %vm774, %v763, %v634
    %v779 = vsel %vm774, %v764, %v636
    %v780 = vsel %vm774, %v765, %v638
    %v781 = vsel %vm774, %v766, %v640
    %v782 = vsel %vm774, %v767, %v642
    %v783 = vsel %vm774, %v768, %v644
    %v784 = vsel %vm774, %v769, %v646
    %v785 = vsel %vm774, %v770, %v648
    %v786 = vsel %vm774, %v771, %v650
    %v787 = vsel %vm774, %v772, %v652
    %v788 = vsel %vm774, %v773, %v654
    %789 = vrot.lane.b32.xlu0 %v239, 8
    %v790 = vpop.permute.xlu0 %789
    %791 = vrot.lane.b32.xlu0 %v242, 8
    %v792 = vpop.permute.xlu0 %791
    %793 = vrot.lane.b32.xlu0 %v245, 8
    %v794 = vpop.permute.xlu0 %793
    %795 = vrot.lane.b32.xlu0 %v248, 8
    %v796 = vpop.permute.xlu0 %795
    %797 = vrot.lane.b32.xlu0 %v251, 8
    %v798 = vpop.permute.xlu0 %797
    %799 = vrot.lane.b32.xlu0 %v254, 8
    %v800 = vpop.permute.xlu0 %799
    %801 = vrot.lane.b32.xlu0 %v257, 8
    %v802 = vpop.permute.xlu0 %801
    %803 = vrot.lane.b32.xlu0 %v260, 8
    %v804 = vpop.permute.xlu0 %803
    %805 = vrot.lane.b32.xlu0 %v263, 8
    %v806 = vpop.permute.xlu0 %805
    %807 = vrot.lane.b32.xlu0 %v266, 8
    %v808 = vpop.permute.xlu0 %807
    %809 = vrot.lane.b32.xlu0 %v269, 8
    %v810 = vpop.permute.xlu0 %809
    %811 = vrot.lane.b32.xlu0 %v272, 8
    %v812 = vpop.permute.xlu0 %811
    %813 = vrot.lane.b32.xlu0 %v275, 8
    %v814 = vpop.permute.xlu0 %813
    %815 = vrot.lane.b32.xlu0 %v278, 8
    %v816 = vpop.permute.xlu0 %815
    %v845 = vrot.slane %v54, 1
    %v846 = vrot.slane %v55, 1
    %v847 = vsel %vm236, %v845, %v846
    %v848 = vrot.slane %v56, 1
    %v849 = vrot.slane %v57, 1
    %v850 = vsel %vm236, %v848, %v849
    %v851 = vrot.slane %v58, 1
    %v852 = vrot.slane %v59, 1
    %v853 = vsel %vm236, %v851, %v852
    %v854 = vrot.slane %v60, 1
    %v855 = vrot.slane %v61, 1
    %v856 = vsel %vm236, %v854, %v855
    %v857 = vrot.slane %v62, 1
    %v858 = vrot.slane %v63, 1
    %v859 = vsel %vm236, %v857, %v858
    %v860 = vrot.slane %v64, 1
    %v861 = vrot.slane %v65, 1
    %v862 = vsel %vm236, %v860, %v861
    %v863 = vrot.slane %v66, 1
    %v864 = vrot.slane %v67, 1
    %v865 = vsel %vm236, %v863, %v864
    %v866 = vrot.slane %v70, 1
    %v867 = vrot.slane %v71, 1
    %v868 = vsel %vm236, %v866, %v867
    %v869 = vrot.slane %v72, 1
    %v870 = vrot.slane %v73, 1
    %v871 = vsel %vm236, %v869, %v870
    %v872 = vrot.slane %v74, 1
    %v873 = vrot.slane %v75, 1
    %v874 = vsel %vm236, %v872, %v873
    %v875 = vrot.slane %v76, 1
    %v876 = vrot.slane %v77, 1
    %v877 = vsel %vm236, %v875, %v876
    %v878 = vrot.slane %v78, 1
    %v879 = vrot.slane %v79, 1
    %v880 = vsel %vm236, %v878, %v879
    %v881 = vrot.slane %v80, 1
    %v882 = vrot.slane %v81, 1
    %v883 = vsel %vm236, %v881, %v882
    %v884 = vrot.slane %v82, 1
    %v885 = vrot.slane %v83, 1
    %v886 = vsel %vm236, %v884, %v885
    %887 = vrot.lane.b32.xlu0 %v847, 16
    %v888 = vpop.permute.xlu0 %887
    %889 = vrot.lane.b32.xlu0 %v850, 16
    %v890 = vpop.permute.xlu0 %889
    %891 = vrot.lane.b32.xlu0 %v853, 16
    %v892 = vpop.permute.xlu0 %891
    %893 = vrot.lane.b32.xlu0 %v856, 16
    %v894 = vpop.permute.xlu0 %893
    %895 = vrot.lane.b32.xlu0 %v859, 16
    %v896 = vpop.permute.xlu0 %895
    %897 = vrot.lane.b32.xlu0 %v862, 16
    %v898 = vpop.permute.xlu0 %897
    %899 = vrot.lane.b32.xlu0 %v865, 16
    %v900 = vpop.permute.xlu0 %899
    %901 = vrot.lane.b32.xlu0 %v868, 16
    %v902 = vpop.permute.xlu0 %901
    %903 = vrot.lane.b32.xlu0 %v871, 16
    %v904 = vpop.permute.xlu0 %903
    %905 = vrot.lane.b32.xlu0 %v874, 16
    %v906 = vpop.permute.xlu0 %905
    %907 = vrot.lane.b32.xlu0 %v877, 16
    %v908 = vpop.permute.xlu0 %907
    %909 = vrot.lane.b32.xlu0 %v880, 16
    %v910 = vpop.permute.xlu0 %909
    %911 = vrot.lane.b32.xlu0 %v883, 16
    %v912 = vpop.permute.xlu0 %911
    %913 = vrot.lane.b32.xlu0 %v886, 16
    %v914 = vpop.permute.xlu0 %913
    %929 = vrot.lane.b32.xlu0 %v120, 24
    %v930 = vpop.permute.xlu0 %929
    %931 = vrot.lane.b32.xlu0 %v122, 24
    %v932 = vpop.permute.xlu0 %931
    %933 = vrot.lane.b32.xlu0 %v124, 24
    %v934 = vpop.permute.xlu0 %933
    %935 = vrot.lane.b32.xlu0 %v126, 24
    %v936 = vpop.permute.xlu0 %935
    %937 = vrot.lane.b32.xlu0 %v128, 24
    %v938 = vpop.permute.xlu0 %937
    %939 = vrot.lane.b32.xlu0 %v130, 24
    %v940 = vpop.permute.xlu0 %939
    %941 = vrot.lane.b32.xlu0 %v132, 24
    %v942 = vpop.permute.xlu0 %941
    %943 = vrot.lane.b32.xlu0 %v136, 24
    %v944 = vpop.permute.xlu0 %943
    %945 = vrot.lane.b32.xlu0 %v138, 24
    %v946 = vpop.permute.xlu0 %945
    %947 = vrot.lane.b32.xlu0 %v140, 24
    %v948 = vpop.permute.xlu0 %947
    %949 = vrot.lane.b32.xlu0 %v142, 24
    %v950 = vpop.permute.xlu0 %949
    %951 = vrot.lane.b32.xlu0 %v144, 24
    %v952 = vpop.permute.xlu0 %951
    %953 = vrot.lane.b32.xlu0 %v146, 24
    %v954 = vpop.permute.xlu0 %953
    %955 = vrot.lane.b32.xlu0 %v148, 24
    %v956 = vpop.permute.xlu0 %955
    %971 = vrot.lane.b32.xlu0 %v449, 32
    %v972 = vpop.permute.xlu0 %971
    %973 = vrot.lane.b32.xlu0 %v452, 32
    %v974 = vpop.permute.xlu0 %973
    %975 = vrot.lane.b32.xlu0 %v455, 32
    %v976 = vpop.permute.xlu0 %975
    %977 = vrot.lane.b32.xlu0 %v458, 32
    %v978 = vpop.permute.xlu0 %977
    %979 = vrot.lane.b32.xlu0 %v461, 32
    %v980 = vpop.permute.xlu0 %979
    %981 = vrot.lane.b32.xlu0 %v464, 32
    %v982 = vpop.permute.xlu0 %981
    %983 = vrot.lane.b32.xlu0 %v467, 32
    %v984 = vpop.permute.xlu0 %983
    %985 = vrot.lane.b32.xlu0 %v470, 32
    %v986 = vpop.permute.xlu0 %985
    %987 = vrot.lane.b32.xlu0 %v473, 32
    %v988 = vpop.permute.xlu0 %987
    %989 = vrot.lane.b32.xlu0 %v476, 32
    %v990 = vpop.permute.xlu0 %989
    %991 = vrot.lane.b32.xlu0 %v479, 32
    %v992 = vpop.permute.xlu0 %991
    %993 = vrot.lane.b32.xlu0 %v482, 32
    %v994 = vpop.permute.xlu0 %993
    %995 = vrot.lane.b32.xlu0 %v485, 32
    %v996 = vpop.permute.xlu0 %995
    %997 = vrot.lane.b32.xlu0 %v488, 32
    %v998 = vpop.permute.xlu0 %997
    %v1027 = vrot.slane %v120, 1
    %v1028 = vrot.slane %v121, 1
    %v1029 = vsel %vm236, %v1027, %v1028
    %v1030 = vrot.slane %v122, 1
    %v1031 = vrot.slane %v123, 1
    %v1032 = vsel %vm236, %v1030, %v1031
    %v1033 = vrot.slane %v124, 1
    %v1034 = vrot.slane %v125, 1
    %v1035 = vsel %vm236, %v1033, %v1034
    %v1036 = vrot.slane %v126, 1
    %v1037 = vrot.slane %v127, 1
    %v1038 = vsel %vm236, %v1036, %v1037
    %v1039 = vrot.slane %v128, 1
    %v1040 = vrot.slane %v129, 1
    %v1041 = vsel %vm236, %v1039, %v1040
    %v1042 = vrot.slane %v130, 1
    %v1043 = vrot.slane %v131, 1
    %v1044 = vsel %vm236, %v1042, %v1043
    %v1045 = vrot.slane %v132, 1
    %v1046 = vrot.slane %v133, 1
    %v1047 = vsel %vm236, %v1045, %v1046
    %v1048 = vrot.slane %v136, 1
    %v1049 = vrot.slane %v137, 1
    %v1050 = vsel %vm236, %v1048, %v1049
    %v1051 = vrot.slane %v138, 1
    %v1052 = vrot.slane %v139, 1
    %v1053 = vsel %vm236, %v1051, %v1052
    %v1054 = vrot.slane %v140, 1
    %v1055 = vrot.slane %v141, 1
    %v1056 = vsel %vm236, %v1054, %v1055
    %v1057 = vrot.slane %v142, 1
    %v1058 = vrot.slane %v143, 1
    %v1059 = vsel %vm236, %v1057, %v1058
    %v1060 = vrot.slane %v144, 1
    %v1061 = vrot.slane %v145, 1
    %v1062 = vsel %vm236, %v1060, %v1061
    %v1063 = vrot.slane %v146, 1
    %v1064 = vrot.slane %v147, 1
    %v1065 = vsel %vm236, %v1063, %v1064
    %v1066 = vrot.slane %v148, 1
    %v1067 = vrot.slane %v149, 1
    %v1068 = vsel %vm236, %v1066, %v1067
    %1069 = vrot.lane.b32.xlu0 %v1029, 40
    %v1070 = vpop.permute.xlu0 %1069
    %1071 = vrot.lane.b32.xlu0 %v1032, 40
    %v1072 = vpop.permute.xlu0 %1071
    %1073 = vrot.lane.b32.xlu0 %v1035, 40
    %v1074 = vpop.permute.xlu0 %1073
    %1075 = vrot.lane.b32.xlu0 %v1038, 40
    %v1076 = vpop.permute.xlu0 %1075
    %1077 = vrot.lane.b32.xlu0 %v1041, 40
    %v1078 = vpop.permute.xlu0 %1077
    %1079 = vrot.lane.b32.xlu0 %v1044, 40
    %v1080 = vpop.permute.xlu0 %1079
    %1081 = vrot.lane.b32.xlu0 %v1047, 40
    %v1082 = vpop.permute.xlu0 %1081
    %1083 = vrot.lane.b32.xlu0 %v1050, 40
    %v1084 = vpop.permute.xlu0 %1083
    %1085 = vrot.lane.b32.xlu0 %v1053, 40
    %v1086 = vpop.permute.xlu0 %1085
    %1087 = vrot.lane.b32.xlu0 %v1056, 40
    %v1088 = vpop.permute.xlu0 %1087
    %1089 = vrot.lane.b32.xlu0 %v1059, 40
    %v1090 = vpop.permute.xlu0 %1089
    %1091 = vrot.lane.b32.xlu0 %v1062, 40
    %v1092 = vpop.permute.xlu0 %1091
    %1093 = vrot.lane.b32.xlu0 %v1065, 40
    %v1094 = vpop.permute.xlu0 %1093
    %1095 = vrot.lane.b32.xlu0 %v1068, 40
    %v1096 = vpop.permute.xlu0 %1095
    %1111 = vrot.lane.b32.xlu0 %v56, 48
    %v1112 = vpop.permute.xlu0 %1111
    %1113 = vrot.lane.b32.xlu0 %v58, 48
    %v1114 = vpop.permute.xlu0 %1113
    %1115 = vrot.lane.b32.xlu0 %v60, 48
    %v1116 = vpop.permute.xlu0 %1115
    %1117 = vrot.lane.b32.xlu0 %v62, 48
    %v1118 = vpop.permute.xlu0 %1117
    %1119 = vrot.lane.b32.xlu0 %v64, 48
    %v1120 = vpop.permute.xlu0 %1119
    %1121 = vrot.lane.b32.xlu0 %v66, 48
    %v1122 = vpop.permute.xlu0 %1121
    %1123 = vrot.lane.b32.xlu0 %v68, 48
    %v1124 = vpop.permute.xlu0 %1123
    %1125 = vrot.lane.b32.xlu0 %v72, 48
    %v1126 = vpop.permute.xlu0 %1125
    %1127 = vrot.lane.b32.xlu0 %v74, 48
    %v1128 = vpop.permute.xlu0 %1127
    %1129 = vrot.lane.b32.xlu0 %v76, 48
    %v1130 = vpop.permute.xlu0 %1129
    %1131 = vrot.lane.b32.xlu0 %v78, 48
    %v1132 = vpop.permute.xlu0 %1131
    %1133 = vrot.lane.b32.xlu0 %v80, 48
    %v1134 = vpop.permute.xlu0 %1133
    %1135 = vrot.lane.b32.xlu0 %v82, 48
    %v1136 = vpop.permute.xlu0 %1135
    %1137 = vrot.lane.b32.xlu0 %v84, 48
    %v1138 = vpop.permute.xlu0 %1137
    %1153 = vrot.lane.b32.xlu0 %v242, 56
    %v1154 = vpop.permute.xlu0 %1153
    %1155 = vrot.lane.b32.xlu0 %v245, 56
    %v1156 = vpop.permute.xlu0 %1155
    %1157 = vrot.lane.b32.xlu0 %v248, 56
    %v1158 = vpop.permute.xlu0 %1157
    %1159 = vrot.lane.b32.xlu0 %v251, 56
    %v1160 = vpop.permute.xlu0 %1159
    %1161 = vrot.lane.b32.xlu0 %v254, 56
    %v1162 = vpop.permute.xlu0 %1161
    %1163 = vrot.lane.b32.xlu0 %v257, 56
    %v1164 = vpop.permute.xlu0 %1163
    %1165 = vrot.lane.b32.xlu0 %v623, 56
    %v1166 = vpop.permute.xlu0 %1165
    %1167 = vrot.lane.b32.xlu0 %v263, 56
    %v1168 = vpop.permute.xlu0 %1167
    %1169 = vrot.lane.b32.xlu0 %v266, 56
    %v1170 = vpop.permute.xlu0 %1169
    %1171 = vrot.lane.b32.xlu0 %v269, 56
    %v1172 = vpop.permute.xlu0 %1171
    %1173 = vrot.lane.b32.xlu0 %v272, 56
    %v1174 = vpop.permute.xlu0 %1173
    %1175 = vrot.lane.b32.xlu0 %v275, 56
    %v1176 = vpop.permute.xlu0 %1175
    %1177 = vrot.lane.b32.xlu0 %v278, 56
    %v1178 = vpop.permute.xlu0 %1177
    %1179 = vrot.lane.b32.xlu0 %v626, 56
    %v1180 = vpop.permute.xlu0 %1179
    %v1197 = vrot.slane %v68, 1
    %v1198 = vrot.slane %v69, 1
    %v1199 = vsel %vm236, %v1197, %v1198
    %v1200 = vrot.slane %v84, 1
    %v1201 = vrot.slane %v85, 1
    %v1202 = vsel %vm236, %v1200, %v1201
    %1203 = vrot.lane.b32.xlu0 %v850, 64
    %v1204 = vpop.permute.xlu0 %1203
    %1205 = vrot.lane.b32.xlu0 %v853, 64
    %v1206 = vpop.permute.xlu0 %1205
    %1207 = vrot.lane.b32.xlu0 %v856, 64
    %v1208 = vpop.permute.xlu0 %1207
    %1209 = vrot.lane.b32.xlu0 %v859, 64
    %v1210 = vpop.permute.xlu0 %1209
    %1211 = vrot.lane.b32.xlu0 %v862, 64
    %v1212 = vpop.permute.xlu0 %1211
    %1213 = vrot.lane.b32.xlu0 %v865, 64
    %v1214 = vpop.permute.xlu0 %1213
    %1215 = vrot.lane.b32.xlu0 %v1199, 64
    %v1216 = vpop.permute.xlu0 %1215
    %1217 = vrot.lane.b32.xlu0 %v871, 64
    %v1218 = vpop.permute.xlu0 %1217
    %1219 = vrot.lane.b32.xlu0 %v874, 64
    %v1220 = vpop.permute.xlu0 %1219
    %1221 = vrot.lane.b32.xlu0 %v877, 64
    %v1222 = vpop.permute.xlu0 %1221
    %1223 = vrot.lane.b32.xlu0 %v880, 64
    %v1224 = vpop.permute.xlu0 %1223
    %1225 = vrot.lane.b32.xlu0 %v883, 64
    %v1226 = vpop.permute.xlu0 %1225
    %1227 = vrot.lane.b32.xlu0 %v886, 64
    %v1228 = vpop.permute.xlu0 %1227
    %1229 = vrot.lane.b32.xlu0 %v1202, 64
    %v1230 = vpop.permute.xlu0 %1229
    %v1245 = vsel %vm669, %v54, %v790
    %v1246 = vsel %vm669, %v56, %v792
    %v1247 = vsel %vm669, %v58, %v794
    %v1248 = vsel %vm669, %v60, %v796
    %v1249 = vsel %vm669, %v62, %v798
    %v1250 = vsel %vm669, %v64, %v800
    %v1251 = vsel %vm669, %v66, %v802
    %v1252 = vsel %vm669, %v70, %v804
    %v1253 = vsel %vm669, %v72, %v806
    %v1254 = vsel %vm669, %v74, %v808
    %v1255 = vsel %vm669, %v76, %v810
    %v1256 = vsel %vm669, %v78, %v812
    %v1257 = vsel %vm669, %v80, %v814
    %v1258 = vsel %vm669, %v82, %v816
    %v1259 = vsel %vm684, %v1245, %v888
    %v1260 = vsel %vm684, %v1246, %v890
    %v1261 = vsel %vm684, %v1247, %v892
    %v1262 = vsel %vm684, %v1248, %v894
    %v1263 = vsel %vm684, %v1249, %v896
    %v1264 = vsel %vm684, %v1250, %v898
    %v1265 = vsel %vm684, %v1251, %v900
    %v1266 = vsel %vm684, %v1252, %v902
    %v1267 = vsel %vm684, %v1253, %v904
    %v1268 = vsel %vm684, %v1254, %v906
    %v1269 = vsel %vm684, %v1255, %v908
    %v1270 = vsel %vm684, %v1256, %v910
    %v1271 = vsel %vm684, %v1257, %v912
    %v1272 = vsel %vm684, %v1258, %v914
    %v1273 = vsel %vm699, %v1259, %v930
    %v1274 = vsel %vm699, %v1260, %v932
    %v1275 = vsel %vm699, %v1261, %v934
    %v1276 = vsel %vm699, %v1262, %v936
    %v1277 = vsel %vm699, %v1263, %v938
    %v1278 = vsel %vm699, %v1264, %v940
    %v1279 = vsel %vm699, %v1265, %v942
    %v1280 = vsel %vm699, %v1266, %v944
    %v1281 = vsel %vm699, %v1267, %v946
    %v1282 = vsel %vm699, %v1268, %v948
    %v1283 = vsel %vm699, %v1269, %v950
    %v1284 = vsel %vm699, %v1270, %v952
    %v1285 = vsel %vm699, %v1271, %v954
    %v1286 = vsel %vm699, %v1272, %v956
    %v1287 = vsel %vm714, %v1273, %v972
    %v1288 = vsel %vm714, %v1274, %v974
    %v1289 = vsel %vm714, %v1275, %v976
    %v1290 = vsel %vm714, %v1276, %v978
    %v1291 = vsel %vm714, %v1277, %v980
    %v1292 = vsel %vm714, %v1278, %v982
    %v1293 = vsel %vm714, %v1279, %v984
    %v1294 = vsel %vm714, %v1280, %v986
    %v1295 = vsel %vm714, %v1281, %v988
    %v1296 = vsel %vm714, %v1282, %v990
    %v1297 = vsel %vm714, %v1283, %v992
    %v1298 = vsel %vm714, %v1284, %v994
    %v1299 = vsel %vm714, %v1285, %v996
    %v1300 = vsel %vm714, %v1286, %v998
    %v1301 = vsel %vm729, %v1287, %v1070
    %v1302 = vsel %vm729, %v1288, %v1072
    %v1303 = vsel %vm729, %v1289, %v1074
    %v1304 = vsel %vm729, %v1290, %v1076
    %v1305 = vsel %vm729, %v1291, %v1078
    %v1306 = vsel %vm729, %v1292, %v1080
    %v1307 = vsel %vm729, %v1293, %v1082
    %v1308 = vsel %vm729, %v1294, %v1084
    %v1309 = vsel %vm729, %v1295, %v1086
    %v1310 = vsel %vm729, %v1296, %v1088
    %v1311 = vsel %vm729, %v1297, %v1090
    %v1312 = vsel %vm729, %v1298, %v1092
    %v1313 = vsel %vm729, %v1299, %v1094
    %v1314 = vsel %vm729, %v1300, %v1096
    %v1315 = vsel %vm744, %v1301, %v1112
    %v1316 = vsel %vm744, %v1302, %v1114
    %v1317 = vsel %vm744, %v1303, %v1116
    %v1318 = vsel %vm744, %v1304, %v1118
    %v1319 = vsel %vm744, %v1305, %v1120
    %v1320 = vsel %vm744, %v1306, %v1122
    %v1321 = vsel %vm744, %v1307, %v1124
    %v1322 = vsel %vm744, %v1308, %v1126
    %v1323 = vsel %vm744, %v1309, %v1128
    %v1324 = vsel %vm744, %v1310, %v1130
    %v1325 = vsel %vm744, %v1311, %v1132
    %v1326 = vsel %vm744, %v1312, %v1134
    %v1327 = vsel %vm744, %v1313, %v1136
    %v1328 = vsel %vm744, %v1314, %v1138
    %v1329 = vsel %vm759, %v1315, %v1154
    %v1330 = vsel %vm759, %v1316, %v1156
    %v1331 = vsel %vm759, %v1317, %v1158
    %v1332 = vsel %vm759, %v1318, %v1160
    %v1333 = vsel %vm759, %v1319, %v1162
    %v1334 = vsel %vm759, %v1320, %v1164
    %v1335 = vsel %vm759, %v1321, %v1166
    %v1336 = vsel %vm759, %v1322, %v1168
    %v1337 = vsel %vm759, %v1323, %v1170
    %v1338 = vsel %vm759, %v1324, %v1172
    %v1339 = vsel %vm759, %v1325, %v1174
    %v1340 = vsel %vm759, %v1326, %v1176
    %v1341 = vsel %vm759, %v1327, %v1178
    %v1342 = vsel %vm759, %v1328, %v1180
    %v1343 = vsel %vm774, %v1329, %v1204
    %v1344 = vsel %vm774, %v1330, %v1206
    %v1345 = vsel %vm774, %v1331, %v1208
    %v1346 = vsel %vm774, %v1332, %v1210
    %v1347 = vsel %vm774, %v1333, %v1212
    %v1348 = vsel %vm774, %v1334, %v1214
    %v1349 = vsel %vm774, %v1335, %v1216
    %v1350 = vsel %vm774, %v1336, %v1218
    %v1351 = vsel %vm774, %v1337, %v1220
    %v1352 = vsel %vm774, %v1338, %v1222
    %v1353 = vsel %vm774, %v1339, %v1224
    %v1354 = vsel %vm774, %v1340, %v1226
    %v1355 = vsel %vm774, %v1341, %v1228
    %v1356 = vsel %vm774, %v1342, %v1230
    %1357 = vrot.lane.b32.xlu0 %v120, 8
    %v1358 = vpop.permute.xlu0 %1357
    %1359 = vrot.lane.b32.xlu0 %v122, 8
    %v1360 = vpop.permute.xlu0 %1359
    %1361 = vrot.lane.b32.xlu0 %v124, 8
    %v1362 = vpop.permute.xlu0 %1361
    %1363 = vrot.lane.b32.xlu0 %v126, 8
    %v1364 = vpop.permute.xlu0 %1363
    %1365 = vrot.lane.b32.xlu0 %v128, 8
    %v1366 = vpop.permute.xlu0 %1365
    %1367 = vrot.lane.b32.xlu0 %v130, 8
    %v1368 = vpop.permute.xlu0 %1367
    %1369 = vrot.lane.b32.xlu0 %v132, 8
    %v1370 = vpop.permute.xlu0 %1369
    %1371 = vrot.lane.b32.xlu0 %v136, 8
    %v1372 = vpop.permute.xlu0 %1371
    %1373 = vrot.lane.b32.xlu0 %v138, 8
    %v1374 = vpop.permute.xlu0 %1373
    %1375 = vrot.lane.b32.xlu0 %v140, 8
    %v1376 = vpop.permute.xlu0 %1375
    %1377 = vrot.lane.b32.xlu0 %v142, 8
    %v1378 = vpop.permute.xlu0 %1377
    %1379 = vrot.lane.b32.xlu0 %v144, 8
    %v1380 = vpop.permute.xlu0 %1379
    %1381 = vrot.lane.b32.xlu0 %v146, 8
    %v1382 = vpop.permute.xlu0 %1381
    %1383 = vrot.lane.b32.xlu0 %v148, 8
    %v1384 = vpop.permute.xlu0 %1383
    %1399 = vrot.lane.b32.xlu0 %v449, 16
    %v1400 = vpop.permute.xlu0 %1399
    %1401 = vrot.lane.b32.xlu0 %v452, 16
    %v1402 = vpop.permute.xlu0 %1401
    %1403 = vrot.lane.b32.xlu0 %v455, 16
    %v1404 = vpop.permute.xlu0 %1403
    %1405 = vrot.lane.b32.xlu0 %v458, 16
    %v1406 = vpop.permute.xlu0 %1405
    %1407 = vrot.lane.b32.xlu0 %v461, 16
    %v1408 = vpop.permute.xlu0 %1407
    %1409 = vrot.lane.b32.xlu0 %v464, 16
    %v1410 = vpop.permute.xlu0 %1409
    %1411 = vrot.lane.b32.xlu0 %v467, 16
    %v1412 = vpop.permute.xlu0 %1411
    %1413 = vrot.lane.b32.xlu0 %v470, 16
    %v1414 = vpop.permute.xlu0 %1413
    %1415 = vrot.lane.b32.xlu0 %v473, 16
    %v1416 = vpop.permute.xlu0 %1415
    %1417 = vrot.lane.b32.xlu0 %v476, 16
    %v1418 = vpop.permute.xlu0 %1417
    %1419 = vrot.lane.b32.xlu0 %v479, 16
    %v1420 = vpop.permute.xlu0 %1419
    %1421 = vrot.lane.b32.xlu0 %v482, 16
    %v1422 = vpop.permute.xlu0 %1421
    %1423 = vrot.lane.b32.xlu0 %v485, 16
    %v1424 = vpop.permute.xlu0 %1423
    %1425 = vrot.lane.b32.xlu0 %v488, 16
    %v1426 = vpop.permute.xlu0 %1425
    %1441 = vrot.lane.b32.xlu0 %v23, 24
    %v1442 = vpop.permute.xlu0 %1441
    %1443 = vrot.lane.b32.xlu0 %v25, 24
    %v1444 = vpop.permute.xlu0 %1443
    %1445 = vrot.lane.b32.xlu0 %v27, 24
    %v1446 = vpop.permute.xlu0 %1445
    %1447 = vrot.lane.b32.xlu0 %v29, 24
    %v1448 = vpop.permute.xlu0 %1447
    %1449 = vrot.lane.b32.xlu0 %v31, 24
    %v1450 = vpop.permute.xlu0 %1449
    %1451 = vrot.lane.b32.xlu0 %v33, 24
    %v1452 = vpop.permute.xlu0 %1451
    %1453 = vrot.lane.b32.xlu0 %v35, 24
    %v1454 = vpop.permute.xlu0 %1453
    %1455 = vrot.lane.b32.xlu0 %v39, 24
    %v1456 = vpop.permute.xlu0 %1455
    %1457 = vrot.lane.b32.xlu0 %v41, 24
    %v1458 = vpop.permute.xlu0 %1457
    %1459 = vrot.lane.b32.xlu0 %v43, 24
    %v1460 = vpop.permute.xlu0 %1459
    %1461 = vrot.lane.b32.xlu0 %v45, 24
    %v1462 = vpop.permute.xlu0 %1461
    %1463 = vrot.lane.b32.xlu0 %v47, 24
    %v1464 = vpop.permute.xlu0 %1463
    %1465 = vrot.lane.b32.xlu0 %v49, 24
    %v1466 = vpop.permute.xlu0 %1465
    %1467 = vrot.lane.b32.xlu0 %v51, 24
    %v1468 = vpop.permute.xlu0 %1467
    %1483 = vrot.lane.b32.xlu0 %v56, 32
    %v1484 = vpop.permute.xlu0 %1483
    %1485 = vrot.lane.b32.xlu0 %v58, 32
    %v1486 = vpop.permute.xlu0 %1485
    %1487 = vrot.lane.b32.xlu0 %v60, 32
    %v1488 = vpop.permute.xlu0 %1487
    %1489 = vrot.lane.b32.xlu0 %v62, 32
    %v1490 = vpop.permute.xlu0 %1489
    %1491 = vrot.lane.b32.xlu0 %v64, 32
    %v1492 = vpop.permute.xlu0 %1491
    %1493 = vrot.lane.b32.xlu0 %v66, 32
    %v1494 = vpop.permute.xlu0 %1493
    %1495 = vrot.lane.b32.xlu0 %v68, 32
    %v1496 = vpop.permute.xlu0 %1495
    %1497 = vrot.lane.b32.xlu0 %v72, 32
    %v1498 = vpop.permute.xlu0 %1497
    %1499 = vrot.lane.b32.xlu0 %v74, 32
    %v1500 = vpop.permute.xlu0 %1499
    %1501 = vrot.lane.b32.xlu0 %v76, 32
    %v1502 = vpop.permute.xlu0 %1501
    %1503 = vrot.lane.b32.xlu0 %v78, 32
    %v1504 = vpop.permute.xlu0 %1503
    %1505 = vrot.lane.b32.xlu0 %v80, 32
    %v1506 = vpop.permute.xlu0 %1505
    %1507 = vrot.lane.b32.xlu0 %v82, 32
    %v1508 = vpop.permute.xlu0 %1507
    %1509 = vrot.lane.b32.xlu0 %v84, 32
    %v1510 = vpop.permute.xlu0 %1509
    %1525 = vrot.lane.b32.xlu0 %v242, 40
    %v1526 = vpop.permute.xlu0 %1525
    %1527 = vrot.lane.b32.xlu0 %v245, 40
    %v1528 = vpop.permute.xlu0 %1527
    %1529 = vrot.lane.b32.xlu0 %v248, 40
    %v1530 = vpop.permute.xlu0 %1529
    %1531 = vrot.lane.b32.xlu0 %v251, 40
    %v1532 = vpop.permute.xlu0 %1531
    %1533 = vrot.lane.b32.xlu0 %v254, 40
    %v1534 = vpop.permute.xlu0 %1533
    %1535 = vrot.lane.b32.xlu0 %v257, 40
    %v1536 = vpop.permute.xlu0 %1535
    %1537 = vrot.lane.b32.xlu0 %v623, 40
    %v1538 = vpop.permute.xlu0 %1537
    %1539 = vrot.lane.b32.xlu0 %v263, 40
    %v1540 = vpop.permute.xlu0 %1539
    %1541 = vrot.lane.b32.xlu0 %v266, 40
    %v1542 = vpop.permute.xlu0 %1541
    %1543 = vrot.lane.b32.xlu0 %v269, 40
    %v1544 = vpop.permute.xlu0 %1543
    %1545 = vrot.lane.b32.xlu0 %v272, 40
    %v1546 = vpop.permute.xlu0 %1545
    %1547 = vrot.lane.b32.xlu0 %v275, 40
    %v1548 = vpop.permute.xlu0 %1547
    %1549 = vrot.lane.b32.xlu0 %v278, 40
    %v1550 = vpop.permute.xlu0 %1549
    %1551 = vrot.lane.b32.xlu0 %v626, 40
    %v1552 = vpop.permute.xlu0 %1551
    %1569 = vrot.lane.b32.xlu0 %v89, 48
    %v1570 = vpop.permute.xlu0 %1569
    %1571 = vrot.lane.b32.xlu0 %v91, 48
    %v1572 = vpop.permute.xlu0 %1571
    %1573 = vrot.lane.b32.xlu0 %v93, 48
    %v1574 = vpop.permute.xlu0 %1573
    %1575 = vrot.lane.b32.xlu0 %v95, 48
    %v1576 = vpop.permute.xlu0 %1575
    %1577 = vrot.lane.b32.xlu0 %v97, 48
    %v1578 = vpop.permute.xlu0 %1577
    %1579 = vrot.lane.b32.xlu0 %v99, 48
    %v1580 = vpop.permute.xlu0 %1579
    %1581 = vrot.lane.b32.xlu0 %v101, 48
    %v1582 = vpop.permute.xlu0 %1581
    %1583 = vrot.lane.b32.xlu0 %v105, 48
    %v1584 = vpop.permute.xlu0 %1583
    %1585 = vrot.lane.b32.xlu0 %v107, 48
    %v1586 = vpop.permute.xlu0 %1585
    %1587 = vrot.lane.b32.xlu0 %v109, 48
    %v1588 = vpop.permute.xlu0 %1587
    %1589 = vrot.lane.b32.xlu0 %v111, 48
    %v1590 = vpop.permute.xlu0 %1589
    %1591 = vrot.lane.b32.xlu0 %v113, 48
    %v1592 = vpop.permute.xlu0 %1591
    %1593 = vrot.lane.b32.xlu0 %v115, 48
    %v1594 = vpop.permute.xlu0 %1593
    %1595 = vrot.lane.b32.xlu0 %v117, 48
    %v1596 = vpop.permute.xlu0 %1595
    %1613 = vrot.lane.b32.xlu0 %v122, 56
    %v1614 = vpop.permute.xlu0 %1613
    %1615 = vrot.lane.b32.xlu0 %v124, 56
    %v1616 = vpop.permute.xlu0 %1615
    %1617 = vrot.lane.b32.xlu0 %v126, 56
    %v1618 = vpop.permute.xlu0 %1617
    %1619 = vrot.lane.b32.xlu0 %v128, 56
    %v1620 = vpop.permute.xlu0 %1619
    %1621 = vrot.lane.b32.xlu0 %v130, 56
    %v1622 = vpop.permute.xlu0 %1621
    %1623 = vrot.lane.b32.xlu0 %v132, 56
    %v1624 = vpop.permute.xlu0 %1623
    %1625 = vrot.lane.b32.xlu0 %v134, 56
    %v1626 = vpop.permute.xlu0 %1625
    %1627 = vrot.lane.b32.xlu0 %v138, 56
    %v1628 = vpop.permute.xlu0 %1627
    %1629 = vrot.lane.b32.xlu0 %v140, 56
    %v1630 = vpop.permute.xlu0 %1629
    %1631 = vrot.lane.b32.xlu0 %v142, 56
    %v1632 = vpop.permute.xlu0 %1631
    %1633 = vrot.lane.b32.xlu0 %v144, 56
    %v1634 = vpop.permute.xlu0 %1633
    %1635 = vrot.lane.b32.xlu0 %v146, 56
    %v1636 = vpop.permute.xlu0 %1635
    %1637 = vrot.lane.b32.xlu0 %v148, 56
    %v1638 = vpop.permute.xlu0 %1637
    %1639 = vrot.lane.b32.xlu0 %v150, 56
    %v1640 = vpop.permute.xlu0 %1639
    %v1657 = vrot.slane %v101, 1
    %v1658 = vrot.slane %v102, 1
    %v1659 = vsel %vm236, %v1657, %v1658
    %v1660 = vrot.slane %v117, 1
    %v1661 = vrot.slane %v118, 1
    %v1662 = vsel %vm236, %v1660, %v1661
    %1663 = vrot.lane.b32.xlu0 %v452, 64
    %v1664 = vpop.permute.xlu0 %1663
    %1665 = vrot.lane.b32.xlu0 %v455, 64
    %v1666 = vpop.permute.xlu0 %1665
    %1667 = vrot.lane.b32.xlu0 %v458, 64
    %v1668 = vpop.permute.xlu0 %1667
    %1669 = vrot.lane.b32.xlu0 %v461, 64
    %v1670 = vpop.permute.xlu0 %1669
    %1671 = vrot.lane.b32.xlu0 %v464, 64
    %v1672 = vpop.permute.xlu0 %1671
    %1673 = vrot.lane.b32.xlu0 %v467, 64
    %v1674 = vpop.permute.xlu0 %1673
    %1675 = vrot.lane.b32.xlu0 %v1659, 64
    %v1676 = vpop.permute.xlu0 %1675
    %1677 = vrot.lane.b32.xlu0 %v473, 64
    %v1678 = vpop.permute.xlu0 %1677
    %1679 = vrot.lane.b32.xlu0 %v476, 64
    %v1680 = vpop.permute.xlu0 %1679
    %1681 = vrot.lane.b32.xlu0 %v479, 64
    %v1682 = vpop.permute.xlu0 %1681
    %1683 = vrot.lane.b32.xlu0 %v482, 64
    %v1684 = vpop.permute.xlu0 %1683
    %1685 = vrot.lane.b32.xlu0 %v485, 64
    %v1686 = vpop.permute.xlu0 %1685
    %1687 = vrot.lane.b32.xlu0 %v488, 64
    %v1688 = vpop.permute.xlu0 %1687
    %1689 = vrot.lane.b32.xlu0 %v1662, 64
    %v1690 = vpop.permute.xlu0 %1689
    %v1705 = vsel %vm669, %v87, %v1358
    %v1706 = vsel %vm669, %v89, %v1360
    %v1707 = vsel %vm669, %v91, %v1362
    %v1708 = vsel %vm669, %v93, %v1364
    %v1709 = vsel %vm669, %v95, %v1366
    %v1710 = vsel %vm669, %v97, %v1368
    %v1711 = vsel %vm669, %v99, %v1370
    %v1712 = vsel %vm669, %v103, %v1372
    %v1713 = vsel %vm669, %v105, %v1374
    %v1714 = vsel %vm669, %v107, %v1376
    %v1715 = vsel %vm669, %v109, %v1378
    %v1716 = vsel %vm669, %v111, %v1380
    %v1717 = vsel %vm669, %v113, %v1382
    %v1718 = vsel %vm669, %v115, %v1384
    %v1719 = vsel %vm684, %v1705, %v1400
    %v1720 = vsel %vm684, %v1706, %v1402
    %v1721 = vsel %vm684, %v1707, %v1404
    %v1722 = vsel %vm684, %v1708, %v1406
    %v1723 = vsel %vm684, %v1709, %v1408
    %v1724 = vsel %vm684, %v1710, %v1410
    %v1725 = vsel %vm684, %v1711, %v1412
    %v1726 = vsel %vm684, %v1712, %v1414
    %v1727 = vsel %vm684, %v1713, %v1416
    %v1728 = vsel %vm684, %v1714, %v1418
    %v1729 = vsel %vm684, %v1715, %v1420
    %v1730 = vsel %vm684, %v1716, %v1422
    %v1731 = vsel %vm684, %v1717, %v1424
    %v1732 = vsel %vm684, %v1718, %v1426
    %v1733 = vsel %vm699, %v1719, %v1442
    %v1734 = vsel %vm699, %v1720, %v1444
    %v1735 = vsel %vm699, %v1721, %v1446
    %v1736 = vsel %vm699, %v1722, %v1448
    %v1737 = vsel %vm699, %v1723, %v1450
    %v1738 = vsel %vm699, %v1724, %v1452
    %v1739 = vsel %vm699, %v1725, %v1454
    %v1740 = vsel %vm699, %v1726, %v1456
    %v1741 = vsel %vm699, %v1727, %v1458
    %v1742 = vsel %vm699, %v1728, %v1460
    %v1743 = vsel %vm699, %v1729, %v1462
    %v1744 = vsel %vm699, %v1730, %v1464
    %v1745 = vsel %vm699, %v1731, %v1466
    %v1746 = vsel %vm699, %v1732, %v1468
    %v1747 = vsel %vm714, %v1733, %v1484
    %v1748 = vsel %vm714, %v1734, %v1486
    %v1749 = vsel %vm714, %v1735, %v1488
    %v1750 = vsel %vm714, %v1736, %v1490
    %v1751 = vsel %vm714, %v1737, %v1492
    %v1752 = vsel %vm714, %v1738, %v1494
    %v1753 = vsel %vm714, %v1739, %v1496
    %v1754 = vsel %vm714, %v1740, %v1498
    %v1755 = vsel %vm714, %v1741, %v1500
    %v1756 = vsel %vm714, %v1742, %v1502
    %v1757 = vsel %vm714, %v1743, %v1504
    %v1758 = vsel %vm714, %v1744, %v1506
    %v1759 = vsel %vm714, %v1745, %v1508
    %v1760 = vsel %vm714, %v1746, %v1510
    %v1761 = vsel %vm729, %v1747, %v1526
    %v1762 = vsel %vm729, %v1748, %v1528
    %v1763 = vsel %vm729, %v1749, %v1530
    %v1764 = vsel %vm729, %v1750, %v1532
    %v1765 = vsel %vm729, %v1751, %v1534
    %v1766 = vsel %vm729, %v1752, %v1536
    %v1767 = vsel %vm729, %v1753, %v1538
    %v1768 = vsel %vm729, %v1754, %v1540
    %v1769 = vsel %vm729, %v1755, %v1542
    %v1770 = vsel %vm729, %v1756, %v1544
    %v1771 = vsel %vm729, %v1757, %v1546
    %v1772 = vsel %vm729, %v1758, %v1548
    %v1773 = vsel %vm729, %v1759, %v1550
    %v1774 = vsel %vm729, %v1760, %v1552
    %v1775 = vsel %vm744, %v1761, %v1570
    %v1776 = vsel %vm744, %v1762, %v1572
    %v1777 = vsel %vm744, %v1763, %v1574
    %v1778 = vsel %vm744, %v1764, %v1576
    %v1779 = vsel %vm744, %v1765, %v1578
    %v1780 = vsel %vm744, %v1766, %v1580
    %v1781 = vsel %vm744, %v1767, %v1582
    %v1782 = vsel %vm744, %v1768, %v1584
    %v1783 = vsel %vm744, %v1769, %v1586
    %v1784 = vsel %vm744, %v1770, %v1588
    %v1785 = vsel %vm744, %v1771, %v1590
    %v1786 = vsel %vm744, %v1772, %v1592
    %v1787 = vsel %vm744, %v1773, %v1594
    %v1788 = vsel %vm744, %v1774, %v1596
    %v1789 = vsel %vm759, %v1775, %v1614
    %v1790 = vsel %vm759, %v1776, %v1616
    %v1791 = vsel %vm759, %v1777, %v1618
    %v1792 = vsel %vm759, %v1778, %v1620
    %v1793 = vsel %vm759, %v1779, %v1622
    %v1794 = vsel %vm759, %v1780, %v1624
    %v1795 = vsel %vm759, %v1781, %v1626
    %v1796 = vsel %vm759, %v1782, %v1628
    %v1797 = vsel %vm759, %v1783, %v1630
    %v1798 = vsel %vm759, %v1784, %v1632
    %v1799 = vsel %vm759, %v1785, %v1634
    %v1800 = vsel %vm759, %v1786, %v1636
    %v1801 = vsel %vm759, %v1787, %v1638
    %v1802 = vsel %vm759, %v1788, %v1640
    %v1803 = vsel %vm774, %v1789, %v1664
    %v1804 = vsel %vm774, %v1790, %v1666
    %v1805 = vsel %vm774, %v1791, %v1668
    %v1806 = vsel %vm774, %v1792, %v1670
    %v1807 = vsel %vm774, %v1793, %v1672
    %v1808 = vsel %vm774, %v1794, %v1674
    %v1809 = vsel %vm774, %v1795, %v1676
    %v1810 = vsel %vm774, %v1796, %v1678
    %v1811 = vsel %vm774, %v1797, %v1680
    %v1812 = vsel %vm774, %v1798, %v1682
    %v1813 = vsel %vm774, %v1799, %v1684
    %v1814 = vsel %vm774, %v1800, %v1686
    %v1815 = vsel %vm774, %v1801, %v1688
    %v1816 = vsel %vm774, %v1802, %v1690
    %1817 = vrot.lane.b32.xlu0 %v449, 8
    %v1818 = vpop.permute.xlu0 %1817
    %1819 = vrot.lane.b32.xlu0 %v452, 8
    %v1820 = vpop.permute.xlu0 %1819
    %1821 = vrot.lane.b32.xlu0 %v455, 8
    %v1822 = vpop.permute.xlu0 %1821
    %1823 = vrot.lane.b32.xlu0 %v458, 8
    %v1824 = vpop.permute.xlu0 %1823
    %1825 = vrot.lane.b32.xlu0 %v461, 8
    %v1826 = vpop.permute.xlu0 %1825
    %1827 = vrot.lane.b32.xlu0 %v464, 8
    %v1828 = vpop.permute.xlu0 %1827
    %1829 = vrot.lane.b32.xlu0 %v467, 8
    %v1830 = vpop.permute.xlu0 %1829
    %1831 = vrot.lane.b32.xlu0 %v470, 8
    %v1832 = vpop.permute.xlu0 %1831
    %1833 = vrot.lane.b32.xlu0 %v473, 8
    %v1834 = vpop.permute.xlu0 %1833
    %1835 = vrot.lane.b32.xlu0 %v476, 8
    %v1836 = vpop.permute.xlu0 %1835
    %1837 = vrot.lane.b32.xlu0 %v479, 8
    %v1838 = vpop.permute.xlu0 %1837
    %1839 = vrot.lane.b32.xlu0 %v482, 8
    %v1840 = vpop.permute.xlu0 %1839
    %1841 = vrot.lane.b32.xlu0 %v485, 8
    %v1842 = vpop.permute.xlu0 %1841
    %1843 = vrot.lane.b32.xlu0 %v488, 8
    %v1844 = vpop.permute.xlu0 %1843
    %1859 = vrot.lane.b32.xlu0 %v1029, 16
    %v1860 = vpop.permute.xlu0 %1859
    %1861 = vrot.lane.b32.xlu0 %v1032, 16
    %v1862 = vpop.permute.xlu0 %1861
    %1863 = vrot.lane.b32.xlu0 %v1035, 16
    %v1864 = vpop.permute.xlu0 %1863
    %1865 = vrot.lane.b32.xlu0 %v1038, 16
    %v1866 = vpop.permute.xlu0 %1865
    %1867 = vrot.lane.b32.xlu0 %v1041, 16
    %v1868 = vpop.permute.xlu0 %1867
    %1869 = vrot.lane.b32.xlu0 %v1044, 16
    %v1870 = vpop.permute.xlu0 %1869
    %1871 = vrot.lane.b32.xlu0 %v1047, 16
    %v1872 = vpop.permute.xlu0 %1871
    %1873 = vrot.lane.b32.xlu0 %v1050, 16
    %v1874 = vpop.permute.xlu0 %1873
    %1875 = vrot.lane.b32.xlu0 %v1053, 16
    %v1876 = vpop.permute.xlu0 %1875
    %1877 = vrot.lane.b32.xlu0 %v1056, 16
    %v1878 = vpop.permute.xlu0 %1877
    %1879 = vrot.lane.b32.xlu0 %v1059, 16
    %v1880 = vpop.permute.xlu0 %1879
    %1881 = vrot.lane.b32.xlu0 %v1062, 16
    %v1882 = vpop.permute.xlu0 %1881
    %1883 = vrot.lane.b32.xlu0 %v1065, 16
    %v1884 = vpop.permute.xlu0 %1883
    %1885 = vrot.lane.b32.xlu0 %v1068, 16
    %v1886 = vpop.permute.xlu0 %1885
    %1901 = vrot.lane.b32.xlu0 %v56, 24
    %v1902 = vpop.permute.xlu0 %1901
    %1903 = vrot.lane.b32.xlu0 %v58, 24
    %v1904 = vpop.permute.xlu0 %1903
    %1905 = vrot.lane.b32.xlu0 %v60, 24
    %v1906 = vpop.permute.xlu0 %1905
    %1907 = vrot.lane.b32.xlu0 %v62, 24
    %v1908 = vpop.permute.xlu0 %1907
    %1909 = vrot.lane.b32.xlu0 %v64, 24
    %v1910 = vpop.permute.xlu0 %1909
    %1911 = vrot.lane.b32.xlu0 %v66, 24
    %v1912 = vpop.permute.xlu0 %1911
    %1913 = vrot.lane.b32.xlu0 %v68, 24
    %v1914 = vpop.permute.xlu0 %1913
    %1915 = vrot.lane.b32.xlu0 %v72, 24
    %v1916 = vpop.permute.xlu0 %1915
    %1917 = vrot.lane.b32.xlu0 %v74, 24
    %v1918 = vpop.permute.xlu0 %1917
    %1919 = vrot.lane.b32.xlu0 %v76, 24
    %v1920 = vpop.permute.xlu0 %1919
    %1921 = vrot.lane.b32.xlu0 %v78, 24
    %v1922 = vpop.permute.xlu0 %1921
    %1923 = vrot.lane.b32.xlu0 %v80, 24
    %v1924 = vpop.permute.xlu0 %1923
    %1925 = vrot.lane.b32.xlu0 %v82, 24
    %v1926 = vpop.permute.xlu0 %1925
    %1927 = vrot.lane.b32.xlu0 %v84, 24
    %v1928 = vpop.permute.xlu0 %1927
    %1943 = vrot.lane.b32.xlu0 %v242, 32
    %v1944 = vpop.permute.xlu0 %1943
    %1945 = vrot.lane.b32.xlu0 %v245, 32
    %v1946 = vpop.permute.xlu0 %1945
    %1947 = vrot.lane.b32.xlu0 %v248, 32
    %v1948 = vpop.permute.xlu0 %1947
    %1949 = vrot.lane.b32.xlu0 %v251, 32
    %v1950 = vpop.permute.xlu0 %1949
    %1951 = vrot.lane.b32.xlu0 %v254, 32
    %v1952 = vpop.permute.xlu0 %1951
    %1953 = vrot.lane.b32.xlu0 %v257, 32
    %v1954 = vpop.permute.xlu0 %1953
    %1955 = vrot.lane.b32.xlu0 %v623, 32
    %v1956 = vpop.permute.xlu0 %1955
    %1957 = vrot.lane.b32.xlu0 %v263, 32
    %v1958 = vpop.permute.xlu0 %1957
    %1959 = vrot.lane.b32.xlu0 %v266, 32
    %v1960 = vpop.permute.xlu0 %1959
    %1961 = vrot.lane.b32.xlu0 %v269, 32
    %v1962 = vpop.permute.xlu0 %1961
    %1963 = vrot.lane.b32.xlu0 %v272, 32
    %v1964 = vpop.permute.xlu0 %1963
    %1965 = vrot.lane.b32.xlu0 %v275, 32
    %v1966 = vpop.permute.xlu0 %1965
    %1967 = vrot.lane.b32.xlu0 %v278, 32
    %v1968 = vpop.permute.xlu0 %1967
    %1969 = vrot.lane.b32.xlu0 %v626, 32
    %v1970 = vpop.permute.xlu0 %1969
    %1985 = vrot.lane.b32.xlu0 %v850, 40
    %v1986 = vpop.permute.xlu0 %1985
    %1987 = vrot.lane.b32.xlu0 %v853, 40
    %v1988 = vpop.permute.xlu0 %1987
    %1989 = vrot.lane.b32.xlu0 %v856, 40
    %v1990 = vpop.permute.xlu0 %1989
    %1991 = vrot.lane.b32.xlu0 %v859, 40
    %v1992 = vpop.permute.xlu0 %1991
    %1993 = vrot.lane.b32.xlu0 %v862, 40
    %v1994 = vpop.permute.xlu0 %1993
    %1995 = vrot.lane.b32.xlu0 %v865, 40
    %v1996 = vpop.permute.xlu0 %1995
    %1997 = vrot.lane.b32.xlu0 %v1199, 40
    %v1998 = vpop.permute.xlu0 %1997
    %1999 = vrot.lane.b32.xlu0 %v871, 40
    %v2000 = vpop.permute.xlu0 %1999
    %2001 = vrot.lane.b32.xlu0 %v874, 40
    %v2002 = vpop.permute.xlu0 %2001
    %2003 = vrot.lane.b32.xlu0 %v877, 40
    %v2004 = vpop.permute.xlu0 %2003
    %2005 = vrot.lane.b32.xlu0 %v880, 40
    %v2006 = vpop.permute.xlu0 %2005
    %2007 = vrot.lane.b32.xlu0 %v883, 40
    %v2008 = vpop.permute.xlu0 %2007
    %2009 = vrot.lane.b32.xlu0 %v886, 40
    %v2010 = vpop.permute.xlu0 %2009
    %2011 = vrot.lane.b32.xlu0 %v1202, 40
    %v2012 = vpop.permute.xlu0 %2011
    %2027 = vrot.lane.b32.xlu0 %v122, 48
    %v2028 = vpop.permute.xlu0 %2027
    %2029 = vrot.lane.b32.xlu0 %v124, 48
    %v2030 = vpop.permute.xlu0 %2029
    %2031 = vrot.lane.b32.xlu0 %v126, 48
    %v2032 = vpop.permute.xlu0 %2031
    %2033 = vrot.lane.b32.xlu0 %v128, 48
    %v2034 = vpop.permute.xlu0 %2033
    %2035 = vrot.lane.b32.xlu0 %v130, 48
    %v2036 = vpop.permute.xlu0 %2035
    %2037 = vrot.lane.b32.xlu0 %v132, 48
    %v2038 = vpop.permute.xlu0 %2037
    %2039 = vrot.lane.b32.xlu0 %v134, 48
    %v2040 = vpop.permute.xlu0 %2039
    %2041 = vrot.lane.b32.xlu0 %v138, 48
    %v2042 = vpop.permute.xlu0 %2041
    %2043 = vrot.lane.b32.xlu0 %v140, 48
    %v2044 = vpop.permute.xlu0 %2043
    %2045 = vrot.lane.b32.xlu0 %v142, 48
    %v2046 = vpop.permute.xlu0 %2045
    %2047 = vrot.lane.b32.xlu0 %v144, 48
    %v2048 = vpop.permute.xlu0 %2047
    %2049 = vrot.lane.b32.xlu0 %v146, 48
    %v2050 = vpop.permute.xlu0 %2049
    %2051 = vrot.lane.b32.xlu0 %v148, 48
    %v2052 = vpop.permute.xlu0 %2051
    %2053 = vrot.lane.b32.xlu0 %v150, 48
    %v2054 = vpop.permute.xlu0 %2053
    %2069 = vrot.lane.b32.xlu0 %v452, 56
    %v2070 = vpop.permute.xlu0 %2069
    %2071 = vrot.lane.b32.xlu0 %v455, 56
    %v2072 = vpop.permute.xlu0 %2071
    %2073 = vrot.lane.b32.xlu0 %v458, 56
    %v2074 = vpop.permute.xlu0 %2073
    %2075 = vrot.lane.b32.xlu0 %v461, 56
    %v2076 = vpop.permute.xlu0 %2075
    %2077 = vrot.lane.b32.xlu0 %v464, 56
    %v2078 = vpop.permute.xlu0 %2077
    %2079 = vrot.lane.b32.xlu0 %v467, 56
    %v2080 = vpop.permute.xlu0 %2079
    %2081 = vrot.lane.b32.xlu0 %v1659, 56
    %v2082 = vpop.permute.xlu0 %2081
    %2083 = vrot.lane.b32.xlu0 %v473, 56
    %v2084 = vpop.permute.xlu0 %2083
    %2085 = vrot.lane.b32.xlu0 %v476, 56
    %v2086 = vpop.permute.xlu0 %2085
    %2087 = vrot.lane.b32.xlu0 %v479, 56
    %v2088 = vpop.permute.xlu0 %2087
    %2089 = vrot.lane.b32.xlu0 %v482, 56
    %v2090 = vpop.permute.xlu0 %2089
    %2091 = vrot.lane.b32.xlu0 %v485, 56
    %v2092 = vpop.permute.xlu0 %2091
    %2093 = vrot.lane.b32.xlu0 %v488, 56
    %v2094 = vpop.permute.xlu0 %2093
    %2095 = vrot.lane.b32.xlu0 %v1662, 56
    %v2096 = vpop.permute.xlu0 %2095
    %v2113 = vrot.slane %v134, 1
    %v2114 = vrot.slane %v135, 1
    %v2115 = vsel %vm236, %v2113, %v2114
    %v2116 = vrot.slane %v150, 1
    %v2117 = vrot.slane %v151, 1
    %v2118 = vsel %vm236, %v2116, %v2117
    %2119 = vrot.lane.b32.xlu0 %v1032, 64
    %v2120 = vpop.permute.xlu0 %2119
    %2121 = vrot.lane.b32.xlu0 %v1035, 64
    %v2122 = vpop.permute.xlu0 %2121
    %2123 = vrot.lane.b32.xlu0 %v1038, 64
    %v2124 = vpop.permute.xlu0 %2123
    %2125 = vrot.lane.b32.xlu0 %v1041, 64
    %v2126 = vpop.permute.xlu0 %2125
    %2127 = vrot.lane.b32.xlu0 %v1044, 64
    %v2128 = vpop.permute.xlu0 %2127
    %2129 = vrot.lane.b32.xlu0 %v1047, 64
    %v2130 = vpop.permute.xlu0 %2129
    %2131 = vrot.lane.b32.xlu0 %v2115, 64
    %v2132 = vpop.permute.xlu0 %2131
    %2133 = vrot.lane.b32.xlu0 %v1053, 64
    %v2134 = vpop.permute.xlu0 %2133
    %2135 = vrot.lane.b32.xlu0 %v1056, 64
    %v2136 = vpop.permute.xlu0 %2135
    %2137 = vrot.lane.b32.xlu0 %v1059, 64
    %v2138 = vpop.permute.xlu0 %2137
    %2139 = vrot.lane.b32.xlu0 %v1062, 64
    %v2140 = vpop.permute.xlu0 %2139
    %2141 = vrot.lane.b32.xlu0 %v1065, 64
    %v2142 = vpop.permute.xlu0 %2141
    %2143 = vrot.lane.b32.xlu0 %v1068, 64
    %v2144 = vpop.permute.xlu0 %2143
    %2145 = vrot.lane.b32.xlu0 %v2118, 64
    %v2146 = vpop.permute.xlu0 %2145
    %v2161 = vsel %vm669, %v120, %v1818
    %v2162 = vsel %vm669, %v122, %v1820
    %v2163 = vsel %vm669, %v124, %v1822
    %v2164 = vsel %vm669, %v126, %v1824
    %v2165 = vsel %vm669, %v128, %v1826
    %v2166 = vsel %vm669, %v130, %v1828
    %v2167 = vsel %vm669, %v132, %v1830
    %v2168 = vsel %vm669, %v136, %v1832
    %v2169 = vsel %vm669, %v138, %v1834
    %v2170 = vsel %vm669, %v140, %v1836
    %v2171 = vsel %vm669, %v142, %v1838
    %v2172 = vsel %vm669, %v144, %v1840
    %v2173 = vsel %vm669, %v146, %v1842
    %v2174 = vsel %vm669, %v148, %v1844
    %v2175 = vsel %vm684, %v2161, %v1860
    %v2176 = vsel %vm684, %v2162, %v1862
    %v2177 = vsel %vm684, %v2163, %v1864
    %v2178 = vsel %vm684, %v2164, %v1866
    %v2179 = vsel %vm684, %v2165, %v1868
    %v2180 = vsel %vm684, %v2166, %v1870
    %v2181 = vsel %vm684, %v2167, %v1872
    %v2182 = vsel %vm684, %v2168, %v1874
    %v2183 = vsel %vm684, %v2169, %v1876
    %v2184 = vsel %vm684, %v2170, %v1878
    %v2185 = vsel %vm684, %v2171, %v1880
    %v2186 = vsel %vm684, %v2172, %v1882
    %v2187 = vsel %vm684, %v2173, %v1884
    %v2188 = vsel %vm684, %v2174, %v1886
    %v2189 = vsel %vm699, %v2175, %v1902
    %v2190 = vsel %vm699, %v2176, %v1904
    %v2191 = vsel %vm699, %v2177, %v1906
    %v2192 = vsel %vm699, %v2178, %v1908
    %v2193 = vsel %vm699, %v2179, %v1910
    %v2194 = vsel %vm699, %v2180, %v1912
    %v2195 = vsel %vm699, %v2181, %v1914
    %v2196 = vsel %vm699, %v2182, %v1916
    %v2197 = vsel %vm699, %v2183, %v1918
    %v2198 = vsel %vm699, %v2184, %v1920
    %v2199 = vsel %vm699, %v2185, %v1922
    %v2200 = vsel %vm699, %v2186, %v1924
    %v2201 = vsel %vm699, %v2187, %v1926
    %v2202 = vsel %vm699, %v2188, %v1928
    %v2203 = vsel %vm714, %v2189, %v1944
    %v2204 = vsel %vm714, %v2190, %v1946
    %v2205 = vsel %vm714, %v2191, %v1948
    %v2206 = vsel %vm714, %v2192, %v1950
    %v2207 = vsel %vm714, %v2193, %v1952
    %v2208 = vsel %vm714, %v2194, %v1954
    %v2209 = vsel %vm714, %v2195, %v1956
    %v2210 = vsel %vm714, %v2196, %v1958
    %v2211 = vsel %vm714, %v2197, %v1960
    %v2212 = vsel %vm714, %v2198, %v1962
    %v2213 = vsel %vm714, %v2199, %v1964
    %v2214 = vsel %vm714, %v2200, %v1966
    %v2215 = vsel %vm714, %v2201, %v1968
    %v2216 = vsel %vm714, %v2202, %v1970
    %v2217 = vsel %vm729, %v2203, %v1986
    %v2218 = vsel %vm729, %v2204, %v1988
    %v2219 = vsel %vm729, %v2205, %v1990
    %v2220 = vsel %vm729, %v2206, %v1992
    %v2221 = vsel %vm729, %v2207, %v1994
    %v2222 = vsel %vm729, %v2208, %v1996
    %v2223 = vsel %vm729, %v2209, %v1998
    %v2224 = vsel %vm729, %v2210, %v2000
    %v2225 = vsel %vm729, %v2211, %v2002
    %v2226 = vsel %vm729, %v2212, %v2004
    %v2227 = vsel %vm729, %v2213, %v2006
    %v2228 = vsel %vm729, %v2214, %v2008
    %v2229 = vsel %vm729, %v2215, %v2010
    %v2230 = vsel %vm729, %v2216, %v2012
    %v2231 = vsel %vm744, %v2217, %v2028
    %v2232 = vsel %vm744, %v2218, %v2030
    %v2233 = vsel %vm744, %v2219, %v2032
    %v2234 = vsel %vm744, %v2220, %v2034
    %v2235 = vsel %vm744, %v2221, %v2036
    %v2236 = vsel %vm744, %v2222, %v2038
    %v2237 = vsel %vm744, %v2223, %v2040
    %v2238 = vsel %vm744, %v2224, %v2042
    %v2239 = vsel %vm744, %v2225, %v2044
    %v2240 = vsel %vm744, %v2226, %v2046
    %v2241 = vsel %vm744, %v2227, %v2048
    %v2242 = vsel %vm744, %v2228, %v2050
    %v2243 = vsel %vm744, %v2229, %v2052
    %v2244 = vsel %vm744, %v2230, %v2054
    %v2245 = vsel %vm759, %v2231, %v2070
    %v2246 = vsel %vm759, %v2232, %v2072
    %v2247 = vsel %vm759, %v2233, %v2074
    %v2248 = vsel %vm759, %v2234, %v2076
    %v2249 = vsel %vm759, %v2235, %v2078
    %v2250 = vsel %vm759, %v2236, %v2080
    %v2251 = vsel %vm759, %v2237, %v2082
    %v2252 = vsel %vm759, %v2238, %v2084
    %v2253 = vsel %vm759, %v2239, %v2086
    %v2254 = vsel %vm759, %v2240, %v2088
    %v2255 = vsel %vm759, %v2241, %v2090
    %v2256 = vsel %vm759, %v2242, %v2092
    %v2257 = vsel %vm759, %v2243, %v2094
    %v2258 = vsel %vm759, %v2244, %v2096
    %v2259 = vsel %vm774, %v2245, %v2120
    %v2260 = vsel %vm774, %v2246, %v2122
    %v2261 = vsel %vm774, %v2247, %v2124
    %v2262 = vsel %vm774, %v2248, %v2126
    %v2263 = vsel %vm774, %v2249, %v2128
    %v2264 = vsel %vm774, %v2250, %v2130
    %v2265 = vsel %vm774, %v2251, %v2132
    %v2266 = vsel %vm774, %v2252, %v2134
    %v2267 = vsel %vm774, %v2253, %v2136
    %v2268 = vsel %vm774, %v2254, %v2138
    %v2269 = vsel %vm774, %v2255, %v2140
    %v2270 = vsel %vm774, %v2256, %v2142
    %v2271 = vsel %vm774, %v2257, %v2144
    %v2272 = vsel %vm774, %v2258, %v2146
    %v2273 = vld [vmem:[%s1] sm:$0xff]
    %v2274 = vld [vmem:[%s1 + $0x8] sm:$0xff]
    %v2275 = vld [vmem:[%s1 + $0x10] sm:$0xff]
    %v2276 = vld [vmem:[%s1 + $0x18] sm:$0xff]
    %v2277 = vld [vmem:[%s1 + $0x20] sm:$0xff]
    %v2278 = vld [vmem:[%s1 + $0x28] sm:$0xff]
    %v2279 = vld [vmem:[%s1 + $0x30] sm:$0xff]
    %v2280 = vld [vmem:[%s1 + $0x38] sm:$0xff]
    %v2281 = vld [vmem:[%s1 + $0x40] sm:$0xff]
    %vm2282 = vcmask 588800
    %v2284 = vsel %vm2282, %v775, 0
    %v2287 = vsel %vm2282, %v776, 0
    %v2290 = vsel %vm2282, %v777, 0
    %v2293 = vsel %vm2282, %v778, 0
    %v2296 = vsel %vm2282, %v779, 0
    %v2299 = vsel %vm2282, %v780, 0
    %v2302 = vsel %vm2282, %v781, 0
    %v2305 = vsel %vm2282, %v782, 0
    %v2308 = vsel %vm2282, %v783, 0
    %v2311 = vsel %vm2282, %v784, 0
    %v2314 = vsel %vm2282, %v785, 0
    %v2317 = vsel %vm2282, %v786, 0
    %v2320 = vsel %vm2282, %v787, 0
    %v2323 = vsel %vm2282, %v788, 0
    %v2326 = vsel %vm2282, %v1343, 0
    %v2329 = vsel %vm2282, %v1344, 0
    %v2332 = vsel %vm2282, %v1345, 0
    %v2335 = vsel %vm2282, %v1346, 0
    %v2338 = vsel %vm2282, %v1347, 0
    %v2341 = vsel %vm2282, %v1348, 0
    %v2344 = vsel %vm2282, %v1349, 0
    %v2347 = vsel %vm2282, %v1350, 0
    %v2350 = vsel %vm2282, %v1351, 0
    %v2353 = vsel %vm2282, %v1352, 0
    %v2356 = vsel %vm2282, %v1353, 0
    %v2359 = vsel %vm2282, %v1354, 0
    %v2362 = vsel %vm2282, %v1355, 0
    %v2365 = vsel %vm2282, %v1356, 0
    %v2368 = vsel %vm2282, %v1803, 0
    %v2371 = vsel %vm2282, %v1804, 0
    %v2374 = vsel %vm2282, %v1805, 0
    %v2377 = vsel %vm2282, %v1806, 0
    %v2380 = vsel %vm2282, %v1807, 0
    %v2383 = vsel %vm2282, %v1808, 0
    %v2386 = vsel %vm2282, %v1809, 0
    %v2389 = vsel %vm2282, %v1810, 0
    %v2392 = vsel %vm2282, %v1811, 0
    %v2395 = vsel %vm2282, %v1812, 0
    %v2398 = vsel %vm2282, %v1813, 0
    %v2401 = vsel %vm2282, %v1814, 0
    %v2404 = vsel %vm2282, %v1815, 0
    %v2407 = vsel %vm2282, %v1816, 0
    %v2410 = vsel %vm2282, %v2259, 0
    %v2413 = vsel %vm2282, %v2260, 0
    %v2416 = vsel %vm2282, %v2261, 0
    %v2419 = vsel %vm2282, %v2262, 0
    %v2422 = vsel %vm2282, %v2263, 0
    %v2425 = vsel %vm2282, %v2264, 0
    %v2428 = vsel %vm2282, %v2265, 0
    %v2431 = vsel %vm2282, %v2266, 0
    %v2434 = vsel %vm2282, %v2267, 0
    %v2437 = vsel %vm2282, %v2268, 0
    %v2440 = vsel %vm2282, %v2269, 0
    %v2443 = vsel %vm2282, %v2270, 0
    %v2446 = vsel %vm2282, %v2271, 0
    %v2449 = vsel %vm2282, %v2272, 0
    %2451 = vmatpush.msra.mxu0 0.0
    %2452 = vmatpush.msra.mxu0 0.0
    %2453 = vmatpush.msra.mxu0 0.0
    %2454 = vmatpush.msra.mxu0 0.0
    %2455 = vmatpush.msra.mxu0 0.0
    %2456 = vmatpush.msra.mxu0 0.0
    %2457 = vmatpush.msra.mxu0 0.0
    %2458 = vmatpush.msra.mxu0 %v2281
    %2459 = vmatpush.msra.mxu0 %v2280
    %2460 = vmatpush.msra.mxu0 %v2279
    %2461 = vmatpush.msra.mxu0 %v2278
    %2462 = vmatpush.msra.mxu0 %v2277
    %2463 = vmatpush.msra.mxu0 %v2276
    %2464 = vmatpush.msra.mxu0 %v2275
    %2465 = vmatpush.msra.mxu0 %v2274
    %2466 = vmatpush.msra.mxu0 %v2273
    %2467 = vmatmul.f32.gmra.mxu0 %v2284
    %v2468 = vpop.f32.mrf.mxu0
    %v2469 = vadd.f32 0.0, %v2468
    %2470 = vmatmul.f32.gmra.mxu0 %v2287
    %v2471 = vpop.f32.mrf.mxu0
    %v2472 = vadd.f32 0.0, %v2471
    %2473 = vmatmul.f32.gmra.mxu0 %v2290
    %v2474 = vpop.f32.mrf.mxu0
    %v2475 = vadd.f32 0.0, %v2474
    %2476 = vmatmul.f32.gmra.mxu0 %v2293
    %v2477 = vpop.f32.mrf.mxu0
    %v2478 = vadd.f32 0.0, %v2477
    %2479 = vmatmul.f32.gmra.mxu0 %v2296
    %v2480 = vpop.f32.mrf.mxu0
    %v2481 = vadd.f32 0.0, %v2480
    %2482 = vmatmul.f32.gmra.mxu0 %v2299
    %v2483 = vpop.f32.mrf.mxu0
    %v2484 = vadd.f32 0.0, %v2483
    %2485 = vmatmul.f32.gmra.mxu0 %v2302
    %v2486 = vpop.f32.mrf.mxu0
    %v2487 = vadd.f32 0.0, %v2486
    %2488 = vmatmul.f32.gmra.mxu0 %v2305
    %v2489 = vpop.f32.mrf.mxu0
    %v2490 = vadd.f32 0.0, %v2489
    %2491 = vmatmul.f32.gmra.mxu0 %v2308
    %v2492 = vpop.f32.mrf.mxu0
    %v2493 = vadd.f32 0.0, %v2492
    %2494 = vmatmul.f32.gmra.mxu0 %v2311
    %v2495 = vpop.f32.mrf.mxu0
    %v2496 = vadd.f32 0.0, %v2495
    %2497 = vmatmul.f32.gmra.mxu0 %v2314
    %v2498 = vpop.f32.mrf.mxu0
    %v2499 = vadd.f32 0.0, %v2498
    %2500 = vmatmul.f32.gmra.mxu0 %v2317
    %v2501 = vpop.f32.mrf.mxu0
    %v2502 = vadd.f32 0.0, %v2501
    %2503 = vmatmul.f32.gmra.mxu0 %v2320
    %v2504 = vpop.f32.mrf.mxu0
    %v2505 = vadd.f32 0.0, %v2504
    %2506 = vmatmul.f32.gmra.mxu0 %v2323
    %v2507 = vpop.f32.mrf.mxu0
    %v2508 = vadd.f32 0.0, %v2507
    %2509 = vmatmul.f32.gmra.mxu0 %v2326
    %v2510 = vpop.f32.mrf.mxu0
    %v2511 = vadd.f32 0.0, %v2510
    %2512 = vmatmul.f32.gmra.mxu0 %v2329
    %v2513 = vpop.f32.mrf.mxu0
    %v2514 = vadd.f32 0.0, %v2513
    %2515 = vmatmul.f32.gmra.mxu0 %v2332
    %v2516 = vpop.f32.mrf.mxu0
    %v2517 = vadd.f32 0.0, %v2516
    %2518 = vmatmul.f32.gmra.mxu0 %v2335
    %v2519 = vpop.f32.mrf.mxu0
    %v2520 = vadd.f32 0.0, %v2519
    %2521 = vmatmul.f32.gmra.mxu0 %v2338
    %v2522 = vpop.f32.mrf.mxu0
    %v2523 = vadd.f32 0.0, %v2522
    %2524 = vmatmul.f32.gmra.mxu0 %v2341
    %v2525 = vpop.f32.mrf.mxu0
    %v2526 = vadd.f32 0.0, %v2525
    %2527 = vmatmul.f32.gmra.mxu0 %v2344
    %v2528 = vpop.f32.mrf.mxu0
    %v2529 = vadd.f32 0.0, %v2528
    %2530 = vmatmul.f32.gmra.mxu0 %v2347
    %v2531 = vpop.f32.mrf.mxu0
    %v2532 = vadd.f32 0.0, %v2531
    %2533 = vmatmul.f32.gmra.mxu0 %v2350
    %v2534 = vpop.f32.mrf.mxu0
    %v2535 = vadd.f32 0.0, %v2534
    %2536 = vmatmul.f32.gmra.mxu0 %v2353
    %v2537 = vpop.f32.mrf.mxu0
    %v2538 = vadd.f32 0.0, %v2537
    %2539 = vmatmul.f32.gmra.mxu0 %v2356
    %v2540 = vpop.f32.mrf.mxu0
    %v2541 = vadd.f32 0.0, %v2540
    %2542 = vmatmul.f32.gmra.mxu0 %v2359
    %v2543 = vpop.f32.mrf.mxu0
    %v2544 = vadd.f32 0.0, %v2543
    %2545 = vmatmul.f32.gmra.mxu0 %v2362
    %v2546 = vpop.f32.mrf.mxu0
    %v2547 = vadd.f32 0.0, %v2546
    %2548 = vmatmul.f32.gmra.mxu0 %v2365
    %v2549 = vpop.f32.mrf.mxu0
    %v2550 = vadd.f32 0.0, %v2549
    %2551 = vmatmul.f32.gmra.mxu0 %v2368
    %v2552 = vpop.f32.mrf.mxu0
    %v2553 = vadd.f32 0.0, %v2552
    %2554 = vmatmul.f32.gmra.mxu0 %v2371
    %v2555 = vpop.f32.mrf.mxu0
    %v2556 = vadd.f32 0.0, %v2555
    %2557 = vmatmul.f32.gmra.mxu0 %v2374
    %v2558 = vpop.f32.mrf.mxu0
    %v2559 = vadd.f32 0.0, %v2558
    %2560 = vmatmul.f32.gmra.mxu0 %v2377
    %v2561 = vpop.f32.mrf.mxu0
    %v2562 = vadd.f32 0.0, %v2561
    %2563 = vmatmul.f32.gmra.mxu0 %v2380
    %v2564 = vpop.f32.mrf.mxu0
    %v2565 = vadd.f32 0.0, %v2564
    %2566 = vmatmul.f32.gmra.mxu0 %v2383
    %v2567 = vpop.f32.mrf.mxu0
    %v2568 = vadd.f32 0.0, %v2567
    %2569 = vmatmul.f32.gmra.mxu0 %v2386
    %v2570 = vpop.f32.mrf.mxu0
    %v2571 = vadd.f32 0.0, %v2570
    %2572 = vmatmul.f32.gmra.mxu0 %v2389
    %v2573 = vpop.f32.mrf.mxu0
    %v2574 = vadd.f32 0.0, %v2573
    %2575 = vmatmul.f32.gmra.mxu0 %v2392
    %v2576 = vpop.f32.mrf.mxu0
    %v2577 = vadd.f32 0.0, %v2576
    %2578 = vmatmul.f32.gmra.mxu0 %v2395
    %v2579 = vpop.f32.mrf.mxu0
    %v2580 = vadd.f32 0.0, %v2579
    %2581 = vmatmul.f32.gmra.mxu0 %v2398
    %v2582 = vpop.f32.mrf.mxu0
    %v2583 = vadd.f32 0.0, %v2582
    %2584 = vmatmul.f32.gmra.mxu0 %v2401
    %v2585 = vpop.f32.mrf.mxu0
    %v2586 = vadd.f32 0.0, %v2585
    %2587 = vmatmul.f32.gmra.mxu0 %v2404
    %v2588 = vpop.f32.mrf.mxu0
    %v2589 = vadd.f32 0.0, %v2588
    %2590 = vmatmul.f32.gmra.mxu0 %v2407
    %v2591 = vpop.f32.mrf.mxu0
    %v2592 = vadd.f32 0.0, %v2591
    %2593 = vmatmul.f32.gmra.mxu0 %v2410
    %v2594 = vpop.f32.mrf.mxu0
    %v2595 = vadd.f32 0.0, %v2594
    %2596 = vmatmul.f32.gmra.mxu0 %v2413
    %v2597 = vpop.f32.mrf.mxu0
    %v2598 = vadd.f32 0.0, %v2597
    %2599 = vmatmul.f32.gmra.mxu0 %v2416
    %v2600 = vpop.f32.mrf.mxu0
    %v2601 = vadd.f32 0.0, %v2600
    %2602 = vmatmul.f32.gmra.mxu0 %v2419
    %v2603 = vpop.f32.mrf.mxu0
    %v2604 = vadd.f32 0.0, %v2603
    %2605 = vmatmul.f32.gmra.mxu0 %v2422
    %v2606 = vpop.f32.mrf.mxu0
    %v2607 = vadd.f32 0.0, %v2606
    %2608 = vmatmul.f32.gmra.mxu0 %v2425
    %v2609 = vpop.f32.mrf.mxu0
    %v2610 = vadd.f32 0.0, %v2609
    %2611 = vmatmul.f32.gmra.mxu0 %v2428
    %v2612 = vpop.f32.mrf.mxu0
    %v2613 = vadd.f32 0.0, %v2612
    %2614 = vmatmul.f32.gmra.mxu0 %v2431
    %v2615 = vpop.f32.mrf.mxu0
    %v2616 = vadd.f32 0.0, %v2615
    %2617 = vmatmul.f32.gmra.mxu0 %v2434
    %v2618 = vpop.f32.mrf.mxu0
    %v2619 = vadd.f32 0.0, %v2618
    %2620 = vmatmul.f32.gmra.mxu0 %v2437
    %v2621 = vpop.f32.mrf.mxu0
    %v2622 = vadd.f32 0.0, %v2621
    %2623 = vmatmul.f32.gmra.mxu0 %v2440
    %v2624 = vpop.f32.mrf.mxu0
    %v2625 = vadd.f32 0.0, %v2624
    %2626 = vmatmul.f32.gmra.mxu0 %v2443
    %v2627 = vpop.f32.mrf.mxu0
    %v2628 = vadd.f32 0.0, %v2627
    %2629 = vmatmul.f32.gmra.mxu0 %v2446
    %v2630 = vpop.f32.mrf.mxu0
    %v2631 = vadd.f32 0.0, %v2630
    %2632 = vmatmul.f32.gmra.mxu0 %v2449
    %v2633 = vpop.f32.mrf.mxu0
    %v2634 = vadd.f32 0.0, %v2633
    %2635 = vdwg.mxu0
    %v2636 = vsel %vm684, %v2469, -inf
    %v2637 = vsel %vm684, %v2511, -inf
    %v2638 = vmax.f32 %v2636, %v2637
    %v2639 = vsel %vm684, %v2553, -inf
    %v2640 = vmax.f32 %v2638, %v2639
    %v2641 = vsel %vm684, %v2595, -inf
    %v2642 = vmax.f32 %v2640, %v2641
    %v2643 = vsel %vm684, %v2472, -inf
    %v2644 = vsel %vm684, %v2514, -inf
    %v2645 = vmax.f32 %v2643, %v2644
    %v2646 = vsel %vm684, %v2556, -inf
    %v2647 = vmax.f32 %v2645, %v2646
    %v2648 = vsel %vm684, %v2598, -inf
    %v2649 = vmax.f32 %v2647, %v2648
    %v2650 = vsel %vm684, %v2475, -inf
    %v2651 = vsel %vm684, %v2517, -inf
    %v2652 = vmax.f32 %v2650, %v2651
    %v2653 = vsel %vm684, %v2559, -inf
    %v2654 = vmax.f32 %v2652, %v2653
    %v2655 = vsel %vm684, %v2601, -inf
    %v2656 = vmax.f32 %v2654, %v2655
    %v2657 = vsel %vm684, %v2478, -inf
    %v2658 = vsel %vm684, %v2520, -inf
    %v2659 = vmax.f32 %v2657, %v2658
    %v2660 = vsel %vm684, %v2562, -inf
    %v2661 = vmax.f32 %v2659, %v2660
    %v2662 = vsel %vm684, %v2604, -inf
    %v2663 = vmax.f32 %v2661, %v2662
    %v2664 = vsel %vm684, %v2481, -inf
    %v2665 = vsel %vm684, %v2523, -inf
    %v2666 = vmax.f32 %v2664, %v2665
    %v2667 = vsel %vm684, %v2565, -inf
    %v2668 = vmax.f32 %v2666, %v2667
    %v2669 = vsel %vm684, %v2607, -inf
    %v2670 = vmax.f32 %v2668, %v2669
    %v2671 = vsel %vm684, %v2484, -inf
    %v2672 = vsel %vm684, %v2526, -inf
    %v2673 = vmax.f32 %v2671, %v2672
    %v2674 = vsel %vm684, %v2568, -inf
    %v2675 = vmax.f32 %v2673, %v2674
    %v2676 = vsel %vm684, %v2610, -inf
    %v2677 = vmax.f32 %v2675, %v2676
    %v2678 = vsel %vm684, %v2487, -inf
    %v2679 = vsel %vm684, %v2529, -inf
    %v2680 = vmax.f32 %v2678, %v2679
    %v2681 = vsel %vm684, %v2571, -inf
    %v2682 = vmax.f32 %v2680, %v2681
    %v2683 = vsel %vm684, %v2613, -inf
    %v2684 = vmax.f32 %v2682, %v2683
    %v2685 = vsel %vm684, %v2490, -inf
    %v2686 = vsel %vm684, %v2532, -inf
    %v2687 = vmax.f32 %v2685, %v2686
    %v2688 = vsel %vm684, %v2574, -inf
    %v2689 = vmax.f32 %v2687, %v2688
    %v2690 = vsel %vm684, %v2616, -inf
    %v2691 = vmax.f32 %v2689, %v2690
    %v2692 = vsel %vm684, %v2493, -inf
    %v2693 = vsel %vm684, %v2535, -inf
    %v2694 = vmax.f32 %v2692, %v2693
    %v2695 = vsel %vm684, %v2577, -inf
    %v2696 = vmax.f32 %v2694, %v2695
    %v2697 = vsel %vm684, %v2619, -inf
    %v2698 = vmax.f32 %v2696, %v2697
    %v2699 = vsel %vm684, %v2496, -inf
    %v2700 = vsel %vm684, %v2538, -inf
    %v2701 = vmax.f32 %v2699, %v2700
    %v2702 = vsel %vm684, %v2580, -inf
    %v2703 = vmax.f32 %v2701, %v2702
    %v2704 = vsel %vm684, %v2622, -inf
    %v2705 = vmax.f32 %v2703, %v2704
    %v2706 = vsel %vm684, %v2499, -inf
    %v2707 = vsel %vm684, %v2541, -inf
    %v2708 = vmax.f32 %v2706, %v2707
    %v2709 = vsel %vm684, %v2583, -inf
    %v2710 = vmax.f32 %v2708, %v2709
    %v2711 = vsel %vm684, %v2625, -inf
    %v2712 = vmax.f32 %v2710, %v2711
    %v2713 = vsel %vm684, %v2502, -inf
    %v2714 = vsel %vm684, %v2544, -inf
    %v2715 = vmax.f32 %v2713, %v2714
    %v2716 = vsel %vm684, %v2586, -inf
    %v2717 = vmax.f32 %v2715, %v2716
    %v2718 = vsel %vm684, %v2628, -inf
    %v2719 = vmax.f32 %v2717, %v2718
    %v2720 = vsel %vm684, %v2505, -inf
    %v2721 = vsel %vm684, %v2547, -inf
    %v2722 = vmax.f32 %v2720, %v2721
    %v2723 = vsel %vm684, %v2589, -inf
    %v2724 = vmax.f32 %v2722, %v2723
    %v2725 = vsel %vm684, %v2631, -inf
    %v2726 = vmax.f32 %v2724, %v2725
    %v2727 = vsel %vm684, %v2508, -inf
    %v2728 = vsel %vm684, %v2550, -inf
    %v2729 = vmax.f32 %v2727, %v2728
    %v2730 = vsel %vm684, %v2592, -inf
    %v2731 = vmax.f32 %v2729, %v2730
    %v2732 = vsel %vm684, %v2634, -inf
    %v2733 = vmax.f32 %v2731, %v2732
    %v2734 = vld [vmem:[%s2] sm:$0x1]
    %v2736 = vperm.slane %v2734, 0
    %v2738 = vadd.f32 %v2642, %v2736
    %v2739 = vadd.f32 %v2649, %v2736
    %v2740 = vadd.f32 %v2656, %v2736
    %v2741 = vadd.f32 %v2663, %v2736
    %v2742 = vadd.f32 %v2670, %v2736
    %v2743 = vadd.f32 %v2677, %v2736
    %v2744 = vadd.f32 %v2684, %v2736
    %v2745 = vadd.f32 %v2691, %v2736
    %v2746 = vadd.f32 %v2698, %v2736
    %v2747 = vadd.f32 %v2705, %v2736
    %v2748 = vadd.f32 %v2712, %v2736
    %v2749 = vadd.f32 %v2719, %v2736
    %v2750 = vadd.f32 %v2726, %v2736
    %v2751 = vadd.f32 %v2733, %v2736
    %v2752 = vmax.f32 %v2738, 0.0
    %v2753 = vmax.f32 %v2739, 0.0
    %v2754 = vmax.f32 %v2740, 0.0
    %v2755 = vmax.f32 %v2741, 0.0
    %v2756 = vmax.f32 %v2742, 0.0
    %v2757 = vmax.f32 %v2743, 0.0
    %v2758 = vmax.f32 %v2744, 0.0
    %v2759 = vmax.f32 %v2745, 0.0
    %v2760 = vmax.f32 %v2746, 0.0
    %v2761 = vmax.f32 %v2747, 0.0
    %v2762 = vmax.f32 %v2748, 0.0
    %v2763 = vmax.f32 %v2749, 0.0
    %v2764 = vmax.f32 %v2750, 0.0
    %v2765 = vmax.f32 %v2751, 0.0
    %v2766 = vld [vmem:[%s3] sm:$0xff]
    %v2767 = vld [vmem:[%s3 + $0x8] sm:$0xff]
    %v2768 = vld [vmem:[%s3 + $0x10] sm:$0xff]
    %v2769 = vld [vmem:[%s3 + $0x18] sm:$0xff]
    %v2770 = vld [vmem:[%s3 + $0x20] sm:$0xff]
    %v2771 = vld [vmem:[%s3 + $0x28] sm:$0xff]
    %v2772 = vld [vmem:[%s3 + $0x30] sm:$0xff]
    %v2773 = vld [vmem:[%s3 + $0x38] sm:$0xff]
    %v2774 = vld [vmem:[%s3 + $0x40] sm:$0xff]
    %v2775 = vld [vmem:[%s3 + $0x48] sm:$0xff]
    %v2776 = vld [vmem:[%s3 + $0x50] sm:$0xff]
    %v2777 = vld [vmem:[%s3 + $0x58] sm:$0xff]
    %v2778 = vld [vmem:[%s3 + $0x60] sm:$0xff]
    %v2779 = vld [vmem:[%s3 + $0x68] sm:$0xff]
    %v2780 = vld [vmem:[%s3 + $0x70] sm:$0xff]
    %v2781 = vld [vmem:[%s3 + $0x78] sm:$0xff]
    %v2782 = vld [vmem:[%s3 + $0x80] sm:$0xff]
    %v2783 = vld [vmem:[%s3 + $0x88] sm:$0xff]
    %v2784 = vld [vmem:[%s3 + $0x90] sm:$0xff]
    %v2785 = vld [vmem:[%s3 + $0x98] sm:$0xff]
    %v2786 = vld [vmem:[%s3 + $0xa0] sm:$0xff]
    %v2787 = vld [vmem:[%s3 + $0xa8] sm:$0xff]
    %v2788 = vld [vmem:[%s3 + $0xb0] sm:$0xff]
    %v2789 = vld [vmem:[%s3 + $0xb8] sm:$0xff]
    %v2790 = vld [vmem:[%s3 + $0xc0] sm:$0xff]
    %v2791 = vld [vmem:[%s3 + $0xc8] sm:$0xff]
    %v2792 = vld [vmem:[%s3 + $0xd0] sm:$0xff]
    %v2793 = vld [vmem:[%s3 + $0xd8] sm:$0xff]
    %v2794 = vld [vmem:[%s3 + $0xe0] sm:$0xff]
    %v2795 = vld [vmem:[%s3 + $0xe8] sm:$0xff]
    %v2796 = vld [vmem:[%s3 + $0xf0] sm:$0xff]
    %v2797 = vld [vmem:[%s3 + $0xf8] sm:$0xff]
    %v2798 = vld [vmem:[%s3 + $0x100] sm:$0xff]
    %v2799 = vld [vmem:[%s3 + $0x108] sm:$0xff]
    %v2800 = vld [vmem:[%s3 + $0x110] sm:$0xff]
    %v2801 = vld [vmem:[%s3 + $0x118] sm:$0xff]
    %v2802 = vld [vmem:[%s3 + $0x120] sm:$0xff]
    %v2803 = vld [vmem:[%s3 + $0x128] sm:$0xff]
    %v2804 = vld [vmem:[%s3 + $0x130] sm:$0xff]
    %v2805 = vld [vmem:[%s3 + $0x138] sm:$0xff]
    %v2806 = vld [vmem:[%s3 + $0x140] sm:$0xff]
    %v2807 = vld [vmem:[%s3 + $0x148] sm:$0xff]
    %v2808 = vld [vmem:[%s3 + $0x150] sm:$0xff]
    %v2809 = vld [vmem:[%s3 + $0x158] sm:$0xff]
    %v2810 = vld [vmem:[%s3 + $0x160] sm:$0xff]
    %v2811 = vld [vmem:[%s3 + $0x168] sm:$0xff]
    %v2812 = vld [vmem:[%s3 + $0x170] sm:$0xff]
    %v2813 = vld [vmem:[%s3 + $0x178] sm:$0xff]
    %v2814 = vld [vmem:[%s3 + $0x180] sm:$0xff]
    %v2815 = vld [vmem:[%s3 + $0x188] sm:$0xff]
    %v2816 = vld [vmem:[%s3 + $0x190] sm:$0xff]
    %v2817 = vld [vmem:[%s3 + $0x198] sm:$0xff]
    %v2818 = vld [vmem:[%s3 + $0x1a0] sm:$0xff]
    %v2819 = vld [vmem:[%s3 + $0x1a8] sm:$0xff]
    %v2820 = vld [vmem:[%s3 + $0x1b0] sm:$0xff]
    %v2821 = vld [vmem:[%s3 + $0x1b8] sm:$0xff]
    %v2822 = vld [vmem:[%s3 + $0x1c0] sm:$0xff]
    %v2823 = vld [vmem:[%s3 + $0x1c8] sm:$0xff]
    %v2824 = vld [vmem:[%s3 + $0x1d0] sm:$0xff]
    %v2825 = vld [vmem:[%s3 + $0x1d8] sm:$0xff]
    %v2826 = vld [vmem:[%s3 + $0x1e0] sm:$0xff]
    %v2827 = vld [vmem:[%s3 + $0x1e8] sm:$0xff]
    %v2828 = vld [vmem:[%s3 + $0x1f0] sm:$0xff]
    %v2829 = vld [vmem:[%s3 + $0x1f8] sm:$0xff]
    %v2830 = vld [vmem:[%s3 + $0x200] sm:$0xff]
    %v2831 = vld [vmem:[%s3 + $0x208] sm:$0xff]
    %v2832 = vld [vmem:[%s3 + $0x210] sm:$0xff]
    %v2833 = vld [vmem:[%s3 + $0x218] sm:$0xff]
    %v2834 = vld [vmem:[%s3 + $0x220] sm:$0xff]
    %v2835 = vld [vmem:[%s3 + $0x228] sm:$0xff]
    %v2836 = vmul.f32 %v2752, %v2766
    %v2837 = vmul.f32 %v2753, %v2767
    %v2838 = vmul.f32 %v2754, %v2768
    %v2839 = vmul.f32 %v2755, %v2769
    %v2840 = vmul.f32 %v2756, %v2770
    %v2841 = vmul.f32 %v2757, %v2771
    %v2842 = vmul.f32 %v2758, %v2772
    %v2843 = vmul.f32 %v2752, %v2773
    %v2844 = vmul.f32 %v2753, %v2774
    %v2845 = vmul.f32 %v2754, %v2775
    %v2846 = vmul.f32 %v2755, %v2776
    %v2847 = vmul.f32 %v2756, %v2777
    %v2848 = vmul.f32 %v2757, %v2778
    %v2849 = vmul.f32 %v2758, %v2779
    %v2850 = vmul.f32 %v2752, %v2780
    %v2851 = vmul.f32 %v2753, %v2781
    %v2852 = vmul.f32 %v2754, %v2782
    %v2853 = vmul.f32 %v2755, %v2783
    %v2854 = vmul.f32 %v2756, %v2784
    %v2855 = vmul.f32 %v2757, %v2785
    %v2856 = vmul.f32 %v2758, %v2786
    %v2857 = vmul.f32 %v2752, %v2787
    %v2858 = vmul.f32 %v2753, %v2788
    %v2859 = vmul.f32 %v2754, %v2789
    %v2860 = vmul.f32 %v2755, %v2790
    %v2861 = vmul.f32 %v2756, %v2791
    %v2862 = vmul.f32 %v2757, %v2792
    %v2863 = vmul.f32 %v2758, %v2793
    %v2864 = vmul.f32 %v2752, %v2794
    %v2865 = vmul.f32 %v2753, %v2795
    %v2866 = vmul.f32 %v2754, %v2796
    %v2867 = vmul.f32 %v2755, %v2797
    %v2868 = vmul.f32 %v2756, %v2798
    %v2869 = vmul.f32 %v2757, %v2799
    %v2870 = vmul.f32 %v2758, %v2800
    %v2871 = vmul.f32 %v2752, %v2801
    %v2872 = vmul.f32 %v2753, %v2802
    %v2873 = vmul.f32 %v2754, %v2803
    %v2874 = vmul.f32 %v2755, %v2804
    %v2875 = vmul.f32 %v2756, %v2805
    %v2876 = vmul.f32 %v2757, %v2806
    %v2877 = vmul.f32 %v2758, %v2807
    %v2878 = vmul.f32 %v2752, %v2808
    %v2879 = vmul.f32 %v2753, %v2809
    %v2880 = vmul.f32 %v2754, %v2810
    %v2881 = vmul.f32 %v2755, %v2811
    %v2882 = vmul.f32 %v2756, %v2812
    %v2883 = vmul.f32 %v2757, %v2813
    %v2884 = vmul.f32 %v2758, %v2814
    %v2885 = vmul.f32 %v2752, %v2815
    %v2886 = vmul.f32 %v2753, %v2816
    %v2887 = vmul.f32 %v2754, %v2817
    %v2888 = vmul.f32 %v2755, %v2818
    %v2889 = vmul.f32 %v2756, %v2819
    %v2890 = vmul.f32 %v2757, %v2820
    %v2891 = vmul.f32 %v2758, %v2821
    %v2892 = vmul.f32 %v2752, %v2822
    %v2893 = vmul.f32 %v2753, %v2823
    %v2894 = vmul.f32 %v2754, %v2824
    %v2895 = vmul.f32 %v2755, %v2825
    %v2896 = vmul.f32 %v2756, %v2826
    %v2897 = vmul.f32 %v2757, %v2827
    %v2898 = vmul.f32 %v2758, %v2828
    %v2899 = vmul.f32 %v2752, %v2829
    %v2900 = vmul.f32 %v2753, %v2830
    %v2901 = vmul.f32 %v2754, %v2831
    %v2902 = vmul.f32 %v2755, %v2832
    %v2903 = vmul.f32 %v2756, %v2833
    %v2904 = vmul.f32 %v2757, %v2834
    %v2905 = vmul.f32 %v2758, %v2835
    %v2906 = vmul.f32 %v2759, %v2766
    %v2907 = vmul.f32 %v2760, %v2767
    %v2908 = vmul.f32 %v2761, %v2768
    %v2909 = vmul.f32 %v2762, %v2769
    %v2910 = vmul.f32 %v2763, %v2770
    %v2911 = vmul.f32 %v2764, %v2771
    %v2912 = vmul.f32 %v2765, %v2772
    %v2913 = vmul.f32 %v2759, %v2773
    %v2914 = vmul.f32 %v2760, %v2774
    %v2915 = vmul.f32 %v2761, %v2775
    %v2916 = vmul.f32 %v2762, %v2776
    %v2917 = vmul.f32 %v2763, %v2777
    %v2918 = vmul.f32 %v2764, %v2778
    %v2919 = vmul.f32 %v2765, %v2779
    %v2920 = vmul.f32 %v2759, %v2780
    %v2921 = vmul.f32 %v2760, %v2781
    %v2922 = vmul.f32 %v2761, %v2782
    %v2923 = vmul.f32 %v2762, %v2783
    %v2924 = vmul.f32 %v2763, %v2784
    %v2925 = vmul.f32 %v2764, %v2785
    %v2926 = vmul.f32 %v2765, %v2786
    %v2927 = vmul.f32 %v2759, %v2787
    %v2928 = vmul.f32 %v2760, %v2788
    %v2929 = vmul.f32 %v2761, %v2789
    %v2930 = vmul.f32 %v2762, %v2790
    %v2931 = vmul.f32 %v2763, %v2791
    %v2932 = vmul.f32 %v2764, %v2792
    %v2933 = vmul.f32 %v2765, %v2793
    %v2934 = vmul.f32 %v2759, %v2794
    %v2935 = vmul.f32 %v2760, %v2795
    %v2936 = vmul.f32 %v2761, %v2796
    %v2937 = vmul.f32 %v2762, %v2797
    %v2938 = vmul.f32 %v2763, %v2798
    %v2939 = vmul.f32 %v2764, %v2799
    %v2940 = vmul.f32 %v2765, %v2800
    %v2941 = vmul.f32 %v2759, %v2801
    %v2942 = vmul.f32 %v2760, %v2802
    %v2943 = vmul.f32 %v2761, %v2803
    %v2944 = vmul.f32 %v2762, %v2804
    %v2945 = vmul.f32 %v2763, %v2805
    %v2946 = vmul.f32 %v2764, %v2806
    %v2947 = vmul.f32 %v2765, %v2807
    %v2948 = vmul.f32 %v2759, %v2808
    %v2949 = vmul.f32 %v2760, %v2809
    %v2950 = vmul.f32 %v2761, %v2810
    %v2951 = vmul.f32 %v2762, %v2811
    %v2952 = vmul.f32 %v2763, %v2812
    %v2953 = vmul.f32 %v2764, %v2813
    %v2954 = vmul.f32 %v2765, %v2814
    %v2955 = vmul.f32 %v2759, %v2815
    %v2956 = vmul.f32 %v2760, %v2816
    %v2957 = vmul.f32 %v2761, %v2817
    %v2958 = vmul.f32 %v2762, %v2818
    %v2959 = vmul.f32 %v2763, %v2819
    %v2960 = vmul.f32 %v2764, %v2820
    %v2961 = vmul.f32 %v2765, %v2821
    %v2962 = vmul.f32 %v2759, %v2822
    %v2963 = vmul.f32 %v2760, %v2823
    %v2964 = vmul.f32 %v2761, %v2824
    %v2965 = vmul.f32 %v2762, %v2825
    %v2966 = vmul.f32 %v2763, %v2826
    %v2967 = vmul.f32 %v2764, %v2827
    %v2968 = vmul.f32 %v2765, %v2828
    %v2969 = vmul.f32 %v2759, %v2829
    %v2970 = vmul.f32 %v2760, %v2830
    %v2971 = vmul.f32 %v2761, %v2831
    %v2972 = vmul.f32 %v2762, %v2832
    %v2973 = vmul.f32 %v2763, %v2833
    %v2974 = vmul.f32 %v2764, %v2834
    %v2975 = vmul.f32 %v2765, %v2835
    %v2976 = vsel %vm684, %v2836, 0.0
    %2977 = vadd.xlane.f32.xlu0 %v2976
    %v2978 = vpop.xlane.xlu0 %2977
    %v2979 = vsel %vm684, %v2837, 0.0
    %2980 = vadd.xlane.f32.xlu0 %v2979
    %v2981 = vpop.xlane.xlu0 %2980
    %v2982 = vsel %vm684, %v2838, 0.0
    %2983 = vadd.xlane.f32.xlu0 %v2982
    %v2984 = vpop.xlane.xlu0 %2983
    %v2985 = vsel %vm684, %v2839, 0.0
    %2986 = vadd.xlane.f32.xlu0 %v2985
    %v2987 = vpop.xlane.xlu0 %2986
    %v2988 = vsel %vm684, %v2840, 0.0
    %2989 = vadd.xlane.f32.xlu0 %v2988
    %v2990 = vpop.xlane.xlu0 %2989
    %v2991 = vsel %vm684, %v2841, 0.0
    %2992 = vadd.xlane.f32.xlu0 %v2991
    %v2993 = vpop.xlane.xlu0 %2992
    %v2994 = vsel %vm684, %v2842, 0.0
    %2995 = vadd.xlane.f32.xlu0 %v2994
    %v2996 = vpop.xlane.xlu0 %2995
    %v2997 = vsel %vm684, %v2843, 0.0
    %2998 = vadd.xlane.f32.xlu0 %v2997
    %v2999 = vpop.xlane.xlu0 %2998
    %v3000 = vsel %vm684, %v2844, 0.0
    %3001 = vadd.xlane.f32.xlu0 %v3000
    %v3002 = vpop.xlane.xlu0 %3001
    %v3003 = vsel %vm684, %v2845, 0.0
    %3004 = vadd.xlane.f32.xlu0 %v3003
    %v3005 = vpop.xlane.xlu0 %3004
    %v3006 = vsel %vm684, %v2846, 0.0
    %3007 = vadd.xlane.f32.xlu0 %v3006
    %v3008 = vpop.xlane.xlu0 %3007
    %v3009 = vsel %vm684, %v2847, 0.0
    %3010 = vadd.xlane.f32.xlu0 %v3009
    %v3011 = vpop.xlane.xlu0 %3010
    %v3012 = vsel %vm684, %v2848, 0.0
    %3013 = vadd.xlane.f32.xlu0 %v3012
    %v3014 = vpop.xlane.xlu0 %3013
    %v3015 = vsel %vm684, %v2849, 0.0
    %3016 = vadd.xlane.f32.xlu0 %v3015
    %v3017 = vpop.xlane.xlu0 %3016
    %v3018 = vsel %vm684, %v2850, 0.0
    %3019 = vadd.xlane.f32.xlu0 %v3018
    %v3020 = vpop.xlane.xlu0 %3019
    %v3021 = vsel %vm684, %v2851, 0.0
    %3022 = vadd.xlane.f32.xlu0 %v3021
    %v3023 = vpop.xlane.xlu0 %3022
    %v3024 = vsel %vm684, %v2852, 0.0
    %3025 = vadd.xlane.f32.xlu0 %v3024
    %v3026 = vpop.xlane.xlu0 %3025
    %v3027 = vsel %vm684, %v2853, 0.0
    %3028 = vadd.xlane.f32.xlu0 %v3027
    %v3029 = vpop.xlane.xlu0 %3028
    %v3030 = vsel %vm684, %v2854, 0.0
    %3031 = vadd.xlane.f32.xlu0 %v3030
    %v3032 = vpop.xlane.xlu0 %3031
    %v3033 = vsel %vm684, %v2855, 0.0
    %3034 = vadd.xlane.f32.xlu0 %v3033
    %v3035 = vpop.xlane.xlu0 %3034
    %v3036 = vsel %vm684, %v2856, 0.0
    %3037 = vadd.xlane.f32.xlu0 %v3036
    %v3038 = vpop.xlane.xlu0 %3037
    %v3039 = vsel %vm684, %v2857, 0.0
    %3040 = vadd.xlane.f32.xlu0 %v3039
    %v3041 = vpop.xlane.xlu0 %3040
    %v3042 = vsel %vm684, %v2858, 0.0
    %3043 = vadd.xlane.f32.xlu0 %v3042
    %v3044 = vpop.xlane.xlu0 %3043
    %v3045 = vsel %vm684, %v2859, 0.0
    %3046 = vadd.xlane.f32.xlu0 %v3045
    %v3047 = vpop.xlane.xlu0 %3046
    %v3048 = vsel %vm684, %v2860, 0.0
    %3049 = vadd.xlane.f32.xlu0 %v3048
    %v3050 = vpop.xlane.xlu0 %3049
    %v3051 = vsel %vm684, %v2861, 0.0
    %3052 = vadd.xlane.f32.xlu0 %v3051
    %v3053 = vpop.xlane.xlu0 %3052
    %v3054 = vsel %vm684, %v2862, 0.0
    %3055 = vadd.xlane.f32.xlu0 %v3054
    %v3056 = vpop.xlane.xlu0 %3055
    %v3057 = vsel %vm684, %v2863, 0.0
    %3058 = vadd.xlane.f32.xlu0 %v3057
    %v3059 = vpop.xlane.xlu0 %3058
    %v3060 = vsel %vm684, %v2864, 0.0
    %3061 = vadd.xlane.f32.xlu0 %v3060
    %v3062 = vpop.xlane.xlu0 %3061
    %v3063 = vsel %vm684, %v2865, 0.0
    %3064 = vadd.xlane.f32.xlu0 %v3063
    %v3065 = vpop.xlane.xlu0 %3064
    %v3066 = vsel %vm684, %v2866, 0.0
    %3067 = vadd.xlane.f32.xlu0 %v3066
    %v3068 = vpop.xlane.xlu0 %3067
    %v3069 = vsel %vm684, %v2867, 0.0
    %3070 = vadd.xlane.f32.xlu0 %v3069
    %v3071 = vpop.xlane.xlu0 %3070
    %v3072 = vsel %vm684, %v2868, 0.0
    %3073 = vadd.xlane.f32.xlu0 %v3072
    %v3074 = vpop.xlane.xlu0 %3073
    %v3075 = vsel %vm684, %v2869, 0.0
    %3076 = vadd.xlane.f32.xlu0 %v3075
    %v3077 = vpop.xlane.xlu0 %3076
    %v3078 = vsel %vm684, %v2870, 0.0
    %3079 = vadd.xlane.f32.xlu0 %v3078
    %v3080 = vpop.xlane.xlu0 %3079
    %v3081 = vsel %vm684, %v2871, 0.0
    %3082 = vadd.xlane.f32.xlu0 %v3081
    %v3083 = vpop.xlane.xlu0 %3082
    %v3084 = vsel %vm684, %v2872, 0.0
    %3085 = vadd.xlane.f32.xlu0 %v3084
    %v3086 = vpop.xlane.xlu0 %3085
    %v3087 = vsel %vm684, %v2873, 0.0
    %3088 = vadd.xlane.f32.xlu0 %v3087
    %v3089 = vpop.xlane.xlu0 %3088
    %v3090 = vsel %vm684, %v2874, 0.0
    %3091 = vadd.xlane.f32.xlu0 %v3090
    %v3092 = vpop.xlane.xlu0 %3091
    %v3093 = vsel %vm684, %v2875, 0.0
    %3094 = vadd.xlane.f32.xlu0 %v3093
    %v3095 = vpop.xlane.xlu0 %3094
    %v3096 = vsel %vm684, %v2876, 0.0
    %3097 = vadd.xlane.f32.xlu0 %v3096
    %v3098 = vpop.xlane.xlu0 %3097
    %v3099 = vsel %vm684, %v2877, 0.0
    %3100 = vadd.xlane.f32.xlu0 %v3099
    %v3101 = vpop.xlane.xlu0 %3100
    %v3102 = vsel %vm684, %v2878, 0.0
    %3103 = vadd.xlane.f32.xlu0 %v3102
    %v3104 = vpop.xlane.xlu0 %3103
    %v3105 = vsel %vm684, %v2879, 0.0
    %3106 = vadd.xlane.f32.xlu0 %v3105
    %v3107 = vpop.xlane.xlu0 %3106
    %v3108 = vsel %vm684, %v2880, 0.0
    %3109 = vadd.xlane.f32.xlu0 %v3108
    %v3110 = vpop.xlane.xlu0 %3109
    %v3111 = vsel %vm684, %v2881, 0.0
    %3112 = vadd.xlane.f32.xlu0 %v3111
    %v3113 = vpop.xlane.xlu0 %3112
    %v3114 = vsel %vm684, %v2882, 0.0
    %3115 = vadd.xlane.f32.xlu0 %v3114
    %v3116 = vpop.xlane.xlu0 %3115
    %v3117 = vsel %vm684, %v2883, 0.0
    %3118 = vadd.xlane.f32.xlu0 %v3117
    %v3119 = vpop.xlane.xlu0 %3118
    %v3120 = vsel %vm684, %v2884, 0.0
    %3121 = vadd.xlane.f32.xlu0 %v3120
    %v3122 = vpop.xlane.xlu0 %3121
    %v3123 = vsel %vm684, %v2885, 0.0
    %3124 = vadd.xlane.f32.xlu0 %v3123
    %v3125 = vpop.xlane.xlu0 %3124
    %v3126 = vsel %vm684, %v2886, 0.0
    %3127 = vadd.xlane.f32.xlu0 %v3126
    %v3128 = vpop.xlane.xlu0 %3127
    %v3129 = vsel %vm684, %v2887, 0.0
    %3130 = vadd.xlane.f32.xlu0 %v3129
    %v3131 = vpop.xlane.xlu0 %3130
    %v3132 = vsel %vm684, %v2888, 0.0
    %3133 = vadd.xlane.f32.xlu0 %v3132
    %v3134 = vpop.xlane.xlu0 %3133
    %v3135 = vsel %vm684, %v2889, 0.0
    %3136 = vadd.xlane.f32.xlu0 %v3135
    %v3137 = vpop.xlane.xlu0 %3136
    %v3138 = vsel %vm684, %v2890, 0.0
    %3139 = vadd.xlane.f32.xlu0 %v3138
    %v3140 = vpop.xlane.xlu0 %3139
    %v3141 = vsel %vm684, %v2891, 0.0
    %3142 = vadd.xlane.f32.xlu0 %v3141
    %v3143 = vpop.xlane.xlu0 %3142
    %v3144 = vsel %vm684, %v2892, 0.0
    %3145 = vadd.xlane.f32.xlu0 %v3144
    %v3146 = vpop.xlane.xlu0 %3145
    %v3147 = vsel %vm684, %v2893, 0.0
    %3148 = vadd.xlane.f32.xlu0 %v3147
    %v3149 = vpop.xlane.xlu0 %3148
    %v3150 = vsel %vm684, %v2894, 0.0
    %3151 = vadd.xlane.f32.xlu0 %v3150
    %v3152 = vpop.xlane.xlu0 %3151
    %v3153 = vsel %vm684, %v2895, 0.0
    %3154 = vadd.xlane.f32.xlu0 %v3153
    %v3155 = vpop.xlane.xlu0 %3154
    %v3156 = vsel %vm684, %v2896, 0.0
    %3157 = vadd.xlane.f32.xlu0 %v3156
    %v3158 = vpop.xlane.xlu0 %3157
    %v3159 = vsel %vm684, %v2897, 0.0
    %3160 = vadd.xlane.f32.xlu0 %v3159
    %v3161 = vpop.xlane.xlu0 %3160
    %v3162 = vsel %vm684, %v2898, 0.0
    %3163 = vadd.xlane.f32.xlu0 %v3162
    %v3164 = vpop.xlane.xlu0 %3163
    %v3165 = vsel %vm684, %v2899, 0.0
    %3166 = vadd.xlane.f32.xlu0 %v3165
    %v3167 = vpop.xlane.xlu0 %3166
    %v3168 = vsel %vm684, %v2900, 0.0
    %3169 = vadd.xlane.f32.xlu0 %v3168
    %v3170 = vpop.xlane.xlu0 %3169
    %v3171 = vsel %vm684, %v2901, 0.0
    %3172 = vadd.xlane.f32.xlu0 %v3171
    %v3173 = vpop.xlane.xlu0 %3172
    %v3174 = vsel %vm684, %v2902, 0.0
    %3175 = vadd.xlane.f32.xlu0 %v3174
    %v3176 = vpop.xlane.xlu0 %3175
    %v3177 = vsel %vm684, %v2903, 0.0
    %3178 = vadd.xlane.f32.xlu0 %v3177
    %v3179 = vpop.xlane.xlu0 %3178
    %v3180 = vsel %vm684, %v2904, 0.0
    %3181 = vadd.xlane.f32.xlu0 %v3180
    %v3182 = vpop.xlane.xlu0 %3181
    %v3183 = vsel %vm684, %v2905, 0.0
    %3184 = vadd.xlane.f32.xlu0 %v3183
    %v3185 = vpop.xlane.xlu0 %3184
    %v3186 = vsel %vm684, %v2906, 0.0
    %3187 = vadd.xlane.f32.xlu0 %v3186
    %v3188 = vpop.xlane.xlu0 %3187
    %v3189 = vsel %vm684, %v2907, 0.0
    %3190 = vadd.xlane.f32.xlu0 %v3189
    %v3191 = vpop.xlane.xlu0 %3190
    %v3192 = vsel %vm684, %v2908, 0.0
    %3193 = vadd.xlane.f32.xlu0 %v3192
    %v3194 = vpop.xlane.xlu0 %3193
    %v3195 = vsel %vm684, %v2909, 0.0
    %3196 = vadd.xlane.f32.xlu0 %v3195
    %v3197 = vpop.xlane.xlu0 %3196
    %v3198 = vsel %vm684, %v2910, 0.0
    %3199 = vadd.xlane.f32.xlu0 %v3198
    %v3200 = vpop.xlane.xlu0 %3199
    %v3201 = vsel %vm684, %v2911, 0.0
    %3202 = vadd.xlane.f32.xlu0 %v3201
    %v3203 = vpop.xlane.xlu0 %3202
    %v3204 = vsel %vm684, %v2912, 0.0
    %3205 = vadd.xlane.f32.xlu0 %v3204
    %v3206 = vpop.xlane.xlu0 %3205
    %v3207 = vsel %vm684, %v2913, 0.0
    %3208 = vadd.xlane.f32.xlu0 %v3207
    %v3209 = vpop.xlane.xlu0 %3208
    %v3210 = vsel %vm684, %v2914, 0.0
    %3211 = vadd.xlane.f32.xlu0 %v3210
    %v3212 = vpop.xlane.xlu0 %3211
    %v3213 = vsel %vm684, %v2915, 0.0
    %3214 = vadd.xlane.f32.xlu0 %v3213
    %v3215 = vpop.xlane.xlu0 %3214
    %v3216 = vsel %vm684, %v2916, 0.0
    %3217 = vadd.xlane.f32.xlu0 %v3216
    %v3218 = vpop.xlane.xlu0 %3217
    %v3219 = vsel %vm684, %v2917, 0.0
    %3220 = vadd.xlane.f32.xlu0 %v3219
    %v3221 = vpop.xlane.xlu0 %3220
    %v3222 = vsel %vm684, %v2918, 0.0
    %3223 = vadd.xlane.f32.xlu0 %v3222
    %v3224 = vpop.xlane.xlu0 %3223
    %v3225 = vsel %vm684, %v2919, 0.0
    %3226 = vadd.xlane.f32.xlu0 %v3225
    %v3227 = vpop.xlane.xlu0 %3226
    %v3228 = vsel %vm684, %v2920, 0.0
    %3229 = vadd.xlane.f32.xlu0 %v3228
    %v3230 = vpop.xlane.xlu0 %3229
    %v3231 = vsel %vm684, %v2921, 0.0
    %3232 = vadd.xlane.f32.xlu0 %v3231
    %v3233 = vpop.xlane.xlu0 %3232
    %v3234 = vsel %vm684, %v2922, 0.0
    %3235 = vadd.xlane.f32.xlu0 %v3234
    %v3236 = vpop.xlane.xlu0 %3235
    %v3237 = vsel %vm684, %v2923, 0.0
    %3238 = vadd.xlane.f32.xlu0 %v3237
    %v3239 = vpop.xlane.xlu0 %3238
    %v3240 = vsel %vm684, %v2924, 0.0
    %3241 = vadd.xlane.f32.xlu0 %v3240
    %v3242 = vpop.xlane.xlu0 %3241
    %v3243 = vsel %vm684, %v2925, 0.0
    %3244 = vadd.xlane.f32.xlu0 %v3243
    %v3245 = vpop.xlane.xlu0 %3244
    %v3246 = vsel %vm684, %v2926, 0.0
    %3247 = vadd.xlane.f32.xlu0 %v3246
    %v3248 = vpop.xlane.xlu0 %3247
    %v3249 = vsel %vm684, %v2927, 0.0
    %3250 = vadd.xlane.f32.xlu0 %v3249
    %v3251 = vpop.xlane.xlu0 %3250
    %v3252 = vsel %vm684, %v2928, 0.0
    %3253 = vadd.xlane.f32.xlu0 %v3252
    %v3254 = vpop.xlane.xlu0 %3253
    %v3255 = vsel %vm684, %v2929, 0.0
    %3256 = vadd.xlane.f32.xlu0 %v3255
    %v3257 = vpop.xlane.xlu0 %3256
    %v3258 = vsel %vm684, %v2930, 0.0
    %3259 = vadd.xlane.f32.xlu0 %v3258
    %v3260 = vpop.xlane.xlu0 %3259
    %v3261 = vsel %vm684, %v2931, 0.0
    %3262 = vadd.xlane.f32.xlu0 %v3261
    %v3263 = vpop.xlane.xlu0 %3262
    %v3264 = vsel %vm684, %v2932, 0.0
    %3265 = vadd.xlane.f32.xlu0 %v3264
    %v3266 = vpop.xlane.xlu0 %3265
    %v3267 = vsel %vm684, %v2933, 0.0
    %3268 = vadd.xlane.f32.xlu0 %v3267
    %v3269 = vpop.xlane.xlu0 %3268
    %v3270 = vsel %vm684, %v2934, 0.0
    %3271 = vadd.xlane.f32.xlu0 %v3270
    %v3272 = vpop.xlane.xlu0 %3271
    %v3273 = vsel %vm684, %v2935, 0.0
    %3274 = vadd.xlane.f32.xlu0 %v3273
    %v3275 = vpop.xlane.xlu0 %3274
    %v3276 = vsel %vm684, %v2936, 0.0
    %3277 = vadd.xlane.f32.xlu0 %v3276
    %v3278 = vpop.xlane.xlu0 %3277
    %v3279 = vsel %vm684, %v2937, 0.0
    %3280 = vadd.xlane.f32.xlu0 %v3279
    %v3281 = vpop.xlane.xlu0 %3280
    %v3282 = vsel %vm684, %v2938, 0.0
    %3283 = vadd.xlane.f32.xlu0 %v3282
    %v3284 = vpop.xlane.xlu0 %3283
    %v3285 = vsel %vm684, %v2939, 0.0
    %3286 = vadd.xlane.f32.xlu0 %v3285
    %v3287 = vpop.xlane.xlu0 %3286
    %v3288 = vsel %vm684, %v2940, 0.0
    %3289 = vadd.xlane.f32.xlu0 %v3288
    %v3290 = vpop.xlane.xlu0 %3289
    %v3291 = vsel %vm684, %v2941, 0.0
    %3292 = vadd.xlane.f32.xlu0 %v3291
    %v3293 = vpop.xlane.xlu0 %3292
    %v3294 = vsel %vm684, %v2942, 0.0
    %3295 = vadd.xlane.f32.xlu0 %v3294
    %v3296 = vpop.xlane.xlu0 %3295
    %v3297 = vsel %vm684, %v2943, 0.0
    %3298 = vadd.xlane.f32.xlu0 %v3297
    %v3299 = vpop.xlane.xlu0 %3298
    %v3300 = vsel %vm684, %v2944, 0.0
    %3301 = vadd.xlane.f32.xlu0 %v3300
    %v3302 = vpop.xlane.xlu0 %3301
    %v3303 = vsel %vm684, %v2945, 0.0
    %3304 = vadd.xlane.f32.xlu0 %v3303
    %v3305 = vpop.xlane.xlu0 %3304
    %v3306 = vsel %vm684, %v2946, 0.0
    %3307 = vadd.xlane.f32.xlu0 %v3306
    %v3308 = vpop.xlane.xlu0 %3307
    %v3309 = vsel %vm684, %v2947, 0.0
    %3310 = vadd.xlane.f32.xlu0 %v3309
    %v3311 = vpop.xlane.xlu0 %3310
    %v3312 = vsel %vm684, %v2948, 0.0
    %3313 = vadd.xlane.f32.xlu0 %v3312
    %v3314 = vpop.xlane.xlu0 %3313
    %v3315 = vsel %vm684, %v2949, 0.0
    %3316 = vadd.xlane.f32.xlu0 %v3315
    %v3317 = vpop.xlane.xlu0 %3316
    %v3318 = vsel %vm684, %v2950, 0.0
    %3319 = vadd.xlane.f32.xlu0 %v3318
    %v3320 = vpop.xlane.xlu0 %3319
    %v3321 = vsel %vm684, %v2951, 0.0
    %3322 = vadd.xlane.f32.xlu0 %v3321
    %v3323 = vpop.xlane.xlu0 %3322
    %v3324 = vsel %vm684, %v2952, 0.0
    %3325 = vadd.xlane.f32.xlu0 %v3324
    %v3326 = vpop.xlane.xlu0 %3325
    %v3327 = vsel %vm684, %v2953, 0.0
    %3328 = vadd.xlane.f32.xlu0 %v3327
    %v3329 = vpop.xlane.xlu0 %3328
    %v3330 = vsel %vm684, %v2954, 0.0
    %3331 = vadd.xlane.f32.xlu0 %v3330
    %v3332 = vpop.xlane.xlu0 %3331
    %v3333 = vsel %vm684, %v2955, 0.0
    %3334 = vadd.xlane.f32.xlu0 %v3333
    %v3335 = vpop.xlane.xlu0 %3334
    %v3336 = vsel %vm684, %v2956, 0.0
    %3337 = vadd.xlane.f32.xlu0 %v3336
    %v3338 = vpop.xlane.xlu0 %3337
    %v3339 = vsel %vm684, %v2957, 0.0
    %3340 = vadd.xlane.f32.xlu0 %v3339
    %v3341 = vpop.xlane.xlu0 %3340
    %v3342 = vsel %vm684, %v2958, 0.0
    %3343 = vadd.xlane.f32.xlu0 %v3342
    %v3344 = vpop.xlane.xlu0 %3343
    %v3345 = vsel %vm684, %v2959, 0.0
    %3346 = vadd.xlane.f32.xlu0 %v3345
    %v3347 = vpop.xlane.xlu0 %3346
    %v3348 = vsel %vm684, %v2960, 0.0
    %3349 = vadd.xlane.f32.xlu0 %v3348
    %v3350 = vpop.xlane.xlu0 %3349
    %v3351 = vsel %vm684, %v2961, 0.0
    %3352 = vadd.xlane.f32.xlu0 %v3351
    %v3353 = vpop.xlane.xlu0 %3352
    %v3354 = vsel %vm684, %v2962, 0.0
    %3355 = vadd.xlane.f32.xlu0 %v3354
    %v3356 = vpop.xlane.xlu0 %3355
    %v3357 = vsel %vm684, %v2963, 0.0
    %3358 = vadd.xlane.f32.xlu0 %v3357
    %v3359 = vpop.xlane.xlu0 %3358
    %v3360 = vsel %vm684, %v2964, 0.0
    %3361 = vadd.xlane.f32.xlu0 %v3360
    %v3362 = vpop.xlane.xlu0 %3361
    %v3363 = vsel %vm684, %v2965, 0.0
    %3364 = vadd.xlane.f32.xlu0 %v3363
    %v3365 = vpop.xlane.xlu0 %3364
    %v3366 = vsel %vm684, %v2966, 0.0
    %3367 = vadd.xlane.f32.xlu0 %v3366
    %v3368 = vpop.xlane.xlu0 %3367
    %v3369 = vsel %vm684, %v2967, 0.0
    %3370 = vadd.xlane.f32.xlu0 %v3369
    %v3371 = vpop.xlane.xlu0 %3370
    %v3372 = vsel %vm684, %v2968, 0.0
    %3373 = vadd.xlane.f32.xlu0 %v3372
    %v3374 = vpop.xlane.xlu0 %3373
    %v3375 = vsel %vm684, %v2969, 0.0
    %3376 = vadd.xlane.f32.xlu0 %v3375
    %v3377 = vpop.xlane.xlu0 %3376
    %v3378 = vsel %vm684, %v2970, 0.0
    %3379 = vadd.xlane.f32.xlu0 %v3378
    %v3380 = vpop.xlane.xlu0 %3379
    %v3381 = vsel %vm684, %v2971, 0.0
    %3382 = vadd.xlane.f32.xlu0 %v3381
    %v3383 = vpop.xlane.xlu0 %3382
    %v3384 = vsel %vm684, %v2972, 0.0
    %3385 = vadd.xlane.f32.xlu0 %v3384
    %v3386 = vpop.xlane.xlu0 %3385
    %v3387 = vsel %vm684, %v2973, 0.0
    %3388 = vadd.xlane.f32.xlu0 %v3387
    %v3389 = vpop.xlane.xlu0 %3388
    %v3390 = vsel %vm684, %v2974, 0.0
    %3391 = vadd.xlane.f32.xlu0 %v3390
    %v3392 = vpop.xlane.xlu0 %3391
    %v3393 = vsel %vm684, %v2975, 0.0
    %3394 = vadd.xlane.f32.xlu0 %v3393
    %v3395 = vpop.xlane.xlu0 %3394
    %v3536 = vlaneseq
    %v3537 = vand.u32 %v3536, 127
    %v3538 = vperm.slane %v2978, %v3537
    %v3539 = vadd.s32 %v3537, 4294967288
    %v3540 = vperm.slane %v2981, %v3539
    %vm3541 = vcmask 130112
    %v3542 = vsel %vm3541, %v3540, %v3538
    %v3543 = vadd.s32 %v3537, 4294967280
    %v3544 = vperm.slane %v2984, %v3543
    %vm3545 = vcmask 195712
    %v3546 = vsel %vm3545, %v3544, %v3542
    %v3547 = vadd.s32 %v3537, 4294967272
    %v3548 = vperm.slane %v2987, %v3547
    %vm3549 = vcmask 261312
    %v3550 = vsel %vm3549, %v3548, %v3546
    %v3551 = vadd.s32 %v3537, 4294967264
    %v3552 = vperm.slane %v2990, %v3551
    %vm3553 = vcmask 326912
    %v3554 = vsel %vm3553, %v3552, %v3550
    %v3555 = vadd.s32 %v3537, 4294967256
    %v3556 = vperm.slane %v2993, %v3555
    %vm3557 = vcmask 392512
    %v3558 = vsel %vm3557, %v3556, %v3554
    %v3559 = vadd.s32 %v3537, 4294967248
    %v3560 = vperm.slane %v2996, %v3559
    %vm3561 = vcmask 458112
    %v3562 = vsel %vm3561, %v3560, %v3558
    %v3563 = vperm.slane %v2999, %v3537
    %v3564 = vperm.slane %v3002, %v3539
    %v3565 = vsel %vm3541, %v3564, %v3563
    %v3566 = vperm.slane %v3005, %v3543
    %v3567 = vsel %vm3545, %v3566, %v3565
    %v3568 = vperm.slane %v3008, %v3547
    %v3569 = vsel %vm3549, %v3568, %v3567
    %v3570 = vperm.slane %v3011, %v3551
    %v3571 = vsel %vm3553, %v3570, %v3569
    %v3572 = vperm.slane %v3014, %v3555
    %v3573 = vsel %vm3557, %v3572, %v3571
    %v3574 = vperm.slane %v3017, %v3559
    %v3575 = vsel %vm3561, %v3574, %v3573
    %v3576 = vperm.slane %v3020, %v3537
    %v3577 = vperm.slane %v3023, %v3539
    %v3578 = vsel %vm3541, %v3577, %v3576
    %v3579 = vperm.slane %v3026, %v3543
    %v3580 = vsel %vm3545, %v3579, %v3578
    %v3581 = vperm.slane %v3029, %v3547
    %v3582 = vsel %vm3549, %v3581, %v3580
    %v3583 = vperm.slane %v3032, %v3551
    %v3584 = vsel %vm3553, %v3583, %v3582
    %v3585 = vperm.slane %v3035, %v3555
    %v3586 = vsel %vm3557, %v3585, %v3584
    %v3587 = vperm.slane %v3038, %v3559
    %v3588 = vsel %vm3561, %v3587, %v3586
    %v3589 = vperm.slane %v3041, %v3537
    %v3590 = vperm.slane %v3044, %v3539
    %v3591 = vsel %vm3541, %v3590, %v3589
    %v3592 = vperm.slane %v3047, %v3543
    %v3593 = vsel %vm3545, %v3592, %v3591
    %v3594 = vperm.slane %v3050, %v3547
    %v3595 = vsel %vm3549, %v3594, %v3593
    %v3596 = vperm.slane %v3053, %v3551
    %v3597 = vsel %vm3553, %v3596, %v3595
    %v3598 = vperm.slane %v3056, %v3555
    %v3599 = vsel %vm3557, %v3598, %v3597
    %v3600 = vperm.slane %v3059, %v3559
    %v3601 = vsel %vm3561, %v3600, %v3599
    %v3602 = vperm.slane %v3062, %v3537
    %v3603 = vperm.slane %v3065, %v3539
    %v3604 = vsel %vm3541, %v3603, %v3602
    %v3605 = vperm.slane %v3068, %v3543
    %v3606 = vsel %vm3545, %v3605, %v3604
    %v3607 = vperm.slane %v3071, %v3547
    %v3608 = vsel %vm3549, %v3607, %v3606
    %v3609 = vperm.slane %v3074, %v3551
    %v3610 = vsel %vm3553, %v3609, %v3608
    %v3611 = vperm.slane %v3077, %v3555
    %v3612 = vsel %vm3557, %v3611, %v3610
    %v3613 = vperm.slane %v3080, %v3559
    %v3614 = vsel %vm3561, %v3613, %v3612
    %v3615 = vperm.slane %v3083, %v3537
    %v3616 = vperm.slane %v3086, %v3539
    %v3617 = vsel %vm3541, %v3616, %v3615
    %v3618 = vperm.slane %v3089, %v3543
    %v3619 = vsel %vm3545, %v3618, %v3617
    %v3620 = vperm.slane %v3092, %v3547
    %v3621 = vsel %vm3549, %v3620, %v3619
    %v3622 = vperm.slane %v3095, %v3551
    %v3623 = vsel %vm3553, %v3622, %v3621
    %v3624 = vperm.slane %v3098, %v3555
    %v3625 = vsel %vm3557, %v3624, %v3623
    %v3626 = vperm.slane %v3101, %v3559
    %v3627 = vsel %vm3561, %v3626, %v3625
    %v3628 = vperm.slane %v3104, %v3537
    %v3629 = vperm.slane %v3107, %v3539
    %v3630 = vsel %vm3541, %v3629, %v3628
    %v3631 = vperm.slane %v3110, %v3543
    %v3632 = vsel %vm3545, %v3631, %v3630
    %v3633 = vperm.slane %v3113, %v3547
    %v3634 = vsel %vm3549, %v3633, %v3632
    %v3635 = vperm.slane %v3116, %v3551
    %v3636 = vsel %vm3553, %v3635, %v3634
    %v3637 = vperm.slane %v3119, %v3555
    %v3638 = vsel %vm3557, %v3637, %v3636
    %v3639 = vperm.slane %v3122, %v3559
    %v3640 = vsel %vm3561, %v3639, %v3638
    %v3641 = vperm.slane %v3125, %v3537
    %v3642 = vperm.slane %v3128, %v3539
    %v3643 = vsel %vm3541, %v3642, %v3641
    %v3644 = vperm.slane %v3131, %v3543
    %v3645 = vsel %vm3545, %v3644, %v3643
    %v3646 = vperm.slane %v3134, %v3547
    %v3647 = vsel %vm3549, %v3646, %v3645
    %v3648 = vperm.slane %v3137, %v3551
    %v3649 = vsel %vm3553, %v3648, %v3647
    %v3650 = vperm.slane %v3140, %v3555
    %v3651 = vsel %vm3557, %v3650, %v3649
    %v3652 = vperm.slane %v3143, %v3559
    %v3653 = vsel %vm3561, %v3652, %v3651
    %v3654 = vperm.slane %v3146, %v3537
    %v3655 = vperm.slane %v3149, %v3539
    %v3656 = vsel %vm3541, %v3655, %v3654
    %v3657 = vperm.slane %v3152, %v3543
    %v3658 = vsel %vm3545, %v3657, %v3656
    %v3659 = vperm.slane %v3155, %v3547
    %v3660 = vsel %vm3549, %v3659, %v3658
    %v3661 = vperm.slane %v3158, %v3551
    %v3662 = vsel %vm3553, %v3661, %v3660
    %v3663 = vperm.slane %v3161, %v3555
    %v3664 = vsel %vm3557, %v3663, %v3662
    %v3665 = vperm.slane %v3164, %v3559
    %v3666 = vsel %vm3561, %v3665, %v3664
    %v3667 = vperm.slane %v3167, %v3537
    %v3668 = vperm.slane %v3170, %v3539
    %v3669 = vsel %vm3541, %v3668, %v3667
    %v3670 = vperm.slane %v3173, %v3543
    %v3671 = vsel %vm3545, %v3670, %v3669
    %v3672 = vperm.slane %v3176, %v3547
    %v3673 = vsel %vm3549, %v3672, %v3671
    %v3674 = vperm.slane %v3179, %v3551
    %v3675 = vsel %vm3553, %v3674, %v3673
    %v3676 = vperm.slane %v3182, %v3555
    %v3677 = vsel %vm3557, %v3676, %v3675
    %v3678 = vperm.slane %v3185, %v3559
    %v3679 = vsel %vm3561, %v3678, %v3677
    %v3680 = vperm.slane %v3188, %v3537
    %v3681 = vperm.slane %v3191, %v3539
    %v3682 = vsel %vm3541, %v3681, %v3680
    %v3683 = vperm.slane %v3194, %v3543
    %v3684 = vsel %vm3545, %v3683, %v3682
    %v3685 = vperm.slane %v3197, %v3547
    %v3686 = vsel %vm3549, %v3685, %v3684
    %v3687 = vperm.slane %v3200, %v3551
    %v3688 = vsel %vm3553, %v3687, %v3686
    %v3689 = vperm.slane %v3203, %v3555
    %v3690 = vsel %vm3557, %v3689, %v3688
    %v3691 = vperm.slane %v3206, %v3559
    %v3692 = vsel %vm3561, %v3691, %v3690
    %v3693 = vperm.slane %v3209, %v3537
    %v3694 = vperm.slane %v3212, %v3539
    %v3695 = vsel %vm3541, %v3694, %v3693
    %v3696 = vperm.slane %v3215, %v3543
    %v3697 = vsel %vm3545, %v3696, %v3695
    %v3698 = vperm.slane %v3218, %v3547
    %v3699 = vsel %vm3549, %v3698, %v3697
    %v3700 = vperm.slane %v3221, %v3551
    %v3701 = vsel %vm3553, %v3700, %v3699
    %v3702 = vperm.slane %v3224, %v3555
    %v3703 = vsel %vm3557, %v3702, %v3701
    %v3704 = vperm.slane %v3227, %v3559
    %v3705 = vsel %vm3561, %v3704, %v3703
    %v3706 = vperm.slane %v3230, %v3537
    %v3707 = vperm.slane %v3233, %v3539
    %v3708 = vsel %vm3541, %v3707, %v3706
    %v3709 = vperm.slane %v3236, %v3543
    %v3710 = vsel %vm3545, %v3709, %v3708
    %v3711 = vperm.slane %v3239, %v3547
    %v3712 = vsel %vm3549, %v3711, %v3710
    %v3713 = vperm.slane %v3242, %v3551
    %v3714 = vsel %vm3553, %v3713, %v3712
    %v3715 = vperm.slane %v3245, %v3555
    %v3716 = vsel %vm3557, %v3715, %v3714
    %v3717 = vperm.slane %v3248, %v3559
    %v3718 = vsel %vm3561, %v3717, %v3716
    %v3719 = vperm.slane %v3251, %v3537
    %v3720 = vperm.slane %v3254, %v3539
    %v3721 = vsel %vm3541, %v3720, %v3719
    %v3722 = vperm.slane %v3257, %v3543
    %v3723 = vsel %vm3545, %v3722, %v3721
    %v3724 = vperm.slane %v3260, %v3547
    %v3725 = vsel %vm3549, %v3724, %v3723
    %v3726 = vperm.slane %v3263, %v3551
    %v3727 = vsel %vm3553, %v3726, %v3725
    %v3728 = vperm.slane %v3266, %v3555
    %v3729 = vsel %vm3557, %v3728, %v3727
    %v3730 = vperm.slane %v3269, %v3559
    %v3731 = vsel %vm3561, %v3730, %v3729
    %v3732 = vperm.slane %v3272, %v3537
    %v3733 = vperm.slane %v3275, %v3539
    %v3734 = vsel %vm3541, %v3733, %v3732
    %v3735 = vperm.slane %v3278, %v3543
    %v3736 = vsel %vm3545, %v3735, %v3734
    %v3737 = vperm.slane %v3281, %v3547
    %v3738 = vsel %vm3549, %v3737, %v3736
    %v3739 = vperm.slane %v3284, %v3551
    %v3740 = vsel %vm3553, %v3739, %v3738
    %v3741 = vperm.slane %v3287, %v3555
    %v3742 = vsel %vm3557, %v3741, %v3740
    %v3743 = vperm.slane %v3290, %v3559
    %v3744 = vsel %vm3561, %v3743, %v3742
    %v3745 = vperm.slane %v3293, %v3537
    %v3746 = vperm.slane %v3296, %v3539
    %v3747 = vsel %vm3541, %v3746, %v3745
    %v3748 = vperm.slane %v3299, %v3543
    %v3749 = vsel %vm3545, %v3748, %v3747
    %v3750 = vperm.slane %v3302, %v3547
    %v3751 = vsel %vm3549, %v3750, %v3749
    %v3752 = vperm.slane %v3305, %v3551
    %v3753 = vsel %vm3553, %v3752, %v3751
    %v3754 = vperm.slane %v3308, %v3555
    %v3755 = vsel %vm3557, %v3754, %v3753
    %v3756 = vperm.slane %v3311, %v3559
    %v3757 = vsel %vm3561, %v3756, %v3755
    %v3758 = vperm.slane %v3314, %v3537
    %v3759 = vperm.slane %v3317, %v3539
    %v3760 = vsel %vm3541, %v3759, %v3758
    %v3761 = vperm.slane %v3320, %v3543
    %v3762 = vsel %vm3545, %v3761, %v3760
    %v3763 = vperm.slane %v3323, %v3547
    %v3764 = vsel %vm3549, %v3763, %v3762
    %v3765 = vperm.slane %v3326, %v3551
    %v3766 = vsel %vm3553, %v3765, %v3764
    %v3767 = vperm.slane %v3329, %v3555
    %v3768 = vsel %vm3557, %v3767, %v3766
    %v3769 = vperm.slane %v3332, %v3559
    %v3770 = vsel %vm3561, %v3769, %v3768
    %v3771 = vperm.slane %v3335, %v3537
    %v3772 = vperm.slane %v3338, %v3539
    %v3773 = vsel %vm3541, %v3772, %v3771
    %v3774 = vperm.slane %v3341, %v3543
    %v3775 = vsel %vm3545, %v3774, %v3773
    %v3776 = vperm.slane %v3344, %v3547
    %v3777 = vsel %vm3549, %v3776, %v3775
    %v3778 = vperm.slane %v3347, %v3551
    %v3779 = vsel %vm3553, %v3778, %v3777
    %v3780 = vperm.slane %v3350, %v3555
    %v3781 = vsel %vm3557, %v3780, %v3779
    %v3782 = vperm.slane %v3353, %v3559
    %v3783 = vsel %vm3561, %v3782, %v3781
    %v3784 = vperm.slane %v3356, %v3537
    %v3785 = vperm.slane %v3359, %v3539
    %v3786 = vsel %vm3541, %v3785, %v3784
    %v3787 = vperm.slane %v3362, %v3543
    %v3788 = vsel %vm3545, %v3787, %v3786
    %v3789 = vperm.slane %v3365, %v3547
    %v3790 = vsel %vm3549, %v3789, %v3788
    %v3791 = vperm.slane %v3368, %v3551
    %v3792 = vsel %vm3553, %v3791, %v3790
    %v3793 = vperm.slane %v3371, %v3555
    %v3794 = vsel %vm3557, %v3793, %v3792
    %v3795 = vperm.slane %v3374, %v3559
    %v3796 = vsel %vm3561, %v3795, %v3794
    %v3797 = vperm.slane %v3377, %v3537
    %v3798 = vperm.slane %v3380, %v3539
    %v3799 = vsel %vm3541, %v3798, %v3797
    %v3800 = vperm.slane %v3383, %v3543
    %v3801 = vsel %vm3545, %v3800, %v3799
    %v3802 = vperm.slane %v3386, %v3547
    %v3803 = vsel %vm3549, %v3802, %v3801
    %v3804 = vperm.slane %v3389, %v3551
    %v3805 = vsel %vm3553, %v3804, %v3803
    %v3806 = vperm.slane %v3392, %v3555
    %v3807 = vsel %vm3557, %v3806, %v3805
    %v3808 = vperm.slane %v3395, %v3559
    %v3809 = vsel %vm3561, %v3808, %v3807
    %vm3810 = vcmask 1041409
    %v3811 = vsel %vm3810, %v3575, %v3562
    %vm3812 = vcmask 1042434
    %v3813 = vsel %vm3812, %v3588, %v3811
    %vm3814 = vcmask 1043459
    %v3815 = vsel %vm3814, %v3601, %v3813
    %vm3816 = vcmask 1044484
    %v3817 = vsel %vm3816, %v3614, %v3815
    %vm3818 = vcmask 1045509
    %v3819 = vsel %vm3818, %v3627, %v3817
    %vm3820 = vcmask 1046534
    %v3821 = vsel %vm3820, %v3640, %v3819
    %vm3822 = vcmask 1047559
    %v3823 = vsel %vm3822, %v3653, %v3821
    %v3824 = vsel %vm3810, %v3679, %v3666
    %v3825 = vsel %vm3810, %v3705, %v3692
    %v3826 = vsel %vm3812, %v3718, %v3825
    %v3827 = vsel %vm3814, %v3731, %v3826
    %v3828 = vsel %vm3816, %v3744, %v3827
    %v3829 = vsel %vm3818, %v3757, %v3828
    %v3830 = vsel %vm3820, %v3770, %v3829
    %v3831 = vsel %vm3822, %v3783, %v3830
    %v3832 = vsel %vm3810, %v3809, %v3796
    %v3837 = vsel %vm759, %v3823, 0.0
    %3838 = vadd.xlane.f32.xlu0 %v3837
    %v3839 = vpop.xlane.xlu0 %3838
    %vm3840 = vcmask 451584
    %v3841 = vsel %vm3840, %v3824, 0.0
    %3842 = vadd.xlane.f32.xlu0 %v3841
    %v3843 = vpop.xlane.xlu0 %3842
    %v3844 = vsel %vm759, %v3831, 0.0
    %3845 = vadd.xlane.f32.xlu0 %v3844
    %v3846 = vpop.xlane.xlu0 %3845
    %v3847 = vsel %vm3840, %v3832, 0.0
    %3848 = vadd.xlane.f32.xlu0 %v3847
    %v3849 = vpop.xlane.xlu0 %3848
    %v3850 = vld [vmem:[%s4] sm:$0x1]
    %v3852 = vperm.slane %v3850, 0
    %v3853 = vlaneseq
    %v3854 = vshrl.u32 %v3853, 7
    %3856 = vset.pattern.permute.xlu0 %v3854
    %3857 = vperm.xlu0 %3856, %v3852
    %v3858 = vpop.permute.xlu0 %3857
    %v3859 = vlaneseq
    %v3860 = vshrl.u32 %v3859, 7
    %v3861 = vadd.s32 %v3860, 8
    %3862 = vset.pattern.permute.xlu0 %v3861
    %3863 = vperm.xlu0 %3862, %v3852
    %v3864 = vpop.permute.xlu0 %3863
    %v3867 = vadd.f32 %v3839, %v3858
    %v3868 = vadd.f32 %v3843, %v3864
    %v3869 = vadd.f32 %v3846, %v3858
    %v3870 = vadd.f32 %v3849, %v3864
    %3875 = vset.pattern.permute.xlu0 0
    %3876 = vperm.xlu0 %3875, %v3867
    %v3877 = vpop.permute.xlu0 %3876
    %3878 = vset.pattern.permute.xlu0 0
    %3879 = vperm.xlu0 %3878, %v3868
    %v3880 = vpop.permute.xlu0 %3879
    %3881 = vset.pattern.permute.xlu0 0
    %3882 = vperm.xlu0 %3881, %v3869
    %v3883 = vpop.permute.xlu0 %3882
    %3884 = vset.pattern.permute.xlu0 0
    %3885 = vperm.xlu0 %3884, %v3870
    %v3886 = vpop.permute.xlu0 %3885
    %v3887 = vperm.slane %v3877, %v3537
    %v3888 = vperm.slane %v3880, %v3539
    %v3889 = vsel %vm3541, %v3888, %v3887
    %v3890 = vperm.slane %v3883, %v3537
    %v3891 = vperm.slane %v3886, %v3539
    %v3892 = vsel %vm3541, %v3891, %v3890
    %v3893 = vsel %vm3810, %v3892, %v3889
    %vm3895 = vcmask 74752
    %3896 = vst.msk [vmem:[#allocation2] sm:$0x3] %vm3895, %v3893
    // Predicated region
    $region22: #{cnn_forward.3} parent=1 // pred_check
      _
    $region23: #{cnn_forward.3} parent=1 // pred_check_branch
      %3898 = sbr.rel (0) target = $region25
    $region24: #{cnn_forward.3} parent=1 // pred_region
      %3900 = vsyncadd [#allocation3], 0
      %s3902 = sshll.u32 [#allocation2], 4
      %s3903 = int_to_ptr.vmem [resolvable:$true] %s3902
      %s3904 = sshll.u32 %s5, 4
      %s3905 = int_to_ptr.hbm [resolvable:$true] %s3904
      %3907 = dma.vmem_to_hbm [thread:$0]  %s3903, 32, %s3905, [#allocation3]
    $region25: #{cnn_forward.3} parent=1 // pred_fallthru
      _
    // Predicated region
    $region26: #{cnn_forward.3} parent=1 // pred_check
      _
    $region27: #{cnn_forward.3} parent=1 // pred_check_branch
      %3909 = sbr.rel (0) target = $region29
    $region28: #{cnn_forward.3} parent=1 // pred_region
      %3911 = dma.done [#allocation3], 32
    $region29: #{cnn_forward.3} parent=1 // pred_fallthru
      _
    %3912 = vsyncpa [#allocation3], 1

// kernel: cnn_forward.2
$region0: #{cnn_forward.2}
  #allocation0 [shape = 'u32[]', space=smem, size = 0x4, offset = 0x4, fixed_abs, tag = 'smem constant byte address 0x4 - core index']
  #allocation1 [shape = 'u32[72,128]{1,0:T(1,128)}', space=vmem, size = 0x9000, scoped, tag = 'internal scratch']
  %s0 = inlined_call_operand.vmem [shape: f32[2,2,2,15,15], index: 0, kind: input, shape index: {}]
  %s1 = inlined_call_operand.vmem [shape: f32[72], index: 1, kind: input, shape index: {}]
  %s2 = inlined_call_operand.vmem [shape: f32[8], index: 2, kind: input, shape index: {}]
  %s3 = inlined_call_operand.vmem [shape: f32[2,8,14,14], index: 3, kind: output, shape index: {}]
  %s4 = sld [smem:[#allocation0]]
  $region30: #{cnn_forward.2} parent=0
    _
  %s6 = ssub.s32 1, %s4
  %s7 = scalar_select 0, %s6, %s4
  $region1: #{cnn_forward.2} parent=0
    #allocation2 [shape = 'u8[512]{0}', space=smem, size = 0x200, scoped, tag = 'input window, operand 1, single buffered']
    #allocation3 [shape = 's32[1]{0}', space=sflag, size = 0x4, scoped, tag = 'scoped memory for cnn_forward.2']
    #allocation4 [shape = 'u8[512]{0}', space=smem, size = 0x200, scoped, tag = 'input window, operand 2, single buffered']
    #allocation5 [shape = 's32[1]{0}', space=sflag, size = 0x4, scoped, tag = 'scoped memory for cnn_forward.2']
    %8 = vsyncpa [#allocation3], 0
    %9 = vsyncpa [#allocation5], 0
    // Predicated region
    $region2: #{cnn_forward.2} parent=1 // pred_check
      _
    $region3: #{cnn_forward.2} parent=1 // pred_check_branch
      %11 = sbr.rel (0) target = $region5
    $region4: #{cnn_forward.2} parent=1 // pred_region
      _
    $region5: #{cnn_forward.2} parent=1 // pred_fallthru
      _
    // Predicated region
    $region6: #{cnn_forward.2} parent=1 // pred_check
      _
    $region7: #{cnn_forward.2} parent=1 // pred_check_branch
      %13 = sbr.rel (0) target = $region9
    $region8: #{cnn_forward.2} parent=1 // pred_region
      %15 = vsyncadd [#allocation3], 0
      %s17 = sshll.u32 %s1, 4
      %s18 = int_to_ptr.vmem [resolvable:$true] %s17
      %20 = dma.vmem_to_smem %s18, 16, [#allocation2], [#allocation3]
    $region9: #{cnn_forward.2} parent=1 // pred_fallthru
      _
    // Predicated region
    $region10: #{cnn_forward.2} parent=1 // pred_check
      _
    $region11: #{cnn_forward.2} parent=1 // pred_check_branch
      %22 = sbr.rel (0) target = $region13
    $region12: #{cnn_forward.2} parent=1 // pred_region
      %24 = vsyncadd [#allocation5], 0
      %s26 = sshll.u32 %s2, 4
      %s27 = int_to_ptr.vmem [resolvable:$true] %s26
      %29 = dma.vmem_to_smem %s27, 16, [#allocation4], [#allocation5]
    $region13: #{cnn_forward.2} parent=1 // pred_fallthru
      _
    // Predicated region
    $region14: #{cnn_forward.2} parent=1 // pred_check
      _
    $region15: #{cnn_forward.2} parent=1 // pred_check_branch
      %31 = sbr.rel (0) target = $region17
    $region16: #{cnn_forward.2} parent=1 // pred_region
      %33 = dma.done [#allocation3], 16
    $region17: #{cnn_forward.2} parent=1 // pred_fallthru
      _
    // Predicated region
    $region18: #{cnn_forward.2} parent=1 // pred_check
      _
    $region19: #{cnn_forward.2} parent=1 // pred_check_branch
      %35 = sbr.rel (0) target = $region21
    $region20: #{cnn_forward.2} parent=1 // pred_region
      %37 = dma.done [#allocation5], 16
    $region21: #{cnn_forward.2} parent=1 // pred_fallthru
      _
    %38 = sfence
    %v39 = vld [vmem:[%s0] sm:$0xff]
    %v40 = vld [vmem:[%s0 + $0x8] sm:$0x7f]
    %v41 = vld [vmem:[%s0 + $0x40] sm:$0xff]
    %v42 = vld [vmem:[%s0 + $0x48] sm:$0x7f]
    %s43 = scalar_lea.vmem %s0, 16
    %v44 = vld [vmem:[%s43] sm:$0xff]
    %v45 = vld [vmem:[%s43 + $0x8] sm:$0x7f]
    %v46 = vld [vmem:[%s43 + $0x40] sm:$0xff]
    %v47 = vld [vmem:[%s43 + $0x48] sm:$0x7f]
    %s48 = scalar_lea.vmem %s0, 32
    %v49 = vld [vmem:[%s48] sm:$0xff]
    %v50 = vld [vmem:[%s48 + $0x8] sm:$0x7f]
    %v51 = vld [vmem:[%s48 + $0x40] sm:$0xff]
    %v52 = vld [vmem:[%s48 + $0x48] sm:$0x7f]
    %s53 = scalar_lea.vmem %s0, 48
    %v54 = vld [vmem:[%s53] sm:$0xff]
    %v55 = vld [vmem:[%s53 + $0x8] sm:$0x7f]
    %v56 = vld [vmem:[%s53 + $0x40] sm:$0xff]
    %v57 = vld [vmem:[%s53 + $0x48] sm:$0x7f]
    %s58 = sld [smem:[#allocation2]]
    %s59 = sld [smem:[#allocation2 + $0x1]]
    %s60 = sld [smem:[#allocation2 + $0x2]]
    %s61 = sld [smem:[#allocation2 + $0x3]]
    %s62 = sld [smem:[#allocation2 + $0x4]]
    %s63 = sld [smem:[#allocation2 + $0x5]]
    %s64 = sld [smem:[#allocation2 + $0x6]]
    %s65 = sld [smem:[#allocation2 + $0x7]]
    %s66 = sld [smem:[#allocation2 + $0x8]]
    %s67 = sld [smem:[#allocation2 + $0x9]]
    %s68 = sld [smem:[#allocation2 + $0xa]]
    %s69 = sld [smem:[#allocation2 + $0xb]]
    %s70 = sld [smem:[#allocation2 + $0xc]]
    %s71 = sld [smem:[#allocation2 + $0xd]]
    %s72 = sld [smem:[#allocation2 + $0xe]]
    %s73 = sld [smem:[#allocation2 + $0xf]]
    %s74 = sld [smem:[#allocation2 + $0x10]]
    %s75 = sld [smem:[#allocation2 + $0x11]]
    %s76 = sld [smem:[#allocation2 + $0x12]]
    %s77 = sld [smem:[#allocation2 + $0x13]]
    %s78 = sld [smem:[#allocation2 + $0x14]]
    %s79 = sld [smem:[#allocation2 + $0x15]]
    %s80 = sld [smem:[#allocation2 + $0x16]]
    %s81 = sld [smem:[#allocation2 + $0x17]]
    %s82 = sld [smem:[#allocation2 + $0x18]]
    %s83 = sld [smem:[#allocation2 + $0x19]]
    %s84 = sld [smem:[#allocation2 + $0x1a]]
    %s85 = sld [smem:[#allocation2 + $0x1b]]
    %s86 = sld [smem:[#allocation2 + $0x1c]]
    %s87 = sld [smem:[#allocation2 + $0x1d]]
    %s88 = sld [smem:[#allocation2 + $0x1e]]
    %s89 = sld [smem:[#allocation2 + $0x1f]]
    %s90 = sld [smem:[#allocation2 + $0x20]]
    %s91 = sld [smem:[#allocation2 + $0x21]]
    %s92 = sld [smem:[#allocation2 + $0x22]]
    %s93 = sld [smem:[#allocation2 + $0x23]]
    %s94 = sld [smem:[#allocation2 + $0x24]]
    %s95 = sld [smem:[#allocation2 + $0x25]]
    %s96 = sld [smem:[#allocation2 + $0x26]]
    %s97 = sld [smem:[#allocation2 + $0x27]]
    %s98 = sld [smem:[#allocation2 + $0x28]]
    %s99 = sld [smem:[#allocation2 + $0x29]]
    %s100 = sld [smem:[#allocation2 + $0x2a]]
    %s101 = sld [smem:[#allocation2 + $0x2b]]
    %s102 = sld [smem:[#allocation2 + $0x2c]]
    %s103 = sld [smem:[#allocation2 + $0x2d]]
    %s104 = sld [smem:[#allocation2 + $0x2e]]
    %s105 = sld [smem:[#allocation2 + $0x2f]]
    %s106 = sld [smem:[#allocation2 + $0x30]]
    %s107 = sld [smem:[#allocation2 + $0x31]]
    %s108 = sld [smem:[#allocation2 + $0x32]]
    %s109 = sld [smem:[#allocation2 + $0x33]]
    %s110 = sld [smem:[#allocation2 + $0x34]]
    %s111 = sld [smem:[#allocation2 + $0x35]]
    %s112 = sld [smem:[#allocation2 + $0x36]]
    %s113 = sld [smem:[#allocation2 + $0x37]]
    %s114 = sld [smem:[#allocation2 + $0x38]]
    %s115 = sld [smem:[#allocation2 + $0x39]]
    %s116 = sld [smem:[#allocation2 + $0x3a]]
    %s117 = sld [smem:[#allocation2 + $0x3b]]
    %s118 = sld [smem:[#allocation2 + $0x3c]]
    %s119 = sld [smem:[#allocation2 + $0x3d]]
    %s120 = sld [smem:[#allocation2 + $0x3e]]
    %s121 = sld [smem:[#allocation2 + $0x3f]]
    %s122 = sld [smem:[#allocation2 + $0x40]]
    %s123 = sld [smem:[#allocation2 + $0x41]]
    %s124 = sld [smem:[#allocation2 + $0x42]]
    %s125 = sld [smem:[#allocation2 + $0x43]]
    %s126 = sld [smem:[#allocation2 + $0x44]]
    %s127 = sld [smem:[#allocation2 + $0x45]]
    %s128 = sld [smem:[#allocation2 + $0x46]]
    %s129 = sld [smem:[#allocation2 + $0x47]]
    %s130 = sld [smem:[#allocation4]]
    %s131 = sld [smem:[#allocation4 + $0x1]]
    %s132 = sld [smem:[#allocation4 + $0x2]]
    %s133 = sld [smem:[#allocation4 + $0x3]]
    %s134 = sld [smem:[#allocation4 + $0x4]]
    %s135 = sld [smem:[#allocation4 + $0x5]]
    %s136 = sld [smem:[#allocation4 + $0x6]]
    %s137 = sld [smem:[#allocation4 + $0x7]]
    %v138 = vstv %s58
    %v139 = vmul.f32 %v39, %v138
    %v140 = vmul.f32 %v40, %v138
    %v141 = vmul.f32 %v41, %v138
    %v142 = vmul.f32 %v42, %v138
    %v143 = vstv %s59
    %v144 = vmul.f32 %v44, %v143
    %v145 = vmul.f32 %v45, %v143
    %v146 = vmul.f32 %v46, %v143
    %v147 = vmul.f32 %v47, %v143
    %v148 = vadd.f32 %v139, %v144
    %v149 = vadd.f32 %v140, %v145
    %v150 = vadd.f32 %v141, %v146
    %v151 = vadd.f32 %v142, %v147
    %v152 = vstv %s60
    %v153 = vmul.f32 %v39, %v152
    %v154 = vmul.f32 %v40, %v152
    %v155 = vmul.f32 %v41, %v152
    %v156 = vmul.f32 %v42, %v152
    %161 = vrot.lane.b32.xlu0 %v153, 127
    %v162 = vpop.permute.xlu0 %161
    %163 = vrot.lane.b32.xlu0 %v154, 127
    %v164 = vpop.permute.xlu0 %163
    %165 = vrot.lane.b32.xlu0 %v155, 127
    %v166 = vpop.permute.xlu0 %165
    %167 = vrot.lane.b32.xlu0 %v156, 127
    %v168 = vpop.permute.xlu0 %167
    %v173 = vadd.f32 %v148, %v162
    %v174 = vadd.f32 %v149, %v164
    %v175 = vadd.f32 %v150, %v166
    %v176 = vadd.f32 %v151, %v168
    %v177 = vstv %s61
    %v178 = vmul.f32 %v49, %v177
    %v179 = vmul.f32 %v50, %v177
    %v180 = vmul.f32 %v51, %v177
    %v181 = vmul.f32 %v52, %v177
    %v182 = vadd.f32 %v173, %v178
    %v183 = vadd.f32 %v174, %v179
    %v184 = vadd.f32 %v175, %v180
    %v185 = vadd.f32 %v176, %v181
    %v186 = vstv %s62
    %v187 = vmul.f32 %v54, %v186
    %v188 = vmul.f32 %v55, %v186
    %v189 = vmul.f32 %v56, %v186
    %v190 = vmul.f32 %v57, %v186
    %v191 = vadd.f32 %v182, %v187
    %v192 = vadd.f32 %v183, %v188
    %v193 = vadd.f32 %v184, %v189
    %v194 = vadd.f32 %v185, %v190
    %v195 = vstv %s63
    %v196 = vmul.f32 %v49, %v195
    %v197 = vmul.f32 %v50, %v195
    %v198 = vmul.f32 %v51, %v195
    %v199 = vmul.f32 %v52, %v195
    %204 = vrot.lane.b32.xlu0 %v196, 127
    %v205 = vpop.permute.xlu0 %204
    %206 = vrot.lane.b32.xlu0 %v197, 127
    %v207 = vpop.permute.xlu0 %206
    %208 = vrot.lane.b32.xlu0 %v198, 127
    %v209 = vpop.permute.xlu0 %208
    %210 = vrot.lane.b32.xlu0 %v199, 127
    %v211 = vpop.permute.xlu0 %210
    %v216 = vadd.f32 %v191, %v205
    %v217 = vadd.f32 %v192, %v207
    %v218 = vadd.f32 %v193, %v209
    %v219 = vadd.f32 %v194, %v211
    %v220 = vstv %s64
    %v221 = vmul.f32 %v39, %v220
    %v222 = vmul.f32 %v40, %v220
    %v223 = vmul.f32 %v41, %v220
    %v224 = vmul.f32 %v42, %v220
    %vm229 = vcmask 1046528
    %v230 = vrot.slane %v221, 1
    %v231 = vrot.slane %v222, 1
    %v232 = vsel %vm229, %v230, %v231
    %v233 = vrot.slane %v223, 1
    %v234 = vrot.slane %v224, 1
    %v235 = vsel %vm229, %v233, %v234
    %v240 = vadd.f32 %v216, %v232
    %v241 = vadd.f32 %v217, %v231
    %v242 = vadd.f32 %v218, %v235
    %v243 = vadd.f32 %v219, %v234
    %v244 = vstv %s65
    %v245 = vmul.f32 %v44, %v244
    %v246 = vmul.f32 %v45, %v244
    %v247 = vmul.f32 %v46, %v244
    %v248 = vmul.f32 %v47, %v244
    %v253 = vrot.slane %v245, 1
    %v254 = vrot.slane %v246, 1
    %v255 = vsel %vm229, %v253, %v254
    %v256 = vrot.slane %v247, 1
    %v257 = vrot.slane %v248, 1
    %v258 = vsel %vm229, %v256, %v257
    %v263 = vadd.f32 %v240, %v255
    %v264 = vadd.f32 %v241, %v254
    %v265 = vadd.f32 %v242, %v258
    %v266 = vadd.f32 %v243, %v257
    %v267 = vstv %s66
    %v268 = vmul.f32 %v39, %v267
    %v269 = vmul.f32 %v40, %v267
    %v270 = vmul.f32 %v41, %v267
    %v271 = vmul.f32 %v42, %v267
    %v276 = vrot.slane %v268, 1
    %v277 = vrot.slane %v269, 1
    %v278 = vsel %vm229, %v276, %v277
    %v279 = vrot.slane %v270, 1
    %v280 = vrot.slane %v271, 1
    %v281 = vsel %vm229, %v279, %v280
    %282 = vrot.lane.b32.xlu0 %v278, 127
    %v283 = vpop.permute.xlu0 %282
    %284 = vrot.lane.b32.xlu0 %v277, 127
    %v285 = vpop.permute.xlu0 %284
    %286 = vrot.lane.b32.xlu0 %v281, 127
    %v287 = vpop.permute.xlu0 %286
    %288 = vrot.lane.b32.xlu0 %v280, 127
    %v289 = vpop.permute.xlu0 %288
    %v294 = vadd.f32 %v263, %v283
    %v295 = vadd.f32 %v264, %v285
    %v296 = vadd.f32 %v265, %v287
    %v297 = vadd.f32 %v266, %v289
    %v298 = vmul.f32 %v44, %v138
    %v299 = vmul.f32 %v45, %v138
    %v300 = vmul.f32 %v46, %v138
    %v301 = vmul.f32 %v47, %v138
    %v302 = vmul.f32 %v39, %v143
    %v303 = vmul.f32 %v40, %v143
    %v304 = vmul.f32 %v41, %v143
    %v305 = vmul.f32 %v42, %v143
    %310 = vrot.lane.b32.xlu0 %v302, 127
    %v311 = vpop.permute.xlu0 %310
    %312 = vrot.lane.b32.xlu0 %v303, 127
    %v313 = vpop.permute.xlu0 %312
    %314 = vrot.lane.b32.xlu0 %v304, 127
    %v315 = vpop.permute.xlu0 %314
    %316 = vrot.lane.b32.xlu0 %v305, 127
    %v317 = vpop.permute.xlu0 %316
    %v322 = vadd.f32 %v298, %v311
    %v323 = vadd.f32 %v299, %v313
    %v324 = vadd.f32 %v300, %v315
    %v325 = vadd.f32 %v301, %v317
    %v326 = vmul.f32 %v44, %v152
    %v327 = vmul.f32 %v45, %v152
    %v328 = vmul.f32 %v46, %v152
    %v329 = vmul.f32 %v47, %v152
    %334 = vrot.lane.b32.xlu0 %v326, 127
    %v335 = vpop.permute.xlu0 %334
    %336 = vrot.lane.b32.xlu0 %v327, 127
    %v337 = vpop.permute.xlu0 %336
    %338 = vrot.lane.b32.xlu0 %v328, 127
    %v339 = vpop.permute.xlu0 %338
    %340 = vrot.lane.b32.xlu0 %v329, 127
    %v341 = vpop.permute.xlu0 %340
    %v346 = vadd.f32 %v322, %v335
    %v347 = vadd.f32 %v323, %v337
    %v348 = vadd.f32 %v324, %v339
    %v349 = vadd.f32 %v325, %v341
    %v350 = vmul.f32 %v54, %v177
    %v351 = vmul.f32 %v55, %v177
    %v352 = vmul.f32 %v56, %v177
    %v353 = vmul.f32 %v57, %v177
    %v354 = vadd.f32 %v346, %v350
    %v355 = vadd.f32 %v347, %v351
    %v356 = vadd.f32 %v348, %v352
    %v357 = vadd.f32 %v349, %v353
    %v358 = vmul.f32 %v49, %v186
    %v359 = vmul.f32 %v50, %v186
    %v360 = vmul.f32 %v51, %v186
    %v361 = vmul.f32 %v52, %v186
    %366 = vrot.lane.b32.xlu0 %v358, 127
    %v367 = vpop.permute.xlu0 %366
    %368 = vrot.lane.b32.xlu0 %v359, 127
    %v369 = vpop.permute.xlu0 %368
    %370 = vrot.lane.b32.xlu0 %v360, 127
    %v371 = vpop.permute.xlu0 %370
    %372 = vrot.lane.b32.xlu0 %v361, 127
    %v373 = vpop.permute.xlu0 %372
    %v378 = vadd.f32 %v354, %v367
    %v379 = vadd.f32 %v355, %v369
    %v380 = vadd.f32 %v356, %v371
    %v381 = vadd.f32 %v357, %v373
    %v382 = vmul.f32 %v54, %v195
    %v383 = vmul.f32 %v55, %v195
    %v384 = vmul.f32 %v56, %v195
    %v385 = vmul.f32 %v57, %v195
    %390 = vrot.lane.b32.xlu0 %v382, 127
    %v391 = vpop.permute.xlu0 %390
    %392 = vrot.lane.b32.xlu0 %v383, 127
    %v393 = vpop.permute.xlu0 %392
    %394 = vrot.lane.b32.xlu0 %v384, 127
    %v395 = vpop.permute.xlu0 %394
    %396 = vrot.lane.b32.xlu0 %v385, 127
    %v397 = vpop.permute.xlu0 %396
    %v402 = vadd.f32 %v378, %v391
    %v403 = vadd.f32 %v379, %v393
    %v404 = vadd.f32 %v380, %v395
    %v405 = vadd.f32 %v381, %v397
    %v406 = vmul.f32 %v44, %v220
    %v407 = vmul.f32 %v45, %v220
    %v408 = vmul.f32 %v46, %v220
    %v409 = vmul.f32 %v47, %v220
    %v414 = vrot.slane %v406, 1
    %v415 = vrot.slane %v407, 1
    %v416 = vsel %vm229, %v414, %v415
    %v417 = vrot.slane %v408, 1
    %v418 = vrot.slane %v409, 1
    %v419 = vsel %vm229, %v417, %v418
    %v424 = vadd.f32 %v402, %v416
    %v425 = vadd.f32 %v403, %v415
    %v426 = vadd.f32 %v404, %v419
    %v427 = vadd.f32 %v405, %v418
    %v428 = vmul.f32 %v39, %v244
    %v429 = vmul.f32 %v40, %v244
    %v430 = vmul.f32 %v41, %v244
    %v431 = vmul.f32 %v42, %v244
    %v436 = vrot.slane %v428, 1
    %v437 = vrot.slane %v429, 1
    %v438 = vsel %vm229, %v436, %v437
    %v439 = vrot.slane %v430, 1
    %v440 = vrot.slane %v431, 1
    %v441 = vsel %vm229, %v439, %v440
    %442 = vrot.lane.b32.xlu0 %v438, 127
    %v443 = vpop.permute.xlu0 %442
    %444 = vrot.lane.b32.xlu0 %v437, 127
    %v445 = vpop.permute.xlu0 %444
    %446 = vrot.lane.b32.xlu0 %v441, 127
    %v447 = vpop.permute.xlu0 %446
    %448 = vrot.lane.b32.xlu0 %v440, 127
    %v449 = vpop.permute.xlu0 %448
    %v454 = vadd.f32 %v424, %v443
    %v455 = vadd.f32 %v425, %v445
    %v456 = vadd.f32 %v426, %v447
    %v457 = vadd.f32 %v427, %v449
    %v458 = vmul.f32 %v44, %v267
    %v459 = vmul.f32 %v45, %v267
    %v460 = vmul.f32 %v46, %v267
    %v461 = vmul.f32 %v47, %v267
    %v466 = vrot.slane %v458, 1
    %v467 = vrot.slane %v459, 1
    %v468 = vsel %vm229, %v466, %v467
    %v469 = vrot.slane %v460, 1
    %v470 = vrot.slane %v461, 1
    %v471 = vsel %vm229, %v469, %v470
    %472 = vrot.lane.b32.xlu0 %v468, 127
    %v473 = vpop.permute.xlu0 %472
    %474 = vrot.lane.b32.xlu0 %v467, 127
    %v475 = vpop.permute.xlu0 %474
    %476 = vrot.lane.b32.xlu0 %v471, 127
    %v477 = vpop.permute.xlu0 %476
    %478 = vrot.lane.b32.xlu0 %v470, 127
    %v479 = vpop.permute.xlu0 %478
    %v484 = vadd.f32 %v454, %v473
    %v485 = vadd.f32 %v455, %v475
    %v486 = vadd.f32 %v456, %v477
    %v487 = vadd.f32 %v457, %v479
    %v488 = vmul.f32 %v49, %v138
    %v489 = vmul.f32 %v50, %v138
    %v490 = vmul.f32 %v51, %v138
    %v491 = vmul.f32 %v52, %v138
    %v492 = vmul.f32 %v54, %v143
    %v493 = vmul.f32 %v55, %v143
    %v494 = vmul.f32 %v56, %v143
    %v495 = vmul.f32 %v57, %v143
    %v496 = vadd.f32 %v488, %v492
    %v497 = vadd.f32 %v489, %v493
    %v498 = vadd.f32 %v490, %v494
    %v499 = vadd.f32 %v491, %v495
    %v500 = vmul.f32 %v49, %v152
    %v501 = vmul.f32 %v50, %v152
    %v502 = vmul.f32 %v51, %v152
    %v503 = vmul.f32 %v52, %v152
    %508 = vrot.lane.b32.xlu0 %v500, 127
    %v509 = vpop.permute.xlu0 %508
    %510 = vrot.lane.b32.xlu0 %v501, 127
    %v511 = vpop.permute.xlu0 %510
    %512 = vrot.lane.b32.xlu0 %v502, 127
    %v513 = vpop.permute.xlu0 %512
    %514 = vrot.lane.b32.xlu0 %v503, 127
    %v515 = vpop.permute.xlu0 %514
    %v520 = vadd.f32 %v496, %v509
    %v521 = vadd.f32 %v497, %v511
    %v522 = vadd.f32 %v498, %v513
    %v523 = vadd.f32 %v499, %v515
    %v524 = vmul.f32 %v39, %v177
    %v525 = vmul.f32 %v40, %v177
    %v526 = vmul.f32 %v41, %v177
    %v527 = vmul.f32 %v42, %v177
    %v532 = vrot.slane %v524, 1
    %v533 = vrot.slane %v525, 1
    %v534 = vsel %vm229, %v532, %v533
    %v535 = vrot.slane %v526, 1
    %v536 = vrot.slane %v527, 1
    %v537 = vsel %vm229, %v535, %v536
    %v542 = vadd.f32 %v520, %v534
    %v543 = vadd.f32 %v521, %v533
    %v544 = vadd.f32 %v522, %v537
    %v545 = vadd.f32 %v523, %v536
    %v546 = vmul.f32 %v44, %v186
    %v547 = vmul.f32 %v45, %v186
    %v548 = vmul.f32 %v46, %v186
    %v549 = vmul.f32 %v47, %v186
    %v554 = vrot.slane %v546, 1
    %v555 = vrot.slane %v547, 1
    %v556 = vsel %vm229, %v554, %v555
    %v557 = vrot.slane %v548, 1
    %v558 = vrot.slane %v549, 1
    %v559 = vsel %vm229, %v557, %v558
    %v564 = vadd.f32 %v542, %v556
    %v565 = vadd.f32 %v543, %v555
    %v566 = vadd.f32 %v544, %v559
    %v567 = vadd.f32 %v545, %v558
    %v568 = vmul.f32 %v39, %v195
    %v569 = vmul.f32 %v40, %v195
    %v570 = vmul.f32 %v41, %v195
    %v571 = vmul.f32 %v42, %v195
    %v576 = vrot.slane %v568, 1
    %v577 = vrot.slane %v569, 1
    %v578 = vsel %vm229, %v576, %v577
    %v579 = vrot.slane %v570, 1
    %v580 = vrot.slane %v571, 1
    %v581 = vsel %vm229, %v579, %v580
    %582 = vrot.lane.b32.xlu0 %v578, 127
    %v583 = vpop.permute.xlu0 %582
    %584 = vrot.lane.b32.xlu0 %v577, 127
    %v585 = vpop.permute.xlu0 %584
    %586 = vrot.lane.b32.xlu0 %v581, 127
    %v587 = vpop.permute.xlu0 %586
    %588 = vrot.lane.b32.xlu0 %v580, 127
    %v589 = vpop.permute.xlu0 %588
    %v594 = vadd.f32 %v564, %v583
    %v595 = vadd.f32 %v565, %v585
    %v596 = vadd.f32 %v566, %v587
    %v597 = vadd.f32 %v567, %v589
    %v598 = vmul.f32 %v49, %v220
    %v599 = vmul.f32 %v50, %v220
    %v600 = vmul.f32 %v51, %v220
    %v601 = vmul.f32 %v52, %v220
    %v606 = vrot.slane %v598, 1
    %v607 = vrot.slane %v599, 1
    %v608 = vsel %vm229, %v606, %v607
    %v609 = vrot.slane %v600, 1
    %v610 = vrot.slane %v601, 1
    %v611 = vsel %vm229, %v609, %v610
    %v616 = vadd.f32 %v594, %v608
    %v617 = vadd.f32 %v595, %v607
    %v618 = vadd.f32 %v596, %v611
    %v619 = vadd.f32 %v597, %v610
    %v620 = vmul.f32 %v54, %v244
    %v621 = vmul.f32 %v55, %v244
    %v622 = vmul.f32 %v56, %v244
    %v623 = vmul.f32 %v57, %v244
    %v628 = vrot.slane %v620, 1
    %v629 = vrot.slane %v621, 1
    %v630 = vsel %vm229, %v628, %v629
    %v631 = vrot.slane %v622, 1
    %v632 = vrot.slane %v623, 1
    %v633 = vsel %vm229, %v631, %v632
    %v638 = vadd.f32 %v616, %v630
    %v639 = vadd.f32 %v617, %v629
    %v640 = vadd.f32 %v618, %v633
    %v641 = vadd.f32 %v619, %v632
    %v642 = vmul.f32 %v49, %v267
    %v643 = vmul.f32 %v50, %v267
    %v644 = vmul.f32 %v51, %v267
    %v645 = vmul.f32 %v52, %v267
    %v650 = vrot.slane %v642, 1
    %v651 = vrot.slane %v643, 1
    %v652 = vsel %vm229, %v650, %v651
    %v653 = vrot.slane %v644, 1
    %v654 = vrot.slane %v645, 1
    %v655 = vsel %vm229, %v653, %v654
    %656 = vrot.lane.b32.xlu0 %v652, 127
    %v657 = vpop.permute.xlu0 %656
    %658 = vrot.lane.b32.xlu0 %v651, 127
    %v659 = vpop.permute.xlu0 %658
    %660 = vrot.lane.b32.xlu0 %v655, 127
    %v661 = vpop.permute.xlu0 %660
    %662 = vrot.lane.b32.xlu0 %v654, 127
    %v663 = vpop.permute.xlu0 %662
    %v668 = vadd.f32 %v638, %v657
    %v669 = vadd.f32 %v639, %v659
    %v670 = vadd.f32 %v640, %v661
    %v671 = vadd.f32 %v641, %v663
    %v672 = vmul.f32 %v54, %v138
    %v673 = vmul.f32 %v55, %v138
    %v674 = vmul.f32 %v56, %v138
    %v675 = vmul.f32 %v57, %v138
    %v676 = vmul.f32 %v49, %v143
    %v677 = vmul.f32 %v50, %v143
    %v678 = vmul.f32 %v51, %v143
    %v679 = vmul.f32 %v52, %v143
    %684 = vrot.lane.b32.xlu0 %v676, 127
    %v685 = vpop.permute.xlu0 %684
    %686 = vrot.lane.b32.xlu0 %v677, 127
    %v687 = vpop.permute.xlu0 %686
    %688 = vrot.lane.b32.xlu0 %v678, 127
    %v689 = vpop.permute.xlu0 %688
    %690 = vrot.lane.b32.xlu0 %v679, 127
    %v691 = vpop.permute.xlu0 %690
    %v696 = vadd.f32 %v672, %v685
    %v697 = vadd.f32 %v673, %v687
    %v698 = vadd.f32 %v674, %v689
    %v699 = vadd.f32 %v675, %v691
    %v700 = vmul.f32 %v54, %v152
    %v701 = vmul.f32 %v55, %v152
    %v702 = vmul.f32 %v56, %v152
    %v703 = vmul.f32 %v57, %v152
    %708 = vrot.lane.b32.xlu0 %v700, 127
    %v709 = vpop.permute.xlu0 %708
    %710 = vrot.lane.b32.xlu0 %v701, 127
    %v711 = vpop.permute.xlu0 %710
    %712 = vrot.lane.b32.xlu0 %v702, 127
    %v713 = vpop.permute.xlu0 %712
    %714 = vrot.lane.b32.xlu0 %v703, 127
    %v715 = vpop.permute.xlu0 %714
    %v720 = vadd.f32 %v696, %v709
    %v721 = vadd.f32 %v697, %v711
    %v722 = vadd.f32 %v698, %v713
    %v723 = vadd.f32 %v699, %v715
    %v724 = vmul.f32 %v44, %v177
    %v725 = vmul.f32 %v45, %v177
    %v726 = vmul.f32 %v46, %v177
    %v727 = vmul.f32 %v47, %v177
    %v732 = vrot.slane %v724, 1
    %v733 = vrot.slane %v725, 1
    %v734 = vsel %vm229, %v732, %v733
    %v735 = vrot.slane %v726, 1
    %v736 = vrot.slane %v727, 1
    %v737 = vsel %vm229, %v735, %v736
    %v742 = vadd.f32 %v720, %v734
    %v743 = vadd.f32 %v721, %v733
    %v744 = vadd.f32 %v722, %v737
    %v745 = vadd.f32 %v723, %v736
    %v746 = vmul.f32 %v39, %v186
    %v747 = vmul.f32 %v40, %v186
    %v748 = vmul.f32 %v41, %v186
    %v749 = vmul.f32 %v42, %v186
    %v754 = vrot.slane %v746, 1
    %v755 = vrot.slane %v747, 1
    %v756 = vsel %vm229, %v754, %v755
    %v757 = vrot.slane %v748, 1
    %v758 = vrot.slane %v749, 1
    %v759 = vsel %vm229, %v757, %v758
    %760 = vrot.lane.b32.xlu0 %v756, 127
    %v761 = vpop.permute.xlu0 %760
    %762 = vrot.lane.b32.xlu0 %v755, 127
    %v763 = vpop.permute.xlu0 %762
    %764 = vrot.lane.b32.xlu0 %v759, 127
    %v765 = vpop.permute.xlu0 %764
    %766 = vrot.lane.b32.xlu0 %v758, 127
    %v767 = vpop.permute.xlu0 %766
    %v772 = vadd.f32 %v742, %v761
    %v773 = vadd.f32 %v743, %v763
    %v774 = vadd.f32 %v744, %v765
    %v775 = vadd.f32 %v745, %v767
    %v776 = vmul.f32 %v44, %v195
    %v777 = vmul.f32 %v45, %v195
    %v778 = vmul.f32 %v46, %v195
    %v779 = vmul.f32 %v47, %v195
    %v784 = vrot.slane %v776, 1
    %v785 = vrot.slane %v777, 1
    %v786 = vsel %vm229, %v784, %v785
    %v787 = vrot.slane %v778, 1
    %v788 = vrot.slane %v779, 1
    %v789 = vsel %vm229, %v787, %v788
    %790 = vrot.lane.b32.xlu0 %v786, 127
    %v791 = vpop.permute.xlu0 %790
    %792 = vrot.lane.b32.xlu0 %v785, 127
    %v793 = vpop.permute.xlu0 %792
    %794 = vrot.lane.b32.xlu0 %v789, 127
    %v795 = vpop.permute.xlu0 %794
    %796 = vrot.lane.b32.xlu0 %v788, 127
    %v797 = vpop.permute.xlu0 %796
    %v802 = vadd.f32 %v772, %v791
    %v803 = vadd.f32 %v773, %v793
    %v804 = vadd.f32 %v774, %v795
    %v805 = vadd.f32 %v775, %v797
    %v806 = vmul.f32 %v54, %v220
    %v807 = vmul.f32 %v55, %v220
    %v808 = vmul.f32 %v56, %v220
    %v809 = vmul.f32 %v57, %v220
    %v814 = vrot.slane %v806, 1
    %v815 = vrot.slane %v807, 1
    %v816 = vsel %vm229, %v814, %v815
    %v817 = vrot.slane %v808, 1
    %v818 = vrot.slane %v809, 1
    %v819 = vsel %vm229, %v817, %v818
    %v824 = vadd.f32 %v802, %v816
    %v825 = vadd.f32 %v803, %v815
    %v826 = vadd.f32 %v804, %v819
    %v827 = vadd.f32 %v805, %v818
    %v828 = vmul.f32 %v49, %v244
    %v829 = vmul.f32 %v50, %v244
    %v830 = vmul.f32 %v51, %v244
    %v831 = vmul.f32 %v52, %v244
    %v836 = vrot.slane %v828, 1
    %v837 = vrot.slane %v829, 1
    %v838 = vsel %vm229, %v836, %v837
    %v839 = vrot.slane %v830, 1
    %v840 = vrot.slane %v831, 1
    %v841 = vsel %vm229, %v839, %v840
    %842 = vrot.lane.b32.xlu0 %v838, 127
    %v843 = vpop.permute.xlu0 %842
    %844 = vrot.lane.b32.xlu0 %v837, 127
    %v845 = vpop.permute.xlu0 %844
    %846 = vrot.lane.b32.xlu0 %v841, 127
    %v847 = vpop.permute.xlu0 %846
    %848 = vrot.lane.b32.xlu0 %v840, 127
    %v849 = vpop.permute.xlu0 %848
    %v854 = vadd.f32 %v824, %v843
    %v855 = vadd.f32 %v825, %v845
    %v856 = vadd.f32 %v826, %v847
    %v857 = vadd.f32 %v827, %v849
    %v858 = vmul.f32 %v54, %v267
    %v859 = vmul.f32 %v55, %v267
    %v860 = vmul.f32 %v56, %v267
    %v861 = vmul.f32 %v57, %v267
    %v866 = vrot.slane %v858, 1
    %v867 = vrot.slane %v859, 1
    %v868 = vsel %vm229, %v866, %v867
    %v869 = vrot.slane %v860, 1
    %v870 = vrot.slane %v861, 1
    %v871 = vsel %vm229, %v869, %v870
    %872 = vrot.lane.b32.xlu0 %v868, 127
    %v873 = vpop.permute.xlu0 %872
    %874 = vrot.lane.b32.xlu0 %v867, 127
    %v875 = vpop.permute.xlu0 %874
    %876 = vrot.lane.b32.xlu0 %v871, 127
    %v877 = vpop.permute.xlu0 %876
    %878 = vrot.lane.b32.xlu0 %v870, 127
    %v879 = vpop.permute.xlu0 %878
    %v884 = vadd.f32 %v854, %v873
    %v885 = vadd.f32 %v855, %v875
    %v886 = vadd.f32 %v856, %v877
    %v887 = vadd.f32 %v857, %v879
    %v888 = vmax.f32 %v294, %v484
    %v889 = vmax.f32 %v295, %v485
    %v890 = vmax.f32 %v296, %v486
    %v891 = vmax.f32 %v297, %v487
    %v892 = vmax.f32 %v668, %v884
    %v893 = vmax.f32 %v669, %v885
    %v894 = vmax.f32 %v670, %v886
    %v895 = vmax.f32 %v671, %v887
    %v896 = vmax.f32 %v888, %v892
    %v897 = vmax.f32 %v889, %v893
    %v898 = vmax.f32 %v890, %v894
    %v899 = vmax.f32 %v891, %v895
    %v900 = vstv %s130
    %v901 = vadd.f32 %v896, %v900
    %v902 = vadd.f32 %v897, %v900
    %v903 = vadd.f32 %v898, %v900
    %v904 = vadd.f32 %v899, %v900
    %v905 = vmax.f32 %v901, 0.0
    %v906 = vmax.f32 %v902, 0.0
    %v907 = vmax.f32 %v903, 0.0
    %v908 = vmax.f32 %v904, 0.0
    %v909 = vstv %s67
    %v910 = vmul.f32 %v39, %v909
    %v911 = vmul.f32 %v40, %v909
    %v912 = vmul.f32 %v41, %v909
    %v913 = vmul.f32 %v42, %v909
    %v914 = vstv %s68
    %v915 = vmul.f32 %v44, %v914
    %v916 = vmul.f32 %v45, %v914
    %v917 = vmul.f32 %v46, %v914
    %v918 = vmul.f32 %v47, %v914
    %v919 = vadd.f32 %v910, %v915
    %v920 = vadd.f32 %v911, %v916
    %v921 = vadd.f32 %v912, %v917
    %v922 = vadd.f32 %v913, %v918
    %v923 = vstv %s69
    %v924 = vmul.f32 %v39, %v923
    %v925 = vmul.f32 %v40, %v923
    %v926 = vmul.f32 %v41, %v923
    %v927 = vmul.f32 %v42, %v923
    %932 = vrot.lane.b32.xlu0 %v924, 127
    %v933 = vpop.permute.xlu0 %932
    %934 = vrot.lane.b32.xlu0 %v925, 127
    %v935 = vpop.permute.xlu0 %934
    %936 = vrot.lane.b32.xlu0 %v926, 127
    %v937 = vpop.permute.xlu0 %936
    %938 = vrot.lane.b32.xlu0 %v927, 127
    %v939 = vpop.permute.xlu0 %938
    %v944 = vadd.f32 %v919, %v933
    %v945 = vadd.f32 %v920, %v935
    %v946 = vadd.f32 %v921, %v937
    %v947 = vadd.f32 %v922, %v939
    %v948 = vstv %s70
    %v949 = vmul.f32 %v49, %v948
    %v950 = vmul.f32 %v50, %v948
    %v951 = vmul.f32 %v51, %v948
    %v952 = vmul.f32 %v52, %v948
    %v953 = vadd.f32 %v944, %v949
    %v954 = vadd.f32 %v945, %v950
    %v955 = vadd.f32 %v946, %v951
    %v956 = vadd.f32 %v947, %v952
    %v957 = vstv %s71
    %v958 = vmul.f32 %v54, %v957
    %v959 = vmul.f32 %v55, %v957
    %v960 = vmul.f32 %v56, %v957
    %v961 = vmul.f32 %v57, %v957
    %v962 = vadd.f32 %v953, %v958
    %v963 = vadd.f32 %v954, %v959
    %v964 = vadd.f32 %v955, %v960
    %v965 = vadd.f32 %v956, %v961
    %v966 = vstv %s72
    %v967 = vmul.f32 %v49, %v966
    %v968 = vmul.f32 %v50, %v966
    %v969 = vmul.f32 %v51, %v966
    %v970 = vmul.f32 %v52, %v966
    %975 = vrot.lane.b32.xlu0 %v967, 127
    %v976 = vpop.permute.xlu0 %975
    %977 = vrot.lane.b32.xlu0 %v968, 127
    %v978 = vpop.permute.xlu0 %977
    %979 = vrot.lane.b32.xlu0 %v969, 127
    %v980 = vpop.permute.xlu0 %979
    %981 = vrot.lane.b32.xlu0 %v970, 127
    %v982 = vpop.permute.xlu0 %981
    %v987 = vadd.f32 %v962, %v976
    %v988 = vadd.f32 %v963, %v978
    %v989 = vadd.f32 %v964, %v980
    %v990 = vadd.f32 %v965, %v982
    %v991 = vstv %s73
    %v992 = vmul.f32 %v39, %v991
    %v993 = vmul.f32 %v40, %v991
    %v994 = vmul.f32 %v41, %v991
    %v995 = vmul.f32 %v42, %v991
    %v1000 = vrot.slane %v992, 1
    %v1001 = vrot.slane %v993, 1
    %v1002 = vsel %vm229, %v1000, %v1001
    %v1003 = vrot.slane %v994, 1
    %v1004 = vrot.slane %v995, 1
    %v1005 = vsel %vm229, %v1003, %v1004
    %v1010 = vadd.f32 %v987, %v1002
    %v1011 = vadd.f32 %v988, %v1001
    %v1012 = vadd.f32 %v989, %v1005
    %v1013 = vadd.f32 %v990, %v1004
    %v1014 = vstv %s74
    %v1015 = vmul.f32 %v44, %v1014
    %v1016 = vmul.f32 %v45, %v1014
    %v1017 = vmul.f32 %v46, %v1014
    %v1018 = vmul.f32 %v47, %v1014
    %v1023 = vrot.slane %v1015, 1
    %v1024 = vrot.slane %v1016, 1
    %v1025 = vsel %vm229, %v1023, %v1024
    %v1026 = vrot.slane %v1017, 1
    %v1027 = vrot.slane %v1018, 1
    %v1028 = vsel %vm229, %v1026, %v1027
    %v1033 = vadd.f32 %v1010, %v1025
    %v1034 = vadd.f32 %v1011, %v1024
    %v1035 = vadd.f32 %v1012, %v1028
    %v1036 = vadd.f32 %v1013, %v1027
    %v1037 = vstv %s75
    %v1038 = vmul.f32 %v39, %v1037
    %v1039 = vmul.f32 %v40, %v1037
    %v1040 = vmul.f32 %v41, %v1037
    %v1041 = vmul.f32 %v42, %v1037
    %v1046 = vrot.slane %v1038, 1
    %v1047 = vrot.slane %v1039, 1
    %v1048 = vsel %vm229, %v1046, %v1047
    %v1049 = vrot.slane %v1040, 1
    %v1050 = vrot.slane %v1041, 1
    %v1051 = vsel %vm229, %v1049, %v1050
    %1052 = vrot.lane.b32.xlu0 %v1048, 127
    %v1053 = vpop.permute.xlu0 %1052
    %1054 = vrot.lane.b32.xlu0 %v1047, 127
    %v1055 = vpop.permute.xlu0 %1054
    %1056 = vrot.lane.b32.xlu0 %v1051, 127
    %v1057 = vpop.permute.xlu0 %1056
    %1058 = vrot.lane.b32.xlu0 %v1050, 127
    %v1059 = vpop.permute.xlu0 %1058
    %v1064 = vadd.f32 %v1033, %v1053
    %v1065 = vadd.f32 %v1034, %v1055
    %v1066 = vadd.f32 %v1035, %v1057
    %v1067 = vadd.f32 %v1036, %v1059
    %v1068 = vmul.f32 %v44, %v909
    %v1069 = vmul.f32 %v45, %v909
    %v1070 = vmul.f32 %v46, %v909
    %v1071 = vmul.f32 %v47, %v909
    %v1072 = vmul.f32 %v39, %v914
    %v1073 = vmul.f32 %v40, %v914
    %v1074 = vmul.f32 %v41, %v914
    %v1075 = vmul.f32 %v42, %v914
    %1080 = vrot.lane.b32.xlu0 %v1072, 127
    %v1081 = vpop.permute.xlu0 %1080
    %1082 = vrot.lane.b32.xlu0 %v1073, 127
    %v1083 = vpop.permute.xlu0 %1082
    %1084 = vrot.lane.b32.xlu0 %v1074, 127
    %v1085 = vpop.permute.xlu0 %1084
    %1086 = vrot.lane.b32.xlu0 %v1075, 127
    %v1087 = vpop.permute.xlu0 %1086
    %v1092 = vadd.f32 %v1068, %v1081
    %v1093 = vadd.f32 %v1069, %v1083
    %v1094 = vadd.f32 %v1070, %v1085
    %v1095 = vadd.f32 %v1071, %v1087
    %v1096 = vmul.f32 %v44, %v923
    %v1097 = vmul.f32 %v45, %v923
    %v1098 = vmul.f32 %v46, %v923
    %v1099 = vmul.f32 %v47, %v923
    %1104 = vrot.lane.b32.xlu0 %v1096, 127
    %v1105 = vpop.permute.xlu0 %1104
    %1106 = vrot.lane.b32.xlu0 %v1097, 127
    %v1107 = vpop.permute.xlu0 %1106
    %1108 = vrot.lane.b32.xlu0 %v1098, 127
    %v1109 = vpop.permute.xlu0 %1108
    %1110 = vrot.lane.b32.xlu0 %v1099, 127
    %v1111 = vpop.permute.xlu0 %1110
    %v1116 = vadd.f32 %v1092, %v1105
    %v1117 = vadd.f32 %v1093, %v1107
    %v1118 = vadd.f32 %v1094, %v1109
    %v1119 = vadd.f32 %v1095, %v1111
    %v1120 = vmul.f32 %v54, %v948
    %v1121 = vmul.f32 %v55, %v948
    %v1122 = vmul.f32 %v56, %v948
    %v1123 = vmul.f32 %v57, %v948
    %v1124 = vadd.f32 %v1116, %v1120
    %v1125 = vadd.f32 %v1117, %v1121
    %v1126 = vadd.f32 %v1118, %v1122
    %v1127 = vadd.f32 %v1119, %v1123
    %v1128 = vmul.f32 %v49, %v957
    %v1129 = vmul.f32 %v50, %v957
    %v1130 = vmul.f32 %v51, %v957
    %v1131 = vmul.f32 %v52, %v957
    %1136 = vrot.lane.b32.xlu0 %v1128, 127
    %v1137 = vpop.permute.xlu0 %1136
    %1138 = vrot.lane.b32.xlu0 %v1129, 127
    %v1139 = vpop.permute.xlu0 %1138
    %1140 = vrot.lane.b32.xlu0 %v1130, 127
    %v1141 = vpop.permute.xlu0 %1140
    %1142 = vrot.lane.b32.xlu0 %v1131, 127
    %v1143 = vpop.permute.xlu0 %1142
    %v1148 = vadd.f32 %v1124, %v1137
    %v1149 = vadd.f32 %v1125, %v1139
    %v1150 = vadd.f32 %v1126, %v1141
    %v1151 = vadd.f32 %v1127, %v1143
    %v1152 = vmul.f32 %v54, %v966
    %v1153 = vmul.f32 %v55, %v966
    %v1154 = vmul.f32 %v56, %v966
    %v1155 = vmul.f32 %v57, %v966
    %1160 = vrot.lane.b32.xlu0 %v1152, 127
    %v1161 = vpop.permute.xlu0 %1160
    %1162 = vrot.lane.b32.xlu0 %v1153, 127
    %v1163 = vpop.permute.xlu0 %1162
    %1164 = vrot.lane.b32.xlu0 %v1154, 127
    %v1165 = vpop.permute.xlu0 %1164
    %1166 = vrot.lane.b32.xlu0 %v1155, 127
    %v1167 = vpop.permute.xlu0 %1166
    %v1172 = vadd.f32 %v1148, %v1161
    %v1173 = vadd.f32 %v1149, %v1163
    %v1174 = vadd.f32 %v1150, %v1165
    %v1175 = vadd.f32 %v1151, %v1167
    %v1176 = vmul.f32 %v44, %v991
    %v1177 = vmul.f32 %v45, %v991
    %v1178 = vmul.f32 %v46, %v991
    %v1179 = vmul.f32 %v47, %v991
    %v1184 = vrot.slane %v1176, 1
    %v1185 = vrot.slane %v1177, 1
    %v1186 = vsel %vm229, %v1184, %v1185
    %v1187 = vrot.slane %v1178, 1
    %v1188 = vrot.slane %v1179, 1
    %v1189 = vsel %vm229, %v1187, %v1188
    %v1194 = vadd.f32 %v1172, %v1186
    %v1195 = vadd.f32 %v1173, %v1185
    %v1196 = vadd.f32 %v1174, %v1189
    %v1197 = vadd.f32 %v1175, %v1188
    %v1198 = vmul.f32 %v39, %v1014
    %v1199 = vmul.f32 %v40, %v1014
    %v1200 = vmul.f32 %v41, %v1014
    %v1201 = vmul.f32 %v42, %v1014
    %v1206 = vrot.slane %v1198, 1
    %v1207 = vrot.slane %v1199, 1
    %v1208 = vsel %vm229, %v1206, %v1207
    %v1209 = vrot.slane %v1200, 1
    %v1210 = vrot.slane %v1201, 1
    %v1211 = vsel %vm229, %v1209, %v1210
    %1212 = vrot.lane.b32.xlu0 %v1208, 127
    %v1213 = vpop.permute.xlu0 %1212
    %1214 = vrot.lane.b32.xlu0 %v1207, 127
    %v1215 = vpop.permute.xlu0 %1214
    %1216 = vrot.lane.b32.xlu0 %v1211, 127
    %v1217 = vpop.permute.xlu0 %1216
    %1218 = vrot.lane.b32.xlu0 %v1210, 127
    %v1219 = vpop.permute.xlu0 %1218
    %v1224 = vadd.f32 %v1194, %v1213
    %v1225 = vadd.f32 %v1195, %v1215
    %v1226 = vadd.f32 %v1196, %v1217
    %v1227 = vadd.f32 %v1197, %v1219
    %v1228 = vmul.f32 %v44, %v1037
    %v1229 = vmul.f32 %v45, %v1037
    %v1230 = vmul.f32 %v46, %v1037
    %v1231 = vmul.f32 %v47, %v1037
    %v1236 = vrot.slane %v1228, 1
    %v1237 = vrot.slane %v1229, 1
    %v1238 = vsel %vm229, %v1236, %v1237
    %v1239 = vrot.slane %v1230, 1
    %v1240 = vrot.slane %v1231, 1
    %v1241 = vsel %vm229, %v1239, %v1240
    %1242 = vrot.lane.b32.xlu0 %v1238, 127
    %v1243 = vpop.permute.xlu0 %1242
    %1244 = vrot.lane.b32.xlu0 %v1237, 127
    %v1245 = vpop.permute.xlu0 %1244
    %1246 = vrot.lane.b32.xlu0 %v1241, 127
    %v1247 = vpop.permute.xlu0 %1246
    %1248 = vrot.lane.b32.xlu0 %v1240, 127
    %v1249 = vpop.permute.xlu0 %1248
    %v1254 = vadd.f32 %v1224, %v1243
    %v1255 = vadd.f32 %v1225, %v1245
    %v1256 = vadd.f32 %v1226, %v1247
    %v1257 = vadd.f32 %v1227, %v1249
    %v1258 = vmul.f32 %v49, %v909
    %v1259 = vmul.f32 %v50, %v909
    %v1260 = vmul.f32 %v51, %v909
    %v1261 = vmul.f32 %v52, %v909
    %v1262 = vmul.f32 %v54, %v914
    %v1263 = vmul.f32 %v55, %v914
    %v1264 = vmul.f32 %v56, %v914
    %v1265 = vmul.f32 %v57, %v914
    %v1266 = vadd.f32 %v1258, %v1262
    %v1267 = vadd.f32 %v1259, %v1263
    %v1268 = vadd.f32 %v1260, %v1264
    %v1269 = vadd.f32 %v1261, %v1265
    %v1270 = vmul.f32 %v49, %v923
    %v1271 = vmul.f32 %v50, %v923
    %v1272 = vmul.f32 %v51, %v923
    %v1273 = vmul.f32 %v52, %v923
    %1278 = vrot.lane.b32.xlu0 %v1270, 127
    %v1279 = vpop.permute.xlu0 %1278
    %1280 = vrot.lane.b32.xlu0 %v1271, 127
    %v1281 = vpop.permute.xlu0 %1280
    %1282 = vrot.lane.b32.xlu0 %v1272, 127
    %v1283 = vpop.permute.xlu0 %1282
    %1284 = vrot.lane.b32.xlu0 %v1273, 127
    %v1285 = vpop.permute.xlu0 %1284
    %v1290 = vadd.f32 %v1266, %v1279
    %v1291 = vadd.f32 %v1267, %v1281
    %v1292 = vadd.f32 %v1268, %v1283
    %v1293 = vadd.f32 %v1269, %v1285
    %v1294 = vmul.f32 %v39, %v948
    %v1295 = vmul.f32 %v40, %v948
    %v1296 = vmul.f32 %v41, %v948
    %v1297 = vmul.f32 %v42, %v948
    %v1302 = vrot.slane %v1294, 1
    %v1303 = vrot.slane %v1295, 1
    %v1304 = vsel %vm229, %v1302, %v1303
    %v1305 = vrot.slane %v1296, 1
    %v1306 = vrot.slane %v1297, 1
    %v1307 = vsel %vm229, %v1305, %v1306
    %v1312 = vadd.f32 %v1290, %v1304
    %v1313 = vadd.f32 %v1291, %v1303
    %v1314 = vadd.f32 %v1292, %v1307
    %v1315 = vadd.f32 %v1293, %v1306
    %v1316 = vmul.f32 %v44, %v957
    %v1317 = vmul.f32 %v45, %v957
    %v1318 = vmul.f32 %v46, %v957
    %v1319 = vmul.f32 %v47, %v957
    %v1324 = vrot.slane %v1316, 1
    %v1325 = vrot.slane %v1317, 1
    %v1326 = vsel %vm229, %v1324, %v1325
    %v1327 = vrot.slane %v1318, 1
    %v1328 = vrot.slane %v1319, 1
    %v1329 = vsel %vm229, %v1327, %v1328
    %v1334 = vadd.f32 %v1312, %v1326
    %v1335 = vadd.f32 %v1313, %v1325
    %v1336 = vadd.f32 %v1314, %v1329
    %v1337 = vadd.f32 %v1315, %v1328
    %v1338 = vmul.f32 %v39, %v966
    %v1339 = vmul.f32 %v40, %v966
    %v1340 = vmul.f32 %v41, %v966
    %v1341 = vmul.f32 %v42, %v966
    %v1346 = vrot.slane %v1338, 1
    %v1347 = vrot.slane %v1339, 1
    %v1348 = vsel %vm229, %v1346, %v1347
    %v1349 = vrot.slane %v1340, 1
    %v1350 = vrot.slane %v1341, 1
    %v1351 = vsel %vm229, %v1349, %v1350
    %1352 = vrot.lane.b32.xlu0 %v1348, 127
    %v1353 = vpop.permute.xlu0 %1352
    %1354 = vrot.lane.b32.xlu0 %v1347, 127
    %v1355 = vpop.permute.xlu0 %1354
    %1356 = vrot.lane.b32.xlu0 %v1351, 127
    %v1357 = vpop.permute.xlu0 %1356
    %1358 = vrot.lane.b32.xlu0 %v1350, 127
    %v1359 = vpop.permute.xlu0 %1358
    %v1364 = vadd.f32 %v1334, %v1353
    %v1365 = vadd.f32 %v1335, %v1355
    %v1366 = vadd.f32 %v1336, %v1357
    %v1367 = vadd.f32 %v1337, %v1359
    %v1368 = vmul.f32 %v49, %v991
    %v1369 = vmul.f32 %v50, %v991
    %v1370 = vmul.f32 %v51, %v991
    %v1371 = vmul.f32 %v52, %v991
    %v1376 = vrot.slane %v1368, 1
    %v1377 = vrot.slane %v1369, 1
    %v1378 = vsel %vm229, %v1376, %v1377
    %v1379 = vrot.slane %v1370, 1
    %v1380 = vrot.slane %v1371, 1
    %v1381 = vsel %vm229, %v1379, %v1380
    %v1386 = vadd.f32 %v1364, %v1378
    %v1387 = vadd.f32 %v1365, %v1377
    %v1388 = vadd.f32 %v1366, %v1381
    %v1389 = vadd.f32 %v1367, %v1380
    %v1390 = vmul.f32 %v54, %v1014
    %v1391 = vmul.f32 %v55, %v1014
    %v1392 = vmul.f32 %v56, %v1014
    %v1393 = vmul.f32 %v57, %v1014
    %v1398 = vrot.slane %v1390, 1
    %v1399 = vrot.slane %v1391, 1
    %v1400 = vsel %vm229, %v1398, %v1399
    %v1401 = vrot.slane %v1392, 1
    %v1402 = vrot.slane %v1393, 1
    %v1403 = vsel %vm229, %v1401, %v1402
    %v1408 = vadd.f32 %v1386, %v1400
    %v1409 = vadd.f32 %v1387, %v1399
    %v1410 = vadd.f32 %v1388, %v1403
    %v1411 = vadd.f32 %v1389, %v1402
    %v1412 = vmul.f32 %v49, %v1037
    %v1413 = vmul.f32 %v50, %v1037
    %v1414 = vmul.f32 %v51, %v1037
    %v1415 = vmul.f32 %v52, %v1037
    %v1420 = vrot.slane %v1412, 1
    %v1421 = vrot.slane %v1413, 1
    %v1422 = vsel %vm229, %v1420, %v1421
    %v1423 = vrot.slane %v1414, 1
    %v1424 = vrot.slane %v1415, 1
    %v1425 = vsel %vm229, %v1423, %v1424
    %1426 = vrot.lane.b32.xlu0 %v1422, 127
    %v1427 = vpop.permute.xlu0 %1426
    %1428 = vrot.lane.b32.xlu0 %v1421, 127
    %v1429 = vpop.permute.xlu0 %1428
    %1430 = vrot.lane.b32.xlu0 %v1425, 127
    %v1431 = vpop.permute.xlu0 %1430
    %1432 = vrot.lane.b32.xlu0 %v1424, 127
    %v1433 = vpop.permute.xlu0 %1432
    %v1438 = vadd.f32 %v1408, %v1427
    %v1439 = vadd.f32 %v1409, %v1429
    %v1440 = vadd.f32 %v1410, %v1431
    %v1441 = vadd.f32 %v1411, %v1433
    %v1442 = vmul.f32 %v54, %v909
    %v1443 = vmul.f32 %v55, %v909
    %v1444 = vmul.f32 %v56, %v909
    %v1445 = vmul.f32 %v57, %v909
    %v1446 = vmul.f32 %v49, %v914
    %v1447 = vmul.f32 %v50, %v914
    %v1448 = vmul.f32 %v51, %v914
    %v1449 = vmul.f32 %v52, %v914
    %1454 = vrot.lane.b32.xlu0 %v1446, 127
    %v1455 = vpop.permute.xlu0 %1454
    %1456 = vrot.lane.b32.xlu0 %v1447, 127
    %v1457 = vpop.permute.xlu0 %1456
    %1458 = vrot.lane.b32.xlu0 %v1448, 127
    %v1459 = vpop.permute.xlu0 %1458
    %1460 = vrot.lane.b32.xlu0 %v1449, 127
    %v1461 = vpop.permute.xlu0 %1460
    %v1466 = vadd.f32 %v1442, %v1455
    %v1467 = vadd.f32 %v1443, %v1457
    %v1468 = vadd.f32 %v1444, %v1459
    %v1469 = vadd.f32 %v1445, %v1461
    %v1470 = vmul.f32 %v54, %v923
    %v1471 = vmul.f32 %v55, %v923
    %v1472 = vmul.f32 %v56, %v923
    %v1473 = vmul.f32 %v57, %v923
    %1478 = vrot.lane.b32.xlu0 %v1470, 127
    %v1479 = vpop.permute.xlu0 %1478
    %1480 = vrot.lane.b32.xlu0 %v1471, 127
    %v1481 = vpop.permute.xlu0 %1480
    %1482 = vrot.lane.b32.xlu0 %v1472, 127
    %v1483 = vpop.permute.xlu0 %1482
    %1484 = vrot.lane.b32.xlu0 %v1473, 127
    %v1485 = vpop.permute.xlu0 %1484
    %v1490 = vadd.f32 %v1466, %v1479
    %v1491 = vadd.f32 %v1467, %v1481
    %v1492 = vadd.f32 %v1468, %v1483
    %v1493 = vadd.f32 %v1469, %v1485
    %v1494 = vmul.f32 %v44, %v948
    %v1495 = vmul.f32 %v45, %v948
    %v1496 = vmul.f32 %v46, %v948
    %v1497 = vmul.f32 %v47, %v948
    %v1502 = vrot.slane %v1494, 1
    %v1503 = vrot.slane %v1495, 1
    %v1504 = vsel %vm229, %v1502, %v1503
    %v1505 = vrot.slane %v1496, 1
    %v1506 = vrot.slane %v1497, 1
    %v1507 = vsel %vm229, %v1505, %v1506
    %v1512 = vadd.f32 %v1490, %v1504
    %v1513 = vadd.f32 %v1491, %v1503
    %v1514 = vadd.f32 %v1492, %v1507
    %v1515 = vadd.f32 %v1493, %v1506
    %v1516 = vmul.f32 %v39, %v957
    %v1517 = vmul.f32 %v40, %v957
    %v1518 = vmul.f32 %v41, %v957
    %v1519 = vmul.f32 %v42, %v957
    %v1524 = vrot.slane %v1516, 1
    %v1525 = vrot.slane %v1517, 1
    %v1526 = vsel %vm229, %v1524, %v1525
    %v1527 = vrot.slane %v1518, 1
    %v1528 = vrot.slane %v1519, 1
    %v1529 = vsel %vm229, %v1527, %v1528
    %1530 = vrot.lane.b32.xlu0 %v1526, 127
    %v1531 = vpop.permute.xlu0 %1530
    %1532 = vrot.lane.b32.xlu0 %v1525, 127
    %v1533 = vpop.permute.xlu0 %1532
    %1534 = vrot.lane.b32.xlu0 %v1529, 127
    %v1535 = vpop.permute.xlu0 %1534
    %1536 = vrot.lane.b32.xlu0 %v1528, 127
    %v1537 = vpop.permute.xlu0 %1536
    %v1542 = vadd.f32 %v1512, %v1531
    %v1543 = vadd.f32 %v1513, %v1533
    %v1544 = vadd.f32 %v1514, %v1535
    %v1545 = vadd.f32 %v1515, %v1537
    %v1546 = vmul.f32 %v44, %v966
    %v1547 = vmul.f32 %v45, %v966
    %v1548 = vmul.f32 %v46, %v966
    %v1549 = vmul.f32 %v47, %v966
    %v1554 = vrot.slane %v1546, 1
    %v1555 = vrot.slane %v1547, 1
    %v1556 = vsel %vm229, %v1554, %v1555
    %v1557 = vrot.slane %v1548, 1
    %v1558 = vrot.slane %v1549, 1
    %v1559 = vsel %vm229, %v1557, %v1558
    %1560 = vrot.lane.b32.xlu0 %v1556, 127
    %v1561 = vpop.permute.xlu0 %1560
    %1562 = vrot.lane.b32.xlu0 %v1555, 127
    %v1563 = vpop.permute.xlu0 %1562
    %1564 = vrot.lane.b32.xlu0 %v1559, 127
    %v1565 = vpop.permute.xlu0 %1564
    %1566 = vrot.lane.b32.xlu0 %v1558, 127
    %v1567 = vpop.permute.xlu0 %1566
    %v1572 = vadd.f32 %v1542, %v1561
    %v1573 = vadd.f32 %v1543, %v1563
    %v1574 = vadd.f32 %v1544, %v1565
    %v1575 = vadd.f32 %v1545, %v1567
    %v1576 = vmul.f32 %v54, %v991
    %v1577 = vmul.f32 %v55, %v991
    %v1578 = vmul.f32 %v56, %v991
    %v1579 = vmul.f32 %v57, %v991
    %v1584 = vrot.slane %v1576, 1
    %v1585 = vrot.slane %v1577, 1
    %v1586 = vsel %vm229, %v1584, %v1585
    %v1587 = vrot.slane %v1578, 1
    %v1588 = vrot.slane %v1579, 1
    %v1589 = vsel %vm229, %v1587, %v1588
    %v1594 = vadd.f32 %v1572, %v1586
    %v1595 = vadd.f32 %v1573, %v1585
    %v1596 = vadd.f32 %v1574, %v1589
    %v1597 = vadd.f32 %v1575, %v1588
    %v1598 = vmul.f32 %v49, %v1014
    %v1599 = vmul.f32 %v50, %v1014
    %v1600 = vmul.f32 %v51, %v1014
    %v1601 = vmul.f32 %v52, %v1014
    %v1606 = vrot.slane %v1598, 1
    %v1607 = vrot.slane %v1599, 1
    %v1608 = vsel %vm229, %v1606, %v1607
    %v1609 = vrot.slane %v1600, 1
    %v1610 = vrot.slane %v1601, 1
    %v1611 = vsel %vm229, %v1609, %v1610
    %1612 = vrot.lane.b32.xlu0 %v1608, 127
    %v1613 = vpop.permute.xlu0 %1612
    %1614 = vrot.lane.b32.xlu0 %v1607, 127
    %v1615 = vpop.permute.xlu0 %1614
    %1616 = vrot.lane.b32.xlu0 %v1611, 127
    %v1617 = vpop.permute.xlu0 %1616
    %1618 = vrot.lane.b32.xlu0 %v1610, 127
    %v1619 = vpop.permute.xlu0 %1618
    %v1624 = vadd.f32 %v1594, %v1613
    %v1625 = vadd.f32 %v1595, %v1615
    %v1626 = vadd.f32 %v1596, %v1617
    %v1627 = vadd.f32 %v1597, %v1619
    %v1628 = vmul.f32 %v54, %v1037
    %v1629 = vmul.f32 %v55, %v1037
    %v1630 = vmul.f32 %v56, %v1037
    %v1631 = vmul.f32 %v57, %v1037
    %v1636 = vrot.slane %v1628, 1
    %v1637 = vrot.slane %v1629, 1
    %v1638 = vsel %vm229, %v1636, %v1637
    %v1639 = vrot.slane %v1630, 1
    %v1640 = vrot.slane %v1631, 1
    %v1641 = vsel %vm229, %v1639, %v1640
    %1642 = vrot.lane.b32.xlu0 %v1638, 127
    %v1643 = vpop.permute.xlu0 %1642
    %1644 = vrot.lane.b32.xlu0 %v1637, 127
    %v1645 = vpop.permute.xlu0 %1644
    %1646 = vrot.lane.b32.xlu0 %v1641, 127
    %v1647 = vpop.permute.xlu0 %1646
    %1648 = vrot.lane.b32.xlu0 %v1640, 127
    %v1649 = vpop.permute.xlu0 %1648
    %v1654 = vadd.f32 %v1624, %v1643
    %v1655 = vadd.f32 %v1625, %v1645
    %v1656 = vadd.f32 %v1626, %v1647
    %v1657 = vadd.f32 %v1627, %v1649
    %v1658 = vmax.f32 %v1064, %v1254
    %v1659 = vmax.f32 %v1065, %v1255
    %v1660 = vmax.f32 %v1066, %v1256
    %v1661 = vmax.f32 %v1067, %v1257
    %v1662 = vmax.f32 %v1438, %v1654
    %v1663 = vmax.f32 %v1439, %v1655
    %v1664 = vmax.f32 %v1440, %v1656
    %v1665 = vmax.f32 %v1441, %v1657
    %v1666 = vmax.f32 %v1658, %v1662
    %v1667 = vmax.f32 %v1659, %v1663
    %v1668 = vmax.f32 %v1660, %v1664
    %v1669 = vmax.f32 %v1661, %v1665
    %v1670 = vstv %s131
    %v1671 = vadd.f32 %v1666, %v1670
    %v1672 = vadd.f32 %v1667, %v1670
    %v1673 = vadd.f32 %v1668, %v1670
    %v1674 = vadd.f32 %v1669, %v1670
    %v1675 = vmax.f32 %v1671, 0.0
    %v1676 = vmax.f32 %v1672, 0.0
    %v1677 = vmax.f32 %v1673, 0.0
    %v1678 = vmax.f32 %v1674, 0.0
    %v1679 = vstv %s76
    %v1680 = vmul.f32 %v39, %v1679
    %v1681 = vmul.f32 %v40, %v1679
    %v1682 = vmul.f32 %v41, %v1679
    %v1683 = vmul.f32 %v42, %v1679
    %v1684 = vstv %s77
    %v1685 = vmul.f32 %v44, %v1684
    %v1686 = vmul.f32 %v45, %v1684
    %v1687 = vmul.f32 %v46, %v1684
    %v1688 = vmul.f32 %v47, %v1684
    %v1689 = vadd.f32 %v1680, %v1685
    %v1690 = vadd.f32 %v1681, %v1686
    %v1691 = vadd.f32 %v1682, %v1687
    %v1692 = vadd.f32 %v1683, %v1688
    %v1693 = vstv %s78
    %v1694 = vmul.f32 %v39, %v1693
    %v1695 = vmul.f32 %v40, %v1693
    %v1696 = vmul.f32 %v41, %v1693
    %v1697 = vmul.f32 %v42, %v1693
    %1702 = vrot.lane.b32.xlu0 %v1694, 127
    %v1703 = vpop.permute.xlu0 %1702
    %1704 = vrot.lane.b32.xlu0 %v1695, 127
    %v1705 = vpop.permute.xlu0 %1704
    %1706 = vrot.lane.b32.xlu0 %v1696, 127
    %v1707 = vpop.permute.xlu0 %1706
    %1708 = vrot.lane.b32.xlu0 %v1697, 127
    %v1709 = vpop.permute.xlu0 %1708
    %v1714 = vadd.f32 %v1689, %v1703
    %v1715 = vadd.f32 %v1690, %v1705
    %v1716 = vadd.f32 %v1691, %v1707
    %v1717 = vadd.f32 %v1692, %v1709
    %v1718 = vstv %s79
    %v1719 = vmul.f32 %v49, %v1718
    %v1720 = vmul.f32 %v50, %v1718
    %v1721 = vmul.f32 %v51, %v1718
    %v1722 = vmul.f32 %v52, %v1718
    %v1723 = vadd.f32 %v1714, %v1719
    %v1724 = vadd.f32 %v1715, %v1720
    %v1725 = vadd.f32 %v1716, %v1721
    %v1726 = vadd.f32 %v1717, %v1722
    %v1727 = vstv %s80
    %v1728 = vmul.f32 %v54, %v1727
    %v1729 = vmul.f32 %v55, %v1727
    %v1730 = vmul.f32 %v56, %v1727
    %v1731 = vmul.f32 %v57, %v1727
    %v1732 = vadd.f32 %v1723, %v1728
    %v1733 = vadd.f32 %v1724, %v1729
    %v1734 = vadd.f32 %v1725, %v1730
    %v1735 = vadd.f32 %v1726, %v1731
    %v1736 = vstv %s81
    %v1737 = vmul.f32 %v49, %v1736
    %v1738 = vmul.f32 %v50, %v1736
    %v1739 = vmul.f32 %v51, %v1736
    %v1740 = vmul.f32 %v52, %v1736
    %1745 = vrot.lane.b32.xlu0 %v1737, 127
    %v1746 = vpop.permute.xlu0 %1745
    %1747 = vrot.lane.b32.xlu0 %v1738, 127
    %v1748 = vpop.permute.xlu0 %1747
    %1749 = vrot.lane.b32.xlu0 %v1739, 127
    %v1750 = vpop.permute.xlu0 %1749
    %1751 = vrot.lane.b32.xlu0 %v1740, 127
    %v1752 = vpop.permute.xlu0 %1751
    %v1757 = vadd.f32 %v1732, %v1746
    %v1758 = vadd.f32 %v1733, %v1748
    %v1759 = vadd.f32 %v1734, %v1750
    %v1760 = vadd.f32 %v1735, %v1752
    %v1761 = vstv %s82
    %v1762 = vmul.f32 %v39, %v1761
    %v1763 = vmul.f32 %v40, %v1761
    %v1764 = vmul.f32 %v41, %v1761
    %v1765 = vmul.f32 %v42, %v1761
    %v1770 = vrot.slane %v1762, 1
    %v1771 = vrot.slane %v1763, 1
    %v1772 = vsel %vm229, %v1770, %v1771
    %v1773 = vrot.slane %v1764, 1
    %v1774 = vrot.slane %v1765, 1
    %v1775 = vsel %vm229, %v1773, %v1774
    %v1780 = vadd.f32 %v1757, %v1772
    %v1781 = vadd.f32 %v1758, %v1771
    %v1782 = vadd.f32 %v1759, %v1775
    %v1783 = vadd.f32 %v1760, %v1774
    %v1784 = vstv %s83
    %v1785 = vmul.f32 %v44, %v1784
    %v1786 = vmul.f32 %v45, %v1784
    %v1787 = vmul.f32 %v46, %v1784
    %v1788 = vmul.f32 %v47, %v1784
    %v1793 = vrot.slane %v1785, 1
    %v1794 = vrot.slane %v1786, 1
    %v1795 = vsel %vm229, %v1793, %v1794
    %v1796 = vrot.slane %v1787, 1
    %v1797 = vrot.slane %v1788, 1
    %v1798 = vsel %vm229, %v1796, %v1797
    %v1803 = vadd.f32 %v1780, %v1795
    %v1804 = vadd.f32 %v1781, %v1794
    %v1805 = vadd.f32 %v1782, %v1798
    %v1806 = vadd.f32 %v1783, %v1797
    %v1807 = vstv %s84
    %v1808 = vmul.f32 %v39, %v1807
    %v1809 = vmul.f32 %v40, %v1807
    %v1810 = vmul.f32 %v41, %v1807
    %v1811 = vmul.f32 %v42, %v1807
    %v1816 = vrot.slane %v1808, 1
    %v1817 = vrot.slane %v1809, 1
    %v1818 = vsel %vm229, %v1816, %v1817
    %v1819 = vrot.slane %v1810, 1
    %v1820 = vrot.slane %v1811, 1
    %v1821 = vsel %vm229, %v1819, %v1820
    %1822 = vrot.lane.b32.xlu0 %v1818, 127
    %v1823 = vpop.permute.xlu0 %1822
    %1824 = vrot.lane.b32.xlu0 %v1817, 127
    %v1825 = vpop.permute.xlu0 %1824
    %1826 = vrot.lane.b32.xlu0 %v1821, 127
    %v1827 = vpop.permute.xlu0 %1826
    %1828 = vrot.lane.b32.xlu0 %v1820, 127
    %v1829 = vpop.permute.xlu0 %1828
    %v1834 = vadd.f32 %v1803, %v1823
    %v1835 = vadd.f32 %v1804, %v1825
    %v1836 = vadd.f32 %v1805, %v1827
    %v1837 = vadd.f32 %v1806, %v1829
    %v1838 = vmul.f32 %v44, %v1679
    %v1839 = vmul.f32 %v45, %v1679
    %v1840 = vmul.f32 %v46, %v1679
    %v1841 = vmul.f32 %v47, %v1679
    %v1842 = vmul.f32 %v39, %v1684
    %v1843 = vmul.f32 %v40, %v1684
    %v1844 = vmul.f32 %v41, %v1684
    %v1845 = vmul.f32 %v42, %v1684
    %1850 = vrot.lane.b32.xlu0 %v1842, 127
    %v1851 = vpop.permute.xlu0 %1850
    %1852 = vrot.lane.b32.xlu0 %v1843, 127
    %v1853 = vpop.permute.xlu0 %1852
    %1854 = vrot.lane.b32.xlu0 %v1844, 127
    %v1855 = vpop.permute.xlu0 %1854
    %1856 = vrot.lane.b32.xlu0 %v1845, 127
    %v1857 = vpop.permute.xlu0 %1856
    %v1862 = vadd.f32 %v1838, %v1851
    %v1863 = vadd.f32 %v1839, %v1853
    %v1864 = vadd.f32 %v1840, %v1855
    %v1865 = vadd.f32 %v1841, %v1857
    %v1866 = vmul.f32 %v44, %v1693
    %v1867 = vmul.f32 %v45, %v1693
    %v1868 = vmul.f32 %v46, %v1693
    %v1869 = vmul.f32 %v47, %v1693
    %1874 = vrot.lane.b32.xlu0 %v1866, 127
    %v1875 = vpop.permute.xlu0 %1874
    %1876 = vrot.lane.b32.xlu0 %v1867, 127
    %v1877 = vpop.permute.xlu0 %1876
    %1878 = vrot.lane.b32.xlu0 %v1868, 127
    %v1879 = vpop.permute.xlu0 %1878
    %1880 = vrot.lane.b32.xlu0 %v1869, 127
    %v1881 = vpop.permute.xlu0 %1880
    %v1886 = vadd.f32 %v1862, %v1875
    %v1887 = vadd.f32 %v1863, %v1877
    %v1888 = vadd.f32 %v1864, %v1879
    %v1889 = vadd.f32 %v1865, %v1881
    %v1890 = vmul.f32 %v54, %v1718
    %v1891 = vmul.f32 %v55, %v1718
    %v1892 = vmul.f32 %v56, %v1718
    %v1893 = vmul.f32 %v57, %v1718
    %v1894 = vadd.f32 %v1886, %v1890
    %v1895 = vadd.f32 %v1887, %v1891
    %v1896 = vadd.f32 %v1888, %v1892
    %v1897 = vadd.f32 %v1889, %v1893
    %v1898 = vmul.f32 %v49, %v1727
    %v1899 = vmul.f32 %v50, %v1727
    %v1900 = vmul.f32 %v51, %v1727
    %v1901 = vmul.f32 %v52, %v1727
    %1906 = vrot.lane.b32.xlu0 %v1898, 127
    %v1907 = vpop.permute.xlu0 %1906
    %1908 = vrot.lane.b32.xlu0 %v1899, 127
    %v1909 = vpop.permute.xlu0 %1908
    %1910 = vrot.lane.b32.xlu0 %v1900, 127
    %v1911 = vpop.permute.xlu0 %1910
    %1912 = vrot.lane.b32.xlu0 %v1901, 127
    %v1913 = vpop.permute.xlu0 %1912
    %v1918 = vadd.f32 %v1894, %v1907
    %v1919 = vadd.f32 %v1895, %v1909
    %v1920 = vadd.f32 %v1896, %v1911
    %v1921 = vadd.f32 %v1897, %v1913
    %v1922 = vmul.f32 %v54, %v1736
    %v1923 = vmul.f32 %v55, %v1736
    %v1924 = vmul.f32 %v56, %v1736
    %v1925 = vmul.f32 %v57, %v1736
    %1930 = vrot.lane.b32.xlu0 %v1922, 127
    %v1931 = vpop.permute.xlu0 %1930
    %1932 = vrot.lane.b32.xlu0 %v1923, 127
    %v1933 = vpop.permute.xlu0 %1932
    %1934 = vrot.lane.b32.xlu0 %v1924, 127
    %v1935 = vpop.permute.xlu0 %1934
    %1936 = vrot.lane.b32.xlu0 %v1925, 127
    %v1937 = vpop.permute.xlu0 %1936
    %v1942 = vadd.f32 %v1918, %v1931
    %v1943 = vadd.f32 %v1919, %v1933
    %v1944 = vadd.f32 %v1920, %v1935
    %v1945 = vadd.f32 %v1921, %v1937
    %v1946 = vmul.f32 %v44, %v1761
    %v1947 = vmul.f32 %v45, %v1761
    %v1948 = vmul.f32 %v46, %v1761
    %v1949 = vmul.f32 %v47, %v1761
    %v1954 = vrot.slane %v1946, 1
    %v1955 = vrot.slane %v1947, 1
    %v1956 = vsel %vm229, %v1954, %v1955
    %v1957 = vrot.slane %v1948, 1
    %v1958 = vrot.slane %v1949, 1
    %v1959 = vsel %vm229, %v1957, %v1958
    %v1964 = vadd.f32 %v1942, %v1956
    %v1965 = vadd.f32 %v1943, %v1955
    %v1966 = vadd.f32 %v1944, %v1959
    %v1967 = vadd.f32 %v1945, %v1958
    %v1968 = vmul.f32 %v39, %v1784
    %v1969 = vmul.f32 %v40, %v1784
    %v1970 = vmul.f32 %v41, %v1784
    %v1971 = vmul.f32 %v42, %v1784
    %v1976 = vrot.slane %v1968, 1
    %v1977 = vrot.slane %v1969, 1
    %v1978 = vsel %vm229, %v1976, %v1977
    %v1979 = vrot.slane %v1970, 1
    %v1980 = vrot.slane %v1971, 1
    %v1981 = vsel %vm229, %v1979, %v1980
    %1982 = vrot.lane.b32.xlu0 %v1978, 127
    %v1983 = vpop.permute.xlu0 %1982
    %1984 = vrot.lane.b32.xlu0 %v1977, 127
    %v1985 = vpop.permute.xlu0 %1984
    %1986 = vrot.lane.b32.xlu0 %v1981, 127
    %v1987 = vpop.permute.xlu0 %1986
    %1988 = vrot.lane.b32.xlu0 %v1980, 127
    %v1989 = vpop.permute.xlu0 %1988
    %v1994 = vadd.f32 %v1964, %v1983
    %v1995 = vadd.f32 %v1965, %v1985
    %v1996 = vadd.f32 %v1966, %v1987
    %v1997 = vadd.f32 %v1967, %v1989
    %v1998 = vmul.f32 %v44, %v1807
    %v1999 = vmul.f32 %v45, %v1807
    %v2000 = vmul.f32 %v46, %v1807
    %v2001 = vmul.f32 %v47, %v1807
    %v2006 = vrot.slane %v1998, 1
    %v2007 = vrot.slane %v1999, 1
    %v2008 = vsel %vm229, %v2006, %v2007
    %v2009 = vrot.slane %v2000, 1
    %v2010 = vrot.slane %v2001, 1
    %v2011 = vsel %vm229, %v2009, %v2010
    %2012 = vrot.lane.b32.xlu0 %v2008, 127
    %v2013 = vpop.permute.xlu0 %2012
    %2014 = vrot.lane.b32.xlu0 %v2007, 127
    %v2015 = vpop.permute.xlu0 %2014
    %2016 = vrot.lane.b32.xlu0 %v2011, 127
    %v2017 = vpop.permute.xlu0 %2016
    %2018 = vrot.lane.b32.xlu0 %v2010, 127
    %v2019 = vpop.permute.xlu0 %2018
    %v2024 = vadd.f32 %v1994, %v2013
    %v2025 = vadd.f32 %v1995, %v2015
    %v2026 = vadd.f32 %v1996, %v2017
    %v2027 = vadd.f32 %v1997, %v2019
    %v2028 = vmul.f32 %v49, %v1679
    %v2029 = vmul.f32 %v50, %v1679
    %v2030 = vmul.f32 %v51, %v1679
    %v2031 = vmul.f32 %v52, %v1679
    %v2032 = vmul.f32 %v54, %v1684
    %v2033 = vmul.f32 %v55, %v1684
    %v2034 = vmul.f32 %v56, %v1684
    %v2035 = vmul.f32 %v57, %v1684
    %v2036 = vadd.f32 %v2028, %v2032
    %v2037 = vadd.f32 %v2029, %v2033
    %v2038 = vadd.f32 %v2030, %v2034
    %v2039 = vadd.f32 %v2031, %v2035
    %v2040 = vmul.f32 %v49, %v1693
    %v2041 = vmul.f32 %v50, %v1693
    %v2042 = vmul.f32 %v51, %v1693
    %v2043 = vmul.f32 %v52, %v1693
    %2048 = vrot.lane.b32.xlu0 %v2040, 127
    %v2049 = vpop.permute.xlu0 %2048
    %2050 = vrot.lane.b32.xlu0 %v2041, 127
    %v2051 = vpop.permute.xlu0 %2050
    %2052 = vrot.lane.b32.xlu0 %v2042, 127
    %v2053 = vpop.permute.xlu0 %2052
    %2054 = vrot.lane.b32.xlu0 %v2043, 127
    %v2055 = vpop.permute.xlu0 %2054
    %v2060 = vadd.f32 %v2036, %v2049
    %v2061 = vadd.f32 %v2037, %v2051
    %v2062 = vadd.f32 %v2038, %v2053
    %v2063 = vadd.f32 %v2039, %v2055
    %v2064 = vmul.f32 %v39, %v1718
    %v2065 = vmul.f32 %v40, %v1718
    %v2066 = vmul.f32 %v41, %v1718
    %v2067 = vmul.f32 %v42, %v1718
    %v2072 = vrot.slane %v2064, 1
    %v2073 = vrot.slane %v2065, 1
    %v2074 = vsel %vm229, %v2072, %v2073
    %v2075 = vrot.slane %v2066, 1
    %v2076 = vrot.slane %v2067, 1
    %v2077 = vsel %vm229, %v2075, %v2076
    %v2082 = vadd.f32 %v2060, %v2074
    %v2083 = vadd.f32 %v2061, %v2073
    %v2084 = vadd.f32 %v2062, %v2077
    %v2085 = vadd.f32 %v2063, %v2076
    %v2086 = vmul.f32 %v44, %v1727
    %v2087 = vmul.f32 %v45, %v1727
    %v2088 = vmul.f32 %v46, %v1727
    %v2089 = vmul.f32 %v47, %v1727
    %v2094 = vrot.slane %v2086, 1
    %v2095 = vrot.slane %v2087, 1
    %v2096 = vsel %vm229, %v2094, %v2095
    %v2097 = vrot.slane %v2088, 1
    %v2098 = vrot.slane %v2089, 1
    %v2099 = vsel %vm229, %v2097, %v2098
    %v2104 = vadd.f32 %v2082, %v2096
    %v2105 = vadd.f32 %v2083, %v2095
    %v2106 = vadd.f32 %v2084, %v2099
    %v2107 = vadd.f32 %v2085, %v2098
    %v2108 = vmul.f32 %v39, %v1736
    %v2109 = vmul.f32 %v40, %v1736
    %v2110 = vmul.f32 %v41, %v1736
    %v2111 = vmul.f32 %v42, %v1736
    %v2116 = vrot.slane %v2108, 1
    %v2117 = vrot.slane %v2109, 1
    %v2118 = vsel %vm229, %v2116, %v2117
    %v2119 = vrot.slane %v2110, 1
    %v2120 = vrot.slane %v2111, 1
    %v2121 = vsel %vm229, %v2119, %v2120
    %2122 = vrot.lane.b32.xlu0 %v2118, 127
    %v2123 = vpop.permute.xlu0 %2122
    %2124 = vrot.lane.b32.xlu0 %v2117, 127
    %v2125 = vpop.permute.xlu0 %2124
    %2126 = vrot.lane.b32.xlu0 %v2121, 127
    %v2127 = vpop.permute.xlu0 %2126
    %2128 = vrot.lane.b32.xlu0 %v2120, 127
    %v2129 = vpop.permute.xlu0 %2128
    %v2134 = vadd.f32 %v2104, %v2123
    %v2135 = vadd.f32 %v2105, %v2125
    %v2136 = vadd.f32 %v2106, %v2127
    %v2137 = vadd.f32 %v2107, %v2129
    %v2138 = vmul.f32 %v49, %v1761
    %v2139 = vmul.f32 %v50, %v1761
    %v2140 = vmul.f32 %v51, %v1761
    %v2141 = vmul.f32 %v52, %v1761
    %v2146 = vrot.slane %v2138, 1
    %v2147 = vrot.slane %v2139, 1
    %v2148 = vsel %vm229, %v2146, %v2147
    %v2149 = vrot.slane %v2140, 1
    %v2150 = vrot.slane %v2141, 1
    %v2151 = vsel %vm229, %v2149, %v2150
    %v2156 = vadd.f32 %v2134, %v2148
    %v2157 = vadd.f32 %v2135, %v2147
    %v2158 = vadd.f32 %v2136, %v2151
    %v2159 = vadd.f32 %v2137, %v2150
    %v2160 = vmul.f32 %v54, %v1784
    %v2161 = vmul.f32 %v55, %v1784
    %v2162 = vmul.f32 %v56, %v1784
    %v2163 = vmul.f32 %v57, %v1784
    %v2168 = vrot.slane %v2160, 1
    %v2169 = vrot.slane %v2161, 1
    %v2170 = vsel %vm229, %v2168, %v2169
    %v2171 = vrot.slane %v2162, 1
    %v2172 = vrot.slane %v2163, 1
    %v2173 = vsel %vm229, %v2171, %v2172
    %v2178 = vadd.f32 %v2156, %v2170
    %v2179 = vadd.f32 %v2157, %v2169
    %v2180 = vadd.f32 %v2158, %v2173
    %v2181 = vadd.f32 %v2159, %v2172
    %v2182 = vmul.f32 %v49, %v1807
    %v2183 = vmul.f32 %v50, %v1807
    %v2184 = vmul.f32 %v51, %v1807
    %v2185 = vmul.f32 %v52, %v1807
    %v2190 = vrot.slane %v2182, 1
    %v2191 = vrot.slane %v2183, 1
    %v2192 = vsel %vm229, %v2190, %v2191
    %v2193 = vrot.slane %v2184, 1
    %v2194 = vrot.slane %v2185, 1
    %v2195 = vsel %vm229, %v2193, %v2194
    %2196 = vrot.lane.b32.xlu0 %v2192, 127
    %v2197 = vpop.permute.xlu0 %2196
    %2198 = vrot.lane.b32.xlu0 %v2191, 127
    %v2199 = vpop.permute.xlu0 %2198
    %2200 = vrot.lane.b32.xlu0 %v2195, 127
    %v2201 = vpop.permute.xlu0 %2200
    %2202 = vrot.lane.b32.xlu0 %v2194, 127
    %v2203 = vpop.permute.xlu0 %2202
    %v2208 = vadd.f32 %v2178, %v2197
    %v2209 = vadd.f32 %v2179, %v2199
    %v2210 = vadd.f32 %v2180, %v2201
    %v2211 = vadd.f32 %v2181, %v2203
    %v2212 = vmul.f32 %v54, %v1679
    %v2213 = vmul.f32 %v55, %v1679
    %v2214 = vmul.f32 %v56, %v1679
    %v2215 = vmul.f32 %v57, %v1679
    %v2216 = vmul.f32 %v49, %v1684
    %v2217 = vmul.f32 %v50, %v1684
    %v2218 = vmul.f32 %v51, %v1684
    %v2219 = vmul.f32 %v52, %v1684
    %2224 = vrot.lane.b32.xlu0 %v2216, 127
    %v2225 = vpop.permute.xlu0 %2224
    %2226 = vrot.lane.b32.xlu0 %v2217, 127
    %v2227 = vpop.permute.xlu0 %2226
    %2228 = vrot.lane.b32.xlu0 %v2218, 127
    %v2229 = vpop.permute.xlu0 %2228
    %2230 = vrot.lane.b32.xlu0 %v2219, 127
    %v2231 = vpop.permute.xlu0 %2230
    %v2236 = vadd.f32 %v2212, %v2225
    %v2237 = vadd.f32 %v2213, %v2227
    %v2238 = vadd.f32 %v2214, %v2229
    %v2239 = vadd.f32 %v2215, %v2231
    %v2240 = vmul.f32 %v54, %v1693
    %v2241 = vmul.f32 %v55, %v1693
    %v2242 = vmul.f32 %v56, %v1693
    %v2243 = vmul.f32 %v57, %v1693
    %2248 = vrot.lane.b32.xlu0 %v2240, 127
    %v2249 = vpop.permute.xlu0 %2248
    %2250 = vrot.lane.b32.xlu0 %v2241, 127
    %v2251 = vpop.permute.xlu0 %2250
    %2252 = vrot.lane.b32.xlu0 %v2242, 127
    %v2253 = vpop.permute.xlu0 %2252
    %2254 = vrot.lane.b32.xlu0 %v2243, 127
    %v2255 = vpop.permute.xlu0 %2254
    %v2260 = vadd.f32 %v2236, %v2249
    %v2261 = vadd.f32 %v2237, %v2251
    %v2262 = vadd.f32 %v2238, %v2253
    %v2263 = vadd.f32 %v2239, %v2255
    %v2264 = vmul.f32 %v44, %v1718
    %v2265 = vmul.f32 %v45, %v1718
    %v2266 = vmul.f32 %v46, %v1718
    %v2267 = vmul.f32 %v47, %v1718
    %v2272 = vrot.slane %v2264, 1
    %v2273 = vrot.slane %v2265, 1
    %v2274 = vsel %vm229, %v2272, %v2273
    %v2275 = vrot.slane %v2266, 1
    %v2276 = vrot.slane %v2267, 1
    %v2277 = vsel %vm229, %v2275, %v2276
    %v2282 = vadd.f32 %v2260, %v2274
    %v2283 = vadd.f32 %v2261, %v2273
    %v2284 = vadd.f32 %v2262, %v2277
    %v2285 = vadd.f32 %v2263, %v2276
    %v2286 = vmul.f32 %v39, %v1727
    %v2287 = vmul.f32 %v40, %v1727
    %v2288 = vmul.f32 %v41, %v1727
    %v2289 = vmul.f32 %v42, %v1727
    %v2294 = vrot.slane %v2286, 1
    %v2295 = vrot.slane %v2287, 1
    %v2296 = vsel %vm229, %v2294, %v2295
    %v2297 = vrot.slane %v2288, 1
    %v2298 = vrot.slane %v2289, 1
    %v2299 = vsel %vm229, %v2297, %v2298
    %2300 = vrot.lane.b32.xlu0 %v2296, 127
    %v2301 = vpop.permute.xlu0 %2300
    %2302 = vrot.lane.b32.xlu0 %v2295, 127
    %v2303 = vpop.permute.xlu0 %2302
    %2304 = vrot.lane.b32.xlu0 %v2299, 127
    %v2305 = vpop.permute.xlu0 %2304
    %2306 = vrot.lane.b32.xlu0 %v2298, 127
    %v2307 = vpop.permute.xlu0 %2306
    %v2312 = vadd.f32 %v2282, %v2301
    %v2313 = vadd.f32 %v2283, %v2303
    %v2314 = vadd.f32 %v2284, %v2305
    %v2315 = vadd.f32 %v2285, %v2307
    %v2316 = vmul.f32 %v44, %v1736
    %v2317 = vmul.f32 %v45, %v1736
    %v2318 = vmul.f32 %v46, %v1736
    %v2319 = vmul.f32 %v47, %v1736
    %v2324 = vrot.slane %v2316, 1
    %v2325 = vrot.slane %v2317, 1
    %v2326 = vsel %vm229, %v2324, %v2325
    %v2327 = vrot.slane %v2318, 1
    %v2328 = vrot.slane %v2319, 1
    %v2329 = vsel %vm229, %v2327, %v2328
    %2330 = vrot.lane.b32.xlu0 %v2326, 127
    %v2331 = vpop.permute.xlu0 %2330
    %2332 = vrot.lane.b32.xlu0 %v2325, 127
    %v2333 = vpop.permute.xlu0 %2332
    %2334 = vrot.lane.b32.xlu0 %v2329, 127
    %v2335 = vpop.permute.xlu0 %2334
    %2336 = vrot.lane.b32.xlu0 %v2328, 127
    %v2337 = vpop.permute.xlu0 %2336
    %v2342 = vadd.f32 %v2312, %v2331
    %v2343 = vadd.f32 %v2313, %v2333
    %v2344 = vadd.f32 %v2314, %v2335
    %v2345 = vadd.f32 %v2315, %v2337
    %v2346 = vmul.f32 %v54, %v1761
    %v2347 = vmul.f32 %v55, %v1761
    %v2348 = vmul.f32 %v56, %v1761
    %v2349 = vmul.f32 %v57, %v1761
    %v2354 = vrot.slane %v2346, 1
    %v2355 = vrot.slane %v2347, 1
    %v2356 = vsel %vm229, %v2354, %v2355
    %v2357 = vrot.slane %v2348, 1
    %v2358 = vrot.slane %v2349, 1
    %v2359 = vsel %vm229, %v2357, %v2358
    %v2364 = vadd.f32 %v2342, %v2356
    %v2365 = vadd.f32 %v2343, %v2355
    %v2366 = vadd.f32 %v2344, %v2359
    %v2367 = vadd.f32 %v2345, %v2358
    %v2368 = vmul.f32 %v49, %v1784
    %v2369 = vmul.f32 %v50, %v1784
    %v2370 = vmul.f32 %v51, %v1784
    %v2371 = vmul.f32 %v52, %v1784
    %v2376 = vrot.slane %v2368, 1
    %v2377 = vrot.slane %v2369, 1
    %v2378 = vsel %vm229, %v2376, %v2377
    %v2379 = vrot.slane %v2370, 1
    %v2380 = vrot.slane %v2371, 1
    %v2381 = vsel %vm229, %v2379, %v2380
    %2382 = vrot.lane.b32.xlu0 %v2378, 127
    %v2383 = vpop.permute.xlu0 %2382
    %2384 = vrot.lane.b32.xlu0 %v2377, 127
    %v2385 = vpop.permute.xlu0 %2384
    %2386 = vrot.lane.b32.xlu0 %v2381, 127
    %v2387 = vpop.permute.xlu0 %2386
    %2388 = vrot.lane.b32.xlu0 %v2380, 127
    %v2389 = vpop.permute.xlu0 %2388
    %v2394 = vadd.f32 %v2364, %v2383
    %v2395 = vadd.f32 %v2365, %v2385
    %v2396 = vadd.f32 %v2366, %v2387
    %v2397 = vadd.f32 %v2367, %v2389
    %v2398 = vmul.f32 %v54, %v1807
    %v2399 = vmul.f32 %v55, %v1807
    %v2400 = vmul.f32 %v56, %v1807
    %v2401 = vmul.f32 %v57, %v1807
    %v2406 = vrot.slane %v2398, 1
    %v2407 = vrot.slane %v2399, 1
    %v2408 = vsel %vm229, %v2406, %v2407
    %v2409 = vrot.slane %v2400, 1
    %v2410 = vrot.slane %v2401, 1
    %v2411 = vsel %vm229, %v2409, %v2410
    %2412 = vrot.lane.b32.xlu0 %v2408, 127
    %v2413 = vpop.permute.xlu0 %2412
    %2414 = vrot.lane.b32.xlu0 %v2407, 127
    %v2415 = vpop.permute.xlu0 %2414
    %2416 = vrot.lane.b32.xlu0 %v2411, 127
    %v2417 = vpop.permute.xlu0 %2416
    %2418 = vrot.lane.b32.xlu0 %v2410, 127
    %v2419 = vpop.permute.xlu0 %2418
    %v2424 = vadd.f32 %v2394, %v2413
    %v2425 = vadd.f32 %v2395, %v2415
    %v2426 = vadd.f32 %v2396, %v2417
    %v2427 = vadd.f32 %v2397, %v2419
    %v2428 = vmax.f32 %v1834, %v2024
    %v2429 = vmax.f32 %v1835, %v2025
    %v2430 = vmax.f32 %v1836, %v2026
    %v2431 = vmax.f32 %v1837, %v2027
    %v2432 = vmax.f32 %v2208, %v2424
    %v2433 = vmax.f32 %v2209, %v2425
    %v2434 = vmax.f32 %v2210, %v2426
    %v2435 = vmax.f32 %v2211, %v2427
    %v2436 = vmax.f32 %v2428, %v2432
    %v2437 = vmax.f32 %v2429, %v2433
    %v2438 = vmax.f32 %v2430, %v2434
    %v2439 = vmax.f32 %v2431, %v2435
    %v2440 = vstv %s132
    %v2441 = vadd.f32 %v2436, %v2440
    %v2442 = vadd.f32 %v2437, %v2440
    %v2443 = vadd.f32 %v2438, %v2440
    %v2444 = vadd.f32 %v2439, %v2440
    %v2445 = vmax.f32 %v2441, 0.0
    %v2446 = vmax.f32 %v2442, 0.0
    %v2447 = vmax.f32 %v2443, 0.0
    %v2448 = vmax.f32 %v2444, 0.0
    %v2449 = vstv %s85
    %v2450 = vmul.f32 %v39, %v2449
    %v2451 = vmul.f32 %v40, %v2449
    %v2452 = vmul.f32 %v41, %v2449
    %v2453 = vmul.f32 %v42, %v2449
    %v2454 = vstv %s86
    %v2455 = vmul.f32 %v44, %v2454
    %v2456 = vmul.f32 %v45, %v2454
    %v2457 = vmul.f32 %v46, %v2454
    %v2458 = vmul.f32 %v47, %v2454
    %v2459 = vadd.f32 %v2450, %v2455
    %v2460 = vadd.f32 %v2451, %v2456
    %v2461 = vadd.f32 %v2452, %v2457
    %v2462 = vadd.f32 %v2453, %v2458
    %v2463 = vstv %s87
    %v2464 = vmul.f32 %v39, %v2463
    %v2465 = vmul.f32 %v40, %v2463
    %v2466 = vmul.f32 %v41, %v2463
    %v2467 = vmul.f32 %v42, %v2463
    %2472 = vrot.lane.b32.xlu0 %v2464, 127
    %v2473 = vpop.permute.xlu0 %2472
    %2474 = vrot.lane.b32.xlu0 %v2465, 127
    %v2475 = vpop.permute.xlu0 %2474
    %2476 = vrot.lane.b32.xlu0 %v2466, 127
    %v2477 = vpop.permute.xlu0 %2476
    %2478 = vrot.lane.b32.xlu0 %v2467, 127
    %v2479 = vpop.permute.xlu0 %2478
    %v2484 = vadd.f32 %v2459, %v2473
    %v2485 = vadd.f32 %v2460, %v2475
    %v2486 = vadd.f32 %v2461, %v2477
    %v2487 = vadd.f32 %v2462, %v2479
    %v2488 = vstv %s88
    %v2489 = vmul.f32 %v49, %v2488
    %v2490 = vmul.f32 %v50, %v2488
    %v2491 = vmul.f32 %v51, %v2488
    %v2492 = vmul.f32 %v52, %v2488
    %v2493 = vadd.f32 %v2484, %v2489
    %v2494 = vadd.f32 %v2485, %v2490
    %v2495 = vadd.f32 %v2486, %v2491
    %v2496 = vadd.f32 %v2487, %v2492
    %v2497 = vstv %s89
    %v2498 = vmul.f32 %v54, %v2497
    %v2499 = vmul.f32 %v55, %v2497
    %v2500 = vmul.f32 %v56, %v2497
    %v2501 = vmul.f32 %v57, %v2497
    %v2502 = vadd.f32 %v2493, %v2498
    %v2503 = vadd.f32 %v2494, %v2499
    %v2504 = vadd.f32 %v2495, %v2500
    %v2505 = vadd.f32 %v2496, %v2501
    %v2506 = vstv %s90
    %v2507 = vmul.f32 %v49, %v2506
    %v2508 = vmul.f32 %v50, %v2506
    %v2509 = vmul.f32 %v51, %v2506
    %v2510 = vmul.f32 %v52, %v2506
    %2515 = vrot.lane.b32.xlu0 %v2507, 127
    %v2516 = vpop.permute.xlu0 %2515
    %2517 = vrot.lane.b32.xlu0 %v2508, 127
    %v2518 = vpop.permute.xlu0 %2517
    %2519 = vrot.lane.b32.xlu0 %v2509, 127
    %v2520 = vpop.permute.xlu0 %2519
    %2521 = vrot.lane.b32.xlu0 %v2510, 127
    %v2522 = vpop.permute.xlu0 %2521
    %v2527 = vadd.f32 %v2502, %v2516
    %v2528 = vadd.f32 %v2503, %v2518
    %v2529 = vadd.f32 %v2504, %v2520
    %v2530 = vadd.f32 %v2505, %v2522
    %v2531 = vstv %s91
    %v2532 = vmul.f32 %v39, %v2531
    %v2533 = vmul.f32 %v40, %v2531
    %v2534 = vmul.f32 %v41, %v2531
    %v2535 = vmul.f32 %v42, %v2531
    %v2540 = vrot.slane %v2532, 1
    %v2541 = vrot.slane %v2533, 1
    %v2542 = vsel %vm229, %v2540, %v2541
    %v2543 = vrot.slane %v2534, 1
    %v2544 = vrot.slane %v2535, 1
    %v2545 = vsel %vm229, %v2543, %v2544
    %v2550 = vadd.f32 %v2527, %v2542
    %v2551 = vadd.f32 %v2528, %v2541
    %v2552 = vadd.f32 %v2529, %v2545
    %v2553 = vadd.f32 %v2530, %v2544
    %v2554 = vstv %s92
    %v2555 = vmul.f32 %v44, %v2554
    %v2556 = vmul.f32 %v45, %v2554
    %v2557 = vmul.f32 %v46, %v2554
    %v2558 = vmul.f32 %v47, %v2554
    %v2563 = vrot.slane %v2555, 1
    %v2564 = vrot.slane %v2556, 1
    %v2565 = vsel %vm229, %v2563, %v2564
    %v2566 = vrot.slane %v2557, 1
    %v2567 = vrot.slane %v2558, 1
    %v2568 = vsel %vm229, %v2566, %v2567
    %v2573 = vadd.f32 %v2550, %v2565
    %v2574 = vadd.f32 %v2551, %v2564
    %v2575 = vadd.f32 %v2552, %v2568
    %v2576 = vadd.f32 %v2553, %v2567
    %v2577 = vstv %s93
    %v2578 = vmul.f32 %v39, %v2577
    %v2579 = vmul.f32 %v40, %v2577
    %v2580 = vmul.f32 %v41, %v2577
    %v2581 = vmul.f32 %v42, %v2577
    %v2586 = vrot.slane %v2578, 1
    %v2587 = vrot.slane %v2579, 1
    %v2588 = vsel %vm229, %v2586, %v2587
    %v2589 = vrot.slane %v2580, 1
    %v2590 = vrot.slane %v2581, 1
    %v2591 = vsel %vm229, %v2589, %v2590
    %2592 = vrot.lane.b32.xlu0 %v2588, 127
    %v2593 = vpop.permute.xlu0 %2592
    %2594 = vrot.lane.b32.xlu0 %v2587, 127
    %v2595 = vpop.permute.xlu0 %2594
    %2596 = vrot.lane.b32.xlu0 %v2591, 127
    %v2597 = vpop.permute.xlu0 %2596
    %2598 = vrot.lane.b32.xlu0 %v2590, 127
    %v2599 = vpop.permute.xlu0 %2598
    %v2604 = vadd.f32 %v2573, %v2593
    %v2605 = vadd.f32 %v2574, %v2595
    %v2606 = vadd.f32 %v2575, %v2597
    %v2607 = vadd.f32 %v2576, %v2599
    %v2608 = vmul.f32 %v44, %v2449
    %v2609 = vmul.f32 %v45, %v2449
    %v2610 = vmul.f32 %v46, %v2449
    %v2611 = vmul.f32 %v47, %v2449
    %v2612 = vmul.f32 %v39, %v2454
    %v2613 = vmul.f32 %v40, %v2454
    %v2614 = vmul.f32 %v41, %v2454
    %v2615 = vmul.f32 %v42, %v2454
    %2620 = vrot.lane.b32.xlu0 %v2612, 127
    %v2621 = vpop.permute.xlu0 %2620
    %2622 = vrot.lane.b32.xlu0 %v2613, 127
    %v2623 = vpop.permute.xlu0 %2622
    %2624 = vrot.lane.b32.xlu0 %v2614, 127
    %v2625 = vpop.permute.xlu0 %2624
    %2626 = vrot.lane.b32.xlu0 %v2615, 127
    %v2627 = vpop.permute.xlu0 %2626
    %v2632 = vadd.f32 %v2608, %v2621
    %v2633 = vadd.f32 %v2609, %v2623
    %v2634 = vadd.f32 %v2610, %v2625
    %v2635 = vadd.f32 %v2611, %v2627
    %v2636 = vmul.f32 %v44, %v2463
    %v2637 = vmul.f32 %v45, %v2463
    %v2638 = vmul.f32 %v46, %v2463
    %v2639 = vmul.f32 %v47, %v2463
    %2644 = vrot.lane.b32.xlu0 %v2636, 127
    %v2645 = vpop.permute.xlu0 %2644
    %2646 = vrot.lane.b32.xlu0 %v2637, 127
    %v2647 = vpop.permute.xlu0 %2646
    %2648 = vrot.lane.b32.xlu0 %v2638, 127
    %v2649 = vpop.permute.xlu0 %2648
    %2650 = vrot.lane.b32.xlu0 %v2639, 127
    %v2651 = vpop.permute.xlu0 %2650
    %v2656 = vadd.f32 %v2632, %v2645
    %v2657 = vadd.f32 %v2633, %v2647
    %v2658 = vadd.f32 %v2634, %v2649
    %v2659 = vadd.f32 %v2635, %v2651
    %v2660 = vmul.f32 %v54, %v2488
    %v2661 = vmul.f32 %v55, %v2488
    %v2662 = vmul.f32 %v56, %v2488
    %v2663 = vmul.f32 %v57, %v2488
    %v2664 = vadd.f32 %v2656, %v2660
    %v2665 = vadd.f32 %v2657, %v2661
    %v2666 = vadd.f32 %v2658, %v2662
    %v2667 = vadd.f32 %v2659, %v2663
    %v2668 = vmul.f32 %v49, %v2497
    %v2669 = vmul.f32 %v50, %v2497
    %v2670 = vmul.f32 %v51, %v2497
    %v2671 = vmul.f32 %v52, %v2497
    %2676 = vrot.lane.b32.xlu0 %v2668, 127
    %v2677 = vpop.permute.xlu0 %2676
    %2678 = vrot.lane.b32.xlu0 %v2669, 127
    %v2679 = vpop.permute.xlu0 %2678
    %2680 = vrot.lane.b32.xlu0 %v2670, 127
    %v2681 = vpop.permute.xlu0 %2680
    %2682 = vrot.lane.b32.xlu0 %v2671, 127
    %v2683 = vpop.permute.xlu0 %2682
    %v2688 = vadd.f32 %v2664, %v2677
    %v2689 = vadd.f32 %v2665, %v2679
    %v2690 = vadd.f32 %v2666, %v2681
    %v2691 = vadd.f32 %v2667, %v2683
    %v2692 = vmul.f32 %v54, %v2506
    %v2693 = vmul.f32 %v55, %v2506
    %v2694 = vmul.f32 %v56, %v2506
    %v2695 = vmul.f32 %v57, %v2506
    %2700 = vrot.lane.b32.xlu0 %v2692, 127
    %v2701 = vpop.permute.xlu0 %2700
    %2702 = vrot.lane.b32.xlu0 %v2693, 127
    %v2703 = vpop.permute.xlu0 %2702
    %2704 = vrot.lane.b32.xlu0 %v2694, 127
    %v2705 = vpop.permute.xlu0 %2704
    %2706 = vrot.lane.b32.xlu0 %v2695, 127
    %v2707 = vpop.permute.xlu0 %2706
    %v2712 = vadd.f32 %v2688, %v2701
    %v2713 = vadd.f32 %v2689, %v2703
    %v2714 = vadd.f32 %v2690, %v2705
    %v2715 = vadd.f32 %v2691, %v2707
    %v2716 = vmul.f32 %v44, %v2531
    %v2717 = vmul.f32 %v45, %v2531
    %v2718 = vmul.f32 %v46, %v2531
    %v2719 = vmul.f32 %v47, %v2531
    %v2724 = vrot.slane %v2716, 1
    %v2725 = vrot.slane %v2717, 1
    %v2726 = vsel %vm229, %v2724, %v2725
    %v2727 = vrot.slane %v2718, 1
    %v2728 = vrot.slane %v2719, 1
    %v2729 = vsel %vm229, %v2727, %v2728
    %v2734 = vadd.f32 %v2712, %v2726
    %v2735 = vadd.f32 %v2713, %v2725
    %v2736 = vadd.f32 %v2714, %v2729
    %v2737 = vadd.f32 %v2715, %v2728
    %v2738 = vmul.f32 %v39, %v2554
    %v2739 = vmul.f32 %v40, %v2554
    %v2740 = vmul.f32 %v41, %v2554
    %v2741 = vmul.f32 %v42, %v2554
    %v2746 = vrot.slane %v2738, 1
    %v2747 = vrot.slane %v2739, 1
    %v2748 = vsel %vm229, %v2746, %v2747
    %v2749 = vrot.slane %v2740, 1
    %v2750 = vrot.slane %v2741, 1
    %v2751 = vsel %vm229, %v2749, %v2750
    %2752 = vrot.lane.b32.xlu0 %v2748, 127
    %v2753 = vpop.permute.xlu0 %2752
    %2754 = vrot.lane.b32.xlu0 %v2747, 127
    %v2755 = vpop.permute.xlu0 %2754
    %2756 = vrot.lane.b32.xlu0 %v2751, 127
    %v2757 = vpop.permute.xlu0 %2756
    %2758 = vrot.lane.b32.xlu0 %v2750, 127
    %v2759 = vpop.permute.xlu0 %2758
    %v2764 = vadd.f32 %v2734, %v2753
    %v2765 = vadd.f32 %v2735, %v2755
    %v2766 = vadd.f32 %v2736, %v2757
    %v2767 = vadd.f32 %v2737, %v2759
    %v2768 = vmul.f32 %v44, %v2577
    %v2769 = vmul.f32 %v45, %v2577
    %v2770 = vmul.f32 %v46, %v2577
    %v2771 = vmul.f32 %v47, %v2577
    %v2776 = vrot.slane %v2768, 1
    %v2777 = vrot.slane %v2769, 1
    %v2778 = vsel %vm229, %v2776, %v2777
    %v2779 = vrot.slane %v2770, 1
    %v2780 = vrot.slane %v2771, 1
    %v2781 = vsel %vm229, %v2779, %v2780
    %2782 = vrot.lane.b32.xlu0 %v2778, 127
    %v2783 = vpop.permute.xlu0 %2782
    %2784 = vrot.lane.b32.xlu0 %v2777, 127
    %v2785 = vpop.permute.xlu0 %2784
    %2786 = vrot.lane.b32.xlu0 %v2781, 127
    %v2787 = vpop.permute.xlu0 %2786
    %2788 = vrot.lane.b32.xlu0 %v2780, 127
    %v2789 = vpop.permute.xlu0 %2788
    %v2794 = vadd.f32 %v2764, %v2783
    %v2795 = vadd.f32 %v2765, %v2785
    %v2796 = vadd.f32 %v2766, %v2787
    %v2797 = vadd.f32 %v2767, %v2789
    %v2798 = vmul.f32 %v49, %v2449
    %v2799 = vmul.f32 %v50, %v2449
    %v2800 = vmul.f32 %v51, %v2449
    %v2801 = vmul.f32 %v52, %v2449
    %v2802 = vmul.f32 %v54, %v2454
    %v2803 = vmul.f32 %v55, %v2454
    %v2804 = vmul.f32 %v56, %v2454
    %v2805 = vmul.f32 %v57, %v2454
    %v2806 = vadd.f32 %v2798, %v2802
    %v2807 = vadd.f32 %v2799, %v2803
    %v2808 = vadd.f32 %v2800, %v2804
    %v2809 = vadd.f32 %v2801, %v2805
    %v2810 = vmul.f32 %v49, %v2463
    %v2811 = vmul.f32 %v50, %v2463
    %v2812 = vmul.f32 %v51, %v2463
    %v2813 = vmul.f32 %v52, %v2463
    %2818 = vrot.lane.b32.xlu0 %v2810, 127
    %v2819 = vpop.permute.xlu0 %2818
    %2820 = vrot.lane.b32.xlu0 %v2811, 127
    %v2821 = vpop.permute.xlu0 %2820
    %2822 = vrot.lane.b32.xlu0 %v2812, 127
    %v2823 = vpop.permute.xlu0 %2822
    %2824 = vrot.lane.b32.xlu0 %v2813, 127
    %v2825 = vpop.permute.xlu0 %2824
    %v2830 = vadd.f32 %v2806, %v2819
    %v2831 = vadd.f32 %v2807, %v2821
    %v2832 = vadd.f32 %v2808, %v2823
    %v2833 = vadd.f32 %v2809, %v2825
    %v2834 = vmul.f32 %v39, %v2488
    %v2835 = vmul.f32 %v40, %v2488
    %v2836 = vmul.f32 %v41, %v2488
    %v2837 = vmul.f32 %v42, %v2488
    %v2842 = vrot.slane %v2834, 1
    %v2843 = vrot.slane %v2835, 1
    %v2844 = vsel %vm229, %v2842, %v2843
    %v2845 = vrot.slane %v2836, 1
    %v2846 = vrot.slane %v2837, 1
    %v2847 = vsel %vm229, %v2845, %v2846
    %v2852 = vadd.f32 %v2830, %v2844
    %v2853 = vadd.f32 %v2831, %v2843
    %v2854 = vadd.f32 %v2832, %v2847
    %v2855 = vadd.f32 %v2833, %v2846
    %v2856 = vmul.f32 %v44, %v2497
    %v2857 = vmul.f32 %v45, %v2497
    %v2858 = vmul.f32 %v46, %v2497
    %v2859 = vmul.f32 %v47, %v2497
    %v2864 = vrot.slane %v2856, 1
    %v2865 = vrot.slane %v2857, 1
    %v2866 = vsel %vm229, %v2864, %v2865
    %v2867 = vrot.slane %v2858, 1
    %v2868 = vrot.slane %v2859, 1
    %v2869 = vsel %vm229, %v2867, %v2868
    %v2874 = vadd.f32 %v2852, %v2866
    %v2875 = vadd.f32 %v2853, %v2865
    %v2876 = vadd.f32 %v2854, %v2869
    %v2877 = vadd.f32 %v2855, %v2868
    %v2878 = vmul.f32 %v39, %v2506
    %v2879 = vmul.f32 %v40, %v2506
    %v2880 = vmul.f32 %v41, %v2506
    %v2881 = vmul.f32 %v42, %v2506
    %v2886 = vrot.slane %v2878, 1
    %v2887 = vrot.slane %v2879, 1
    %v2888 = vsel %vm229, %v2886, %v2887
    %v2889 = vrot.slane %v2880, 1
    %v2890 = vrot.slane %v2881, 1
    %v2891 = vsel %vm229, %v2889, %v2890
    %2892 = vrot.lane.b32.xlu0 %v2888, 127
    %v2893 = vpop.permute.xlu0 %2892
    %2894 = vrot.lane.b32.xlu0 %v2887, 127
    %v2895 = vpop.permute.xlu0 %2894
    %2896 = vrot.lane.b32.xlu0 %v2891, 127
    %v2897 = vpop.permute.xlu0 %2896
    %2898 = vrot.lane.b32.xlu0 %v2890, 127
    %v2899 = vpop.permute.xlu0 %2898
    %v2904 = vadd.f32 %v2874, %v2893
    %v2905 = vadd.f32 %v2875, %v2895
    %v2906 = vadd.f32 %v2876, %v2897
    %v2907 = vadd.f32 %v2877, %v2899
    %v2908 = vmul.f32 %v49, %v2531
    %v2909 = vmul.f32 %v50, %v2531
    %v2910 = vmul.f32 %v51, %v2531
    %v2911 = vmul.f32 %v52, %v2531
    %v2916 = vrot.slane %v2908, 1
    %v2917 = vrot.slane %v2909, 1
    %v2918 = vsel %vm229, %v2916, %v2917
    %v2919 = vrot.slane %v2910, 1
    %v2920 = vrot.slane %v2911, 1
    %v2921 = vsel %vm229, %v2919, %v2920
    %v2926 = vadd.f32 %v2904, %v2918
    %v2927 = vadd.f32 %v2905, %v2917
    %v2928 = vadd.f32 %v2906, %v2921
    %v2929 = vadd.f32 %v2907, %v2920
    %v2930 = vmul.f32 %v54, %v2554
    %v2931 = vmul.f32 %v55, %v2554
    %v2932 = vmul.f32 %v56, %v2554
    %v2933 = vmul.f32 %v57, %v2554
    %v2938 = vrot.slane %v2930, 1
    %v2939 = vrot.slane %v2931, 1
    %v2940 = vsel %vm229, %v2938, %v2939
    %v2941 = vrot.slane %v2932, 1
    %v2942 = vrot.slane %v2933, 1
    %v2943 = vsel %vm229, %v2941, %v2942
    %v2948 = vadd.f32 %v2926, %v2940
    %v2949 = vadd.f32 %v2927, %v2939
    %v2950 = vadd.f32 %v2928, %v2943
    %v2951 = vadd.f32 %v2929, %v2942
    %v2952 = vmul.f32 %v49, %v2577
    %v2953 = vmul.f32 %v50, %v2577
    %v2954 = vmul.f32 %v51, %v2577
    %v2955 = vmul.f32 %v52, %v2577
    %v2960 = vrot.slane %v2952, 1
    %v2961 = vrot.slane %v2953, 1
    %v2962 = vsel %vm229, %v2960, %v2961
    %v2963 = vrot.slane %v2954, 1
    %v2964 = vrot.slane %v2955, 1
    %v2965 = vsel %vm229, %v2963, %v2964
    %2966 = vrot.lane.b32.xlu0 %v2962, 127
    %v2967 = vpop.permute.xlu0 %2966
    %2968 = vrot.lane.b32.xlu0 %v2961, 127
    %v2969 = vpop.permute.xlu0 %2968
    %2970 = vrot.lane.b32.xlu0 %v2965, 127
    %v2971 = vpop.permute.xlu0 %2970
    %2972 = vrot.lane.b32.xlu0 %v2964, 127
    %v2973 = vpop.permute.xlu0 %2972
    %v2978 = vadd.f32 %v2948, %v2967
    %v2979 = vadd.f32 %v2949, %v2969
    %v2980 = vadd.f32 %v2950, %v2971
    %v2981 = vadd.f32 %v2951, %v2973
    %v2982 = vmul.f32 %v54, %v2449
    %v2983 = vmul.f32 %v55, %v2449
    %v2984 = vmul.f32 %v56, %v2449
    %v2985 = vmul.f32 %v57, %v2449
    %v2986 = vmul.f32 %v49, %v2454
    %v2987 = vmul.f32 %v50, %v2454
    %v2988 = vmul.f32 %v51, %v2454
    %v2989 = vmul.f32 %v52, %v2454
    %2994 = vrot.lane.b32.xlu0 %v2986, 127
    %v2995 = vpop.permute.xlu0 %2994
    %2996 = vrot.lane.b32.xlu0 %v2987, 127
    %v2997 = vpop.permute.xlu0 %2996
    %2998 = vrot.lane.b32.xlu0 %v2988, 127
    %v2999 = vpop.permute.xlu0 %2998
    %3000 = vrot.lane.b32.xlu0 %v2989, 127
    %v3001 = vpop.permute.xlu0 %3000
    %v3006 = vadd.f32 %v2982, %v2995
    %v3007 = vadd.f32 %v2983, %v2997
    %v3008 = vadd.f32 %v2984, %v2999
    %v3009 = vadd.f32 %v2985, %v3001
    %v3010 = vmul.f32 %v54, %v2463
    %v3011 = vmul.f32 %v55, %v2463
    %v3012 = vmul.f32 %v56, %v2463
    %v3013 = vmul.f32 %v57, %v2463
    %3018 = vrot.lane.b32.xlu0 %v3010, 127
    %v3019 = vpop.permute.xlu0 %3018
    %3020 = vrot.lane.b32.xlu0 %v3011, 127
    %v3021 = vpop.permute.xlu0 %3020
    %3022 = vrot.lane.b32.xlu0 %v3012, 127
    %v3023 = vpop.permute.xlu0 %3022
    %3024 = vrot.lane.b32.xlu0 %v3013, 127
    %v3025 = vpop.permute.xlu0 %3024
    %v3030 = vadd.f32 %v3006, %v3019
    %v3031 = vadd.f32 %v3007, %v3021
    %v3032 = vadd.f32 %v3008, %v3023
    %v3033 = vadd.f32 %v3009, %v3025
    %v3034 = vmul.f32 %v44, %v2488
    %v3035 = vmul.f32 %v45, %v2488
    %v3036 = vmul.f32 %v46, %v2488
    %v3037 = vmul.f32 %v47, %v2488
    %v3042 = vrot.slane %v3034, 1
    %v3043 = vrot.slane %v3035, 1
    %v3044 = vsel %vm229, %v3042, %v3043
    %v3045 = vrot.slane %v3036, 1
    %v3046 = vrot.slane %v3037, 1
    %v3047 = vsel %vm229, %v3045, %v3046
    %v3052 = vadd.f32 %v3030, %v3044
    %v3053 = vadd.f32 %v3031, %v3043
    %v3054 = vadd.f32 %v3032, %v3047
    %v3055 = vadd.f32 %v3033, %v3046
    %v3056 = vmul.f32 %v39, %v2497
    %v3057 = vmul.f32 %v40, %v2497
    %v3058 = vmul.f32 %v41, %v2497
    %v3059 = vmul.f32 %v42, %v2497
    %v3064 = vrot.slane %v3056, 1
    %v3065 = vrot.slane %v3057, 1
    %v3066 = vsel %vm229, %v3064, %v3065
    %v3067 = vrot.slane %v3058, 1
    %v3068 = vrot.slane %v3059, 1
    %v3069 = vsel %vm229, %v3067, %v3068
    %3070 = vrot.lane.b32.xlu0 %v3066, 127
    %v3071 = vpop.permute.xlu0 %3070
    %3072 = vrot.lane.b32.xlu0 %v3065, 127
    %v3073 = vpop.permute.xlu0 %3072
    %3074 = vrot.lane.b32.xlu0 %v3069, 127
    %v3075 = vpop.permute.xlu0 %3074
    %3076 = vrot.lane.b32.xlu0 %v3068, 127
    %v3077 = vpop.permute.xlu0 %3076
    %v3082 = vadd.f32 %v3052, %v3071
    %v3083 = vadd.f32 %v3053, %v3073
    %v3084 = vadd.f32 %v3054, %v3075
    %v3085 = vadd.f32 %v3055, %v3077
    %v3086 = vmul.f32 %v44, %v2506
    %v3087 = vmul.f32 %v45, %v2506
    %v3088 = vmul.f32 %v46, %v2506
    %v3089 = vmul.f32 %v47, %v2506
    %v3094 = vrot.slane %v3086, 1
    %v3095 = vrot.slane %v3087, 1
    %v3096 = vsel %vm229, %v3094, %v3095
    %v3097 = vrot.slane %v3088, 1
    %v3098 = vrot.slane %v3089, 1
    %v3099 = vsel %vm229, %v3097, %v3098
    %3100 = vrot.lane.b32.xlu0 %v3096, 127
    %v3101 = vpop.permute.xlu0 %3100
    %3102 = vrot.lane.b32.xlu0 %v3095, 127
    %v3103 = vpop.permute.xlu0 %3102
    %3104 = vrot.lane.b32.xlu0 %v3099, 127
    %v3105 = vpop.permute.xlu0 %3104
    %3106 = vrot.lane.b32.xlu0 %v3098, 127
    %v3107 = vpop.permute.xlu0 %3106
    %v3112 = vadd.f32 %v3082, %v3101
    %v3113 = vadd.f32 %v3083, %v3103
    %v3114 = vadd.f32 %v3084, %v3105
    %v3115 = vadd.f32 %v3085, %v3107
    %v3116 = vmul.f32 %v54, %v2531
    %v3117 = vmul.f32 %v55, %v2531
    %v3118 = vmul.f32 %v56, %v2531
    %v3119 = vmul.f32 %v57, %v2531
    %v3124 = vrot.slane %v3116, 1
    %v3125 = vrot.slane %v3117, 1
    %v3126 = vsel %vm229, %v3124, %v3125
    %v3127 = vrot.slane %v3118, 1
    %v3128 = vrot.slane %v3119, 1
    %v3129 = vsel %vm229, %v3127, %v3128
    %v3134 = vadd.f32 %v3112, %v3126
    %v3135 = vadd.f32 %v3113, %v3125
    %v3136 = vadd.f32 %v3114, %v3129
    %v3137 = vadd.f32 %v3115, %v3128
    %v3138 = vmul.f32 %v49, %v2554
    %v3139 = vmul.f32 %v50, %v2554
    %v3140 = vmul.f32 %v51, %v2554
    %v3141 = vmul.f32 %v52, %v2554
    %v3146 = vrot.slane %v3138, 1
    %v3147 = vrot.slane %v3139, 1
    %v3148 = vsel %vm229, %v3146, %v3147
    %v3149 = vrot.slane %v3140, 1
    %v3150 = vrot.slane %v3141, 1
    %v3151 = vsel %vm229, %v3149, %v3150
    %3152 = vrot.lane.b32.xlu0 %v3148, 127
    %v3153 = vpop.permute.xlu0 %3152
    %3154 = vrot.lane.b32.xlu0 %v3147, 127
    %v3155 = vpop.permute.xlu0 %3154
    %3156 = vrot.lane.b32.xlu0 %v3151, 127
    %v3157 = vpop.permute.xlu0 %3156
    %3158 = vrot.lane.b32.xlu0 %v3150, 127
    %v3159 = vpop.permute.xlu0 %3158
    %v3164 = vadd.f32 %v3134, %v3153
    %v3165 = vadd.f32 %v3135, %v3155
    %v3166 = vadd.f32 %v3136, %v3157
    %v3167 = vadd.f32 %v3137, %v3159
    %v3168 = vmul.f32 %v54, %v2577
    %v3169 = vmul.f32 %v55, %v2577
    %v3170 = vmul.f32 %v56, %v2577
    %v3171 = vmul.f32 %v57, %v2577
    %v3176 = vrot.slane %v3168, 1
    %v3177 = vrot.slane %v3169, 1
    %v3178 = vsel %vm229, %v3176, %v3177
    %v3179 = vrot.slane %v3170, 1
    %v3180 = vrot.slane %v3171, 1
    %v3181 = vsel %vm229, %v3179, %v3180
    %3182 = vrot.lane.b32.xlu0 %v3178, 127
    %v3183 = vpop.permute.xlu0 %3182
    %3184 = vrot.lane.b32.xlu0 %v3177, 127
    %v3185 = vpop.permute.xlu0 %3184
    %3186 = vrot.lane.b32.xlu0 %v3181, 127
    %v3187 = vpop.permute.xlu0 %3186
    %3188 = vrot.lane.b32.xlu0 %v3180, 127
    %v3189 = vpop.permute.xlu0 %3188
    %v3194 = vadd.f32 %v3164, %v3183
    %v3195 = vadd.f32 %v3165, %v3185
    %v3196 = vadd.f32 %v3166, %v3187
    %v3197 = vadd.f32 %v3167, %v3189
    %v3198 = vmax.f32 %v2604, %v2794
    %v3199 = vmax.f32 %v2605, %v2795
    %v3200 = vmax.f32 %v2606, %v2796
    %v3201 = vmax.f32 %v2607, %v2797
    %v3202 = vmax.f32 %v2978, %v3194
    %v3203 = vmax.f32 %v2979, %v3195
    %v3204 = vmax.f32 %v2980, %v3196
    %v3205 = vmax.f32 %v2981, %v3197
    %v3206 = vmax.f32 %v3198, %v3202
    %v3207 = vmax.f32 %v3199, %v3203
    %v3208 = vmax.f32 %v3200, %v3204
    %v3209 = vmax.f32 %v3201, %v3205
    %v3210 = vstv %s133
    %v3211 = vadd.f32 %v3206, %v3210
    %v3212 = vadd.f32 %v3207, %v3210
    %v3213 = vadd.f32 %v3208, %v3210
    %v3214 = vadd.f32 %v3209, %v3210
    %v3215 = vmax.f32 %v3211, 0.0
    %v3216 = vmax.f32 %v3212, 0.0
    %v3217 = vmax.f32 %v3213, 0.0
    %v3218 = vmax.f32 %v3214, 0.0
    %v3219 = vstv %s94
    %v3220 = vmul.f32 %v39, %v3219
    %v3221 = vmul.f32 %v40, %v3219
    %v3222 = vmul.f32 %v41, %v3219
    %v3223 = vmul.f32 %v42, %v3219
    %v3224 = vstv %s95
    %v3225 = vmul.f32 %v44, %v3224
    %v3226 = vmul.f32 %v45, %v3224
    %v3227 = vmul.f32 %v46, %v3224
    %v3228 = vmul.f32 %v47, %v3224
    %v3229 = vadd.f32 %v3220, %v3225
    %v3230 = vadd.f32 %v3221, %v3226
    %v3231 = vadd.f32 %v3222, %v3227
    %v3232 = vadd.f32 %v3223, %v3228
    %v3233 = vstv %s96
    %v3234 = vmul.f32 %v39, %v3233
    %v3235 = vmul.f32 %v40, %v3233
    %v3236 = vmul.f32 %v41, %v3233
    %v3237 = vmul.f32 %v42, %v3233
    %3242 = vrot.lane.b32.xlu0 %v3234, 127
    %v3243 = vpop.permute.xlu0 %3242
    %3244 = vrot.lane.b32.xlu0 %v3235, 127
    %v3245 = vpop.permute.xlu0 %3244
    %3246 = vrot.lane.b32.xlu0 %v3236, 127
    %v3247 = vpop.permute.xlu0 %3246
    %3248 = vrot.lane.b32.xlu0 %v3237, 127
    %v3249 = vpop.permute.xlu0 %3248
    %v3254 = vadd.f32 %v3229, %v3243
    %v3255 = vadd.f32 %v3230, %v3245
    %v3256 = vadd.f32 %v3231, %v3247
    %v3257 = vadd.f32 %v3232, %v3249
    %v3258 = vstv %s97
    %v3259 = vmul.f32 %v49, %v3258
    %v3260 = vmul.f32 %v50, %v3258
    %v3261 = vmul.f32 %v51, %v3258
    %v3262 = vmul.f32 %v52, %v3258
    %v3263 = vadd.f32 %v3254, %v3259
    %v3264 = vadd.f32 %v3255, %v3260
    %v3265 = vadd.f32 %v3256, %v3261
    %v3266 = vadd.f32 %v3257, %v3262
    %v3267 = vstv %s98
    %v3268 = vmul.f32 %v54, %v3267
    %v3269 = vmul.f32 %v55, %v3267
    %v3270 = vmul.f32 %v56, %v3267
    %v3271 = vmul.f32 %v57, %v3267
    %v3272 = vadd.f32 %v3263, %v3268
    %v3273 = vadd.f32 %v3264, %v3269
    %v3274 = vadd.f32 %v3265, %v3270
    %v3275 = vadd.f32 %v3266, %v3271
    %v3276 = vstv %s99
    %v3277 = vmul.f32 %v49, %v3276
    %v3278 = vmul.f32 %v50, %v3276
    %v3279 = vmul.f32 %v51, %v3276
    %v3280 = vmul.f32 %v52, %v3276
    %3285 = vrot.lane.b32.xlu0 %v3277, 127
    %v3286 = vpop.permute.xlu0 %3285
    %3287 = vrot.lane.b32.xlu0 %v3278, 127
    %v3288 = vpop.permute.xlu0 %3287
    %3289 = vrot.lane.b32.xlu0 %v3279, 127
    %v3290 = vpop.permute.xlu0 %3289
    %3291 = vrot.lane.b32.xlu0 %v3280, 127
    %v3292 = vpop.permute.xlu0 %3291
    %v3297 = vadd.f32 %v3272, %v3286
    %v3298 = vadd.f32 %v3273, %v3288
    %v3299 = vadd.f32 %v3274, %v3290
    %v3300 = vadd.f32 %v3275, %v3292
    %v3301 = vstv %s100
    %v3302 = vmul.f32 %v39, %v3301
    %v3303 = vmul.f32 %v40, %v3301
    %v3304 = vmul.f32 %v41, %v3301
    %v3305 = vmul.f32 %v42, %v3301
    %v3310 = vrot.slane %v3302, 1
    %v3311 = vrot.slane %v3303, 1
    %v3312 = vsel %vm229, %v3310, %v3311
    %v3313 = vrot.slane %v3304, 1
    %v3314 = vrot.slane %v3305, 1
    %v3315 = vsel %vm229, %v3313, %v3314
    %v3320 = vadd.f32 %v3297, %v3312
    %v3321 = vadd.f32 %v3298, %v3311
    %v3322 = vadd.f32 %v3299, %v3315
    %v3323 = vadd.f32 %v3300, %v3314
    %v3324 = vstv %s101
    %v3325 = vmul.f32 %v44, %v3324
    %v3326 = vmul.f32 %v45, %v3324
    %v3327 = vmul.f32 %v46, %v3324
    %v3328 = vmul.f32 %v47, %v3324
    %v3333 = vrot.slane %v3325, 1
    %v3334 = vrot.slane %v3326, 1
    %v3335 = vsel %vm229, %v3333, %v3334
    %v3336 = vrot.slane %v3327, 1
    %v3337 = vrot.slane %v3328, 1
    %v3338 = vsel %vm229, %v3336, %v3337
    %v3343 = vadd.f32 %v3320, %v3335
    %v3344 = vadd.f32 %v3321, %v3334
    %v3345 = vadd.f32 %v3322, %v3338
    %v3346 = vadd.f32 %v3323, %v3337
    %v3347 = vstv %s102
    %v3348 = vmul.f32 %v39, %v3347
    %v3349 = vmul.f32 %v40, %v3347
    %v3350 = vmul.f32 %v41, %v3347
    %v3351 = vmul.f32 %v42, %v3347
    %v3356 = vrot.slane %v3348, 1
    %v3357 = vrot.slane %v3349, 1
    %v3358 = vsel %vm229, %v3356, %v3357
    %v3359 = vrot.slane %v3350, 1
    %v3360 = vrot.slane %v3351, 1
    %v3361 = vsel %vm229, %v3359, %v3360
    %3362 = vrot.lane.b32.xlu0 %v3358, 127
    %v3363 = vpop.permute.xlu0 %3362
    %3364 = vrot.lane.b32.xlu0 %v3357, 127
    %v3365 = vpop.permute.xlu0 %3364
    %3366 = vrot.lane.b32.xlu0 %v3361, 127
    %v3367 = vpop.permute.xlu0 %3366
    %3368 = vrot.lane.b32.xlu0 %v3360, 127
    %v3369 = vpop.permute.xlu0 %3368
    %v3374 = vadd.f32 %v3343, %v3363
    %v3375 = vadd.f32 %v3344, %v3365
    %v3376 = vadd.f32 %v3345, %v3367
    %v3377 = vadd.f32 %v3346, %v3369
    %v3378 = vmul.f32 %v44, %v3219
    %v3379 = vmul.f32 %v45, %v3219
    %v3380 = vmul.f32 %v46, %v3219
    %v3381 = vmul.f32 %v47, %v3219
    %v3382 = vmul.f32 %v39, %v3224
    %v3383 = vmul.f32 %v40, %v3224
    %v3384 = vmul.f32 %v41, %v3224
    %v3385 = vmul.f32 %v42, %v3224
    %3390 = vrot.lane.b32.xlu0 %v3382, 127
    %v3391 = vpop.permute.xlu0 %3390
    %3392 = vrot.lane.b32.xlu0 %v3383, 127
    %v3393 = vpop.permute.xlu0 %3392
    %3394 = vrot.lane.b32.xlu0 %v3384, 127
    %v3395 = vpop.permute.xlu0 %3394
    %3396 = vrot.lane.b32.xlu0 %v3385, 127
    %v3397 = vpop.permute.xlu0 %3396
    %v3402 = vadd.f32 %v3378, %v3391
    %v3403 = vadd.f32 %v3379, %v3393
    %v3404 = vadd.f32 %v3380, %v3395
    %v3405 = vadd.f32 %v3381, %v3397
    %v3406 = vmul.f32 %v44, %v3233
    %v3407 = vmul.f32 %v45, %v3233
    %v3408 = vmul.f32 %v46, %v3233
    %v3409 = vmul.f32 %v47, %v3233
    %3414 = vrot.lane.b32.xlu0 %v3406, 127
    %v3415 = vpop.permute.xlu0 %3414
    %3416 = vrot.lane.b32.xlu0 %v3407, 127
    %v3417 = vpop.permute.xlu0 %3416
    %3418 = vrot.lane.b32.xlu0 %v3408, 127
    %v3419 = vpop.permute.xlu0 %3418
    %3420 = vrot.lane.b32.xlu0 %v3409, 127
    %v3421 = vpop.permute.xlu0 %3420
    %v3426 = vadd.f32 %v3402, %v3415
    %v3427 = vadd.f32 %v3403, %v3417
    %v3428 = vadd.f32 %v3404, %v3419
    %v3429 = vadd.f32 %v3405, %v3421
    %v3430 = vmul.f32 %v54, %v3258
    %v3431 = vmul.f32 %v55, %v3258
    %v3432 = vmul.f32 %v56, %v3258
    %v3433 = vmul.f32 %v57, %v3258
    %v3434 = vadd.f32 %v3426, %v3430
    %v3435 = vadd.f32 %v3427, %v3431
    %v3436 = vadd.f32 %v3428, %v3432
    %v3437 = vadd.f32 %v3429, %v3433
    %v3438 = vmul.f32 %v49, %v3267
    %v3439 = vmul.f32 %v50, %v3267
    %v3440 = vmul.f32 %v51, %v3267
    %v3441 = vmul.f32 %v52, %v3267
    %3446 = vrot.lane.b32.xlu0 %v3438, 127
    %v3447 = vpop.permute.xlu0 %3446
    %3448 = vrot.lane.b32.xlu0 %v3439, 127
    %v3449 = vpop.permute.xlu0 %3448
    %3450 = vrot.lane.b32.xlu0 %v3440, 127
    %v3451 = vpop.permute.xlu0 %3450
    %3452 = vrot.lane.b32.xlu0 %v3441, 127
    %v3453 = vpop.permute.xlu0 %3452
    %v3458 = vadd.f32 %v3434, %v3447
    %v3459 = vadd.f32 %v3435, %v3449
    %v3460 = vadd.f32 %v3436, %v3451
    %v3461 = vadd.f32 %v3437, %v3453
    %v3462 = vmul.f32 %v54, %v3276
    %v3463 = vmul.f32 %v55, %v3276
    %v3464 = vmul.f32 %v56, %v3276
    %v3465 = vmul.f32 %v57, %v3276
    %3470 = vrot.lane.b32.xlu0 %v3462, 127
    %v3471 = vpop.permute.xlu0 %3470
    %3472 = vrot.lane.b32.xlu0 %v3463, 127
    %v3473 = vpop.permute.xlu0 %3472
    %3474 = vrot.lane.b32.xlu0 %v3464, 127
    %v3475 = vpop.permute.xlu0 %3474
    %3476 = vrot.lane.b32.xlu0 %v3465, 127
    %v3477 = vpop.permute.xlu0 %3476
    %v3482 = vadd.f32 %v3458, %v3471
    %v3483 = vadd.f32 %v3459, %v3473
    %v3484 = vadd.f32 %v3460, %v3475
    %v3485 = vadd.f32 %v3461, %v3477
    %v3486 = vmul.f32 %v44, %v3301
    %v3487 = vmul.f32 %v45, %v3301
    %v3488 = vmul.f32 %v46, %v3301
    %v3489 = vmul.f32 %v47, %v3301
    %v3494 = vrot.slane %v3486, 1
    %v3495 = vrot.slane %v3487, 1
    %v3496 = vsel %vm229, %v3494, %v3495
    %v3497 = vrot.slane %v3488, 1
    %v3498 = vrot.slane %v3489, 1
    %v3499 = vsel %vm229, %v3497, %v3498
    %v3504 = vadd.f32 %v3482, %v3496
    %v3505 = vadd.f32 %v3483, %v3495
    %v3506 = vadd.f32 %v3484, %v3499
    %v3507 = vadd.f32 %v3485, %v3498
    %v3508 = vmul.f32 %v39, %v3324
    %v3509 = vmul.f32 %v40, %v3324
    %v3510 = vmul.f32 %v41, %v3324
    %v3511 = vmul.f32 %v42, %v3324
    %v3516 = vrot.slane %v3508, 1
    %v3517 = vrot.slane %v3509, 1
    %v3518 = vsel %vm229, %v3516, %v3517
    %v3519 = vrot.slane %v3510, 1
    %v3520 = vrot.slane %v3511, 1
    %v3521 = vsel %vm229, %v3519, %v3520
    %3522 = vrot.lane.b32.xlu0 %v3518, 127
    %v3523 = vpop.permute.xlu0 %3522
    %3524 = vrot.lane.b32.xlu0 %v3517, 127
    %v3525 = vpop.permute.xlu0 %3524
    %3526 = vrot.lane.b32.xlu0 %v3521, 127
    %v3527 = vpop.permute.xlu0 %3526
    %3528 = vrot.lane.b32.xlu0 %v3520, 127
    %v3529 = vpop.permute.xlu0 %3528
    %v3534 = vadd.f32 %v3504, %v3523
    %v3535 = vadd.f32 %v3505, %v3525
    %v3536 = vadd.f32 %v3506, %v3527
    %v3537 = vadd.f32 %v3507, %v3529
    %v3538 = vmul.f32 %v44, %v3347
    %v3539 = vmul.f32 %v45, %v3347
    %v3540 = vmul.f32 %v46, %v3347
    %v3541 = vmul.f32 %v47, %v3347
    %v3546 = vrot.slane %v3538, 1
    %v3547 = vrot.slane %v3539, 1
    %v3548 = vsel %vm229, %v3546, %v3547
    %v3549 = vrot.slane %v3540, 1
    %v3550 = vrot.slane %v3541, 1
    %v3551 = vsel %vm229, %v3549, %v3550
    %3552 = vrot.lane.b32.xlu0 %v3548, 127
    %v3553 = vpop.permute.xlu0 %3552
    %3554 = vrot.lane.b32.xlu0 %v3547, 127
    %v3555 = vpop.permute.xlu0 %3554
    %3556 = vrot.lane.b32.xlu0 %v3551, 127
    %v3557 = vpop.permute.xlu0 %3556
    %3558 = vrot.lane.b32.xlu0 %v3550, 127
    %v3559 = vpop.permute.xlu0 %3558
    %v3564 = vadd.f32 %v3534, %v3553
    %v3565 = vadd.f32 %v3535, %v3555
    %v3566 = vadd.f32 %v3536, %v3557
    %v3567 = vadd.f32 %v3537, %v3559
    %v3568 = vmul.f32 %v49, %v3219
    %v3569 = vmul.f32 %v50, %v3219
    %v3570 = vmul.f32 %v51, %v3219
    %v3571 = vmul.f32 %v52, %v3219
    %v3572 = vmul.f32 %v54, %v3224
    %v3573 = vmul.f32 %v55, %v3224
    %v3574 = vmul.f32 %v56, %v3224
    %v3575 = vmul.f32 %v57, %v3224
    %v3576 = vadd.f32 %v3568, %v3572
    %v3577 = vadd.f32 %v3569, %v3573
    %v3578 = vadd.f32 %v3570, %v3574
    %v3579 = vadd.f32 %v3571, %v3575
    %v3580 = vmul.f32 %v49, %v3233
    %v3581 = vmul.f32 %v50, %v3233
    %v3582 = vmul.f32 %v51, %v3233
    %v3583 = vmul.f32 %v52, %v3233
    %3588 = vrot.lane.b32.xlu0 %v3580, 127
    %v3589 = vpop.permute.xlu0 %3588
    %3590 = vrot.lane.b32.xlu0 %v3581, 127
    %v3591 = vpop.permute.xlu0 %3590
    %3592 = vrot.lane.b32.xlu0 %v3582, 127
    %v3593 = vpop.permute.xlu0 %3592
    %3594 = vrot.lane.b32.xlu0 %v3583, 127
    %v3595 = vpop.permute.xlu0 %3594
    %v3600 = vadd.f32 %v3576, %v3589
    %v3601 = vadd.f32 %v3577, %v3591
    %v3602 = vadd.f32 %v3578, %v3593
    %v3603 = vadd.f32 %v3579, %v3595
    %v3604 = vmul.f32 %v39, %v3258
    %v3605 = vmul.f32 %v40, %v3258
    %v3606 = vmul.f32 %v41, %v3258
    %v3607 = vmul.f32 %v42, %v3258
    %v3612 = vrot.slane %v3604, 1
    %v3613 = vrot.slane %v3605, 1
    %v3614 = vsel %vm229, %v3612, %v3613
    %v3615 = vrot.slane %v3606, 1
    %v3616 = vrot.slane %v3607, 1
    %v3617 = vsel %vm229, %v3615, %v3616
    %v3622 = vadd.f32 %v3600, %v3614
    %v3623 = vadd.f32 %v3601, %v3613
    %v3624 = vadd.f32 %v3602, %v3617
    %v3625 = vadd.f32 %v3603, %v3616
    %v3626 = vmul.f32 %v44, %v3267
    %v3627 = vmul.f32 %v45, %v3267
    %v3628 = vmul.f32 %v46, %v3267
    %v3629 = vmul.f32 %v47, %v3267
    %v3634 = vrot.slane %v3626, 1
    %v3635 = vrot.slane %v3627, 1
    %v3636 = vsel %vm229, %v3634, %v3635
    %v3637 = vrot.slane %v3628, 1
    %v3638 = vrot.slane %v3629, 1
    %v3639 = vsel %vm229, %v3637, %v3638
    %v3644 = vadd.f32 %v3622, %v3636
    %v3645 = vadd.f32 %v3623, %v3635
    %v3646 = vadd.f32 %v3624, %v3639
    %v3647 = vadd.f32 %v3625, %v3638
    %v3648 = vmul.f32 %v39, %v3276
    %v3649 = vmul.f32 %v40, %v3276
    %v3650 = vmul.f32 %v41, %v3276
    %v3651 = vmul.f32 %v42, %v3276
    %v3656 = vrot.slane %v3648, 1
    %v3657 = vrot.slane %v3649, 1
    %v3658 = vsel %vm229, %v3656, %v3657
    %v3659 = vrot.slane %v3650, 1
    %v3660 = vrot.slane %v3651, 1
    %v3661 = vsel %vm229, %v3659, %v3660
    %3662 = vrot.lane.b32.xlu0 %v3658, 127
    %v3663 = vpop.permute.xlu0 %3662
    %3664 = vrot.lane.b32.xlu0 %v3657, 127
    %v3665 = vpop.permute.xlu0 %3664
    %3666 = vrot.lane.b32.xlu0 %v3661, 127
    %v3667 = vpop.permute.xlu0 %3666
    %3668 = vrot.lane.b32.xlu0 %v3660, 127
    %v3669 = vpop.permute.xlu0 %3668
    %v3674 = vadd.f32 %v3644, %v3663
    %v3675 = vadd.f32 %v3645, %v3665
    %v3676 = vadd.f32 %v3646, %v3667
    %v3677 = vadd.f32 %v3647, %v3669
    %v3678 = vmul.f32 %v49, %v3301
    %v3679 = vmul.f32 %v50, %v3301
    %v3680 = vmul.f32 %v51, %v3301
    %v3681 = vmul.f32 %v52, %v3301
    %v3686 = vrot.slane %v3678, 1
    %v3687 = vrot.slane %v3679, 1
    %v3688 = vsel %vm229, %v3686, %v3687
    %v3689 = vrot.slane %v3680, 1
    %v3690 = vrot.slane %v3681, 1
    %v3691 = vsel %vm229, %v3689, %v3690
    %v3696 = vadd.f32 %v3674, %v3688
    %v3697 = vadd.f32 %v3675, %v3687
    %v3698 = vadd.f32 %v3676, %v3691
    %v3699 = vadd.f32 %v3677, %v3690
    %v3700 = vmul.f32 %v54, %v3324
    %v3701 = vmul.f32 %v55, %v3324
    %v3702 = vmul.f32 %v56, %v3324
    %v3703 = vmul.f32 %v57, %v3324
    %v3708 = vrot.slane %v3700, 1
    %v3709 = vrot.slane %v3701, 1
    %v3710 = vsel %vm229, %v3708, %v3709
    %v3711 = vrot.slane %v3702, 1
    %v3712 = vrot.slane %v3703, 1
    %v3713 = vsel %vm229, %v3711, %v3712
    %v3718 = vadd.f32 %v3696, %v3710
    %v3719 = vadd.f32 %v3697, %v3709
    %v3720 = vadd.f32 %v3698, %v3713
    %v3721 = vadd.f32 %v3699, %v3712
    %v3722 = vmul.f32 %v49, %v3347
    %v3723 = vmul.f32 %v50, %v3347
    %v3724 = vmul.f32 %v51, %v3347
    %v3725 = vmul.f32 %v52, %v3347
    %v3730 = vrot.slane %v3722, 1
    %v3731 = vrot.slane %v3723, 1
    %v3732 = vsel %vm229, %v3730, %v3731
    %v3733 = vrot.slane %v3724, 1
    %v3734 = vrot.slane %v3725, 1
    %v3735 = vsel %vm229, %v3733, %v3734
    %3736 = vrot.lane.b32.xlu0 %v3732, 127
    %v3737 = vpop.permute.xlu0 %3736
    %3738 = vrot.lane.b32.xlu0 %v3731, 127
    %v3739 = vpop.permute.xlu0 %3738
    %3740 = vrot.lane.b32.xlu0 %v3735, 127
    %v3741 = vpop.permute.xlu0 %3740
    %3742 = vrot.lane.b32.xlu0 %v3734, 127
    %v3743 = vpop.permute.xlu0 %3742
    %v3748 = vadd.f32 %v3718, %v3737
    %v3749 = vadd.f32 %v3719, %v3739
    %v3750 = vadd.f32 %v3720, %v3741
    %v3751 = vadd.f32 %v3721, %v3743
    %v3752 = vmul.f32 %v54, %v3219
    %v3753 = vmul.f32 %v55, %v3219
    %v3754 = vmul.f32 %v56, %v3219
    %v3755 = vmul.f32 %v57, %v3219
    %v3756 = vmul.f32 %v49, %v3224
    %v3757 = vmul.f32 %v50, %v3224
    %v3758 = vmul.f32 %v51, %v3224
    %v3759 = vmul.f32 %v52, %v3224
    %3764 = vrot.lane.b32.xlu0 %v3756, 127
    %v3765 = vpop.permute.xlu0 %3764
    %3766 = vrot.lane.b32.xlu0 %v3757, 127
    %v3767 = vpop.permute.xlu0 %3766
    %3768 = vrot.lane.b32.xlu0 %v3758, 127
    %v3769 = vpop.permute.xlu0 %3768
    %3770 = vrot.lane.b32.xlu0 %v3759, 127
    %v3771 = vpop.permute.xlu0 %3770
    %v3776 = vadd.f32 %v3752, %v3765
    %v3777 = vadd.f32 %v3753, %v3767
    %v3778 = vadd.f32 %v3754, %v3769
    %v3779 = vadd.f32 %v3755, %v3771
    %v3780 = vmul.f32 %v54, %v3233
    %v3781 = vmul.f32 %v55, %v3233
    %v3782 = vmul.f32 %v56, %v3233
    %v3783 = vmul.f32 %v57, %v3233
    %3788 = vrot.lane.b32.xlu0 %v3780, 127
    %v3789 = vpop.permute.xlu0 %3788
    %3790 = vrot.lane.b32.xlu0 %v3781, 127
    %v3791 = vpop.permute.xlu0 %3790
    %3792 = vrot.lane.b32.xlu0 %v3782, 127
    %v3793 = vpop.permute.xlu0 %3792
    %3794 = vrot.lane.b32.xlu0 %v3783, 127
    %v3795 = vpop.permute.xlu0 %3794
    %v3800 = vadd.f32 %v3776, %v3789
    %v3801 = vadd.f32 %v3777, %v3791
    %v3802 = vadd.f32 %v3778, %v3793
    %v3803 = vadd.f32 %v3779, %v3795
    %v3804 = vmul.f32 %v44, %v3258
    %v3805 = vmul.f32 %v45, %v3258
    %v3806 = vmul.f32 %v46, %v3258
    %v3807 = vmul.f32 %v47, %v3258
    %v3812 = vrot.slane %v3804, 1
    %v3813 = vrot.slane %v3805, 1
    %v3814 = vsel %vm229, %v3812, %v3813
    %v3815 = vrot.slane %v3806, 1
    %v3816 = vrot.slane %v3807, 1
    %v3817 = vsel %vm229, %v3815, %v3816
    %v3822 = vadd.f32 %v3800, %v3814
    %v3823 = vadd.f32 %v3801, %v3813
    %v3824 = vadd.f32 %v3802, %v3817
    %v3825 = vadd.f32 %v3803, %v3816
    %v3826 = vmul.f32 %v39, %v3267
    %v3827 = vmul.f32 %v40, %v3267
    %v3828 = vmul.f32 %v41, %v3267
    %v3829 = vmul.f32 %v42, %v3267
    %v3834 = vrot.slane %v3826, 1
    %v3835 = vrot.slane %v3827, 1
    %v3836 = vsel %vm229, %v3834, %v3835
    %v3837 = vrot.slane %v3828, 1
    %v3838 = vrot.slane %v3829, 1
    %v3839 = vsel %vm229, %v3837, %v3838
    %3840 = vrot.lane.b32.xlu0 %v3836, 127
    %v3841 = vpop.permute.xlu0 %3840
    %3842 = vrot.lane.b32.xlu0 %v3835, 127
    %v3843 = vpop.permute.xlu0 %3842
    %3844 = vrot.lane.b32.xlu0 %v3839, 127
    %v3845 = vpop.permute.xlu0 %3844
    %3846 = vrot.lane.b32.xlu0 %v3838, 127
    %v3847 = vpop.permute.xlu0 %3846
    %v3852 = vadd.f32 %v3822, %v3841
    %v3853 = vadd.f32 %v3823, %v3843
    %v3854 = vadd.f32 %v3824, %v3845
    %v3855 = vadd.f32 %v3825, %v3847
    %v3856 = vmul.f32 %v44, %v3276
    %v3857 = vmul.f32 %v45, %v3276
    %v3858 = vmul.f32 %v46, %v3276
    %v3859 = vmul.f32 %v47, %v3276
    %v3864 = vrot.slane %v3856, 1
    %v3865 = vrot.slane %v3857, 1
    %v3866 = vsel %vm229, %v3864, %v3865
    %v3867 = vrot.slane %v3858, 1
    %v3868 = vrot.slane %v3859, 1
    %v3869 = vsel %vm229, %v3867, %v3868
    %3870 = vrot.lane.b32.xlu0 %v3866, 127
    %v3871 = vpop.permute.xlu0 %3870
    %3872 = vrot.lane.b32.xlu0 %v3865, 127
    %v3873 = vpop.permute.xlu0 %3872
    %3874 = vrot.lane.b32.xlu0 %v3869, 127
    %v3875 = vpop.permute.xlu0 %3874
    %3876 = vrot.lane.b32.xlu0 %v3868, 127
    %v3877 = vpop.permute.xlu0 %3876
    %v3882 = vadd.f32 %v3852, %v3871
    %v3883 = vadd.f32 %v3853, %v3873
    %v3884 = vadd.f32 %v3854, %v3875
    %v3885 = vadd.f32 %v3855, %v3877
    %v3886 = vmul.f32 %v54, %v3301
    %v3887 = vmul.f32 %v55, %v3301
    %v3888 = vmul.f32 %v56, %v3301
    %v3889 = vmul.f32 %v57, %v3301
    %v3894 = vrot.slane %v3886, 1
    %v3895 = vrot.slane %v3887, 1
    %v3896 = vsel %vm229, %v3894, %v3895
    %v3897 = vrot.slane %v3888, 1
    %v3898 = vrot.slane %v3889, 1
    %v3899 = vsel %vm229, %v3897, %v3898
    %v3904 = vadd.f32 %v3882, %v3896
    %v3905 = vadd.f32 %v3883, %v3895
    %v3906 = vadd.f32 %v3884, %v3899
    %v3907 = vadd.f32 %v3885, %v3898
    %v3908 = vmul.f32 %v49, %v3324
    %v3909 = vmul.f32 %v50, %v3324
    %v3910 = vmul.f32 %v51, %v3324
    %v3911 = vmul.f32 %v52, %v3324
    %v3916 = vrot.slane %v3908, 1
    %v3917 = vrot.slane %v3909, 1
    %v3918 = vsel %vm229, %v3916, %v3917
    %v3919 = vrot.slane %v3910, 1
    %v3920 = vrot.slane %v3911, 1
    %v3921 = vsel %vm229, %v3919, %v3920
    %3922 = vrot.lane.b32.xlu0 %v3918, 127
    %v3923 = vpop.permute.xlu0 %3922
    %3924 = vrot.lane.b32.xlu0 %v3917, 127
    %v3925 = vpop.permute.xlu0 %3924
    %3926 = vrot.lane.b32.xlu0 %v3921, 127
    %v3927 = vpop.permute.xlu0 %3926
    %3928 = vrot.lane.b32.xlu0 %v3920, 127
    %v3929 = vpop.permute.xlu0 %3928
    %v3934 = vadd.f32 %v3904, %v3923
    %v3935 = vadd.f32 %v3905, %v3925
    %v3936 = vadd.f32 %v3906, %v3927
    %v3937 = vadd.f32 %v3907, %v3929
    %v3938 = vmul.f32 %v54, %v3347
    %v3939 = vmul.f32 %v55, %v3347
    %v3940 = vmul.f32 %v56, %v3347
    %v3941 = vmul.f32 %v57, %v3347
    %v3946 = vrot.slane %v3938, 1
    %v3947 = vrot.slane %v3939, 1
    %v3948 = vsel %vm229, %v3946, %v3947
    %v3949 = vrot.slane %v3940, 1
    %v3950 = vrot.slane %v3941, 1
    %v3951 = vsel %vm229, %v3949, %v3950
    %3952 = vrot.lane.b32.xlu0 %v3948, 127
    %v3953 = vpop.permute.xlu0 %3952
    %3954 = vrot.lane.b32.xlu0 %v3947, 127
    %v3955 = vpop.permute.xlu0 %3954
    %3956 = vrot.lane.b32.xlu0 %v3951, 127
    %v3957 = vpop.permute.xlu0 %3956
    %3958 = vrot.lane.b32.xlu0 %v3950, 127
    %v3959 = vpop.permute.xlu0 %3958
    %v3964 = vadd.f32 %v3934, %v3953
    %v3965 = vadd.f32 %v3935, %v3955
    %v3966 = vadd.f32 %v3936, %v3957
    %v3967 = vadd.f32 %v3937, %v3959
    %v3968 = vmax.f32 %v3374, %v3564
    %v3969 = vmax.f32 %v3375, %v3565
    %v3970 = vmax.f32 %v3376, %v3566
    %v3971 = vmax.f32 %v3377, %v3567
    %v3972 = vmax.f32 %v3748, %v3964
    %v3973 = vmax.f32 %v3749, %v3965
    %v3974 = vmax.f32 %v3750, %v3966
    %v3975 = vmax.f32 %v3751, %v3967
    %v3976 = vmax.f32 %v3968, %v3972
    %v3977 = vmax.f32 %v3969, %v3973
    %v3978 = vmax.f32 %v3970, %v3974
    %v3979 = vmax.f32 %v3971, %v3975
    %v3980 = vstv %s134
    %v3981 = vadd.f32 %v3976, %v3980
    %v3982 = vadd.f32 %v3977, %v3980
    %v3983 = vadd.f32 %v3978, %v3980
    %v3984 = vadd.f32 %v3979, %v3980
    %v3985 = vmax.f32 %v3981, 0.0
    %v3986 = vmax.f32 %v3982, 0.0
    %v3987 = vmax.f32 %v3983, 0.0
    %v3988 = vmax.f32 %v3984, 0.0
    %v3989 = vstv %s103
    %v3990 = vmul.f32 %v39, %v3989
    %v3991 = vmul.f32 %v40, %v3989
    %v3992 = vmul.f32 %v41, %v3989
    %v3993 = vmul.f32 %v42, %v3989
    %v3994 = vstv %s104
    %v3995 = vmul.f32 %v44, %v3994
    %v3996 = vmul.f32 %v45, %v3994
    %v3997 = vmul.f32 %v46, %v3994
    %v3998 = vmul.f32 %v47, %v3994
    %v3999 = vadd.f32 %v3990, %v3995
    %v4000 = vadd.f32 %v3991, %v3996
    %v4001 = vadd.f32 %v3992, %v3997
    %v4002 = vadd.f32 %v3993, %v3998
    %v4003 = vstv %s105
    %v4004 = vmul.f32 %v39, %v4003
    %v4005 = vmul.f32 %v40, %v4003
    %v4006 = vmul.f32 %v41, %v4003
    %v4007 = vmul.f32 %v42, %v4003
    %4012 = vrot.lane.b32.xlu0 %v4004, 127
    %v4013 = vpop.permute.xlu0 %4012
    %4014 = vrot.lane.b32.xlu0 %v4005, 127
    %v4015 = vpop.permute.xlu0 %4014
    %4016 = vrot.lane.b32.xlu0 %v4006, 127
    %v4017 = vpop.permute.xlu0 %4016
    %4018 = vrot.lane.b32.xlu0 %v4007, 127
    %v4019 = vpop.permute.xlu0 %4018
    %v4024 = vadd.f32 %v3999, %v4013
    %v4025 = vadd.f32 %v4000, %v4015
    %v4026 = vadd.f32 %v4001, %v4017
    %v4027 = vadd.f32 %v4002, %v4019
    %v4028 = vstv %s106
    %v4029 = vmul.f32 %v49, %v4028
    %v4030 = vmul.f32 %v50, %v4028
    %v4031 = vmul.f32 %v51, %v4028
    %v4032 = vmul.f32 %v52, %v4028
    %v4033 = vadd.f32 %v4024, %v4029
    %v4034 = vadd.f32 %v4025, %v4030
    %v4035 = vadd.f32 %v4026, %v4031
    %v4036 = vadd.f32 %v4027, %v4032
    %v4037 = vstv %s107
    %v4038 = vmul.f32 %v54, %v4037
    %v4039 = vmul.f32 %v55, %v4037
    %v4040 = vmul.f32 %v56, %v4037
    %v4041 = vmul.f32 %v57, %v4037
    %v4042 = vadd.f32 %v4033, %v4038
    %v4043 = vadd.f32 %v4034, %v4039
    %v4044 = vadd.f32 %v4035, %v4040
    %v4045 = vadd.f32 %v4036, %v4041
    %v4046 = vstv %s108
    %v4047 = vmul.f32 %v49, %v4046
    %v4048 = vmul.f32 %v50, %v4046
    %v4049 = vmul.f32 %v51, %v4046
    %v4050 = vmul.f32 %v52, %v4046
    %4055 = vrot.lane.b32.xlu0 %v4047, 127
    %v4056 = vpop.permute.xlu0 %4055
    %4057 = vrot.lane.b32.xlu0 %v4048, 127
    %v4058 = vpop.permute.xlu0 %4057
    %4059 = vrot.lane.b32.xlu0 %v4049, 127
    %v4060 = vpop.permute.xlu0 %4059
    %4061 = vrot.lane.b32.xlu0 %v4050, 127
    %v4062 = vpop.permute.xlu0 %4061
    %v4067 = vadd.f32 %v4042, %v4056
    %v4068 = vadd.f32 %v4043, %v4058
    %v4069 = vadd.f32 %v4044, %v4060
    %v4070 = vadd.f32 %v4045, %v4062
    %v4071 = vstv %s109
    %v4072 = vmul.f32 %v39, %v4071
    %v4073 = vmul.f32 %v40, %v4071
    %v4074 = vmul.f32 %v41, %v4071
    %v4075 = vmul.f32 %v42, %v4071
    %v4080 = vrot.slane %v4072, 1
    %v4081 = vrot.slane %v4073, 1
    %v4082 = vsel %vm229, %v4080, %v4081
    %v4083 = vrot.slane %v4074, 1
    %v4084 = vrot.slane %v4075, 1
    %v4085 = vsel %vm229, %v4083, %v4084
    %v4090 = vadd.f32 %v4067, %v4082
    %v4091 = vadd.f32 %v4068, %v4081
    %v4092 = vadd.f32 %v4069, %v4085
    %v4093 = vadd.f32 %v4070, %v4084
    %v4094 = vstv %s110
    %v4095 = vmul.f32 %v44, %v4094
    %v4096 = vmul.f32 %v45, %v4094
    %v4097 = vmul.f32 %v46, %v4094
    %v4098 = vmul.f32 %v47, %v4094
    %v4103 = vrot.slane %v4095, 1
    %v4104 = vrot.slane %v4096, 1
    %v4105 = vsel %vm229, %v4103, %v4104
    %v4106 = vrot.slane %v4097, 1
    %v4107 = vrot.slane %v4098, 1
    %v4108 = vsel %vm229, %v4106, %v4107
    %v4113 = vadd.f32 %v4090, %v4105
    %v4114 = vadd.f32 %v4091, %v4104
    %v4115 = vadd.f32 %v4092, %v4108
    %v4116 = vadd.f32 %v4093, %v4107
    %v4117 = vstv %s111
    %v4118 = vmul.f32 %v39, %v4117
    %v4119 = vmul.f32 %v40, %v4117
    %v4120 = vmul.f32 %v41, %v4117
    %v4121 = vmul.f32 %v42, %v4117
    %v4126 = vrot.slane %v4118, 1
    %v4127 = vrot.slane %v4119, 1
    %v4128 = vsel %vm229, %v4126, %v4127
    %v4129 = vrot.slane %v4120, 1
    %v4130 = vrot.slane %v4121, 1
    %v4131 = vsel %vm229, %v4129, %v4130
    %4132 = vrot.lane.b32.xlu0 %v4128, 127
    %v4133 = vpop.permute.xlu0 %4132
    %4134 = vrot.lane.b32.xlu0 %v4127, 127
    %v4135 = vpop.permute.xlu0 %4134
    %4136 = vrot.lane.b32.xlu0 %v4131, 127
    %v4137 = vpop.permute.xlu0 %4136
    %4138 = vrot.lane.b32.xlu0 %v4130, 127
    %v4139 = vpop.permute.xlu0 %4138
    %v4144 = vadd.f32 %v4113, %v4133
    %v4145 = vadd.f32 %v4114, %v4135
    %v4146 = vadd.f32 %v4115, %v4137
    %v4147 = vadd.f32 %v4116, %v4139
    %v4148 = vmul.f32 %v44, %v3989
    %v4149 = vmul.f32 %v45, %v3989
    %v4150 = vmul.f32 %v46, %v3989
    %v4151 = vmul.f32 %v47, %v3989
    %v4152 = vmul.f32 %v39, %v3994
    %v4153 = vmul.f32 %v40, %v3994
    %v4154 = vmul.f32 %v41, %v3994
    %v4155 = vmul.f32 %v42, %v3994
    %4160 = vrot.lane.b32.xlu0 %v4152, 127
    %v4161 = vpop.permute.xlu0 %4160
    %4162 = vrot.lane.b32.xlu0 %v4153, 127
    %v4163 = vpop.permute.xlu0 %4162
    %4164 = vrot.lane.b32.xlu0 %v4154, 127
    %v4165 = vpop.permute.xlu0 %4164
    %4166 = vrot.lane.b32.xlu0 %v4155, 127
    %v4167 = vpop.permute.xlu0 %4166
    %v4172 = vadd.f32 %v4148, %v4161
    %v4173 = vadd.f32 %v4149, %v4163
    %v4174 = vadd.f32 %v4150, %v4165
    %v4175 = vadd.f32 %v4151, %v4167
    %v4176 = vmul.f32 %v44, %v4003
    %v4177 = vmul.f32 %v45, %v4003
    %v4178 = vmul.f32 %v46, %v4003
    %v4179 = vmul.f32 %v47, %v4003
    %4184 = vrot.lane.b32.xlu0 %v4176, 127
    %v4185 = vpop.permute.xlu0 %4184
    %4186 = vrot.lane.b32.xlu0 %v4177, 127
    %v4187 = vpop.permute.xlu0 %4186
    %4188 = vrot.lane.b32.xlu0 %v4178, 127
    %v4189 = vpop.permute.xlu0 %4188
    %4190 = vrot.lane.b32.xlu0 %v4179, 127
    %v4191 = vpop.permute.xlu0 %4190
    %v4196 = vadd.f32 %v4172, %v4185
    %v4197 = vadd.f32 %v4173, %v4187
    %v4198 = vadd.f32 %v4174, %v4189
    %v4199 = vadd.f32 %v4175, %v4191
    %v4200 = vmul.f32 %v54, %v4028
    %v4201 = vmul.f32 %v55, %v4028
    %v4202 = vmul.f32 %v56, %v4028
    %v4203 = vmul.f32 %v57, %v4028
    %v4204 = vadd.f32 %v4196, %v4200
    %v4205 = vadd.f32 %v4197, %v4201
    %v4206 = vadd.f32 %v4198, %v4202
    %v4207 = vadd.f32 %v4199, %v4203
    %v4208 = vmul.f32 %v49, %v4037
    %v4209 = vmul.f32 %v50, %v4037
    %v4210 = vmul.f32 %v51, %v4037
    %v4211 = vmul.f32 %v52, %v4037
    %4216 = vrot.lane.b32.xlu0 %v4208, 127
    %v4217 = vpop.permute.xlu0 %4216
    %4218 = vrot.lane.b32.xlu0 %v4209, 127
    %v4219 = vpop.permute.xlu0 %4218
    %4220 = vrot.lane.b32.xlu0 %v4210, 127
    %v4221 = vpop.permute.xlu0 %4220
    %4222 = vrot.lane.b32.xlu0 %v4211, 127
    %v4223 = vpop.permute.xlu0 %4222
    %v4228 = vadd.f32 %v4204, %v4217
    %v4229 = vadd.f32 %v4205, %v4219
    %v4230 = vadd.f32 %v4206, %v4221
    %v4231 = vadd.f32 %v4207, %v4223
    %v4232 = vmul.f32 %v54, %v4046
    %v4233 = vmul.f32 %v55, %v4046
    %v4234 = vmul.f32 %v56, %v4046
    %v4235 = vmul.f32 %v57, %v4046
    %4240 = vrot.lane.b32.xlu0 %v4232, 127
    %v4241 = vpop.permute.xlu0 %4240
    %4242 = vrot.lane.b32.xlu0 %v4233, 127
    %v4243 = vpop.permute.xlu0 %4242
    %4244 = vrot.lane.b32.xlu0 %v4234, 127
    %v4245 = vpop.permute.xlu0 %4244
    %4246 = vrot.lane.b32.xlu0 %v4235, 127
    %v4247 = vpop.permute.xlu0 %4246
    %v4252 = vadd.f32 %v4228, %v4241
    %v4253 = vadd.f32 %v4229, %v4243
    %v4254 = vadd.f32 %v4230, %v4245
    %v4255 = vadd.f32 %v4231, %v4247
    %v4256 = vmul.f32 %v44, %v4071
    %v4257 = vmul.f32 %v45, %v4071
    %v4258 = vmul.f32 %v46, %v4071
    %v4259 = vmul.f32 %v47, %v4071
    %v4264 = vrot.slane %v4256, 1
    %v4265 = vrot.slane %v4257, 1
    %v4266 = vsel %vm229, %v4264, %v4265
    %v4267 = vrot.slane %v4258, 1
    %v4268 = vrot.slane %v4259, 1
    %v4269 = vsel %vm229, %v4267, %v4268
    %v4274 = vadd.f32 %v4252, %v4266
    %v4275 = vadd.f32 %v4253, %v4265
    %v4276 = vadd.f32 %v4254, %v4269
    %v4277 = vadd.f32 %v4255, %v4268
    %v4278 = vmul.f32 %v39, %v4094
    %v4279 = vmul.f32 %v40, %v4094
    %v4280 = vmul.f32 %v41, %v4094
    %v4281 = vmul.f32 %v42, %v4094
    %v4286 = vrot.slane %v4278, 1
    %v4287 = vrot.slane %v4279, 1
    %v4288 = vsel %vm229, %v4286, %v4287
    %v4289 = vrot.slane %v4280, 1
    %v4290 = vrot.slane %v4281, 1
    %v4291 = vsel %vm229, %v4289, %v4290
    %4292 = vrot.lane.b32.xlu0 %v4288, 127
    %v4293 = vpop.permute.xlu0 %4292
    %4294 = vrot.lane.b32.xlu0 %v4287, 127
    %v4295 = vpop.permute.xlu0 %4294
    %4296 = vrot.lane.b32.xlu0 %v4291, 127
    %v4297 = vpop.permute.xlu0 %4296
    %4298 = vrot.lane.b32.xlu0 %v4290, 127
    %v4299 = vpop.permute.xlu0 %4298
    %v4304 = vadd.f32 %v4274, %v4293
    %v4305 = vadd.f32 %v4275, %v4295
    %v4306 = vadd.f32 %v4276, %v4297
    %v4307 = vadd.f32 %v4277, %v4299
    %v4308 = vmul.f32 %v44, %v4117
    %v4309 = vmul.f32 %v45, %v4117
    %v4310 = vmul.f32 %v46, %v4117
    %v4311 = vmul.f32 %v47, %v4117
    %v4316 = vrot.slane %v4308, 1
    %v4317 = vrot.slane %v4309, 1
    %v4318 = vsel %vm229, %v4316, %v4317
    %v4319 = vrot.slane %v4310, 1
    %v4320 = vrot.slane %v4311, 1
    %v4321 = vsel %vm229, %v4319, %v4320
    %4322 = vrot.lane.b32.xlu0 %v4318, 127
    %v4323 = vpop.permute.xlu0 %4322
    %4324 = vrot.lane.b32.xlu0 %v4317, 127
    %v4325 = vpop.permute.xlu0 %4324
    %4326 = vrot.lane.b32.xlu0 %v4321, 127
    %v4327 = vpop.permute.xlu0 %4326
    %4328 = vrot.lane.b32.xlu0 %v4320, 127
    %v4329 = vpop.permute.xlu0 %4328
    %v4334 = vadd.f32 %v4304, %v4323
    %v4335 = vadd.f32 %v4305, %v4325
    %v4336 = vadd.f32 %v4306, %v4327
    %v4337 = vadd.f32 %v4307, %v4329
    %v4338 = vmul.f32 %v49, %v3989
    %v4339 = vmul.f32 %v50, %v3989
    %v4340 = vmul.f32 %v51, %v3989
    %v4341 = vmul.f32 %v52, %v3989
    %v4342 = vmul.f32 %v54, %v3994
    %v4343 = vmul.f32 %v55, %v3994
    %v4344 = vmul.f32 %v56, %v3994
    %v4345 = vmul.f32 %v57, %v3994
    %v4346 = vadd.f32 %v4338, %v4342
    %v4347 = vadd.f32 %v4339, %v4343
    %v4348 = vadd.f32 %v4340, %v4344
    %v4349 = vadd.f32 %v4341, %v4345
    %v4350 = vmul.f32 %v49, %v4003
    %v4351 = vmul.f32 %v50, %v4003
    %v4352 = vmul.f32 %v51, %v4003
    %v4353 = vmul.f32 %v52, %v4003
    %4358 = vrot.lane.b32.xlu0 %v4350, 127
    %v4359 = vpop.permute.xlu0 %4358
    %4360 = vrot.lane.b32.xlu0 %v4351, 127
    %v4361 = vpop.permute.xlu0 %4360
    %4362 = vrot.lane.b32.xlu0 %v4352, 127
    %v4363 = vpop.permute.xlu0 %4362
    %4364 = vrot.lane.b32.xlu0 %v4353, 127
    %v4365 = vpop.permute.xlu0 %4364
    %v4370 = vadd.f32 %v4346, %v4359
    %v4371 = vadd.f32 %v4347, %v4361
    %v4372 = vadd.f32 %v4348, %v4363
    %v4373 = vadd.f32 %v4349, %v4365
    %v4374 = vmul.f32 %v39, %v4028
    %v4375 = vmul.f32 %v40, %v4028
    %v4376 = vmul.f32 %v41, %v4028
    %v4377 = vmul.f32 %v42, %v4028
    %v4382 = vrot.slane %v4374, 1
    %v4383 = vrot.slane %v4375, 1
    %v4384 = vsel %vm229, %v4382, %v4383
    %v4385 = vrot.slane %v4376, 1
    %v4386 = vrot.slane %v4377, 1
    %v4387 = vsel %vm229, %v4385, %v4386
    %v4392 = vadd.f32 %v4370, %v4384
    %v4393 = vadd.f32 %v4371, %v4383
    %v4394 = vadd.f32 %v4372, %v4387
    %v4395 = vadd.f32 %v4373, %v4386
    %v4396 = vmul.f32 %v44, %v4037
    %v4397 = vmul.f32 %v45, %v4037
    %v4398 = vmul.f32 %v46, %v4037
    %v4399 = vmul.f32 %v47, %v4037
    %v4404 = vrot.slane %v4396, 1
    %v4405 = vrot.slane %v4397, 1
    %v4406 = vsel %vm229, %v4404, %v4405
    %v4407 = vrot.slane %v4398, 1
    %v4408 = vrot.slane %v4399, 1
    %v4409 = vsel %vm229, %v4407, %v4408
    %v4414 = vadd.f32 %v4392, %v4406
    %v4415 = vadd.f32 %v4393, %v4405
    %v4416 = vadd.f32 %v4394, %v4409
    %v4417 = vadd.f32 %v4395, %v4408
    %v4418 = vmul.f32 %v39, %v4046
    %v4419 = vmul.f32 %v40, %v4046
    %v4420 = vmul.f32 %v41, %v4046
    %v4421 = vmul.f32 %v42, %v4046
    %v4426 = vrot.slane %v4418, 1
    %v4427 = vrot.slane %v4419, 1
    %v4428 = vsel %vm229, %v4426, %v4427
    %v4429 = vrot.slane %v4420, 1
    %v4430 = vrot.slane %v4421, 1
    %v4431 = vsel %vm229, %v4429, %v4430
    %4432 = vrot.lane.b32.xlu0 %v4428, 127
    %v4433 = vpop.permute.xlu0 %4432
    %4434 = vrot.lane.b32.xlu0 %v4427, 127
    %v4435 = vpop.permute.xlu0 %4434
    %4436 = vrot.lane.b32.xlu0 %v4431, 127
    %v4437 = vpop.permute.xlu0 %4436
    %4438 = vrot.lane.b32.xlu0 %v4430, 127
    %v4439 = vpop.permute.xlu0 %4438
    %v4444 = vadd.f32 %v4414, %v4433
    %v4445 = vadd.f32 %v4415, %v4435
    %v4446 = vadd.f32 %v4416, %v4437
    %v4447 = vadd.f32 %v4417, %v4439
    %v4448 = vmul.f32 %v49, %v4071
    %v4449 = vmul.f32 %v50, %v4071
    %v4450 = vmul.f32 %v51, %v4071
    %v4451 = vmul.f32 %v52, %v4071
    %v4456 = vrot.slane %v4448, 1
    %v4457 = vrot.slane %v4449, 1
    %v4458 = vsel %vm229, %v4456, %v4457
    %v4459 = vrot.slane %v4450, 1
    %v4460 = vrot.slane %v4451, 1
    %v4461 = vsel %vm229, %v4459, %v4460
    %v4466 = vadd.f32 %v4444, %v4458
    %v4467 = vadd.f32 %v4445, %v4457
    %v4468 = vadd.f32 %v4446, %v4461
    %v4469 = vadd.f32 %v4447, %v4460
    %v4470 = vmul.f32 %v54, %v4094
    %v4471 = vmul.f32 %v55, %v4094
    %v4472 = vmul.f32 %v56, %v4094
    %v4473 = vmul.f32 %v57, %v4094
    %v4478 = vrot.slane %v4470, 1
    %v4479 = vrot.slane %v4471, 1
    %v4480 = vsel %vm229, %v4478, %v4479
    %v4481 = vrot.slane %v4472, 1
    %v4482 = vrot.slane %v4473, 1
    %v4483 = vsel %vm229, %v4481, %v4482
    %v4488 = vadd.f32 %v4466, %v4480
    %v4489 = vadd.f32 %v4467, %v4479
    %v4490 = vadd.f32 %v4468, %v4483
    %v4491 = vadd.f32 %v4469, %v4482
    %v4492 = vmul.f32 %v49, %v4117
    %v4493 = vmul.f32 %v50, %v4117
    %v4494 = vmul.f32 %v51, %v4117
    %v4495 = vmul.f32 %v52, %v4117
    %v4500 = vrot.slane %v4492, 1
    %v4501 = vrot.slane %v4493, 1
    %v4502 = vsel %vm229, %v4500, %v4501
    %v4503 = vrot.slane %v4494, 1
    %v4504 = vrot.slane %v4495, 1
    %v4505 = vsel %vm229, %v4503, %v4504
    %4506 = vrot.lane.b32.xlu0 %v4502, 127
    %v4507 = vpop.permute.xlu0 %4506
    %4508 = vrot.lane.b32.xlu0 %v4501, 127
    %v4509 = vpop.permute.xlu0 %4508
    %4510 = vrot.lane.b32.xlu0 %v4505, 127
    %v4511 = vpop.permute.xlu0 %4510
    %4512 = vrot.lane.b32.xlu0 %v4504, 127
    %v4513 = vpop.permute.xlu0 %4512
    %v4518 = vadd.f32 %v4488, %v4507
    %v4519 = vadd.f32 %v4489, %v4509
    %v4520 = vadd.f32 %v4490, %v4511
    %v4521 = vadd.f32 %v4491, %v4513
    %v4522 = vmul.f32 %v54, %v3989
    %v4523 = vmul.f32 %v55, %v3989
    %v4524 = vmul.f32 %v56, %v3989
    %v4525 = vmul.f32 %v57, %v3989
    %v4526 = vmul.f32 %v49, %v3994
    %v4527 = vmul.f32 %v50, %v3994
    %v4528 = vmul.f32 %v51, %v3994
    %v4529 = vmul.f32 %v52, %v3994
    %4534 = vrot.lane.b32.xlu0 %v4526, 127
    %v4535 = vpop.permute.xlu0 %4534
    %4536 = vrot.lane.b32.xlu0 %v4527, 127
    %v4537 = vpop.permute.xlu0 %4536
    %4538 = vrot.lane.b32.xlu0 %v4528, 127
    %v4539 = vpop.permute.xlu0 %4538
    %4540 = vrot.lane.b32.xlu0 %v4529, 127
    %v4541 = vpop.permute.xlu0 %4540
    %v4546 = vadd.f32 %v4522, %v4535
    %v4547 = vadd.f32 %v4523, %v4537
    %v4548 = vadd.f32 %v4524, %v4539
    %v4549 = vadd.f32 %v4525, %v4541
    %v4550 = vmul.f32 %v54, %v4003
    %v4551 = vmul.f32 %v55, %v4003
    %v4552 = vmul.f32 %v56, %v4003
    %v4553 = vmul.f32 %v57, %v4003
    %4558 = vrot.lane.b32.xlu0 %v4550, 127
    %v4559 = vpop.permute.xlu0 %4558
    %4560 = vrot.lane.b32.xlu0 %v4551, 127
    %v4561 = vpop.permute.xlu0 %4560
    %4562 = vrot.lane.b32.xlu0 %v4552, 127
    %v4563 = vpop.permute.xlu0 %4562
    %4564 = vrot.lane.b32.xlu0 %v4553, 127
    %v4565 = vpop.permute.xlu0 %4564
    %v4570 = vadd.f32 %v4546, %v4559
    %v4571 = vadd.f32 %v4547, %v4561
    %v4572 = vadd.f32 %v4548, %v4563
    %v4573 = vadd.f32 %v4549, %v4565
    %v4574 = vmul.f32 %v44, %v4028
    %v4575 = vmul.f32 %v45, %v4028
    %v4576 = vmul.f32 %v46, %v4028
    %v4577 = vmul.f32 %v47, %v4028
    %v4582 = vrot.slane %v4574, 1
    %v4583 = vrot.slane %v4575, 1
    %v4584 = vsel %vm229, %v4582, %v4583
    %v4585 = vrot.slane %v4576, 1
    %v4586 = vrot.slane %v4577, 1
    %v4587 = vsel %vm229, %v4585, %v4586
    %v4592 = vadd.f32 %v4570, %v4584
    %v4593 = vadd.f32 %v4571, %v4583
    %v4594 = vadd.f32 %v4572, %v4587
    %v4595 = vadd.f32 %v4573, %v4586
    %v4596 = vmul.f32 %v39, %v4037
    %v4597 = vmul.f32 %v40, %v4037
    %v4598 = vmul.f32 %v41, %v4037
    %v4599 = vmul.f32 %v42, %v4037
    %v4604 = vrot.slane %v4596, 1
    %v4605 = vrot.slane %v4597, 1
    %v4606 = vsel %vm229, %v4604, %v4605
    %v4607 = vrot.slane %v4598, 1
    %v4608 = vrot.slane %v4599, 1
    %v4609 = vsel %vm229, %v4607, %v4608
    %4610 = vrot.lane.b32.xlu0 %v4606, 127
    %v4611 = vpop.permute.xlu0 %4610
    %4612 = vrot.lane.b32.xlu0 %v4605, 127
    %v4613 = vpop.permute.xlu0 %4612
    %4614 = vrot.lane.b32.xlu0 %v4609, 127
    %v4615 = vpop.permute.xlu0 %4614
    %4616 = vrot.lane.b32.xlu0 %v4608, 127
    %v4617 = vpop.permute.xlu0 %4616
    %v4622 = vadd.f32 %v4592, %v4611
    %v4623 = vadd.f32 %v4593, %v4613
    %v4624 = vadd.f32 %v4594, %v4615
    %v4625 = vadd.f32 %v4595, %v4617
    %v4626 = vmul.f32 %v44, %v4046
    %v4627 = vmul.f32 %v45, %v4046
    %v4628 = vmul.f32 %v46, %v4046
    %v4629 = vmul.f32 %v47, %v4046
    %v4634 = vrot.slane %v4626, 1
    %v4635 = vrot.slane %v4627, 1
    %v4636 = vsel %vm229, %v4634, %v4635
    %v4637 = vrot.slane %v4628, 1
    %v4638 = vrot.slane %v4629, 1
    %v4639 = vsel %vm229, %v4637, %v4638
    %4640 = vrot.lane.b32.xlu0 %v4636, 127
    %v4641 = vpop.permute.xlu0 %4640
    %4642 = vrot.lane.b32.xlu0 %v4635, 127
    %v4643 = vpop.permute.xlu0 %4642
    %4644 = vrot.lane.b32.xlu0 %v4639, 127
    %v4645 = vpop.permute.xlu0 %4644
    %4646 = vrot.lane.b32.xlu0 %v4638, 127
    %v4647 = vpop.permute.xlu0 %4646
    %v4652 = vadd.f32 %v4622, %v4641
    %v4653 = vadd.f32 %v4623, %v4643
    %v4654 = vadd.f32 %v4624, %v4645
    %v4655 = vadd.f32 %v4625, %v4647
    %v4656 = vmul.f32 %v54, %v4071
    %v4657 = vmul.f32 %v55, %v4071
    %v4658 = vmul.f32 %v56, %v4071
    %v4659 = vmul.f32 %v57, %v4071
    %v4664 = vrot.slane %v4656, 1
    %v4665 = vrot.slane %v4657, 1
    %v4666 = vsel %vm229, %v4664, %v4665
    %v4667 = vrot.slane %v4658, 1
    %v4668 = vrot.slane %v4659, 1
    %v4669 = vsel %vm229, %v4667, %v4668
    %v4674 = vadd.f32 %v4652, %v4666
    %v4675 = vadd.f32 %v4653, %v4665
    %v4676 = vadd.f32 %v4654, %v4669
    %v4677 = vadd.f32 %v4655, %v4668
    %v4678 = vmul.f32 %v49, %v4094
    %v4679 = vmul.f32 %v50, %v4094
    %v4680 = vmul.f32 %v51, %v4094
    %v4681 = vmul.f32 %v52, %v4094
    %v4686 = vrot.slane %v4678, 1
    %v4687 = vrot.slane %v4679, 1
    %v4688 = vsel %vm229, %v4686, %v4687
    %v4689 = vrot.slane %v4680, 1
    %v4690 = vrot.slane %v4681, 1
    %v4691 = vsel %vm229, %v4689, %v4690
    %4692 = vrot.lane.b32.xlu0 %v4688, 127
    %v4693 = vpop.permute.xlu0 %4692
    %4694 = vrot.lane.b32.xlu0 %v4687, 127
    %v4695 = vpop.permute.xlu0 %4694
    %4696 = vrot.lane.b32.xlu0 %v4691, 127
    %v4697 = vpop.permute.xlu0 %4696
    %4698 = vrot.lane.b32.xlu0 %v4690, 127
    %v4699 = vpop.permute.xlu0 %4698
    %v4704 = vadd.f32 %v4674, %v4693
    %v4705 = vadd.f32 %v4675, %v4695
    %v4706 = vadd.f32 %v4676, %v4697
    %v4707 = vadd.f32 %v4677, %v4699
    %v4708 = vmul.f32 %v54, %v4117
    %v4709 = vmul.f32 %v55, %v4117
    %v4710 = vmul.f32 %v56, %v4117
    %v4711 = vmul.f32 %v57, %v4117
    %v4716 = vrot.slane %v4708, 1
    %v4717 = vrot.slane %v4709, 1
    %v4718 = vsel %vm229, %v4716, %v4717
    %v4719 = vrot.slane %v4710, 1
    %v4720 = vrot.slane %v4711, 1
    %v4721 = vsel %vm229, %v4719, %v4720
    %4722 = vrot.lane.b32.xlu0 %v4718, 127
    %v4723 = vpop.permute.xlu0 %4722
    %4724 = vrot.lane.b32.xlu0 %v4717, 127
    %v4725 = vpop.permute.xlu0 %4724
    %4726 = vrot.lane.b32.xlu0 %v4721, 127
    %v4727 = vpop.permute.xlu0 %4726
    %4728 = vrot.lane.b32.xlu0 %v4720, 127
    %v4729 = vpop.permute.xlu0 %4728
    %v4734 = vadd.f32 %v4704, %v4723
    %v4735 = vadd.f32 %v4705, %v4725
    %v4736 = vadd.f32 %v4706, %v4727
    %v4737 = vadd.f32 %v4707, %v4729
    %v4738 = vmax.f32 %v4144, %v4334
    %v4739 = vmax.f32 %v4145, %v4335
    %v4740 = vmax.f32 %v4146, %v4336
    %v4741 = vmax.f32 %v4147, %v4337
    %v4742 = vmax.f32 %v4518, %v4734
    %v4743 = vmax.f32 %v4519, %v4735
    %v4744 = vmax.f32 %v4520, %v4736
    %v4745 = vmax.f32 %v4521, %v4737
    %v4746 = vmax.f32 %v4738, %v4742
    %v4747 = vmax.f32 %v4739, %v4743
    %v4748 = vmax.f32 %v4740, %v4744
    %v4749 = vmax.f32 %v4741, %v4745
    %v4750 = vstv %s135
    %v4751 = vadd.f32 %v4746, %v4750
    %v4752 = vadd.f32 %v4747, %v4750
    %v4753 = vadd.f32 %v4748, %v4750
    %v4754 = vadd.f32 %v4749, %v4750
    %v4755 = vmax.f32 %v4751, 0.0
    %v4756 = vmax.f32 %v4752, 0.0
    %v4757 = vmax.f32 %v4753, 0.0
    %v4758 = vmax.f32 %v4754, 0.0
    %v4759 = vstv %s112
    %v4760 = vmul.f32 %v39, %v4759
    %v4761 = vmul.f32 %v40, %v4759
    %v4762 = vmul.f32 %v41, %v4759
    %v4763 = vmul.f32 %v42, %v4759
    %v4764 = vstv %s113
    %v4765 = vmul.f32 %v44, %v4764
    %v4766 = vmul.f32 %v45, %v4764
    %v4767 = vmul.f32 %v46, %v4764
    %v4768 = vmul.f32 %v47, %v4764
    %v4769 = vadd.f32 %v4760, %v4765
    %v4770 = vadd.f32 %v4761, %v4766
    %v4771 = vadd.f32 %v4762, %v4767
    %v4772 = vadd.f32 %v4763, %v4768
    %v4773 = vstv %s114
    %v4774 = vmul.f32 %v39, %v4773
    %v4775 = vmul.f32 %v40, %v4773
    %v4776 = vmul.f32 %v41, %v4773
    %v4777 = vmul.f32 %v42, %v4773
    %4782 = vrot.lane.b32.xlu0 %v4774, 127
    %v4783 = vpop.permute.xlu0 %4782
    %4784 = vrot.lane.b32.xlu0 %v4775, 127
    %v4785 = vpop.permute.xlu0 %4784
    %4786 = vrot.lane.b32.xlu0 %v4776, 127
    %v4787 = vpop.permute.xlu0 %4786
    %4788 = vrot.lane.b32.xlu0 %v4777, 127
    %v4789 = vpop.permute.xlu0 %4788
    %v4794 = vadd.f32 %v4769, %v4783
    %v4795 = vadd.f32 %v4770, %v4785
    %v4796 = vadd.f32 %v4771, %v4787
    %v4797 = vadd.f32 %v4772, %v4789
    %v4798 = vstv %s115
    %v4799 = vmul.f32 %v49, %v4798
    %v4800 = vmul.f32 %v50, %v4798
    %v4801 = vmul.f32 %v51, %v4798
    %v4802 = vmul.f32 %v52, %v4798
    %v4803 = vadd.f32 %v4794, %v4799
    %v4804 = vadd.f32 %v4795, %v4800
    %v4805 = vadd.f32 %v4796, %v4801
    %v4806 = vadd.f32 %v4797, %v4802
    %v4807 = vstv %s116
    %v4808 = vmul.f32 %v54, %v4807
    %v4809 = vmul.f32 %v55, %v4807
    %v4810 = vmul.f32 %v56, %v4807
    %v4811 = vmul.f32 %v57, %v4807
    %v4812 = vadd.f32 %v4803, %v4808
    %v4813 = vadd.f32 %v4804, %v4809
    %v4814 = vadd.f32 %v4805, %v4810
    %v4815 = vadd.f32 %v4806, %v4811
    %v4816 = vstv %s117
    %v4817 = vmul.f32 %v49, %v4816
    %v4818 = vmul.f32 %v50, %v4816
    %v4819 = vmul.f32 %v51, %v4816
    %v4820 = vmul.f32 %v52, %v4816
    %4825 = vrot.lane.b32.xlu0 %v4817, 127
    %v4826 = vpop.permute.xlu0 %4825
    %4827 = vrot.lane.b32.xlu0 %v4818, 127
    %v4828 = vpop.permute.xlu0 %4827
    %4829 = vrot.lane.b32.xlu0 %v4819, 127
    %v4830 = vpop.permute.xlu0 %4829
    %4831 = vrot.lane.b32.xlu0 %v4820, 127
    %v4832 = vpop.permute.xlu0 %4831
    %v4837 = vadd.f32 %v4812, %v4826
    %v4838 = vadd.f32 %v4813, %v4828
    %v4839 = vadd.f32 %v4814, %v4830
    %v4840 = vadd.f32 %v4815, %v4832
    %v4841 = vstv %s118
    %v4842 = vmul.f32 %v39, %v4841
    %v4843 = vmul.f32 %v40, %v4841
    %v4844 = vmul.f32 %v41, %v4841
    %v4845 = vmul.f32 %v42, %v4841
    %v4850 = vrot.slane %v4842, 1
    %v4851 = vrot.slane %v4843, 1
    %v4852 = vsel %vm229, %v4850, %v4851
    %v4853 = vrot.slane %v4844, 1
    %v4854 = vrot.slane %v4845, 1
    %v4855 = vsel %vm229, %v4853, %v4854
    %v4860 = vadd.f32 %v4837, %v4852
    %v4861 = vadd.f32 %v4838, %v4851
    %v4862 = vadd.f32 %v4839, %v4855
    %v4863 = vadd.f32 %v4840, %v4854
    %v4864 = vstv %s119
    %v4865 = vmul.f32 %v44, %v4864
    %v4866 = vmul.f32 %v45, %v4864
    %v4867 = vmul.f32 %v46, %v4864
    %v4868 = vmul.f32 %v47, %v4864
    %v4873 = vrot.slane %v4865, 1
    %v4874 = vrot.slane %v4866, 1
    %v4875 = vsel %vm229, %v4873, %v4874
    %v4876 = vrot.slane %v4867, 1
    %v4877 = vrot.slane %v4868, 1
    %v4878 = vsel %vm229, %v4876, %v4877
    %v4883 = vadd.f32 %v4860, %v4875
    %v4884 = vadd.f32 %v4861, %v4874
    %v4885 = vadd.f32 %v4862, %v4878
    %v4886 = vadd.f32 %v4863, %v4877
    %v4887 = vstv %s120
    %v4888 = vmul.f32 %v39, %v4887
    %v4889 = vmul.f32 %v40, %v4887
    %v4890 = vmul.f32 %v41, %v4887
    %v4891 = vmul.f32 %v42, %v4887
    %v4896 = vrot.slane %v4888, 1
    %v4897 = vrot.slane %v4889, 1
    %v4898 = vsel %vm229, %v4896, %v4897
    %v4899 = vrot.slane %v4890, 1
    %v4900 = vrot.slane %v4891, 1
    %v4901 = vsel %vm229, %v4899, %v4900
    %4902 = vrot.lane.b32.xlu0 %v4898, 127
    %v4903 = vpop.permute.xlu0 %4902
    %4904 = vrot.lane.b32.xlu0 %v4897, 127
    %v4905 = vpop.permute.xlu0 %4904
    %4906 = vrot.lane.b32.xlu0 %v4901, 127
    %v4907 = vpop.permute.xlu0 %4906
    %4908 = vrot.lane.b32.xlu0 %v4900, 127
    %v4909 = vpop.permute.xlu0 %4908
    %v4914 = vadd.f32 %v4883, %v4903
    %v4915 = vadd.f32 %v4884, %v4905
    %v4916 = vadd.f32 %v4885, %v4907
    %v4917 = vadd.f32 %v4886, %v4909
    %v4918 = vmul.f32 %v44, %v4759
    %v4919 = vmul.f32 %v45, %v4759
    %v4920 = vmul.f32 %v46, %v4759
    %v4921 = vmul.f32 %v47, %v4759
    %v4922 = vmul.f32 %v39, %v4764
    %v4923 = vmul.f32 %v40, %v4764
    %v4924 = vmul.f32 %v41, %v4764
    %v4925 = vmul.f32 %v42, %v4764
    %4930 = vrot.lane.b32.xlu0 %v4922, 127
    %v4931 = vpop.permute.xlu0 %4930
    %4932 = vrot.lane.b32.xlu0 %v4923, 127
    %v4933 = vpop.permute.xlu0 %4932
    %4934 = vrot.lane.b32.xlu0 %v4924, 127
    %v4935 = vpop.permute.xlu0 %4934
    %4936 = vrot.lane.b32.xlu0 %v4925, 127
    %v4937 = vpop.permute.xlu0 %4936
    %v4942 = vadd.f32 %v4918, %v4931
    %v4943 = vadd.f32 %v4919, %v4933
    %v4944 = vadd.f32 %v4920, %v4935
    %v4945 = vadd.f32 %v4921, %v4937
    %v4946 = vmul.f32 %v44, %v4773
    %v4947 = vmul.f32 %v45, %v4773
    %v4948 = vmul.f32 %v46, %v4773
    %v4949 = vmul.f32 %v47, %v4773
    %4954 = vrot.lane.b32.xlu0 %v4946, 127
    %v4955 = vpop.permute.xlu0 %4954
    %4956 = vrot.lane.b32.xlu0 %v4947, 127
    %v4957 = vpop.permute.xlu0 %4956
    %4958 = vrot.lane.b32.xlu0 %v4948, 127
    %v4959 = vpop.permute.xlu0 %4958
    %4960 = vrot.lane.b32.xlu0 %v4949, 127
    %v4961 = vpop.permute.xlu0 %4960
    %v4966 = vadd.f32 %v4942, %v4955
    %v4967 = vadd.f32 %v4943, %v4957
    %v4968 = vadd.f32 %v4944, %v4959
    %v4969 = vadd.f32 %v4945, %v4961
    %v4970 = vmul.f32 %v54, %v4798
    %v4971 = vmul.f32 %v55, %v4798
    %v4972 = vmul.f32 %v56, %v4798
    %v4973 = vmul.f32 %v57, %v4798
    %v4974 = vadd.f32 %v4966, %v4970
    %v4975 = vadd.f32 %v4967, %v4971
    %v4976 = vadd.f32 %v4968, %v4972
    %v4977 = vadd.f32 %v4969, %v4973
    %v4978 = vmul.f32 %v49, %v4807
    %v4979 = vmul.f32 %v50, %v4807
    %v4980 = vmul.f32 %v51, %v4807
    %v4981 = vmul.f32 %v52, %v4807
    %4986 = vrot.lane.b32.xlu0 %v4978, 127
    %v4987 = vpop.permute.xlu0 %4986
    %4988 = vrot.lane.b32.xlu0 %v4979, 127
    %v4989 = vpop.permute.xlu0 %4988
    %4990 = vrot.lane.b32.xlu0 %v4980, 127
    %v4991 = vpop.permute.xlu0 %4990
    %4992 = vrot.lane.b32.xlu0 %v4981, 127
    %v4993 = vpop.permute.xlu0 %4992
    %v4998 = vadd.f32 %v4974, %v4987
    %v4999 = vadd.f32 %v4975, %v4989
    %v5000 = vadd.f32 %v4976, %v4991
    %v5001 = vadd.f32 %v4977, %v4993
    %v5002 = vmul.f32 %v54, %v4816
    %v5003 = vmul.f32 %v55, %v4816
    %v5004 = vmul.f32 %v56, %v4816
    %v5005 = vmul.f32 %v57, %v4816
    %5010 = vrot.lane.b32.xlu0 %v5002, 127
    %v5011 = vpop.permute.xlu0 %5010
    %5012 = vrot.lane.b32.xlu0 %v5003, 127
    %v5013 = vpop.permute.xlu0 %5012
    %5014 = vrot.lane.b32.xlu0 %v5004, 127
    %v5015 = vpop.permute.xlu0 %5014
    %5016 = vrot.lane.b32.xlu0 %v5005, 127
    %v5017 = vpop.permute.xlu0 %5016
    %v5022 = vadd.f32 %v4998, %v5011
    %v5023 = vadd.f32 %v4999, %v5013
    %v5024 = vadd.f32 %v5000, %v5015
    %v5025 = vadd.f32 %v5001, %v5017
    %v5026 = vmul.f32 %v44, %v4841
    %v5027 = vmul.f32 %v45, %v4841
    %v5028 = vmul.f32 %v46, %v4841
    %v5029 = vmul.f32 %v47, %v4841
    %v5034 = vrot.slane %v5026, 1
    %v5035 = vrot.slane %v5027, 1
    %v5036 = vsel %vm229, %v5034, %v5035
    %v5037 = vrot.slane %v5028, 1
    %v5038 = vrot.slane %v5029, 1
    %v5039 = vsel %vm229, %v5037, %v5038
    %v5044 = vadd.f32 %v5022, %v5036
    %v5045 = vadd.f32 %v5023, %v5035
    %v5046 = vadd.f32 %v5024, %v5039
    %v5047 = vadd.f32 %v5025, %v5038
    %v5048 = vmul.f32 %v39, %v4864
    %v5049 = vmul.f32 %v40, %v4864
    %v5050 = vmul.f32 %v41, %v4864
    %v5051 = vmul.f32 %v42, %v4864
    %v5056 = vrot.slane %v5048, 1
    %v5057 = vrot.slane %v5049, 1
    %v5058 = vsel %vm229, %v5056, %v5057
    %v5059 = vrot.slane %v5050, 1
    %v5060 = vrot.slane %v5051, 1
    %v5061 = vsel %vm229, %v5059, %v5060
    %5062 = vrot.lane.b32.xlu0 %v5058, 127
    %v5063 = vpop.permute.xlu0 %5062
    %5064 = vrot.lane.b32.xlu0 %v5057, 127
    %v5065 = vpop.permute.xlu0 %5064
    %5066 = vrot.lane.b32.xlu0 %v5061, 127
    %v5067 = vpop.permute.xlu0 %5066
    %5068 = vrot.lane.b32.xlu0 %v5060, 127
    %v5069 = vpop.permute.xlu0 %5068
    %v5074 = vadd.f32 %v5044, %v5063
    %v5075 = vadd.f32 %v5045, %v5065
    %v5076 = vadd.f32 %v5046, %v5067
    %v5077 = vadd.f32 %v5047, %v5069
    %v5078 = vmul.f32 %v44, %v4887
    %v5079 = vmul.f32 %v45, %v4887
    %v5080 = vmul.f32 %v46, %v4887
    %v5081 = vmul.f32 %v47, %v4887
    %v5086 = vrot.slane %v5078, 1
    %v5087 = vrot.slane %v5079, 1
    %v5088 = vsel %vm229, %v5086, %v5087
    %v5089 = vrot.slane %v5080, 1
    %v5090 = vrot.slane %v5081, 1
    %v5091 = vsel %vm229, %v5089, %v5090
    %5092 = vrot.lane.b32.xlu0 %v5088, 127
    %v5093 = vpop.permute.xlu0 %5092
    %5094 = vrot.lane.b32.xlu0 %v5087, 127
    %v5095 = vpop.permute.xlu0 %5094
    %5096 = vrot.lane.b32.xlu0 %v5091, 127
    %v5097 = vpop.permute.xlu0 %5096
    %5098 = vrot.lane.b32.xlu0 %v5090, 127
    %v5099 = vpop.permute.xlu0 %5098
    %v5104 = vadd.f32 %v5074, %v5093
    %v5105 = vadd.f32 %v5075, %v5095
    %v5106 = vadd.f32 %v5076, %v5097
    %v5107 = vadd.f32 %v5077, %v5099
    %v5108 = vmul.f32 %v49, %v4759
    %v5109 = vmul.f32 %v50, %v4759
    %v5110 = vmul.f32 %v51, %v4759
    %v5111 = vmul.f32 %v52, %v4759
    %v5112 = vmul.f32 %v54, %v4764
    %v5113 = vmul.f32 %v55, %v4764
    %v5114 = vmul.f32 %v56, %v4764
    %v5115 = vmul.f32 %v57, %v4764
    %v5116 = vadd.f32 %v5108, %v5112
    %v5117 = vadd.f32 %v5109, %v5113
    %v5118 = vadd.f32 %v5110, %v5114
    %v5119 = vadd.f32 %v5111, %v5115
    %v5120 = vmul.f32 %v49, %v4773
    %v5121 = vmul.f32 %v50, %v4773
    %v5122 = vmul.f32 %v51, %v4773
    %v5123 = vmul.f32 %v52, %v4773
    %5128 = vrot.lane.b32.xlu0 %v5120, 127
    %v5129 = vpop.permute.xlu0 %5128
    %5130 = vrot.lane.b32.xlu0 %v5121, 127
    %v5131 = vpop.permute.xlu0 %5130
    %5132 = vrot.lane.b32.xlu0 %v5122, 127
    %v5133 = vpop.permute.xlu0 %5132
    %5134 = vrot.lane.b32.xlu0 %v5123, 127
    %v5135 = vpop.permute.xlu0 %5134
    %v5140 = vadd.f32 %v5116, %v5129
    %v5141 = vadd.f32 %v5117, %v5131
    %v5142 = vadd.f32 %v5118, %v5133
    %v5143 = vadd.f32 %v5119, %v5135
    %v5144 = vmul.f32 %v39, %v4798
    %v5145 = vmul.f32 %v40, %v4798
    %v5146 = vmul.f32 %v41, %v4798
    %v5147 = vmul.f32 %v42, %v4798
    %v5152 = vrot.slane %v5144, 1
    %v5153 = vrot.slane %v5145, 1
    %v5154 = vsel %vm229, %v5152, %v5153
    %v5155 = vrot.slane %v5146, 1
    %v5156 = vrot.slane %v5147, 1
    %v5157 = vsel %vm229, %v5155, %v5156
    %v5162 = vadd.f32 %v5140, %v5154
    %v5163 = vadd.f32 %v5141, %v5153
    %v5164 = vadd.f32 %v5142, %v5157
    %v5165 = vadd.f32 %v5143, %v5156
    %v5166 = vmul.f32 %v44, %v4807
    %v5167 = vmul.f32 %v45, %v4807
    %v5168 = vmul.f32 %v46, %v4807
    %v5169 = vmul.f32 %v47, %v4807
    %v5174 = vrot.slane %v5166, 1
    %v5175 = vrot.slane %v5167, 1
    %v5176 = vsel %vm229, %v5174, %v5175
    %v5177 = vrot.slane %v5168, 1
    %v5178 = vrot.slane %v5169, 1
    %v5179 = vsel %vm229, %v5177, %v5178
    %v5184 = vadd.f32 %v5162, %v5176
    %v5185 = vadd.f32 %v5163, %v5175
    %v5186 = vadd.f32 %v5164, %v5179
    %v5187 = vadd.f32 %v5165, %v5178
    %v5188 = vmul.f32 %v39, %v4816
    %v5189 = vmul.f32 %v40, %v4816
    %v5190 = vmul.f32 %v41, %v4816
    %v5191 = vmul.f32 %v42, %v4816
    %v5196 = vrot.slane %v5188, 1
    %v5197 = vrot.slane %v5189, 1
    %v5198 = vsel %vm229, %v5196, %v5197
    %v5199 = vrot.slane %v5190, 1
    %v5200 = vrot.slane %v5191, 1
    %v5201 = vsel %vm229, %v5199, %v5200
    %5202 = vrot.lane.b32.xlu0 %v5198, 127
    %v5203 = vpop.permute.xlu0 %5202
    %5204 = vrot.lane.b32.xlu0 %v5197, 127
    %v5205 = vpop.permute.xlu0 %5204
    %5206 = vrot.lane.b32.xlu0 %v5201, 127
    %v5207 = vpop.permute.xlu0 %5206
    %5208 = vrot.lane.b32.xlu0 %v5200, 127
    %v5209 = vpop.permute.xlu0 %5208
    %v5214 = vadd.f32 %v5184, %v5203
    %v5215 = vadd.f32 %v5185, %v5205
    %v5216 = vadd.f32 %v5186, %v5207
    %v5217 = vadd.f32 %v5187, %v5209
    %v5218 = vmul.f32 %v49, %v4841
    %v5219 = vmul.f32 %v50, %v4841
    %v5220 = vmul.f32 %v51, %v4841
    %v5221 = vmul.f32 %v52, %v4841
    %v5226 = vrot.slane %v5218, 1
    %v5227 = vrot.slane %v5219, 1
    %v5228 = vsel %vm229, %v5226, %v5227
    %v5229 = vrot.slane %v5220, 1
    %v5230 = vrot.slane %v5221, 1
    %v5231 = vsel %vm229, %v5229, %v5230
    %v5236 = vadd.f32 %v5214, %v5228
    %v5237 = vadd.f32 %v5215, %v5227
    %v5238 = vadd.f32 %v5216, %v5231
    %v5239 = vadd.f32 %v5217, %v5230
    %v5240 = vmul.f32 %v54, %v4864
    %v5241 = vmul.f32 %v55, %v4864
    %v5242 = vmul.f32 %v56, %v4864
    %v5243 = vmul.f32 %v57, %v4864
    %v5248 = vrot.slane %v5240, 1
    %v5249 = vrot.slane %v5241, 1
    %v5250 = vsel %vm229, %v5248, %v5249
    %v5251 = vrot.slane %v5242, 1
    %v5252 = vrot.slane %v5243, 1
    %v5253 = vsel %vm229, %v5251, %v5252
    %v5258 = vadd.f32 %v5236, %v5250
    %v5259 = vadd.f32 %v5237, %v5249
    %v5260 = vadd.f32 %v5238, %v5253
    %v5261 = vadd.f32 %v5239, %v5252
    %v5262 = vmul.f32 %v49, %v4887
    %v5263 = vmul.f32 %v50, %v4887
    %v5264 = vmul.f32 %v51, %v4887
    %v5265 = vmul.f32 %v52, %v4887
    %v5270 = vrot.slane %v5262, 1
    %v5271 = vrot.slane %v5263, 1
    %v5272 = vsel %vm229, %v5270, %v5271
    %v5273 = vrot.slane %v5264, 1
    %v5274 = vrot.slane %v5265, 1
    %v5275 = vsel %vm229, %v5273, %v5274
    %5276 = vrot.lane.b32.xlu0 %v5272, 127
    %v5277 = vpop.permute.xlu0 %5276
    %5278 = vrot.lane.b32.xlu0 %v5271, 127
    %v5279 = vpop.permute.xlu0 %5278
    %5280 = vrot.lane.b32.xlu0 %v5275, 127
    %v5281 = vpop.permute.xlu0 %5280
    %5282 = vrot.lane.b32.xlu0 %v5274, 127
    %v5283 = vpop.permute.xlu0 %5282
    %v5288 = vadd.f32 %v5258, %v5277
    %v5289 = vadd.f32 %v5259, %v5279
    %v5290 = vadd.f32 %v5260, %v5281
    %v5291 = vadd.f32 %v5261, %v5283
    %v5292 = vmul.f32 %v54, %v4759
    %v5293 = vmul.f32 %v55, %v4759
    %v5294 = vmul.f32 %v56, %v4759
    %v5295 = vmul.f32 %v57, %v4759
    %v5296 = vmul.f32 %v49, %v4764
    %v5297 = vmul.f32 %v50, %v4764
    %v5298 = vmul.f32 %v51, %v4764
    %v5299 = vmul.f32 %v52, %v4764
    %5304 = vrot.lane.b32.xlu0 %v5296, 127
    %v5305 = vpop.permute.xlu0 %5304
    %5306 = vrot.lane.b32.xlu0 %v5297, 127
    %v5307 = vpop.permute.xlu0 %5306
    %5308 = vrot.lane.b32.xlu0 %v5298, 127
    %v5309 = vpop.permute.xlu0 %5308
    %5310 = vrot.lane.b32.xlu0 %v5299, 127
    %v5311 = vpop.permute.xlu0 %5310
    %v5316 = vadd.f32 %v5292, %v5305
    %v5317 = vadd.f32 %v5293, %v5307
    %v5318 = vadd.f32 %v5294, %v5309
    %v5319 = vadd.f32 %v5295, %v5311
    %v5320 = vmul.f32 %v54, %v4773
    %v5321 = vmul.f32 %v55, %v4773
    %v5322 = vmul.f32 %v56, %v4773
    %v5323 = vmul.f32 %v57, %v4773
    %5328 = vrot.lane.b32.xlu0 %v5320, 127
    %v5329 = vpop.permute.xlu0 %5328
    %5330 = vrot.lane.b32.xlu0 %v5321, 127
    %v5331 = vpop.permute.xlu0 %5330
    %5332 = vrot.lane.b32.xlu0 %v5322, 127
    %v5333 = vpop.permute.xlu0 %5332
    %5334 = vrot.lane.b32.xlu0 %v5323, 127
    %v5335 = vpop.permute.xlu0 %5334
    %v5340 = vadd.f32 %v5316, %v5329
    %v5341 = vadd.f32 %v5317, %v5331
    %v5342 = vadd.f32 %v5318, %v5333
    %v5343 = vadd.f32 %v5319, %v5335
    %v5344 = vmul.f32 %v44, %v4798
    %v5345 = vmul.f32 %v45, %v4798
    %v5346 = vmul.f32 %v46, %v4798
    %v5347 = vmul.f32 %v47, %v4798
    %v5352 = vrot.slane %v5344, 1
    %v5353 = vrot.slane %v5345, 1
    %v5354 = vsel %vm229, %v5352, %v5353
    %v5355 = vrot.slane %v5346, 1
    %v5356 = vrot.slane %v5347, 1
    %v5357 = vsel %vm229, %v5355, %v5356
    %v5362 = vadd.f32 %v5340, %v5354
    %v5363 = vadd.f32 %v5341, %v5353
    %v5364 = vadd.f32 %v5342, %v5357
    %v5365 = vadd.f32 %v5343, %v5356
    %v5366 = vmul.f32 %v39, %v4807
    %v5367 = vmul.f32 %v40, %v4807
    %v5368 = vmul.f32 %v41, %v4807
    %v5369 = vmul.f32 %v42, %v4807
    %v5374 = vrot.slane %v5366, 1
    %v5375 = vrot.slane %v5367, 1
    %v5376 = vsel %vm229, %v5374, %v5375
    %v5377 = vrot.slane %v5368, 1
    %v5378 = vrot.slane %v5369, 1
    %v5379 = vsel %vm229, %v5377, %v5378
    %5380 = vrot.lane.b32.xlu0 %v5376, 127
    %v5381 = vpop.permute.xlu0 %5380
    %5382 = vrot.lane.b32.xlu0 %v5375, 127
    %v5383 = vpop.permute.xlu0 %5382
    %5384 = vrot.lane.b32.xlu0 %v5379, 127
    %v5385 = vpop.permute.xlu0 %5384
    %5386 = vrot.lane.b32.xlu0 %v5378, 127
    %v5387 = vpop.permute.xlu0 %5386
    %v5392 = vadd.f32 %v5362, %v5381
    %v5393 = vadd.f32 %v5363, %v5383
    %v5394 = vadd.f32 %v5364, %v5385
    %v5395 = vadd.f32 %v5365, %v5387
    %v5396 = vmul.f32 %v44, %v4816
    %v5397 = vmul.f32 %v45, %v4816
    %v5398 = vmul.f32 %v46, %v4816
    %v5399 = vmul.f32 %v47, %v4816
    %v5404 = vrot.slane %v5396, 1
    %v5405 = vrot.slane %v5397, 1
    %v5406 = vsel %vm229, %v5404, %v5405
    %v5407 = vrot.slane %v5398, 1
    %v5408 = vrot.slane %v5399, 1
    %v5409 = vsel %vm229, %v5407, %v5408
    %5410 = vrot.lane.b32.xlu0 %v5406, 127
    %v5411 = vpop.permute.xlu0 %5410
    %5412 = vrot.lane.b32.xlu0 %v5405, 127
    %v5413 = vpop.permute.xlu0 %5412
    %5414 = vrot.lane.b32.xlu0 %v5409, 127
    %v5415 = vpop.permute.xlu0 %5414
    %5416 = vrot.lane.b32.xlu0 %v5408, 127
    %v5417 = vpop.permute.xlu0 %5416
    %v5422 = vadd.f32 %v5392, %v5411
    %v5423 = vadd.f32 %v5393, %v5413
    %v5424 = vadd.f32 %v5394, %v5415
    %v5425 = vadd.f32 %v5395, %v5417
    %v5426 = vmul.f32 %v54, %v4841
    %v5427 = vmul.f32 %v55, %v4841
    %v5428 = vmul.f32 %v56, %v4841
    %v5429 = vmul.f32 %v57, %v4841
    %v5434 = vrot.slane %v5426, 1
    %v5435 = vrot.slane %v5427, 1
    %v5436 = vsel %vm229, %v5434, %v5435
    %v5437 = vrot.slane %v5428, 1
    %v5438 = vrot.slane %v5429, 1
    %v5439 = vsel %vm229, %v5437, %v5438
    %v5444 = vadd.f32 %v5422, %v5436
    %v5445 = vadd.f32 %v5423, %v5435
    %v5446 = vadd.f32 %v5424, %v5439
    %v5447 = vadd.f32 %v5425, %v5438
    %v5448 = vmul.f32 %v49, %v4864
    %v5449 = vmul.f32 %v50, %v4864
    %v5450 = vmul.f32 %v51, %v4864
    %v5451 = vmul.f32 %v52, %v4864
    %v5456 = vrot.slane %v5448, 1
    %v5457 = vrot.slane %v5449, 1
    %v5458 = vsel %vm229, %v5456, %v5457
    %v5459 = vrot.slane %v5450, 1
    %v5460 = vrot.slane %v5451, 1
    %v5461 = vsel %vm229, %v5459, %v5460
    %5462 = vrot.lane.b32.xlu0 %v5458, 127
    %v5463 = vpop.permute.xlu0 %5462
    %5464 = vrot.lane.b32.xlu0 %v5457, 127
    %v5465 = vpop.permute.xlu0 %5464
    %5466 = vrot.lane.b32.xlu0 %v5461, 127
    %v5467 = vpop.permute.xlu0 %5466
    %5468 = vrot.lane.b32.xlu0 %v5460, 127
    %v5469 = vpop.permute.xlu0 %5468
    %v5474 = vadd.f32 %v5444, %v5463
    %v5475 = vadd.f32 %v5445, %v5465
    %v5476 = vadd.f32 %v5446, %v5467
    %v5477 = vadd.f32 %v5447, %v5469
    %v5478 = vmul.f32 %v54, %v4887
    %v5479 = vmul.f32 %v55, %v4887
    %v5480 = vmul.f32 %v56, %v4887
    %v5481 = vmul.f32 %v57, %v4887
    %v5486 = vrot.slane %v5478, 1
    %v5487 = vrot.slane %v5479, 1
    %v5488 = vsel %vm229, %v5486, %v5487
    %v5489 = vrot.slane %v5480, 1
    %v5490 = vrot.slane %v5481, 1
    %v5491 = vsel %vm229, %v5489, %v5490
    %5492 = vrot.lane.b32.xlu0 %v5488, 127
    %v5493 = vpop.permute.xlu0 %5492
    %5494 = vrot.lane.b32.xlu0 %v5487, 127
    %v5495 = vpop.permute.xlu0 %5494
    %5496 = vrot.lane.b32.xlu0 %v5491, 127
    %v5497 = vpop.permute.xlu0 %5496
    %5498 = vrot.lane.b32.xlu0 %v5490, 127
    %v5499 = vpop.permute.xlu0 %5498
    %v5504 = vadd.f32 %v5474, %v5493
    %v5505 = vadd.f32 %v5475, %v5495
    %v5506 = vadd.f32 %v5476, %v5497
    %v5507 = vadd.f32 %v5477, %v5499
    %v5508 = vmax.f32 %v4914, %v5104
    %v5509 = vmax.f32 %v4915, %v5105
    %v5510 = vmax.f32 %v4916, %v5106
    %v5511 = vmax.f32 %v4917, %v5107
    %v5512 = vmax.f32 %v5288, %v5504
    %v5513 = vmax.f32 %v5289, %v5505
    %v5514 = vmax.f32 %v5290, %v5506
    %v5515 = vmax.f32 %v5291, %v5507
    %v5516 = vmax.f32 %v5508, %v5512
    %v5517 = vmax.f32 %v5509, %v5513
    %v5518 = vmax.f32 %v5510, %v5514
    %v5519 = vmax.f32 %v5511, %v5515
    %v5520 = vstv %s136
    %v5521 = vadd.f32 %v5516, %v5520
    %v5522 = vadd.f32 %v5517, %v5520
    %v5523 = vadd.f32 %v5518, %v5520
    %v5524 = vadd.f32 %v5519, %v5520
    %v5525 = vmax.f32 %v5521, 0.0
    %v5526 = vmax.f32 %v5522, 0.0
    %v5527 = vmax.f32 %v5523, 0.0
    %v5528 = vmax.f32 %v5524, 0.0
    %v5529 = vstv %s121
    %v5530 = vmul.f32 %v39, %v5529
    %v5531 = vmul.f32 %v40, %v5529
    %v5532 = vmul.f32 %v41, %v5529
    %v5533 = vmul.f32 %v42, %v5529
    %v5534 = vstv %s122
    %v5535 = vmul.f32 %v44, %v5534
    %v5536 = vmul.f32 %v45, %v5534
    %v5537 = vmul.f32 %v46, %v5534
    %v5538 = vmul.f32 %v47, %v5534
    %v5539 = vadd.f32 %v5530, %v5535
    %v5540 = vadd.f32 %v5531, %v5536
    %v5541 = vadd.f32 %v5532, %v5537
    %v5542 = vadd.f32 %v5533, %v5538
    %v5543 = vstv %s123
    %v5544 = vmul.f32 %v39, %v5543
    %v5545 = vmul.f32 %v40, %v5543
    %v5546 = vmul.f32 %v41, %v5543
    %v5547 = vmul.f32 %v42, %v5543
    %5552 = vrot.lane.b32.xlu0 %v5544, 127
    %v5553 = vpop.permute.xlu0 %5552
    %5554 = vrot.lane.b32.xlu0 %v5545, 127
    %v5555 = vpop.permute.xlu0 %5554
    %5556 = vrot.lane.b32.xlu0 %v5546, 127
    %v5557 = vpop.permute.xlu0 %5556
    %5558 = vrot.lane.b32.xlu0 %v5547, 127
    %v5559 = vpop.permute.xlu0 %5558
    %v5564 = vadd.f32 %v5539, %v5553
    %v5565 = vadd.f32 %v5540, %v5555
    %v5566 = vadd.f32 %v5541, %v5557
    %v5567 = vadd.f32 %v5542, %v5559
    %v5568 = vstv %s124
    %v5569 = vmul.f32 %v49, %v5568
    %v5570 = vmul.f32 %v50, %v5568
    %v5571 = vmul.f32 %v51, %v5568
    %v5572 = vmul.f32 %v52, %v5568
    %v5573 = vadd.f32 %v5564, %v5569
    %v5574 = vadd.f32 %v5565, %v5570
    %v5575 = vadd.f32 %v5566, %v5571
    %v5576 = vadd.f32 %v5567, %v5572
    %v5577 = vstv %s125
    %v5578 = vmul.f32 %v54, %v5577
    %v5579 = vmul.f32 %v55, %v5577
    %v5580 = vmul.f32 %v56, %v5577
    %v5581 = vmul.f32 %v57, %v5577
    %v5582 = vadd.f32 %v5573, %v5578
    %v5583 = vadd.f32 %v5574, %v5579
    %v5584 = vadd.f32 %v5575, %v5580
    %v5585 = vadd.f32 %v5576, %v5581
    %v5586 = vstv %s126
    %v5587 = vmul.f32 %v49, %v5586
    %v5588 = vmul.f32 %v50, %v5586
    %v5589 = vmul.f32 %v51, %v5586
    %v5590 = vmul.f32 %v52, %v5586
    %5595 = vrot.lane.b32.xlu0 %v5587, 127
    %v5596 = vpop.permute.xlu0 %5595
    %5597 = vrot.lane.b32.xlu0 %v5588, 127
    %v5598 = vpop.permute.xlu0 %5597
    %5599 = vrot.lane.b32.xlu0 %v5589, 127
    %v5600 = vpop.permute.xlu0 %5599
    %5601 = vrot.lane.b32.xlu0 %v5590, 127
    %v5602 = vpop.permute.xlu0 %5601
    %v5607 = vadd.f32 %v5582, %v5596
    %v5608 = vadd.f32 %v5583, %v5598
    %v5609 = vadd.f32 %v5584, %v5600
    %v5610 = vadd.f32 %v5585, %v5602
    %v5611 = vstv %s127
    %v5612 = vmul.f32 %v39, %v5611
    %v5613 = vmul.f32 %v40, %v5611
    %v5614 = vmul.f32 %v41, %v5611
    %v5615 = vmul.f32 %v42, %v5611
    %v5620 = vrot.slane %v5612, 1
    %v5621 = vrot.slane %v5613, 1
    %v5622 = vsel %vm229, %v5620, %v5621
    %v5623 = vrot.slane %v5614, 1
    %v5624 = vrot.slane %v5615, 1
    %v5625 = vsel %vm229, %v5623, %v5624
    %v5630 = vadd.f32 %v5607, %v5622
    %v5631 = vadd.f32 %v5608, %v5621
    %v5632 = vadd.f32 %v5609, %v5625
    %v5633 = vadd.f32 %v5610, %v5624
    %v5634 = vstv %s128
    %v5635 = vmul.f32 %v44, %v5634
    %v5636 = vmul.f32 %v45, %v5634
    %v5637 = vmul.f32 %v46, %v5634
    %v5638 = vmul.f32 %v47, %v5634
    %v5643 = vrot.slane %v5635, 1
    %v5644 = vrot.slane %v5636, 1
    %v5645 = vsel %vm229, %v5643, %v5644
    %v5646 = vrot.slane %v5637, 1
    %v5647 = vrot.slane %v5638, 1
    %v5648 = vsel %vm229, %v5646, %v5647
    %v5653 = vadd.f32 %v5630, %v5645
    %v5654 = vadd.f32 %v5631, %v5644
    %v5655 = vadd.f32 %v5632, %v5648
    %v5656 = vadd.f32 %v5633, %v5647
    %v5657 = vstv %s129
    %v5658 = vmul.f32 %v39, %v5657
    %v5659 = vmul.f32 %v40, %v5657
    %v5660 = vmul.f32 %v41, %v5657
    %v5661 = vmul.f32 %v42, %v5657
    %v5666 = vrot.slane %v5658, 1
    %v5667 = vrot.slane %v5659, 1
    %v5668 = vsel %vm229, %v5666, %v5667
    %v5669 = vrot.slane %v5660, 1
    %v5670 = vrot.slane %v5661, 1
    %v5671 = vsel %vm229, %v5669, %v5670
    %5672 = vrot.lane.b32.xlu0 %v5668, 127
    %v5673 = vpop.permute.xlu0 %5672
    %5674 = vrot.lane.b32.xlu0 %v5667, 127
    %v5675 = vpop.permute.xlu0 %5674
    %5676 = vrot.lane.b32.xlu0 %v5671, 127
    %v5677 = vpop.permute.xlu0 %5676
    %5678 = vrot.lane.b32.xlu0 %v5670, 127
    %v5679 = vpop.permute.xlu0 %5678
    %v5684 = vadd.f32 %v5653, %v5673
    %v5685 = vadd.f32 %v5654, %v5675
    %v5686 = vadd.f32 %v5655, %v5677
    %v5687 = vadd.f32 %v5656, %v5679
    %v5688 = vmul.f32 %v44, %v5529
    %v5689 = vmul.f32 %v45, %v5529
    %v5690 = vmul.f32 %v46, %v5529
    %v5691 = vmul.f32 %v47, %v5529
    %v5692 = vmul.f32 %v39, %v5534
    %v5693 = vmul.f32 %v40, %v5534
    %v5694 = vmul.f32 %v41, %v5534
    %v5695 = vmul.f32 %v42, %v5534
    %5700 = vrot.lane.b32.xlu0 %v5692, 127
    %v5701 = vpop.permute.xlu0 %5700
    %5702 = vrot.lane.b32.xlu0 %v5693, 127
    %v5703 = vpop.permute.xlu0 %5702
    %5704 = vrot.lane.b32.xlu0 %v5694, 127
    %v5705 = vpop.permute.xlu0 %5704
    %5706 = vrot.lane.b32.xlu0 %v5695, 127
    %v5707 = vpop.permute.xlu0 %5706
    %v5712 = vadd.f32 %v5688, %v5701
    %v5713 = vadd.f32 %v5689, %v5703
    %v5714 = vadd.f32 %v5690, %v5705
    %v5715 = vadd.f32 %v5691, %v5707
    %v5716 = vmul.f32 %v44, %v5543
    %v5717 = vmul.f32 %v45, %v5543
    %v5718 = vmul.f32 %v46, %v5543
    %v5719 = vmul.f32 %v47, %v5543
    %5724 = vrot.lane.b32.xlu0 %v5716, 127
    %v5725 = vpop.permute.xlu0 %5724
    %5726 = vrot.lane.b32.xlu0 %v5717, 127
    %v5727 = vpop.permute.xlu0 %5726
    %5728 = vrot.lane.b32.xlu0 %v5718, 127
    %v5729 = vpop.permute.xlu0 %5728
    %5730 = vrot.lane.b32.xlu0 %v5719, 127
    %v5731 = vpop.permute.xlu0 %5730
    %v5736 = vadd.f32 %v5712, %v5725
    %v5737 = vadd.f32 %v5713, %v5727
    %v5738 = vadd.f32 %v5714, %v5729
    %v5739 = vadd.f32 %v5715, %v5731
    %v5740 = vmul.f32 %v54, %v5568
    %v5741 = vmul.f32 %v55, %v5568
    %v5742 = vmul.f32 %v56, %v5568
    %v5743 = vmul.f32 %v57, %v5568
    %v5744 = vadd.f32 %v5736, %v5740
    %v5745 = vadd.f32 %v5737, %v5741
    %v5746 = vadd.f32 %v5738, %v5742
    %v5747 = vadd.f32 %v5739, %v5743
    %v5748 = vmul.f32 %v49, %v5577
    %v5749 = vmul.f32 %v50, %v5577
    %v5750 = vmul.f32 %v51, %v5577
    %v5751 = vmul.f32 %v52, %v5577
    %5756 = vrot.lane.b32.xlu0 %v5748, 127
    %v5757 = vpop.permute.xlu0 %5756
    %5758 = vrot.lane.b32.xlu0 %v5749, 127
    %v5759 = vpop.permute.xlu0 %5758
    %5760 = vrot.lane.b32.xlu0 %v5750, 127
    %v5761 = vpop.permute.xlu0 %5760
    %5762 = vrot.lane.b32.xlu0 %v5751, 127
    %v5763 = vpop.permute.xlu0 %5762
    %v5768 = vadd.f32 %v5744, %v5757
    %v5769 = vadd.f32 %v5745, %v5759
    %v5770 = vadd.f32 %v5746, %v5761
    %v5771 = vadd.f32 %v5747, %v5763
    %v5772 = vmul.f32 %v54, %v5586
    %v5773 = vmul.f32 %v55, %v5586
    %v5774 = vmul.f32 %v56, %v5586
    %v5775 = vmul.f32 %v57, %v5586
    %5780 = vrot.lane.b32.xlu0 %v5772, 127
    %v5781 = vpop.permute.xlu0 %5780
    %5782 = vrot.lane.b32.xlu0 %v5773, 127
    %v5783 = vpop.permute.xlu0 %5782
    %5784 = vrot.lane.b32.xlu0 %v5774, 127
    %v5785 = vpop.permute.xlu0 %5784
    %5786 = vrot.lane.b32.xlu0 %v5775, 127
    %v5787 = vpop.permute.xlu0 %5786
    %v5792 = vadd.f32 %v5768, %v5781
    %v5793 = vadd.f32 %v5769, %v5783
    %v5794 = vadd.f32 %v5770, %v5785
    %v5795 = vadd.f32 %v5771, %v5787
    %v5796 = vmul.f32 %v44, %v5611
    %v5797 = vmul.f32 %v45, %v5611
    %v5798 = vmul.f32 %v46, %v5611
    %v5799 = vmul.f32 %v47, %v5611
    %v5804 = vrot.slane %v5796, 1
    %v5805 = vrot.slane %v5797, 1
    %v5806 = vsel %vm229, %v5804, %v5805
    %v5807 = vrot.slane %v5798, 1
    %v5808 = vrot.slane %v5799, 1
    %v5809 = vsel %vm229, %v5807, %v5808
    %v5814 = vadd.f32 %v5792, %v5806
    %v5815 = vadd.f32 %v5793, %v5805
    %v5816 = vadd.f32 %v5794, %v5809
    %v5817 = vadd.f32 %v5795, %v5808
    %v5818 = vmul.f32 %v39, %v5634
    %v5819 = vmul.f32 %v40, %v5634
    %v5820 = vmul.f32 %v41, %v5634
    %v5821 = vmul.f32 %v42, %v5634
    %v5826 = vrot.slane %v5818, 1
    %v5827 = vrot.slane %v5819, 1
    %v5828 = vsel %vm229, %v5826, %v5827
    %v5829 = vrot.slane %v5820, 1
    %v5830 = vrot.slane %v5821, 1
    %v5831 = vsel %vm229, %v5829, %v5830
    %5832 = vrot.lane.b32.xlu0 %v5828, 127
    %v5833 = vpop.permute.xlu0 %5832
    %5834 = vrot.lane.b32.xlu0 %v5827, 127
    %v5835 = vpop.permute.xlu0 %5834
    %5836 = vrot.lane.b32.xlu0 %v5831, 127
    %v5837 = vpop.permute.xlu0 %5836
    %5838 = vrot.lane.b32.xlu0 %v5830, 127
    %v5839 = vpop.permute.xlu0 %5838
    %v5844 = vadd.f32 %v5814, %v5833
    %v5845 = vadd.f32 %v5815, %v5835
    %v5846 = vadd.f32 %v5816, %v5837
    %v5847 = vadd.f32 %v5817, %v5839
    %v5848 = vmul.f32 %v44, %v5657
    %v5849 = vmul.f32 %v45, %v5657
    %v5850 = vmul.f32 %v46, %v5657
    %v5851 = vmul.f32 %v47, %v5657
    %v5856 = vrot.slane %v5848, 1
    %v5857 = vrot.slane %v5849, 1
    %v5858 = vsel %vm229, %v5856, %v5857
    %v5859 = vrot.slane %v5850, 1
    %v5860 = vrot.slane %v5851, 1
    %v5861 = vsel %vm229, %v5859, %v5860
    %5862 = vrot.lane.b32.xlu0 %v5858, 127
    %v5863 = vpop.permute.xlu0 %5862
    %5864 = vrot.lane.b32.xlu0 %v5857, 127
    %v5865 = vpop.permute.xlu0 %5864
    %5866 = vrot.lane.b32.xlu0 %v5861, 127
    %v5867 = vpop.permute.xlu0 %5866
    %5868 = vrot.lane.b32.xlu0 %v5860, 127
    %v5869 = vpop.permute.xlu0 %5868
    %v5874 = vadd.f32 %v5844, %v5863
    %v5875 = vadd.f32 %v5845, %v5865
    %v5876 = vadd.f32 %v5846, %v5867
    %v5877 = vadd.f32 %v5847, %v5869
    %v5878 = vmul.f32 %v49, %v5529
    %v5879 = vmul.f32 %v50, %v5529
    %v5880 = vmul.f32 %v51, %v5529
    %v5881 = vmul.f32 %v52, %v5529
    %v5882 = vmul.f32 %v54, %v5534
    %v5883 = vmul.f32 %v55, %v5534
    %v5884 = vmul.f32 %v56, %v5534
    %v5885 = vmul.f32 %v57, %v5534
    %v5886 = vadd.f32 %v5878, %v5882
    %v5887 = vadd.f32 %v5879, %v5883
    %v5888 = vadd.f32 %v5880, %v5884
    %v5889 = vadd.f32 %v5881, %v5885
    %v5890 = vmul.f32 %v49, %v5543
    %v5891 = vmul.f32 %v50, %v5543
    %v5892 = vmul.f32 %v51, %v5543
    %v5893 = vmul.f32 %v52, %v5543
    %5898 = vrot.lane.b32.xlu0 %v5890, 127
    %v5899 = vpop.permute.xlu0 %5898
    %5900 = vrot.lane.b32.xlu0 %v5891, 127
    %v5901 = vpop.permute.xlu0 %5900
    %5902 = vrot.lane.b32.xlu0 %v5892, 127
    %v5903 = vpop.permute.xlu0 %5902
    %5904 = vrot.lane.b32.xlu0 %v5893, 127
    %v5905 = vpop.permute.xlu0 %5904
    %v5910 = vadd.f32 %v5886, %v5899
    %v5911 = vadd.f32 %v5887, %v5901
    %v5912 = vadd.f32 %v5888, %v5903
    %v5913 = vadd.f32 %v5889, %v5905
    %v5914 = vmul.f32 %v39, %v5568
    %v5915 = vmul.f32 %v40, %v5568
    %v5916 = vmul.f32 %v41, %v5568
    %v5917 = vmul.f32 %v42, %v5568
    %v5922 = vrot.slane %v5914, 1
    %v5923 = vrot.slane %v5915, 1
    %v5924 = vsel %vm229, %v5922, %v5923
    %v5925 = vrot.slane %v5916, 1
    %v5926 = vrot.slane %v5917, 1
    %v5927 = vsel %vm229, %v5925, %v5926
    %v5932 = vadd.f32 %v5910, %v5924
    %v5933 = vadd.f32 %v5911, %v5923
    %v5934 = vadd.f32 %v5912, %v5927
    %v5935 = vadd.f32 %v5913, %v5926
    %v5936 = vmul.f32 %v44, %v5577
    %v5937 = vmul.f32 %v45, %v5577
    %v5938 = vmul.f32 %v46, %v5577
    %v5939 = vmul.f32 %v47, %v5577
    %v5944 = vrot.slane %v5936, 1
    %v5945 = vrot.slane %v5937, 1
    %v5946 = vsel %vm229, %v5944, %v5945
    %v5947 = vrot.slane %v5938, 1
    %v5948 = vrot.slane %v5939, 1
    %v5949 = vsel %vm229, %v5947, %v5948
    %v5954 = vadd.f32 %v5932, %v5946
    %v5955 = vadd.f32 %v5933, %v5945
    %v5956 = vadd.f32 %v5934, %v5949
    %v5957 = vadd.f32 %v5935, %v5948
    %v5958 = vmul.f32 %v39, %v5586
    %v5959 = vmul.f32 %v40, %v5586
    %v5960 = vmul.f32 %v41, %v5586
    %v5961 = vmul.f32 %v42, %v5586
    %v5966 = vrot.slane %v5958, 1
    %v5967 = vrot.slane %v5959, 1
    %v5968 = vsel %vm229, %v5966, %v5967
    %v5969 = vrot.slane %v5960, 1
    %v5970 = vrot.slane %v5961, 1
    %v5971 = vsel %vm229, %v5969, %v5970
    %5972 = vrot.lane.b32.xlu0 %v5968, 127
    %v5973 = vpop.permute.xlu0 %5972
    %5974 = vrot.lane.b32.xlu0 %v5967, 127
    %v5975 = vpop.permute.xlu0 %5974
    %5976 = vrot.lane.b32.xlu0 %v5971, 127
    %v5977 = vpop.permute.xlu0 %5976
    %5978 = vrot.lane.b32.xlu0 %v5970, 127
    %v5979 = vpop.permute.xlu0 %5978
    %v5984 = vadd.f32 %v5954, %v5973
    %v5985 = vadd.f32 %v5955, %v5975
    %v5986 = vadd.f32 %v5956, %v5977
    %v5987 = vadd.f32 %v5957, %v5979
    %v5988 = vmul.f32 %v49, %v5611
    %v5989 = vmul.f32 %v50, %v5611
    %v5990 = vmul.f32 %v51, %v5611
    %v5991 = vmul.f32 %v52, %v5611
    %v5996 = vrot.slane %v5988, 1
    %v5997 = vrot.slane %v5989, 1
    %v5998 = vsel %vm229, %v5996, %v5997
    %v5999 = vrot.slane %v5990, 1
    %v6000 = vrot.slane %v5991, 1
    %v6001 = vsel %vm229, %v5999, %v6000
    %v6006 = vadd.f32 %v5984, %v5998
    %v6007 = vadd.f32 %v5985, %v5997
    %v6008 = vadd.f32 %v5986, %v6001
    %v6009 = vadd.f32 %v5987, %v6000
    %v6010 = vmul.f32 %v54, %v5634
    %v6011 = vmul.f32 %v55, %v5634
    %v6012 = vmul.f32 %v56, %v5634
    %v6013 = vmul.f32 %v57, %v5634
    %v6018 = vrot.slane %v6010, 1
    %v6019 = vrot.slane %v6011, 1
    %v6020 = vsel %vm229, %v6018, %v6019
    %v6021 = vrot.slane %v6012, 1
    %v6022 = vrot.slane %v6013, 1
    %v6023 = vsel %vm229, %v6021, %v6022
    %v6028 = vadd.f32 %v6006, %v6020
    %v6029 = vadd.f32 %v6007, %v6019
    %v6030 = vadd.f32 %v6008, %v6023
    %v6031 = vadd.f32 %v6009, %v6022
    %v6032 = vmul.f32 %v49, %v5657
    %v6033 = vmul.f32 %v50, %v5657
    %v6034 = vmul.f32 %v51, %v5657
    %v6035 = vmul.f32 %v52, %v5657
    %v6040 = vrot.slane %v6032, 1
    %v6041 = vrot.slane %v6033, 1
    %v6042 = vsel %vm229, %v6040, %v6041
    %v6043 = vrot.slane %v6034, 1
    %v6044 = vrot.slane %v6035, 1
    %v6045 = vsel %vm229, %v6043, %v6044
    %6046 = vrot.lane.b32.xlu0 %v6042, 127
    %v6047 = vpop.permute.xlu0 %6046
    %6048 = vrot.lane.b32.xlu0 %v6041, 127
    %v6049 = vpop.permute.xlu0 %6048
    %6050 = vrot.lane.b32.xlu0 %v6045, 127
    %v6051 = vpop.permute.xlu0 %6050
    %6052 = vrot.lane.b32.xlu0 %v6044, 127
    %v6053 = vpop.permute.xlu0 %6052
    %v6058 = vadd.f32 %v6028, %v6047
    %v6059 = vadd.f32 %v6029, %v6049
    %v6060 = vadd.f32 %v6030, %v6051
    %v6061 = vadd.f32 %v6031, %v6053
    %v6062 = vmul.f32 %v54, %v5529
    %v6063 = vmul.f32 %v55, %v5529
    %v6064 = vmul.f32 %v56, %v5529
    %v6065 = vmul.f32 %v57, %v5529
    %v6066 = vmul.f32 %v49, %v5534
    %v6067 = vmul.f32 %v50, %v5534
    %v6068 = vmul.f32 %v51, %v5534
    %v6069 = vmul.f32 %v52, %v5534
    %6074 = vrot.lane.b32.xlu0 %v6066, 127
    %v6075 = vpop.permute.xlu0 %6074
    %6076 = vrot.lane.b32.xlu0 %v6067, 127
    %v6077 = vpop.permute.xlu0 %6076
    %6078 = vrot.lane.b32.xlu0 %v6068, 127
    %v6079 = vpop.permute.xlu0 %6078
    %6080 = vrot.lane.b32.xlu0 %v6069, 127
    %v6081 = vpop.permute.xlu0 %6080
    %v6086 = vadd.f32 %v6062, %v6075
    %v6087 = vadd.f32 %v6063, %v6077
    %v6088 = vadd.f32 %v6064, %v6079
    %v6089 = vadd.f32 %v6065, %v6081
    %v6090 = vmul.f32 %v54, %v5543
    %v6091 = vmul.f32 %v55, %v5543
    %v6092 = vmul.f32 %v56, %v5543
    %v6093 = vmul.f32 %v57, %v5543
    %6098 = vrot.lane.b32.xlu0 %v6090, 127
    %v6099 = vpop.permute.xlu0 %6098
    %6100 = vrot.lane.b32.xlu0 %v6091, 127
    %v6101 = vpop.permute.xlu0 %6100
    %6102 = vrot.lane.b32.xlu0 %v6092, 127
    %v6103 = vpop.permute.xlu0 %6102
    %6104 = vrot.lane.b32.xlu0 %v6093, 127
    %v6105 = vpop.permute.xlu0 %6104
    %v6110 = vadd.f32 %v6086, %v6099
    %v6111 = vadd.f32 %v6087, %v6101
    %v6112 = vadd.f32 %v6088, %v6103
    %v6113 = vadd.f32 %v6089, %v6105
    %v6114 = vmul.f32 %v44, %v5568
    %v6115 = vmul.f32 %v45, %v5568
    %v6116 = vmul.f32 %v46, %v5568
    %v6117 = vmul.f32 %v47, %v5568
    %v6122 = vrot.slane %v6114, 1
    %v6123 = vrot.slane %v6115, 1
    %v6124 = vsel %vm229, %v6122, %v6123
    %v6125 = vrot.slane %v6116, 1
    %v6126 = vrot.slane %v6117, 1
    %v6127 = vsel %vm229, %v6125, %v6126
    %v6132 = vadd.f32 %v6110, %v6124
    %v6133 = vadd.f32 %v6111, %v6123
    %v6134 = vadd.f32 %v6112, %v6127
    %v6135 = vadd.f32 %v6113, %v6126
    %v6136 = vmul.f32 %v39, %v5577
    %v6137 = vmul.f32 %v40, %v5577
    %v6138 = vmul.f32 %v41, %v5577
    %v6139 = vmul.f32 %v42, %v5577
    %v6144 = vrot.slane %v6136, 1
    %v6145 = vrot.slane %v6137, 1
    %v6146 = vsel %vm229, %v6144, %v6145
    %v6147 = vrot.slane %v6138, 1
    %v6148 = vrot.slane %v6139, 1
    %v6149 = vsel %vm229, %v6147, %v6148
    %6150 = vrot.lane.b32.xlu0 %v6146, 127
    %v6151 = vpop.permute.xlu0 %6150
    %6152 = vrot.lane.b32.xlu0 %v6145, 127
    %v6153 = vpop.permute.xlu0 %6152
    %6154 = vrot.lane.b32.xlu0 %v6149, 127
    %v6155 = vpop.permute.xlu0 %6154
    %6156 = vrot.lane.b32.xlu0 %v6148, 127
    %v6157 = vpop.permute.xlu0 %6156
    %v6162 = vadd.f32 %v6132, %v6151
    %v6163 = vadd.f32 %v6133, %v6153
    %v6164 = vadd.f32 %v6134, %v6155
    %v6165 = vadd.f32 %v6135, %v6157
    %v6166 = vmul.f32 %v44, %v5586
    %v6167 = vmul.f32 %v45, %v5586
    %v6168 = vmul.f32 %v46, %v5586
    %v6169 = vmul.f32 %v47, %v5586
    %v6174 = vrot.slane %v6166, 1
    %v6175 = vrot.slane %v6167, 1
    %v6176 = vsel %vm229, %v6174, %v6175
    %v6177 = vrot.slane %v6168, 1
    %v6178 = vrot.slane %v6169, 1
    %v6179 = vsel %vm229, %v6177, %v6178
    %6180 = vrot.lane.b32.xlu0 %v6176, 127
    %v6181 = vpop.permute.xlu0 %6180
    %6182 = vrot.lane.b32.xlu0 %v6175, 127
    %v6183 = vpop.permute.xlu0 %6182
    %6184 = vrot.lane.b32.xlu0 %v6179, 127
    %v6185 = vpop.permute.xlu0 %6184
    %6186 = vrot.lane.b32.xlu0 %v6178, 127
    %v6187 = vpop.permute.xlu0 %6186
    %v6192 = vadd.f32 %v6162, %v6181
    %v6193 = vadd.f32 %v6163, %v6183
    %v6194 = vadd.f32 %v6164, %v6185
    %v6195 = vadd.f32 %v6165, %v6187
    %v6196 = vmul.f32 %v54, %v5611
    %v6197 = vmul.f32 %v55, %v5611
    %v6198 = vmul.f32 %v56, %v5611
    %v6199 = vmul.f32 %v57, %v5611
    %v6204 = vrot.slane %v6196, 1
    %v6205 = vrot.slane %v6197, 1
    %v6206 = vsel %vm229, %v6204, %v6205
    %v6207 = vrot.slane %v6198, 1
    %v6208 = vrot.slane %v6199, 1
    %v6209 = vsel %vm229, %v6207, %v6208
    %v6214 = vadd.f32 %v6192, %v6206
    %v6215 = vadd.f32 %v6193, %v6205
    %v6216 = vadd.f32 %v6194, %v6209
    %v6217 = vadd.f32 %v6195, %v6208
    %v6218 = vmul.f32 %v49, %v5634
    %v6219 = vmul.f32 %v50, %v5634
    %v6220 = vmul.f32 %v51, %v5634
    %v6221 = vmul.f32 %v52, %v5634
    %v6226 = vrot.slane %v6218, 1
    %v6227 = vrot.slane %v6219, 1
    %v6228 = vsel %vm229, %v6226, %v6227
    %v6229 = vrot.slane %v6220, 1
    %v6230 = vrot.slane %v6221, 1
    %v6231 = vsel %vm229, %v6229, %v6230
    %6232 = vrot.lane.b32.xlu0 %v6228, 127
    %v6233 = vpop.permute.xlu0 %6232
    %6234 = vrot.lane.b32.xlu0 %v6227, 127
    %v6235 = vpop.permute.xlu0 %6234
    %6236 = vrot.lane.b32.xlu0 %v6231, 127
    %v6237 = vpop.permute.xlu0 %6236
    %6238 = vrot.lane.b32.xlu0 %v6230, 127
    %v6239 = vpop.permute.xlu0 %6238
    %v6244 = vadd.f32 %v6214, %v6233
    %v6245 = vadd.f32 %v6215, %v6235
    %v6246 = vadd.f32 %v6216, %v6237
    %v6247 = vadd.f32 %v6217, %v6239
    %v6248 = vmul.f32 %v54, %v5657
    %v6249 = vmul.f32 %v55, %v5657
    %v6250 = vmul.f32 %v56, %v5657
    %v6251 = vmul.f32 %v57, %v5657
    %v6256 = vrot.slane %v6248, 1
    %v6257 = vrot.slane %v6249, 1
    %v6258 = vsel %vm229, %v6256, %v6257
    %v6259 = vrot.slane %v6250, 1
    %v6260 = vrot.slane %v6251, 1
    %v6261 = vsel %vm229, %v6259, %v6260
    %6262 = vrot.lane.b32.xlu0 %v6258, 127
    %v6263 = vpop.permute.xlu0 %6262
    %6264 = vrot.lane.b32.xlu0 %v6257, 127
    %v6265 = vpop.permute.xlu0 %6264
    %6266 = vrot.lane.b32.xlu0 %v6261, 127
    %v6267 = vpop.permute.xlu0 %6266
    %6268 = vrot.lane.b32.xlu0 %v6260, 127
    %v6269 = vpop.permute.xlu0 %6268
    %v6274 = vadd.f32 %v6244, %v6263
    %v6275 = vadd.f32 %v6245, %v6265
    %v6276 = vadd.f32 %v6246, %v6267
    %v6277 = vadd.f32 %v6247, %v6269
    %v6278 = vmax.f32 %v5684, %v5874
    %v6279 = vmax.f32 %v5685, %v5875
    %v6280 = vmax.f32 %v5686, %v5876
    %v6281 = vmax.f32 %v5687, %v5877
    %v6282 = vmax.f32 %v6058, %v6274
    %v6283 = vmax.f32 %v6059, %v6275
    %v6284 = vmax.f32 %v6060, %v6276
    %v6285 = vmax.f32 %v6061, %v6277
    %v6286 = vmax.f32 %v6278, %v6282
    %v6287 = vmax.f32 %v6279, %v6283
    %v6288 = vmax.f32 %v6280, %v6284
    %v6289 = vmax.f32 %v6281, %v6285
    %v6290 = vstv %s137
    %v6291 = vadd.f32 %v6286, %v6290
    %v6292 = vadd.f32 %v6287, %v6290
    %v6293 = vadd.f32 %v6288, %v6290
    %v6294 = vadd.f32 %v6289, %v6290
    %v6295 = vmax.f32 %v6291, 0.0
    %v6296 = vmax.f32 %v6292, 0.0
    %v6297 = vmax.f32 %v6293, 0.0
    %v6298 = vmax.f32 %v6294, 0.0
    %vm6299 = vcmask 113664
    %6300 = vst.msk [vmem:[%s3] sm:$0xff] %vm6299, %v905
    %vm6301 = vcmask 111616
    %6302 = vst.msk [vmem:[%s3 + $0x8] sm:$0x3f] %vm6301, %v906
    %6303 = vst.msk [vmem:[%s3 + $0x10] sm:$0xff] %vm6299, %v1675
    %6304 = vst.msk [vmem:[%s3 + $0x18] sm:$0x3f] %vm6301, %v1676
    %6305 = vst.msk [vmem:[%s3 + $0x20] sm:$0xff] %vm6299, %v2445
    %6306 = vst.msk [vmem:[%s3 + $0x28] sm:$0x3f] %vm6301, %v2446
    %6307 = vst.msk [vmem:[%s3 + $0x30] sm:$0xff] %vm6299, %v3215
    %6308 = vst.msk [vmem:[%s3 + $0x38] sm:$0x3f] %vm6301, %v3216
    %6309 = vst.msk [vmem:[%s3 + $0x40] sm:$0xff] %vm6299, %v3985
    %6310 = vst.msk [vmem:[%s3 + $0x48] sm:$0x3f] %vm6301, %v3986
    %6311 = vst.msk [vmem:[%s3 + $0x50] sm:$0xff] %vm6299, %v4755
    %6312 = vst.msk [vmem:[%s3 + $0x58] sm:$0x3f] %vm6301, %v4756
    %6313 = vst.msk [vmem:[%s3 + $0x60] sm:$0xff] %vm6299, %v5525
    %6314 = vst.msk [vmem:[%s3 + $0x68] sm:$0x3f] %vm6301, %v5526
    %6315 = vst.msk [vmem:[%s3 + $0x70] sm:$0xff] %vm6299, %v6295
    %6316 = vst.msk [vmem:[%s3 + $0x78] sm:$0x3f] %vm6301, %v6296
    %6317 = vst.msk [vmem:[%s3 + $0x80] sm:$0xff] %vm6299, %v907
    %6318 = vst.msk [vmem:[%s3 + $0x88] sm:$0x3f] %vm6301, %v908
    %6319 = vst.msk [vmem:[%s3 + $0x90] sm:$0xff] %vm6299, %v1677
    %6320 = vst.msk [vmem:[%s3 + $0x98] sm:$0x3f] %vm6301, %v1678
    %6321 = vst.msk [vmem:[%s3 + $0xa0] sm:$0xff] %vm6299, %v2447
    %6322 = vst.msk [vmem:[%s3 + $0xa8] sm:$0x3f] %vm6301, %v2448
    %6323 = vst.msk [vmem:[%s3 + $0xb0] sm:$0xff] %vm6299, %v3217
    %6324 = vst.msk [vmem:[%s3 + $0xb8] sm:$0x3f] %vm6301, %v3218
    %6325 = vst.msk [vmem:[%s3 + $0xc0] sm:$0xff] %vm6299, %v3987
    %6326 = vst.msk [vmem:[%s3 + $0xc8] sm:$0x3f] %vm6301, %v3988
    %6327 = vst.msk [vmem:[%s3 + $0xd0] sm:$0xff] %vm6299, %v4757
    %6328 = vst.msk [vmem:[%s3 + $0xd8] sm:$0x3f] %vm6301, %v4758
    %6329 = vst.msk [vmem:[%s3 + $0xe0] sm:$0xff] %vm6299, %v5527
    %6330 = vst.msk [vmem:[%s3 + $0xe8] sm:$0x3f] %vm6301, %v5528
    %6331 = vst.msk [vmem:[%s3 + $0xf0] sm:$0xff] %vm6299, %v6297
    %6332 = vst.msk [vmem:[%s3 + $0xf8] sm:$0x3f] %vm6301, %v6298
    // Predicated region
    $region22: #{cnn_forward.2} parent=1 // pred_check
      _
    $region23: #{cnn_forward.2} parent=1 // pred_check_branch
      %6334 = sbr.rel (0) target = $region25
    $region24: #{cnn_forward.2} parent=1 // pred_region
      _
    $region25: #{cnn_forward.2} parent=1 // pred_fallthru
      _
    // Predicated region
    $region26: #{cnn_forward.2} parent=1 // pred_check
      _
    $region27: #{cnn_forward.2} parent=1 // pred_check_branch
      %6336 = sbr.rel (0) target = $region29
    $region28: #{cnn_forward.2} parent=1 // pred_region
      _
    $region29: #{cnn_forward.2} parent=1 // pred_fallthru
      _
    %6337 = vsyncpa [#allocation3], 1
    %6338 = vsyncpa [#allocation5], 1

</llo_original>
